<compile_context>
chip_gen: v6e
topology: v6e:2x2x1
jax: 0.10.0
libtpu: 0.0.40
codegen_flags: <defaults>
</compile_context>

<pallas_src>
import functools

import numpy as np
import jax
import jax.numpy as jnp
from jax.experimental import pallas as pl
from jax.experimental.pallas import tpu as pltpu

LRELU_SLOPE = 0.02
BN_EPS = 1e-5


def _vmem_limit_bytes(block_bytes, scratch_bytes=0):
    # Double-buffered pipeline I/O + scratch + slack, clamped so the request
    # stays within every generation's physical VMEM (v7x has only 64 MiB).
    need = 2 * block_bytes + scratch_bytes + (4 << 20)
    return int(min(max(need, 32 << 20), 48 << 20))


# ---------------------------------------------------------------------------
# Kernel 1: fused [optional BN-affine + LeakyReLU on the input] -> 3x3 conv
# (9 accumulated MXU dots) -> per-step BN batch-stat partial sums.
# One batch element per grid step; the grid axis is fully parallel.
# ---------------------------------------------------------------------------
def _conv_bn_stats_kernel(*refs, H, W, apply_input_act, compute_dtype):
    if apply_input_act:
        (x_ref, scale_ref, shift_ref, w_ref,
         o_ref, sum_ref, sq_ref, xp) = refs
    else:
        x_ref, w_ref, o_ref, sum_ref, sq_ref, xp = refs
        scale_ref = shift_ref = None

    cin = x_ref.shape[-1]
    cout = w_ref.shape[-1]

    # Zero the halo border every step (O(H+W) elements, cheap).  Doing it per
    # step (not under pl.when(program_id==0)) keeps the grid axis safe as
    # "parallel" on v7x, where each TensorCore owns a private scratch and its
    # first step is not program_id 0.
    xp[0:1, :, :] = jnp.zeros((1, W + 2, cin), xp.dtype)
    xp[H + 1:H + 2, :, :] = jnp.zeros((1, W + 2, cin), xp.dtype)
    xp[:, 0:1, :] = jnp.zeros((H + 2, 1, cin), xp.dtype)
    xp[:, W + 1:W + 2, :] = jnp.zeros((H + 2, 1, cin), xp.dtype)

    x = x_ref[0].astype(jnp.float32)                          # (H, W, Cin)
    if apply_input_act:
        # Previous stage's folded BN affine + LeakyReLU fused into the conv
        # input path (removes one full HBM write+read and one launch).
        t = (x * scale_ref[...].reshape(1, 1, cin)
             + shift_ref[...].reshape(1, 1, cin))
        x = jnp.where(t > 0, t, LRELU_SLOPE * t)

    xp[1:H + 1, 1:W + 1, :] = x                               # zero halo around it
    # TODO(synk): on v5e (single vector-store slot) feed interior taps directly
    # from `x` via pltpu.roll + edge masks instead of this full-tile VMEM
    # rewrite; kept slice-based here for lowering robustness.

    # 3x3 conv as 9 accumulated (H*W, Cin) x (Cin, Cout) MXU dots.  No
    # materialized (H*W, 9*Cin) im2col tensor (which is 9x the input tile in
    # VMEM and blows v7x's 64 MiB at real channel counts).  Operands are cast
    # to `compute_dtype` (bf16 in production) for MXU-native throughput;
    # accumulation stays f32.
    acc = None
    for dy in range(3):
        row = xp[dy:dy + H, :, :]                             # cheap outer-dim slice
        for dx in range(3):
            tap = row[:, dx:dx + W, :].reshape(H * W, cin).astype(compute_dtype)
            d = jnp.dot(tap, w_ref[dy * 3 + dx],
                        preferred_element_type=jnp.float32)
            acc = d if acc is None else acc + d

    # Per-step partial BN statistics while acc is live in vregs.  Reduced over
    # the batch in the wrapper -> no resident accumulator -> no cross-core
    # race under "parallel" semantics on v7x.
    # NOTE: E[x^2]-E[x]^2 can cancel when |mean| >> std; acceptable here, use a
    # shifted/two-pass formulation if BN accuracy matters at scale.
    sum_ref[...] = jnp.sum(acc, axis=0, keepdims=True).reshape(1, 1, cout)
    sq_ref[...] = jnp.sum(acc * acc, axis=0, keepdims=True).reshape(1, 1, cout)

    # With Cout < 128 this NHWC store is lane-masked; at production channel
    # counts (multiples of 128 / 256-aligned tiles on v6e+) it is an unmasked
    # full-lane vst.
    # TODO(synk): for small Cout, store a lane-dense (1, H, W*Cout) block once
    # Mosaic's sublane->lane relayout for this reshape is verified on target.
    o_ref[...] = acc.reshape(1, H, W, cout).astype(o_ref.dtype)


def conv_bn_stage(x, w, scale_in=None, shift_in=None, *,
                  compute_dtype=np.dtype(jnp.float32),
                  act_dtype=np.dtype(jnp.float32)):
    """3x3 'same' conv of x (NHWC) with weights w (9, Cin, Cout).

    Optionally applies a per-channel affine + LeakyReLU to the input first
    (the previous stage's folded BN).  Returns (conv_out, batch_mean, batch_var).
    """
    N, H, W, Cin = x.shape
    Cout = w.shape[-1]
    apply_input_act = scale_in is not None

    in_specs = [pl.BlockSpec((1, H, W, Cin), lambda n: (n, 0, 0, 0))]
    args = [x]
    if apply_input_act:
        in_specs += [pl.BlockSpec((1, Cin), lambda n: (0, 0)),
                     pl.BlockSpec((1, Cin), lambda n: (0, 0))]
        args += [scale_in.reshape(1, Cin).astype(jnp.float32),
                 shift_in.reshape(1, Cin).astype(jnp.float32)]
    in_specs += [pl.BlockSpec((9, Cin, Cout), lambda n: (0, 0, 0))]
    args += [w.astype(compute_dtype)]          # bf16 weights halve the weight DMA

    blk_bytes = (H * W * Cin * x.dtype.itemsize
                 + H * W * Cout * np.dtype(act_dtype).itemsize
                 + 9 * Cin * Cout * np.dtype(compute_dtype).itemsize)
    scratch_bytes = (H + 2) * (W + 2) * Cin * 4

    # TODO(synk): for production UNet sizes, tile H into strips with a 2-row
    # halo (grid (N, H//strip) with >=8-16 steps), sizing input+output strips
    # (double-buffered) + halo scratch to ~48 MiB on v7x and ~2x that on
    # v5e/v6e, and target Cout/K tiles of 256 on v6e/v7x vs 128 on v5e.
    y, s, sq = pl.pallas_call(
        functools.partial(_conv_bn_stats_kernel, H=H, W=W,
                          apply_input_act=apply_input_act,
                          compute_dtype=compute_dtype),
        out_shape=(jax.ShapeDtypeStruct((N, H, W, Cout), act_dtype),
                   jax.ShapeDtypeStruct((N, 1, Cout), jnp.float32),
                   jax.ShapeDtypeStruct((N, 1, Cout), jnp.float32)),
        grid=(N,),
        in_specs=in_specs,
        out_specs=(pl.BlockSpec((1, H, W, Cout), lambda n: (n, 0, 0, 0)),
                   pl.BlockSpec((1, 1, Cout), lambda n: (n, 0, 0)),
                   pl.BlockSpec((1, 1, Cout), lambda n: (n, 0, 0))),
        scratch_shapes=[pltpu.VMEM((H + 2, W + 2, Cin), jnp.float32)],
        compiler_params=pltpu.CompilerParams(
            dimension_semantics=("parallel",),
            vmem_limit_bytes=_vmem_limit_bytes(blk_bytes, scratch_bytes)),
    )(*args)

    cnt = float(N * H * W)
    ssum = jnp.sum(s, axis=0)[0]                              # (Cout,)
    ssq = jnp.sum(sq, axis=0)[0]
    mean = ssum / cnt
    # Biased variance (PyTorch training-mode BN); clamp guards tiny negatives.
    var = jnp.maximum(ssq / cnt - mean * mean, 0.0)
    return y, mean, var


# ---------------------------------------------------------------------------
# Kernel 2: final per-channel affine (folded BN) + LeakyReLU, lane-dense.
# ---------------------------------------------------------------------------
def _affine_lrelu_kernel(x_ref, scale_ref, shift_ref, o_ref):
    y = x_ref[...].astype(jnp.float32) * scale_ref[...] + shift_ref[...]
    o_ref[...] = jnp.where(y > 0, y, LRELU_SLOPE * y).astype(o_ref.dtype)


def affine_lrelu_lane_dense(y, scale, shift):
    # Operate on a lane-dense (N, H, W*C) view of y (free reshape in HBM) so
    # loads/stores use full 128-lane vregs.  H is tiled so each block stays a
    # few MiB at production sizes.
    # TODO(synk): at production C >= 128 keep C on lanes and broadcast a
    # (1, 1, C) vector in-kernel instead of host-side jnp.tile across W; and
    # ideally fuse this pass into the consumer of DoubleConv's output.
    N, H, W, C = y.shape
    WC = W * C
    yd = y.reshape(N, H, WC)
    scale_t = jnp.tile(scale.astype(jnp.float32), W).reshape(1, WC)
    shift_t = jnp.tile(shift.astype(jnp.float32), W).reshape(1, WC)

    th = min(H, 512)
    if H % th:
        th = H
    blk_bytes = th * WC * (yd.dtype.itemsize + 4)

    out = pl.pallas_call(
        _affine_lrelu_kernel,
        out_shape=jax.ShapeDtypeStruct((N, H, WC), jnp.float32),
        grid=(N, H // th),
        in_specs=[pl.BlockSpec((1, th, WC), lambda n, h: (n, h, 0)),
                  pl.BlockSpec((1, WC), lambda n, h: (0, 0)),
                  pl.BlockSpec((1, WC), lambda n, h: (0, 0))],
        out_specs=pl.BlockSpec((1, th, WC), lambda n, h: (n, h, 0)),
        compiler_params=pltpu.CompilerParams(
            dimension_semantics=("parallel", "parallel"),
            vmem_limit_bytes=_vmem_limit_bytes(blk_bytes)),
    )(yd, scale_t, shift_t)
    return out.reshape(N, H, W, C)


# ---------------------------------------------------------------------------
# DoubleConv forward (NCHW in / NCHW out, like the PyTorch module)
# ---------------------------------------------------------------------------
@functools.partial(jax.jit, static_argnames=("compute_dtype",))
def double_conv_forward(x_nchw, params, compute_dtype=jnp.bfloat16):
    cdt = np.dtype(compute_dtype)   # MXU operand + inter-stage activation dtype
    x = jnp.transpose(x_nchw, (0, 2, 3, 1))                   # NCHW -> NHWC

    # stage 1: conv1 + BN1 batch stats (conv bias dropped: BN cancels it)
    y1, m1, v1 = conv_bn_stage(x, params["w1"],
                               compute_dtype=cdt, act_dtype=cdt)
    scale1 = params["g1"] / jnp.sqrt(v1 + BN_EPS)
    shift1 = params["be1"] - m1 * scale1

    # stage 2: BN1-affine + LeakyReLU fused into conv2's input path, + BN2 stats
    y2, m2, v2 = conv_bn_stage(y1, params["w2"], scale1, shift1,
                               compute_dtype=cdt, act_dtype=cdt)
    scale2 = params["g2"] / jnp.sqrt(v2 + BN_EPS)
    shift2 = params["be2"] - m2 * scale2

    # final BN2-affine + LeakyReLU (lane-dense elementwise pass), f32 output
    out = affine_lrelu_lane_dense(y2, scale2, shift2)
    return jnp.transpose(out, (0, 3, 1, 2))                   # NHWC -> NCHW
    # TODO(synk): PyTorch training-mode BN also updates running_mean/var
    # buffers as a side effect; that state update is not modeled here.


# ---------------------------------------------------------------------------
# Pure-JAX f32 reference (for correctness check) — includes the conv biases.
# ---------------------------------------------------------------------------
def reference_forward(x_nchw, params_hwio):
    x = jnp.transpose(x_nchw, (0, 2, 3, 1))

    def stage(h, w_hwio, b, gamma, beta):
        y = jax.lax.conv_general_dilated(
            h, w_hwio, window_strides=(1, 1), padding="SAME",
            dimension_numbers=("NHWC", "HWIO", "NHWC")) + b
        mean = y.mean(axis=(0, 1, 2))
        var = y.var(axis=(0, 1, 2))
        yn = (y - mean) / jnp.sqrt(var + BN_EPS) * gamma + beta
        return jnp.where(yn > 0, yn, LRELU_SLOPE * yn)

    h = stage(x, params_hwio["w1"], params_hwio["b1"],
              params_hwio["g1"], params_hwio["be1"])
    h = stage(h, params_hwio["w2"], params_hwio["b2"],
              params_hwio["g2"], params_hwio["be2"])
    return jnp.transpose(h, (0, 3, 1, 2))


if __name__ == "__main__":
    # Small shapes: batch=2, in_channels=4, mid=out=8, spatial=16x16.
    N, Cin, H, W = 2, 4, 16, 16
    Cmid, Cout = 8, 8

    key = jax.random.PRNGKey(0)
    ks = jax.random.split(key, 9)

    # PyTorch Conv2d weight layout OIHW -> HWIO -> (9, Cin, Cout) per-tap.
    w1_oihw = jax.random.normal(ks[0], (Cmid, Cin, 3, 3), jnp.float32) * 0.1
    b1 = jax.random.normal(ks[1], (Cmid,), jnp.float32) * 0.05
    g1 = 1.0 + 0.1 * jax.random.normal(ks[2], (Cmid,), jnp.float32)
    be1 = 0.05 * jax.random.normal(ks[3], (Cmid,), jnp.float32)

    w2_oihw = jax.random.normal(ks[4], (Cout, Cmid, 3, 3), jnp.float32) * 0.1
    b2 = jax.random.normal(ks[5], (Cout,), jnp.float32) * 0.05
    g2 = 1.0 + 0.1 * jax.random.normal(ks[6], (Cout,), jnp.float32)
    be2 = 0.05 * jax.random.normal(ks[7], (Cout,), jnp.float32)

    w1_hwio = jnp.transpose(w1_oihw, (2, 3, 1, 0))            # (3,3,Cin,Cmid)
    w2_hwio = jnp.transpose(w2_oihw, (2, 3, 1, 0))            # (3,3,Cmid,Cout)

    params = {
        "w1": w1_hwio.reshape(9, Cin, Cmid), "g1": g1, "be1": be1,
        "w2": w2_hwio.reshape(9, Cmid, Cout), "g2": g2, "be2": be2,
    }
    # Conv biases only feed the reference: training-mode BN cancels them.
    params_ref = {
        "w1": w1_hwio, "b1": b1, "g1": g1, "be1": be1,
        "w2": w2_hwio, "b2": b2, "g2": g2, "be2": be2,
    }

    x = jax.random.normal(ks[8], (N, Cin, H, W), jnp.float32)

    ref = jax.block_until_ready(reference_forward(x, params_ref))

    # f32 compute path: tight tolerance against the f32 reference.
    out_f32 = jax.block_until_ready(
        double_conv_forward(x, params, compute_dtype=jnp.float32))
    assert out_f32.shape == (N, Cout, H, W), out_f32.shape
    err32 = float(jnp.max(jnp.abs(out_f32 - ref)))
    assert jnp.allclose(out_f32, ref, rtol=5e-4, atol=5e-4), \
        f"f32 max abs err {err32}"

    # bf16 MXU path (production configuration): looser tolerance.
    out_bf16 = jax.block_until_ready(
        double_conv_forward(x, params, compute_dtype=jnp.bfloat16))
    assert out_bf16.shape == (N, Cout, H, W), out_bf16.shape
    errbf = float(jnp.max(jnp.abs(out_bf16 - ref)))
    assert jnp.allclose(out_bf16, ref, rtol=5e-2, atol=1e-1), \
        f"bf16 max abs err {errbf}"

    print("KERNEL_OK")
</pallas_src>

<mosaic_0001>
module attributes {stable_mosaic.version = 11 : i64} {
  func.func @_conv_bn_stats_kernel(%arg0: i32, %arg1: memref<1x16x16x4xf32, #tpu.memory_space<vmem>>, %arg2: memref<9x4x8xf32, #tpu.memory_space<vmem>>, %arg3: memref<1x16x16x8xf32, #tpu.memory_space<vmem>>, %arg4: memref<1x1x8xf32, #tpu.memory_space<vmem>>, %arg5: memref<1x1x8xf32, #tpu.memory_space<vmem>>, %arg6: memref<18x18x4xf32, #tpu.memory_space<vmem>>) attributes {dimension_semantics = [#tpu.dimension_semantics<parallel>], iteration_bounds = array<i64: 2>, scalar_prefetch = 0 : i64, scratch_operands = 1 : i64, tpu.core_type = #tpu.core_type<tc>, window_params = [{transform_indices = @transform_0, window_bounds = array<i64: 1, 16, 16, 4>}, {pipeline_mode = #tpu.pipeline_mode<synchronous>, transform_indices = @transform_1, window_bounds = array<i64: 9, 4, 8>}, {transform_indices = @transform_2, window_bounds = array<i64: 1, 16, 16, 8>}, {transform_indices = @transform_3, window_bounds = array<i64: 1, 1, 8>}, {transform_indices = @transform_4, window_bounds = array<i64: 1, 1, 8>}]} {
    %cst = arith.constant 0.000000e+00 : f32
    %0 = vector.broadcast %cst : f32 to vector<1x18x4xf32>
    %c0 = arith.constant 0 : index
    %c0_0 = arith.constant 0 : index
    %c0_1 = arith.constant 0 : index
    %1 = vector.load %arg6[%c0, %c0_0, %c0_1] : memref<18x18x4xf32, #tpu.memory_space<vmem>>, vector<1x18x4xf32>
    tpu.vector_store %arg6[%c0, %c0_0, %c0_1], %0 {strides = array<i32>} : memref<18x18x4xf32, #tpu.memory_space<vmem>>, vector<1x18x4xf32>,
    %cst_2 = arith.constant 0.000000e+00 : f32
    %2 = vector.broadcast %cst_2 : f32 to vector<1x18x4xf32>
    %c17 = arith.constant 17 : index
    %c0_3 = arith.constant 0 : index
    %c0_4 = arith.constant 0 : index
    %3 = vector.load %arg6[%c17, %c0_3, %c0_4] : memref<18x18x4xf32, #tpu.memory_space<vmem>>, vector<1x18x4xf32>
    tpu.vector_store %arg6[%c17, %c0_3, %c0_4], %2 {strides = array<i32>} : memref<18x18x4xf32, #tpu.memory_space<vmem>>, vector<1x18x4xf32>,
    %cst_5 = arith.constant 0.000000e+00 : f32
    %4 = vector.broadcast %cst_5 : f32 to vector<18x1x4xf32>
    %c0_6 = arith.constant 0 : index
    %c0_7 = arith.constant 0 : index
    %c0_8 = arith.constant 0 : index
    %5 = vector.load %arg6[%c0_6, %c0_7, %c0_8] : memref<18x18x4xf32, #tpu.memory_space<vmem>>, vector<18x1x4xf32>
    tpu.vector_store %arg6[%c0_6, %c0_7, %c0_8], %4 {strides = array<i32>} : memref<18x18x4xf32, #tpu.memory_space<vmem>>, vector<18x1x4xf32>,
    %cst_9 = arith.constant 0.000000e+00 : f32
    %6 = vector.broadcast %cst_9 : f32 to vector<18x1x4xf32>
    %c0_10 = arith.constant 0 : index
    %c17_11 = arith.constant 17 : index
    %c0_12 = arith.constant 0 : index
    %7 = vector.load %arg6[%c0_10, %c17_11, %c0_12] : memref<18x18x4xf32, #tpu.memory_space<vmem>>, vector<18x1x4xf32>
    tpu.vector_store %arg6[%c0_10, %c17_11, %c0_12], %6 {strides = array<i32>} : memref<18x18x4xf32, #tpu.memory_space<vmem>>, vector<18x1x4xf32>,
    %c0_13 = arith.constant 0 : index
    %c0_14 = arith.constant 0 : index
    %c0_15 = arith.constant 0 : index
    %c0_16 = arith.constant 0 : index
    %8 = vector.load %arg1[%c0_13, %c0_14, %c0_15, %c0_16] : memref<1x16x16x4xf32, #tpu.memory_space<vmem>>, vector<1x16x16x4xf32>
    %9 = vector.shape_cast %8 : vector<1x16x16x4xf32> to vector<16x16x4xf32>
    %c1 = arith.constant 1 : index
    %c1_17 = arith.constant 1 : index
    %c0_18 = arith.constant 0 : index
    %10 = vector.load %arg6[%c1, %c1_17, %c0_18] : memref<18x18x4xf32, #tpu.memory_space<vmem>>, vector<16x16x4xf32>
    tpu.vector_store %arg6[%c1, %c1_17, %c0_18], %9 {strides = array<i32>} : memref<18x18x4xf32, #tpu.memory_space<vmem>>, vector<16x16x4xf32>,
    %c0_19 = arith.constant 0 : index
    %c0_20 = arith.constant 0 : index
    %c0_21 = arith.constant 0 : index
    %11 = vector.load %arg6[%c0_19, %c0_20, %c0_21] : memref<18x18x4xf32, #tpu.memory_space<vmem>>, vector<16x18x4xf32>
    %12 = vector.extract_strided_slice %11 {offsets = [0, 0, 0], sizes = [16, 16, 4], strides = [1, 1, 1]} : vector<16x18x4xf32> to vector<16x16x4xf32>
    %13 = vector.shape_cast %12 : vector<16x16x4xf32> to vector<256x4xf32>
    %c0_22 = arith.constant 0 : index
    %c0_23 = arith.constant 0 : index
    %c0_24 = arith.constant 0 : index
    %14 = vector.load %arg2[%c0_22, %c0_23, %c0_24] : memref<9x4x8xf32, #tpu.memory_space<vmem>>, vector<1x4x8xf32>
    %15 = vector.shape_cast %14 : vector<1x4x8xf32> to vector<4x8xf32>
    %cst_25 = arith.constant dense<0.000000e+00> : vector<256x8xf32>
    %16 = tpu.matmul %13, %15, %cst_25 {dimension_numbers = #tpu.dot_dimension_numbers<[1], [0], [0], [1], [0, 0, 1, 1], [], []>} : vector<256x4xf32>, vector<4x8xf32>, vector<256x8xf32> -> vector<256x8xf32>
    %17 = vector.extract_strided_slice %11 {offsets = [0, 1, 0], sizes = [16, 16, 4], strides = [1, 1, 1]} : vector<16x18x4xf32> to vector<16x16x4xf32>
    %18 = vector.shape_cast %17 : vector<16x16x4xf32> to vector<256x4xf32>
    %c1_26 = arith.constant 1 : index
    %c0_27 = arith.constant 0 : index
    %c0_28 = arith.constant 0 : index
    %19 = vector.load %arg2[%c1_26, %c0_27, %c0_28] : memref<9x4x8xf32, #tpu.memory_space<vmem>>, vector<1x4x8xf32>
    %20 = vector.shape_cast %19 : vector<1x4x8xf32> to vector<4x8xf32>
    %cst_29 = arith.constant dense<0.000000e+00> : vector<256x8xf32>
    %21 = tpu.matmul %18, %20, %cst_29 {dimension_numbers = #tpu.dot_dimension_numbers<[1], [0], [0], [1], [0, 0, 1, 1], [], []>} : vector<256x4xf32>, vector<4x8xf32>, vector<256x8xf32> -> vector<256x8xf32>
    %22 = arith.addf %16, %21 : vector<256x8xf32>
    %23 = vector.extract_strided_slice %11 {offsets = [0, 2, 0], sizes = [16, 16, 4], strides = [1, 1, 1]} : vector<16x18x4xf32> to vector<16x16x4xf32>
    %24 = vector.shape_cast %23 : vector<16x16x4xf32> to vector<256x4xf32>
    %c2 = arith.constant 2 : index
    %c0_30 = arith.constant 0 : index
    %c0_31 = arith.constant 0 : index
    %25 = vector.load %arg2[%c2, %c0_30, %c0_31] : memref<9x4x8xf32, #tpu.memory_space<vmem>>, vector<1x4x8xf32>
    %26 = vector.shape_cast %25 : vector<1x4x8xf32> to vector<4x8xf32>
    %cst_32 = arith.constant dense<0.000000e+00> : vector<256x8xf32>
    %27 = tpu.matmul %24, %26, %cst_32 {dimension_numbers = #tpu.dot_dimension_numbers<[1], [0], [0], [1], [0, 0, 1, 1], [], []>} : vector<256x4xf32>, vector<4x8xf32>, vector<256x8xf32> -> vector<256x8xf32>
    %28 = arith.addf %22, %27 : vector<256x8xf32>
    %c1_33 = arith.constant 1 : index
    %c0_34 = arith.constant 0 : index
    %c0_35 = arith.constant 0 : index
    %29 = vector.load %arg6[%c1_33, %c0_34, %c0_35] : memref<18x18x4xf32, #tpu.memory_space<vmem>>, vector<16x18x4xf32>
    %30 = vector.extract_strided_slice %29 {offsets = [0, 0, 0], sizes = [16, 16, 4], strides = [1, 1, 1]} : vector<16x18x4xf32> to vector<16x16x4xf32>
    %31 = vector.shape_cast %30 : vector<16x16x4xf32> to vector<256x4xf32>
    %c3 = arith.constant 3 : index
    %c0_36 = arith.constant 0 : index
    %c0_37 = arith.constant 0 : index
    %32 = vector.load %arg2[%c3, %c0_36, %c0_37] : memref<9x4x8xf32, #tpu.memory_space<vmem>>, vector<1x4x8xf32>
    %33 = vector.shape_cast %32 : vector<1x4x8xf32> to vector<4x8xf32>
    %cst_38 = arith.constant dense<0.000000e+00> : vector<256x8xf32>
    %34 = tpu.matmul %31, %33, %cst_38 {dimension_numbers = #tpu.dot_dimension_numbers<[1], [0], [0], [1], [0, 0, 1, 1], [], []>} : vector<256x4xf32>, vector<4x8xf32>, vector<256x8xf32> -> vector<256x8xf32>
    %35 = arith.addf %28, %34 : vector<256x8xf32>
    %36 = vector.extract_strided_slice %29 {offsets = [0, 1, 0], sizes = [16, 16, 4], strides = [1, 1, 1]} : vector<16x18x4xf32> to vector<16x16x4xf32>
    %37 = vector.shape_cast %36 : vector<16x16x4xf32> to vector<256x4xf32>
    %c4 = arith.constant 4 : index
    %c0_39 = arith.constant 0 : index
    %c0_40 = arith.constant 0 : index
    %38 = vector.load %arg2[%c4, %c0_39, %c0_40] : memref<9x4x8xf32, #tpu.memory_space<vmem>>, vector<1x4x8xf32>
    %39 = vector.shape_cast %38 : vector<1x4x8xf32> to vector<4x8xf32>
    %cst_41 = arith.constant dense<0.000000e+00> : vector<256x8xf32>
    %40 = tpu.matmul %37, %39, %cst_41 {dimension_numbers = #tpu.dot_dimension_numbers<[1], [0], [0], [1], [0, 0, 1, 1], [], []>} : vector<256x4xf32>, vector<4x8xf32>, vector<256x8xf32> -> vector<256x8xf32>
    %41 = arith.addf %35, %40 : vector<256x8xf32>
    %42 = vector.extract_strided_slice %29 {offsets = [0, 2, 0], sizes = [16, 16, 4], strides = [1, 1, 1]} : vector<16x18x4xf32> to vector<16x16x4xf32>
    %43 = vector.shape_cast %42 : vector<16x16x4xf32> to vector<256x4xf32>
    %c5 = arith.constant 5 : index
    %c0_42 = arith.constant 0 : index
    %c0_43 = arith.constant 0 : index
    %44 = vector.load %arg2[%c5, %c0_42, %c0_43] : memref<9x4x8xf32, #tpu.memory_space<vmem>>, vector<1x4x8xf32>
    %45 = vector.shape_cast %44 : vector<1x4x8xf32> to vector<4x8xf32>
    %cst_44 = arith.constant dense<0.000000e+00> : vector<256x8xf32>
    %46 = tpu.matmul %43, %45, %cst_44 {dimension_numbers = #tpu.dot_dimension_numbers<[1], [0], [0], [1], [0, 0, 1, 1], [], []>} : vector<256x4xf32>, vector<4x8xf32>, vector<256x8xf32> -> vector<256x8xf32>
    %47 = arith.addf %41, %46 : vector<256x8xf32>
    %c2_45 = arith.constant 2 : index
    %c0_46 = arith.constant 0 : index
    %c0_47 = arith.constant 0 : index
    %48 = vector.load %arg6[%c2_45, %c0_46, %c0_47] : memref<18x18x4xf32, #tpu.memory_space<vmem>>, vector<16x18x4xf32>
    %49 = vector.extract_strided_slice %48 {offsets = [0, 0, 0], sizes = [16, 16, 4], strides = [1, 1, 1]} : vector<16x18x4xf32> to vector<16x16x4xf32>
    %50 = vector.shape_cast %49 : vector<16x16x4xf32> to vector<256x4xf32>
    %c6 = arith.constant 6 : index
    %c0_48 = arith.constant 0 : index
    %c0_49 = arith.constant 0 : index
    %51 = vector.load %arg2[%c6, %c0_48, %c0_49] : memref<9x4x8xf32, #tpu.memory_space<vmem>>, vector<1x4x8xf32>
    %52 = vector.shape_cast %51 : vector<1x4x8xf32> to vector<4x8xf32>
    %cst_50 = arith.constant dense<0.000000e+00> : vector<256x8xf32>
    %53 = tpu.matmul %50, %52, %cst_50 {dimension_numbers = #tpu.dot_dimension_numbers<[1], [0], [0], [1], [0, 0, 1, 1], [], []>} : vector<256x4xf32>, vector<4x8xf32>, vector<256x8xf32> -> vector<256x8xf32>
    %54 = arith.addf %47, %53 : vector<256x8xf32>
    %55 = vector.extract_strided_slice %48 {offsets = [0, 1, 0], sizes = [16, 16, 4], strides = [1, 1, 1]} : vector<16x18x4xf32> to vector<16x16x4xf32>
    %56 = vector.shape_cast %55 : vector<16x16x4xf32> to vector<256x4xf32>
    %c7 = arith.constant 7 : index
    %c0_51 = arith.constant 0 : index
    %c0_52 = arith.constant 0 : index
    %57 = vector.load %arg2[%c7, %c0_51, %c0_52] : memref<9x4x8xf32, #tpu.memory_space<vmem>>, vector<1x4x8xf32>
    %58 = vector.shape_cast %57 : vector<1x4x8xf32> to vector<4x8xf32>
    %cst_53 = arith.constant dense<0.000000e+00> : vector<256x8xf32>
    %59 = tpu.matmul %56, %58, %cst_53 {dimension_numbers = #tpu.dot_dimension_numbers<[1], [0], [0], [1], [0, 0, 1, 1], [], []>} : vector<256x4xf32>, vector<4x8xf32>, vector<256x8xf32> -> vector<256x8xf32>
    %60 = arith.addf %54, %59 : vector<256x8xf32>
    %61 = vector.extract_strided_slice %48 {offsets = [0, 2, 0], sizes = [16, 16, 4], strides = [1, 1, 1]} : vector<16x18x4xf32> to vector<16x16x4xf32>
    %62 = vector.shape_cast %61 : vector<16x16x4xf32> to vector<256x4xf32>
    %c8 = arith.constant 8 : index
    %c0_54 = arith.constant 0 : index
    %c0_55 = arith.constant 0 : index
    %63 = vector.load %arg2[%c8, %c0_54, %c0_55] : memref<9x4x8xf32, #tpu.memory_space<vmem>>, vector<1x4x8xf32>
    %64 = vector.shape_cast %63 : vector<1x4x8xf32> to vector<4x8xf32>
    %cst_56 = arith.constant dense<0.000000e+00> : vector<256x8xf32>
    %65 = tpu.matmul %62, %64, %cst_56 {dimension_numbers = #tpu.dot_dimension_numbers<[1], [0], [0], [1], [0, 0, 1, 1], [], []>} : vector<256x4xf32>, vector<4x8xf32>, vector<256x8xf32> -> vector<256x8xf32>
    %66 = arith.addf %60, %65 : vector<256x8xf32>
    %cst_57 = arith.constant dense<0.000000e+00> : vector<8xf32>
    %67 = vector.multi_reduction <add>, %66, %cst_57 [0] : vector<256x8xf32> to vector<8xf32>
    %68 = vector.shape_cast %67 : vector<8xf32> to vector<1x8xf32>
    %69 = vector.shape_cast %68 : vector<1x8xf32> to vector<1x1x8xf32>
    %c0_58 = arith.constant 0 : index
    %c0_59 = arith.constant 0 : index
    %c0_60 = arith.constant 0 : index
    %70 = vector.load %arg4[%c0_58, %c0_59, %c0_60] : memref<1x1x8xf32, #tpu.memory_space<vmem>>, vector<1x1x8xf32>
    tpu.vector_store %arg4[%c0_58, %c0_59, %c0_60], %69 {strides = array<i32>} : memref<1x1x8xf32, #tpu.memory_space<vmem>>, vector<1x1x8xf32>,
    %71 = arith.mulf %66, %66 : vector<256x8xf32>
    %cst_61 = arith.constant dense<0.000000e+00> : vector<8xf32>
    %72 = vector.multi_reduction <add>, %71, %cst_61 [0] : vector<256x8xf32> to vector<8xf32>
    %73 = vector.shape_cast %72 : vector<8xf32> to vector<1x8xf32>
    %74 = vector.shape_cast %73 : vector<1x8xf32> to vector<1x1x8xf32>
    %c0_62 = arith.constant 0 : index
    %c0_63 = arith.constant 0 : index
    %c0_64 = arith.constant 0 : index
    %75 = vector.load %arg5[%c0_62, %c0_63, %c0_64] : memref<1x1x8xf32, #tpu.memory_space<vmem>>, vector<1x1x8xf32>
    tpu.vector_store %arg5[%c0_62, %c0_63, %c0_64], %74 {strides = array<i32>} : memref<1x1x8xf32, #tpu.memory_space<vmem>>, vector<1x1x8xf32>,
    %76 = vector.shape_cast %66 : vector<256x8xf32> to vector<1x16x16x8xf32>
    %c0_65 = arith.constant 0 : index
    %c0_66 = arith.constant 0 : index
    %c0_67 = arith.constant 0 : index
    %c0_68 = arith.constant 0 : index
    %77 = vector.load %arg3[%c0_65, %c0_66, %c0_67, %c0_68] : memref<1x16x16x8xf32, #tpu.memory_space<vmem>>, vector<1x16x16x8xf32>
    tpu.vector_store %arg3[%c0_65, %c0_66, %c0_67, %c0_68], %76 {strides = array<i32>} : memref<1x16x16x8xf32, #tpu.memory_space<vmem>>, vector<1x16x16x8xf32>,
    return
  }
  func.func @transform_0(%arg0: i32) -> (i32, i32, i32, i32) {
    %c0_i32 = arith.constant 0 : i32
    %c0_i32_0 = arith.constant 0 : i32
    %c0_i32_1 = arith.constant 0 : i32
    %c0_i32_2 = arith.constant 0 : i32
    return %arg0, %c0_i32, %c0_i32_0, %c0_i32_1 : i32, i32, i32, i32
  }
  func.func @transform_1(%arg0: i32) -> (i32, i32, i32) {
    %c0_i32 = arith.constant 0 : i32
    %c0_i32_0 = arith.constant 0 : i32
    %c0_i32_1 = arith.constant 0 : i32
    %c0_i32_2 = arith.constant 0 : i32
    return %c0_i32, %c0_i32_0, %c0_i32_1 : i32, i32, i32
  }
  func.func @transform_2(%arg0: i32) -> (i32, i32, i32, i32) {
    %c0_i32 = arith.constant 0 : i32
    %c0_i32_0 = arith.constant 0 : i32
    %c0_i32_1 = arith.constant 0 : i32
    %c0_i32_2 = arith.constant 0 : i32
    return %arg0, %c0_i32, %c0_i32_0, %c0_i32_1 : i32, i32, i32, i32
  }
  func.func @transform_3(%arg0: i32) -> (i32, i32, i32) {
    %c0_i32 = arith.constant 0 : i32
    %c0_i32_0 = arith.constant 0 : i32
    %c0_i32_1 = arith.constant 0 : i32
    return %arg0, %c0_i32, %c0_i32_0 : i32, i32, i32
  }
  func.func @transform_4(%arg0: i32) -> (i32, i32, i32) {
    %c0_i32 = arith.constant 0 : i32
    %c0_i32_0 = arith.constant 0 : i32
    %c0_i32_1 = arith.constant 0 : i32
    return %arg0, %c0_i32, %c0_i32_0 : i32, i32, i32
  }
}

module attributes {stable_mosaic.version = 11 : i64} {
  func.func @_conv_bn_stats_kernel(%arg0: i32, %arg1: memref<1x16x16x8xf32, #tpu.memory_space<vmem>>, %arg2: memref<1x8xf32, #tpu.memory_space<vmem>>, %arg3: memref<1x8xf32, #tpu.memory_space<vmem>>, %arg4: memref<9x8x8xf32, #tpu.memory_space<vmem>>, %arg5: memref<1x16x16x8xf32, #tpu.memory_space<vmem>>, %arg6: memref<1x1x8xf32, #tpu.memory_space<vmem>>, %arg7: memref<1x1x8xf32, #tpu.memory_space<vmem>>, %arg8: memref<18x18x8xf32, #tpu.memory_space<vmem>>) attributes {dimension_semantics = [#tpu.dimension_semantics<parallel>], iteration_bounds = array<i64: 2>, scalar_prefetch = 0 : i64, scratch_operands = 1 : i64, tpu.core_type = #tpu.core_type<tc>, window_params = [{transform_indices = @transform_0, window_bounds = array<i64: 1, 16, 16, 8>}, {pipeline_mode = #tpu.pipeline_mode<synchronous>, transform_indices = @transform_1, window_bounds = array<i64: 1, 8>}, {pipeline_mode = #tpu.pipeline_mode<synchronous>, transform_indices = @transform_2, window_bounds = array<i64: 1, 8>}, {pipeline_mode = #tpu.pipeline_mode<synchronous>, transform_indices = @transform_3, window_bounds = array<i64: 9, 8, 8>}, {transform_indices = @transform_4, window_bounds = array<i64: 1, 16, 16, 8>}, {transform_indices = @transform_5, window_bounds = array<i64: 1, 1, 8>}, {transform_indices = @transform_6, window_bounds = array<i64: 1, 1, 8>}]} {
    %cst = arith.constant 0.000000e+00 : f32
    %0 = vector.broadcast %cst : f32 to vector<1x18x8xf32>
    %c0 = arith.constant 0 : index
    %c0_0 = arith.constant 0 : index
    %c0_1 = arith.constant 0 : index
    %1 = vector.load %arg8[%c0, %c0_0, %c0_1] : memref<18x18x8xf32, #tpu.memory_space<vmem>>, vector<1x18x8xf32>
    tpu.vector_store %arg8[%c0, %c0_0, %c0_1], %0 {strides = array<i32>} : memref<18x18x8xf32, #tpu.memory_space<vmem>>, vector<1x18x8xf32>,
    %cst_2 = arith.constant 0.000000e+00 : f32
    %2 = vector.broadcast %cst_2 : f32 to vector<1x18x8xf32>
    %c17 = arith.constant 17 : index
    %c0_3 = arith.constant 0 : index
    %c0_4 = arith.constant 0 : index
    %3 = vector.load %arg8[%c17, %c0_3, %c0_4] : memref<18x18x8xf32, #tpu.memory_space<vmem>>, vector<1x18x8xf32>
    tpu.vector_store %arg8[%c17, %c0_3, %c0_4], %2 {strides = array<i32>} : memref<18x18x8xf32, #tpu.memory_space<vmem>>, vector<1x18x8xf32>,
    %cst_5 = arith.constant 0.000000e+00 : f32
    %4 = vector.broadcast %cst_5 : f32 to vector<18x1x8xf32>
    %c0_6 = arith.constant 0 : index
    %c0_7 = arith.constant 0 : index
    %c0_8 = arith.constant 0 : index
    %5 = vector.load %arg8[%c0_6, %c0_7, %c0_8] : memref<18x18x8xf32, #tpu.memory_space<vmem>>, vector<18x1x8xf32>
    tpu.vector_store %arg8[%c0_6, %c0_7, %c0_8], %4 {strides = array<i32>} : memref<18x18x8xf32, #tpu.memory_space<vmem>>, vector<18x1x8xf32>,
    %cst_9 = arith.constant 0.000000e+00 : f32
    %6 = vector.broadcast %cst_9 : f32 to vector<18x1x8xf32>
    %c0_10 = arith.constant 0 : index
    %c17_11 = arith.constant 17 : index
    %c0_12 = arith.constant 0 : index
    %7 = vector.load %arg8[%c0_10, %c17_11, %c0_12] : memref<18x18x8xf32, #tpu.memory_space<vmem>>, vector<18x1x8xf32>
    tpu.vector_store %arg8[%c0_10, %c17_11, %c0_12], %6 {strides = array<i32>} : memref<18x18x8xf32, #tpu.memory_space<vmem>>, vector<18x1x8xf32>,
    %c0_13 = arith.constant 0 : index
    %c0_14 = arith.constant 0 : index
    %c0_15 = arith.constant 0 : index
    %c0_16 = arith.constant 0 : index
    %8 = vector.load %arg1[%c0_13, %c0_14, %c0_15, %c0_16] : memref<1x16x16x8xf32, #tpu.memory_space<vmem>>, vector<1x16x16x8xf32>
    %9 = vector.shape_cast %8 : vector<1x16x16x8xf32> to vector<16x16x8xf32>
    %c0_17 = arith.constant 0 : index
    %c0_18 = arith.constant 0 : index
    %10 = vector.load %arg2[%c0_17, %c0_18] : memref<1x8xf32, #tpu.memory_space<vmem>>, vector<1x8xf32>
    %11 = vector.shape_cast %10 : vector<1x8xf32> to vector<1x1x8xf32>
    %12 = vector.broadcast %11 : vector<1x1x8xf32> to vector<16x16x8xf32>
    %13 = arith.mulf %9, %12 : vector<16x16x8xf32>
    %c0_19 = arith.constant 0 : index
    %c0_20 = arith.constant 0 : index
    %14 = vector.load %arg3[%c0_19, %c0_20] : memref<1x8xf32, #tpu.memory_space<vmem>>, vector<1x8xf32>
    %15 = vector.shape_cast %14 : vector<1x8xf32> to vector<1x1x8xf32>
    %16 = vector.broadcast %15 : vector<1x1x8xf32> to vector<16x16x8xf32>
    %17 = arith.addf %13, %16 : vector<16x16x8xf32>
    %cst_21 = arith.constant 0.000000e+00 : f32
    %18 = vector.broadcast %cst_21 : f32 to vector<16x16x8xf32>
    %19 = arith.cmpf ogt, %17, %18 : vector<16x16x8xf32>
    %cst_22 = arith.constant 2.000000e-02 : f32
    %20 = vector.broadcast %cst_22 : f32 to vector<16x16x8xf32>
    %21 = arith.mulf %20, %17 : vector<16x16x8xf32>
    %22 = arith.select %19, %17, %21 : vector<16x16x8xi1>, vector<16x16x8xf32>
    %c1 = arith.constant 1 : index
    %c1_23 = arith.constant 1 : index
    %c0_24 = arith.constant 0 : index
    %23 = vector.load %arg8[%c1, %c1_23, %c0_24] : memref<18x18x8xf32, #tpu.memory_space<vmem>>, vector<16x16x8xf32>
    tpu.vector_store %arg8[%c1, %c1_23, %c0_24], %22 {strides = array<i32>} : memref<18x18x8xf32, #tpu.memory_space<vmem>>, vector<16x16x8xf32>,
    %c0_25 = arith.constant 0 : index
    %c0_26 = arith.constant 0 : index
    %c0_27 = arith.constant 0 : index
    %24 = vector.load %arg8[%c0_25, %c0_26, %c0_27] : memref<18x18x8xf32, #tpu.memory_space<vmem>>, vector<16x18x8xf32>
    %25 = vector.extract_strided_slice %24 {offsets = [0, 0, 0], sizes = [16, 16, 8], strides = [1, 1, 1]} : vector<16x18x8xf32> to vector<16x16x8xf32>
    %26 = vector.shape_cast %25 : vector<16x16x8xf32> to vector<256x8xf32>
    %c0_28 = arith.constant 0 : index
    %c0_29 = arith.constant 0 : index
    %c0_30 = arith.constant 0 : index
    %27 = vector.load %arg4[%c0_28, %c0_29, %c0_30] : memref<9x8x8xf32, #tpu.memory_space<vmem>>, vector<1x8x8xf32>
    %28 = vector.shape_cast %27 : vector<1x8x8xf32> to vector<8x8xf32>
    %cst_31 = arith.constant dense<0.000000e+00> : vector<256x8xf32>
    %29 = tpu.matmul %26, %28, %cst_31 {dimension_numbers = #tpu.dot_dimension_numbers<[1], [0], [0], [1], [0, 0, 1, 1], [], []>} : vector<256x8xf32>, vector<8x8xf32>, vector<256x8xf32> -> vector<256x8xf32>
    %30 = vector.extract_strided_slice %24 {offsets = [0, 1, 0], sizes = [16, 16, 8], strides = [1, 1, 1]} : vector<16x18x8xf32> to vector<16x16x8xf32>
    %31 = vector.shape_cast %30 : vector<16x16x8xf32> to vector<256x8xf32>
    %c1_32 = arith.constant 1 : index
    %c0_33 = arith.constant 0 : index
    %c0_34 = arith.constant 0 : index
    %32 = vector.load %arg4[%c1_32, %c0_33, %c0_34] : memref<9x8x8xf32, #tpu.memory_space<vmem>>, vector<1x8x8xf32>
    %33 = vector.shape_cast %32 : vector<1x8x8xf32> to vector<8x8xf32>
    %cst_35 = arith.constant dense<0.000000e+00> : vector<256x8xf32>
    %34 = tpu.matmul %31, %33, %cst_35 {dimension_numbers = #tpu.dot_dimension_numbers<[1], [0], [0], [1], [0, 0, 1, 1], [], []>} : vector<256x8xf32>, vector<8x8xf32>, vector<256x8xf32> -> vector<256x8xf32>
    %35 = arith.addf %29, %34 : vector<256x8xf32>
    %36 = vector.extract_strided_slice %24 {offsets = [0, 2, 0], sizes = [16, 16, 8], strides = [1, 1, 1]} : vector<16x18x8xf32> to vector<16x16x8xf32>
    %37 = vector.shape_cast %36 : vector<16x16x8xf32> to vector<256x8xf32>
    %c2 = arith.constant 2 : index
    %c0_36 = arith.constant 0 : index
    %c0_37 = arith.constant 0 : index
    %38 = vector.load %arg4[%c2, %c0_36, %c0_37] : memref<9x8x8xf32, #tpu.memory_space<vmem>>, vector<1x8x8xf32>
    %39 = vector.shape_cast %38 : vector<1x8x8xf32> to vector<8x8xf32>
    %cst_38 = arith.constant dense<0.000000e+00> : vector<256x8xf32>
    %40 = tpu.matmul %37, %39, %cst_38 {dimension_numbers = #tpu.dot_dimension_numbers<[1], [0], [0], [1], [0, 0, 1, 1], [], []>} : vector<256x8xf32>, vector<8x8xf32>, vector<256x8xf32> -> vector<256x8xf32>
    %41 = arith.addf %35, %40 : vector<256x8xf32>
    %c1_39 = arith.constant 1 : index
    %c0_40 = arith.constant 0 : index
    %c0_41 = arith.constant 0 : index
    %42 = vector.load %arg8[%c1_39, %c0_40, %c0_41] : memref<18x18x8xf32, #tpu.memory_space<vmem>>, vector<16x18x8xf32>
    %43 = vector.extract_strided_slice %42 {offsets = [0, 0, 0], sizes = [16, 16, 8], strides = [1, 1, 1]} : vector<16x18x8xf32> to vector<16x16x8xf32>
    %44 = vector.shape_cast %43 : vector<16x16x8xf32> to vector<256x8xf32>
    %c3 = arith.constant 3 : index
    %c0_42 = arith.constant 0 : index
    %c0_43 = arith.constant 0 : index
    %45 = vector.load %arg4[%c3, %c0_42, %c0_43] : memref<9x8x8xf32, #tpu.memory_space<vmem>>, vector<1x8x8xf32>
    %46 = vector.shape_cast %45 : vector<1x8x8xf32> to vector<8x8xf32>
    %cst_44 = arith.constant dense<0.000000e+00> : vector<256x8xf32>
    %47 = tpu.matmul %44, %46, %cst_44 {dimension_numbers = #tpu.dot_dimension_numbers<[1], [0], [0], [1], [0, 0, 1, 1], [], []>} : vector<256x8xf32>, vector<8x8xf32>, vector<256x8xf32> -> vector<256x8xf32>
    %48 = arith.addf %41, %47 : vector<256x8xf32>
    %49 = vector.extract_strided_slice %42 {offsets = [0, 1, 0], sizes = [16, 16, 8], strides = [1, 1, 1]} : vector<16x18x8xf32> to vector<16x16x8xf32>
    %50 = vector.shape_cast %49 : vector<16x16x8xf32> to vector<256x8xf32>
    %c4 = arith.constant 4 : index
    %c0_45 = arith.constant 0 : index
    %c0_46 = arith.constant 0 : index
    %51 = vector.load %arg4[%c4, %c0_45, %c0_46] : memref<9x8x8xf32, #tpu.memory_space<vmem>>, vector<1x8x8xf32>
    %52 = vector.shape_cast %51 : vector<1x8x8xf32> to vector<8x8xf32>
    %cst_47 = arith.constant dense<0.000000e+00> : vector<256x8xf32>
    %53 = tpu.matmul %50, %52, %cst_47 {dimension_numbers = #tpu.dot_dimension_numbers<[1], [0], [0], [1], [0, 0, 1, 1], [], []>} : vector<256x8xf32>, vector<8x8xf32>, vector<256x8xf32> -> vector<256x8xf32>
    %54 = arith.addf %48, %53 : vector<256x8xf32>
    %55 = vector.extract_strided_slice %42 {offsets = [0, 2, 0], sizes = [16, 16, 8], strides = [1, 1, 1]} : vector<16x18x8xf32> to vector<16x16x8xf32>
    %56 = vector.shape_cast %55 : vector<16x16x8xf32> to vector<256x8xf32>
    %c5 = arith.constant 5 : index
    %c0_48 = arith.constant 0 : index
    %c0_49 = arith.constant 0 : index
    %57 = vector.load %arg4[%c5, %c0_48, %c0_49] : memref<9x8x8xf32, #tpu.memory_space<vmem>>, vector<1x8x8xf32>
    %58 = vector.shape_cast %57 : vector<1x8x8xf32> to vector<8x8xf32>
    %cst_50 = arith.constant dense<0.000000e+00> : vector<256x8xf32>
    %59 = tpu.matmul %56, %58, %cst_50 {dimension_numbers = #tpu.dot_dimension_numbers<[1], [0], [0], [1], [0, 0, 1, 1], [], []>} : vector<256x8xf32>, vector<8x8xf32>, vector<256x8xf32> -> vector<256x8xf32>
    %60 = arith.addf %54, %59 : vector<256x8xf32>
    %c2_51 = arith.constant 2 : index
    %c0_52 = arith.constant 0 : index
    %c0_53 = arith.constant 0 : index
    %61 = vector.load %arg8[%c2_51, %c0_52, %c0_53] : memref<18x18x8xf32, #tpu.memory_space<vmem>>, vector<16x18x8xf32>
    %62 = vector.extract_strided_slice %61 {offsets = [0, 0, 0], sizes = [16, 16, 8], strides = [1, 1, 1]} : vector<16x18x8xf32> to vector<16x16x8xf32>
    %63 = vector.shape_cast %62 : vector<16x16x8xf32> to vector<256x8xf32>
    %c6 = arith.constant 6 : index
    %c0_54 = arith.constant 0 : index
    %c0_55 = arith.constant 0 : index
    %64 = vector.load %arg4[%c6, %c0_54, %c0_55] : memref<9x8x8xf32, #tpu.memory_space<vmem>>, vector<1x8x8xf32>
    %65 = vector.shape_cast %64 : vector<1x8x8xf32> to vector<8x8xf32>
    %cst_56 = arith.constant dense<0.000000e+00> : vector<256x8xf32>
    %66 = tpu.matmul %63, %65, %cst_56 {dimension_numbers = #tpu.dot_dimension_numbers<[1], [0], [0], [1], [0, 0, 1, 1], [], []>} : vector<256x8xf32>, vector<8x8xf32>, vector<256x8xf32> -> vector<256x8xf32>
    %67 = arith.addf %60, %66 : vector<256x8xf32>
    %68 = vector.extract_strided_slice %61 {offsets = [0, 1, 0], sizes = [16, 16, 8], strides = [1, 1, 1]} : vector<16x18x8xf32> to vector<16x16x8xf32>
    %69 = vector.shape_cast %68 : vector<16x16x8xf32> to vector<256x8xf32>
    %c7 = arith.constant 7 : index
    %c0_57 = arith.constant 0 : index
    %c0_58 = arith.constant 0 : index
    %70 = vector.load %arg4[%c7, %c0_57, %c0_58] : memref<9x8x8xf32, #tpu.memory_space<vmem>>, vector<1x8x8xf32>
    %71 = vector.shape_cast %70 : vector<1x8x8xf32> to vector<8x8xf32>
    %cst_59 = arith.constant dense<0.000000e+00> : vector<256x8xf32>
    %72 = tpu.matmul %69, %71, %cst_59 {dimension_numbers = #tpu.dot_dimension_numbers<[1], [0], [0], [1], [0, 0, 1, 1], [], []>} : vector<256x8xf32>, vector<8x8xf32>, vector<256x8xf32> -> vector<256x8xf32>
    %73 = arith.addf %67, %72 : vector<256x8xf32>
    %74 = vector.extract_strided_slice %61 {offsets = [0, 2, 0], sizes = [16, 16, 8], strides = [1, 1, 1]} : vector<16x18x8xf32> to vector<16x16x8xf32>
    %75 = vector.shape_cast %74 : vector<16x16x8xf32> to vector<256x8xf32>
    %c8 = arith.constant 8 : index
    %c0_60 = arith.constant 0 : index
    %c0_61 = arith.constant 0 : index
    %76 = vector.load %arg4[%c8, %c0_60, %c0_61] : memref<9x8x8xf32, #tpu.memory_space<vmem>>, vector<1x8x8xf32>
    %77 = vector.shape_cast %76 : vector<1x8x8xf32> to vector<8x8xf32>
    %cst_62 = arith.constant dense<0.000000e+00> : vector<256x8xf32>
    %78 = tpu.matmul %75, %77, %cst_62 {dimension_numbers = #tpu.dot_dimension_numbers<[1], [0], [0], [1], [0, 0, 1, 1], [], []>} : vector<256x8xf32>, vector<8x8xf32>, vector<256x8xf32> -> vector<256x8xf32>
    %79 = arith.addf %73, %78 : vector<256x8xf32>
    %cst_63 = arith.constant dense<0.000000e+00> : vector<8xf32>
    %80 = vector.multi_reduction <add>, %79, %cst_63 [0] : vector<256x8xf32> to vector<8xf32>
    %81 = vector.shape_cast %80 : vector<8xf32> to vector<1x8xf32>
    %82 = vector.shape_cast %81 : vector<1x8xf32> to vector<1x1x8xf32>
    %c0_64 = arith.constant 0 : index
    %c0_65 = arith.constant 0 : index
    %c0_66 = arith.constant 0 : index
    %83 = vector.load %arg6[%c0_64, %c0_65, %c0_66] : memref<1x1x8xf32, #tpu.memory_space<vmem>>, vector<1x1x8xf32>
    tpu.vector_store %arg6[%c0_64, %c0_65, %c0_66], %82 {strides = array<i32>} : memref<1x1x8xf32, #tpu.memory_space<vmem>>, vector<1x1x8xf32>,
    %84 = arith.mulf %79, %79 : vector<256x8xf32>
    %cst_67 = arith.constant dense<0.000000e+00> : vector<8xf32>
    %85 = vector.multi_reduction <add>, %84, %cst_67 [0] : vector<256x8xf32> to vector<8xf32>
    %86 = vector.shape_cast %85 : vector<8xf32> to vector<1x8xf32>
    %87 = vector.shape_cast %86 : vector<1x8xf32> to vector<1x1x8xf32>
    %c0_68 = arith.constant 0 : index
    %c0_69 = arith.constant 0 : index
    %c0_70 = arith.constant 0 : index
    %88 = vector.load %arg7[%c0_68, %c0_69, %c0_70] : memref<1x1x8xf32, #tpu.memory_space<vmem>>, vector<1x1x8xf32>
    tpu.vector_store %arg7[%c0_68, %c0_69, %c0_70], %87 {strides = array<i32>} : memref<1x1x8xf32, #tpu.memory_space<vmem>>, vector<1x1x8xf32>,
    %89 = vector.shape_cast %79 : vector<256x8xf32> to vector<1x16x16x8xf32>
    %c0_71 = arith.constant 0 : index
    %c0_72 = arith.constant 0 : index
    %c0_73 = arith.constant 0 : index
    %c0_74 = arith.constant 0 : index
    %90 = vector.load %arg5[%c0_71, %c0_72, %c0_73, %c0_74] : memref<1x16x16x8xf32, #tpu.memory_space<vmem>>, vector<1x16x16x8xf32>
    tpu.vector_store %arg5[%c0_71, %c0_72, %c0_73, %c0_74], %89 {strides = array<i32>} : memref<1x16x16x8xf32, #tpu.memory_space<vmem>>, vector<1x16x16x8xf32>,
    return
  }
  func.func @transform_0(%arg0: i32) -> (i32, i32, i32, i32) {
    %c0_i32 = arith.constant 0 : i32
    %c0_i32_0 = arith.constant 0 : i32
    %c0_i32_1 = arith.constant 0 : i32
    %c0_i32_2 = arith.constant 0 : i32
    return %arg0, %c0_i32, %c0_i32_0, %c0_i32_1 : i32, i32, i32, i32
  }
  func.func @transform_1(%arg0: i32) -> (i32, i32) {
    %c0_i32 = arith.constant 0 : i32
    %c0_i32_0 = arith.constant 0 : i32
    %c0_i32_1 = arith.constant 0 : i32
    return %c0_i32, %c0_i32_0 : i32, i32
  }
  func.func @transform_2(%arg0: i32) -> (i32, i32) {
    %c0_i32 = arith.constant 0 : i32
    %c0_i32_0 = arith.constant 0 : i32
    %c0_i32_1 = arith.constant 0 : i32
    return %c0_i32, %c0_i32_0 : i32, i32
  }
  func.func @transform_3(%arg0: i32) -> (i32, i32, i32) {
    %c0_i32 = arith.constant 0 : i32
    %c0_i32_0 = arith.constant 0 : i32
    %c0_i32_1 = arith.constant 0 : i32
    %c0_i32_2 = arith.constant 0 : i32
    return %c0_i32, %c0_i32_0, %c0_i32_1 : i32, i32, i32
  }
  func.func @transform_4(%arg0: i32) -> (i32, i32, i32, i32) {
    %c0_i32 = arith.constant 0 : i32
    %c0_i32_0 = arith.constant 0 : i32
    %c0_i32_1 = arith.constant 0 : i32
    %c0_i32_2 = arith.constant 0 : i32
    return %arg0, %c0_i32, %c0_i32_0, %c0_i32_1 : i32, i32, i32, i32
  }
  func.func @transform_5(%arg0: i32) -> (i32, i32, i32) {
    %c0_i32 = arith.constant 0 : i32
    %c0_i32_0 = arith.constant 0 : i32
    %c0_i32_1 = arith.constant 0 : i32
    return %arg0, %c0_i32, %c0_i32_0 : i32, i32, i32
  }
  func.func @transform_6(%arg0: i32) -> (i32, i32, i32) {
    %c0_i32 = arith.constant 0 : i32
    %c0_i32_0 = arith.constant 0 : i32
    %c0_i32_1 = arith.constant 0 : i32
    return %arg0, %c0_i32, %c0_i32_0 : i32, i32, i32
  }
}

module attributes {stable_mosaic.version = 11 : i64} {
  func.func @_affine_lrelu_kernel(%arg0: i32, %arg1: i32, %arg2: memref<1x16x128xf32, #tpu.memory_space<vmem>>, %arg3: memref<1x128xf32, #tpu.memory_space<vmem>>, %arg4: memref<1x128xf32, #tpu.memory_space<vmem>>, %arg5: memref<1x16x128xf32, #tpu.memory_space<vmem>>) attributes {dimension_semantics = [#tpu.dimension_semantics<parallel>, #tpu.dimension_semantics<parallel>], iteration_bounds = array<i64: 2, 1>, scalar_prefetch = 0 : i64, scratch_operands = 0 : i64, tpu.core_type = #tpu.core_type<tc>, window_params = [{transform_indices = @transform_0, window_bounds = array<i64: 1, 16, 128>}, {pipeline_mode = #tpu.pipeline_mode<synchronous>, transform_indices = @transform_1, window_bounds = array<i64: 1, 128>}, {pipeline_mode = #tpu.pipeline_mode<synchronous>, transform_indices = @transform_2, window_bounds = array<i64: 1, 128>}, {transform_indices = @transform_3, window_bounds = array<i64: 1, 16, 128>}]} {
    %c0 = arith.constant 0 : index
    %c0_0 = arith.constant 0 : index
    %c0_1 = arith.constant 0 : index
    %0 = vector.load %arg2[%c0, %c0_0, %c0_1] : memref<1x16x128xf32, #tpu.memory_space<vmem>>, vector<1x16x128xf32>
    %c0_2 = arith.constant 0 : index
    %c0_3 = arith.constant 0 : index
    %1 = vector.load %arg3[%c0_2, %c0_3] : memref<1x128xf32, #tpu.memory_space<vmem>>, vector<1x128xf32>
    %2 = vector.shape_cast %1 : vector<1x128xf32> to vector<1x1x128xf32>
    %3 = vector.broadcast %2 : vector<1x1x128xf32> to vector<1x16x128xf32>
    %4 = arith.mulf %0, %3 : vector<1x16x128xf32>
    %c0_4 = arith.constant 0 : index
    %c0_5 = arith.constant 0 : index
    %5 = vector.load %arg4[%c0_4, %c0_5] : memref<1x128xf32, #tpu.memory_space<vmem>>, vector<1x128xf32>
    %6 = vector.shape_cast %5 : vector<1x128xf32> to vector<1x1x128xf32>
    %7 = vector.broadcast %6 : vector<1x1x128xf32> to vector<1x16x128xf32>
    %8 = arith.addf %4, %7 : vector<1x16x128xf32>
    %cst = arith.constant 0.000000e+00 : f32
    %9 = vector.broadcast %cst : f32 to vector<1x16x128xf32>
    %10 = arith.cmpf ogt, %8, %9 : vector<1x16x128xf32>
    %cst_6 = arith.constant 2.000000e-02 : f32
    %11 = vector.broadcast %cst_6 : f32 to vector<1x16x128xf32>
    %12 = arith.mulf %11, %8 : vector<1x16x128xf32>
    %13 = arith.select %10, %8, %12 : vector<1x16x128xi1>, vector<1x16x128xf32>
    %c0_7 = arith.constant 0 : index
    %c0_8 = arith.constant 0 : index
    %c0_9 = arith.constant 0 : index
    %14 = vector.load %arg5[%c0_7, %c0_8, %c0_9] : memref<1x16x128xf32, #tpu.memory_space<vmem>>, vector<1x16x128xf32>
    tpu.vector_store %arg5[%c0_7, %c0_8, %c0_9], %13 {strides = array<i32>} : memref<1x16x128xf32, #tpu.memory_space<vmem>>, vector<1x16x128xf32>,
    return
  }
  func.func @transform_0(%arg0: i32, %arg1: i32) -> (i32, i32, i32) {
    %c0_i32 = arith.constant 0 : i32
    %c0_i32_0 = arith.constant 0 : i32
    return %arg0, %arg1, %c0_i32 : i32, i32, i32
  }
  func.func @transform_1(%arg0: i32, %arg1: i32) -> (i32, i32) {
    %c0_i32 = arith.constant 0 : i32
    %c0_i32_0 = arith.constant 0 : i32
    %c0_i32_1 = arith.constant 0 : i32
    return %c0_i32, %c0_i32_0 : i32, i32
  }
  func.func @transform_2(%arg0: i32, %arg1: i32) -> (i32, i32) {
    %c0_i32 = arith.constant 0 : i32
    %c0_i32_0 = arith.constant 0 : i32
    %c0_i32_1 = arith.constant 0 : i32
    return %c0_i32, %c0_i32_0 : i32, i32
  }
  func.func @transform_3(%arg0: i32, %arg1: i32) -> (i32, i32, i32) {
    %c0_i32 = arith.constant 0 : i32
    %c0_i32_0 = arith.constant 0 : i32
    return %arg0, %arg1, %c0_i32 : i32, i32, i32
  }
}

</mosaic_0001>

<llo_original>
// kernel: tile.13
$region0: #{tile.13}
  #allocation0 [shape = 's32[1]{0}', space=sflag, size = 0x4, scoped, tag = 'scoped memory for tile.13']
  %s0 = inlined_call_operand.vmem [shape: f32[8], index: 0, kind: input, shape index: {}]
  %s1 = inlined_call_operand.vmem [shape: f32[16,8], index: 1, kind: output, shape index: {}]
  // Predicated region
  $region2: #{tile.13} parent=0 // pred_check
    _
  $region3: #{tile.13} parent=0 // pred_check_branch
    %3 = sbr.rel (0) target = $region5
  $region4: #{tile.13} parent=0 // pred_region
    _
  $region5: #{tile.13} parent=0 // pred_fallthru
    _
  %v4 = vld [vmem:[%s0] ss:$0 sm:$0xff]
  %5 = vst [vmem:[%s1] sm:$0xff] %v4
  %s6 = scalar_lea.vmem %s1, 8
  %7 = vst [vmem:[%s6] sm:$0xff] %v4

// kernel: tile.14
$region0: #{tile.14}
  %s0 = inlined_call_operand.vmem [shape: f32[16,8], index: 0, kind: input, shape index: {}]
  %s1 = inlined_call_operand.vmem [shape: f32[1,128], index: 1, kind: output, shape index: {}]
  $region1: #{tile.14} parent=0
    #allocation0 [shape = 'u8[4096]{0}', space=vmem, size = 0x1000, scoped, tag = 'scoped mem for output reshape']
    %v2 = vld [vmem:[%s0] sm:$0x1]
    %vm3 = vcmask 64512
    %4 = vst.msk [vmem:[#allocation0] sm:$0x1] %vm3, %v2
    %s5 = scalar_lea.vmem %s0, 15
    %v6 = vld [vmem:[%s5] sm:$0x1]
    %7 = vrot.lane.b32.xlu0 %v6, 120
    %v8 = vpop.permute.xlu0 %7
    %vm9 = vcmask 1048512
    %10 = vst.msk [vmem:[#allocation0] sm:$0x1] %vm9, %v8
    %s11 = scalar_lea.vmem %s0, 14
    %v12 = vld [vmem:[%s11] sm:$0x1]
    %13 = vrot.lane.b32.xlu0 %v12, 112
    %v14 = vpop.permute.xlu0 %13
    %vm15 = vcmask 982912
    %16 = vst.msk [vmem:[#allocation0] sm:$0x1] %vm15, %v14
    %s17 = scalar_lea.vmem %s0, 13
    %v18 = vld [vmem:[%s17] sm:$0x1]
    %19 = vrot.lane.b32.xlu0 %v18, 104
    %v20 = vpop.permute.xlu0 %19
    %vm21 = vcmask 917312
    %22 = vst.msk [vmem:[#allocation0] sm:$0x1] %vm21, %v20
    %s23 = scalar_lea.vmem %s0, 12
    %v24 = vld [vmem:[%s23] sm:$0x1]
    %25 = vrot.lane.b32.xlu0 %v24, 96
    %v26 = vpop.permute.xlu0 %25
    %vm27 = vcmask 851712
    %28 = vst.msk [vmem:[#allocation0] sm:$0x1] %vm27, %v26
    %s29 = scalar_lea.vmem %s0, 11
    %v30 = vld [vmem:[%s29] sm:$0x1]
    %31 = vrot.lane.b32.xlu0 %v30, 88
    %v32 = vpop.permute.xlu0 %31
    %vm33 = vcmask 786112
    %34 = vst.msk [vmem:[#allocation0] sm:$0x1] %vm33, %v32
    %s35 = scalar_lea.vmem %s0, 10
    %v36 = vld [vmem:[%s35] sm:$0x1]
    %37 = vrot.lane.b32.xlu0 %v36, 80
    %v38 = vpop.permute.xlu0 %37
    %vm39 = vcmask 720512
    %40 = vst.msk [vmem:[#allocation0] sm:$0x1] %vm39, %v38
    %s41 = scalar_lea.vmem %s0, 9
    %v42 = vld [vmem:[%s41] sm:$0x1]
    %43 = vrot.lane.b32.xlu0 %v42, 72
    %v44 = vpop.permute.xlu0 %43
    %vm45 = vcmask 654912
    %46 = vst.msk [vmem:[#allocation0] sm:$0x1] %vm45, %v44
    %s47 = scalar_lea.vmem %s0, 8
    %v48 = vld [vmem:[%s47] sm:$0x1]
    %49 = vrot.lane.b32.xlu0 %v48, 64
    %v50 = vpop.permute.xlu0 %49
    %vm51 = vcmask 589312
    %52 = vst.msk [vmem:[#allocation0] sm:$0x1] %vm51, %v50
    %s53 = scalar_lea.vmem %s0, 7
    %v54 = vld [vmem:[%s53] sm:$0x1]
    %55 = vrot.lane.b32.xlu0 %v54, 56
    %v56 = vpop.permute.xlu0 %55
    %vm57 = vcmask 523712
    %58 = vst.msk [vmem:[#allocation0] sm:$0x1] %vm57, %v56
    %s59 = scalar_lea.vmem %s0, 6
    %v60 = vld [vmem:[%s59] sm:$0x1]
    %61 = vrot.lane.b32.xlu0 %v60, 48
    %v62 = vpop.permute.xlu0 %61
    %vm63 = vcmask 458112
    %64 = vst.msk [vmem:[#allocation0] sm:$0x1] %vm63, %v62
    %s65 = scalar_lea.vmem %s0, 5
    %v66 = vld [vmem:[%s65] sm:$0x1]
    %67 = vrot.lane.b32.xlu0 %v66, 40
    %v68 = vpop.permute.xlu0 %67
    %vm69 = vcmask 392512
    %70 = vst.msk [vmem:[#allocation0] sm:$0x1] %vm69, %v68
    %s71 = scalar_lea.vmem %s0, 4
    %v72 = vld [vmem:[%s71] sm:$0x1]
    %73 = vrot.lane.b32.xlu0 %v72, 32
    %v74 = vpop.permute.xlu0 %73
    %vm75 = vcmask 326912
    %76 = vst.msk [vmem:[#allocation0] sm:$0x1] %vm75, %v74
    %s77 = scalar_lea.vmem %s0, 3
    %v78 = vld [vmem:[%s77] sm:$0x1]
    %79 = vrot.lane.b32.xlu0 %v78, 24
    %v80 = vpop.permute.xlu0 %79
    %vm81 = vcmask 261312
    %82 = vst.msk [vmem:[#allocation0] sm:$0x1] %vm81, %v80
    %s83 = scalar_lea.vmem %s0, 2
    %v84 = vld [vmem:[%s83] sm:$0x1]
    %85 = vrot.lane.b32.xlu0 %v84, 16
    %v86 = vpop.permute.xlu0 %85
    %vm87 = vcmask 195712
    %88 = vst.msk [vmem:[#allocation0] sm:$0x1] %vm87, %v86
    %s89 = scalar_lea.vmem %s0, 1
    %v90 = vld [vmem:[%s89] sm:$0x1]
    %91 = vrot.lane.b32.xlu0 %v90, 8
    %v92 = vpop.permute.xlu0 %91
    %vm93 = vcmask 130112
    %94 = vst.msk [vmem:[#allocation0] sm:$0x1] %vm93, %v92
    %s96 = sshll.u32 1, 1
    %s97 = ssub.s32 %s96, 1
    %v99 = vld [vmem:[#allocation0] sm:%s97]
    %s100 = sshll.u32 1, 1
    %s101 = ssub.s32 %s100, 1
    %102 = vst [vmem:[%s1] sm:%s101] %v99

// kernel: double_conv_forward.5
$region0: #{double_conv_forward.5}
  #allocation0 [shape = 'u32[]', space=smem, size = 0x4, offset = 0x4, fixed_abs, tag = 'smem constant byte address 0x4 - core index']
  #allocation1 [shape = 'u32[144,128]{1,0:T(1,128)}', space=vmem, size = 0x12000, scoped, tag = 'internal scratch']
  %s0 = inlined_call_operand.vmem [shape: f32[2,16,128], index: 0, kind: input, shape index: {}]
  %s1 = inlined_call_operand.vmem [shape: f32[1,128], index: 1, kind: input, shape index: {}]
  %s2 = inlined_call_operand.vmem [shape: f32[1,128], index: 2, kind: input, shape index: {}]
  %s3 = inlined_call_operand.vmem [shape: f32[2,16,128], index: 3, kind: output, shape index: {}]
  %s4 = sld [smem:[#allocation0]]
  $region45: #{double_conv_forward.5} parent=0
    _
  %s6 = ssub.s32 1, %s4
  %s7 = scalar_select 0, %s6, %s4
  loop: start=0, step=1, limit=4
  $region2: #{double_conv_forward.5} parent=0 // loop_pre_header
    _
  $region3: #{double_conv_forward.5} parent=0 // loop_header
    %s9 = sphi 0, %s13
    %p10 = scmp.ge.s32.totalorder %s9, 4
    %s16 = sphi 0, %s28
    %s17 = sphi 0, %s24
    %s18 = sphi 0, %s16
    %s19 = sphi 0, %s17
    %s20 = sphi 0, %s18
    %s21 = sphi 0, %s19
    %s33 = sphi 0, %s35
    %s36 = sphi 0, %s33
    %s37 = sphi 0, %s36
    %s53 = sphi 0, %s37
    %s57 = sphi 0, %s57
    %s59 = sphi 0, %s57
    %s60 = sphi 0, %s59
    %s74 = sphi 0, %s60
    %s78 = sphi 0, %s78
    %s80 = sphi 0, %s78
    %s81 = sphi 0, %s80
    %s95 = sphi 0, %s81
    %s103 = sphi 0, %s105
    %s106 = sphi 0, %s103
    %s107 = sphi 0, %s106
    %s123 = sphi 0, %s107
  $region4: #{double_conv_forward.5} parent=0 // loop_header_branch
    %12 = sbr.rel (%p10) target = $region8
  $region5: #{double_conv_forward.5} parent=0 // loop_body
    %s14 = ssub.s32 %s9, 1
    %s15 = ssub.s32 %s9, 2
    %s22 = sadd.s32 1, %s17
    %p23 = scmp.ge.s32.totalorder %s22, 1
    %s24 = scalar_select %p23, 0, %s22
    %s25 = sadd.s32 1, %s16
    %s26 = scalar_select %p23, %s25, %s16
    %p27 = scmp.ge.s32.totalorder %s26, 2
    %s28 = scalar_select %p27, 0, %s26
    %s29 = ssub.s32 %s16, %s28
    %s30 = ssub.s32 %s17, %s24
    %s31 = sor.u32 %s29, %s30
    %p32 = scmp.eq.s32.totalorder %s31, 0
    %s34 = sadd.s32 %s33, 1
    %s35 = scalar_select %p32, %s33, %s34
    %p38 = pneg %p32
    %p39 = scmp.eq.s32.totalorder %s9, 1
    %p40 = por %p38, %p39
    %p41 = scmp.ne.s32.totalorder %s33, %s36
    %p42 = scmp.eq.s32.totalorder %s9, 0
    %p43 = por %p41, %p42
    %p44 = scmp.ne.s32.totalorder %s33, %s36
    %p45 = scmp.eq.s32.totalorder %s14, 1
    %p46 = por %p44, %p45
    %p47 = scmp.ne.s32.totalorder %s36, %s37
    %p48 = scmp.eq.s32.totalorder %s14, 0
    %p49 = por %p47, %p48
    %p50 = scmp.ne.s32.totalorder %s36, %s37
    %p51 = scmp.eq.s32.totalorder %s15, 1
    %p52 = por %p50, %p51
    %p54 = scmp.ne.s32.totalorder %s37, %s53
    %p55 = scmp.eq.s32.totalorder %s15, 0
    %p56 = por %p54, %p55
    %s58 = sadd.s32 %s57, 1
    %p61 = scmp.eq.s32.totalorder %s9, 1
    %p62 = scmp.ne.s32.totalorder %s57, %s59
    %p63 = scmp.eq.s32.totalorder %s9, 0
    %p64 = por %p62, %p63
    %p65 = scmp.ne.s32.totalorder %s57, %s59
    %p66 = scmp.eq.s32.totalorder %s14, 1
    %p67 = por %p65, %p66
    %p68 = scmp.ne.s32.totalorder %s59, %s60
    %p69 = scmp.eq.s32.totalorder %s14, 0
    %p70 = por %p68, %p69
    %p71 = scmp.ne.s32.totalorder %s59, %s60
    %p72 = scmp.eq.s32.totalorder %s15, 1
    %p73 = por %p71, %p72
    %p75 = scmp.ne.s32.totalorder %s60, %s74
    %p76 = scmp.eq.s32.totalorder %s15, 0
    %p77 = por %p75, %p76
    %s79 = sadd.s32 %s78, 1
    %p82 = scmp.eq.s32.totalorder %s9, 1
    %p83 = scmp.ne.s32.totalorder %s78, %s80
    %p84 = scmp.eq.s32.totalorder %s9, 0
    %p85 = por %p83, %p84
    %p86 = scmp.ne.s32.totalorder %s78, %s80
    %p87 = scmp.eq.s32.totalorder %s14, 1
    %p88 = por %p86, %p87
    %p89 = scmp.ne.s32.totalorder %s80, %s81
    %p90 = scmp.eq.s32.totalorder %s14, 0
    %p91 = por %p89, %p90
    %p92 = scmp.ne.s32.totalorder %s80, %s81
    %p93 = scmp.eq.s32.totalorder %s15, 1
    %p94 = por %p92, %p93
    %p96 = scmp.ne.s32.totalorder %s81, %s95
    %p97 = scmp.eq.s32.totalorder %s15, 0
    %p98 = por %p96, %p97
    %s99 = ssub.s32 %s16, %s28
    %s100 = ssub.s32 %s17, %s24
    %s101 = sor.u32 %s99, %s100
    %p102 = scmp.eq.s32.totalorder %s101, 0
    %s104 = sadd.s32 %s103, 1
    %s105 = scalar_select %p102, %s103, %s104
    %p108 = pneg %p102
    %p109 = scmp.eq.s32.totalorder %s9, 1
    %p110 = por %p108, %p109
    %p111 = scmp.ne.s32.totalorder %s103, %s106
    %p112 = scmp.eq.s32.totalorder %s9, 0
    %p113 = por %p111, %p112
    %p114 = scmp.ne.s32.totalorder %s103, %s106
    %p115 = scmp.eq.s32.totalorder %s14, 1
    %p116 = por %p114, %p115
    %p117 = scmp.ne.s32.totalorder %s106, %s107
    %p118 = scmp.eq.s32.totalorder %s14, 0
    %p119 = por %p117, %p118
    %p120 = scmp.ne.s32.totalorder %s106, %s107
    %p121 = scmp.eq.s32.totalorder %s15, 1
    %p122 = por %p120, %p121
    %p124 = scmp.ne.s32.totalorder %s107, %s123
    %p125 = scmp.eq.s32.totalorder %s15, 0
    %p126 = por %p124, %p125
    %p127 = scmp.le.s32.totalorder 1, %s9
    %p128 = scmp.lt.s32.totalorder %s9, 3
    %p129 = pnand %p127, %p128
    %p130 = pneg %p129
    // Predicated region
    $region9: #{double_conv_forward.5} parent=5 // pred_check
      _
    $region10: #{double_conv_forward.5} parent=5 // pred_check_branch
      %132 = sbr.rel (%p129) target = $region12
    $region11: #{double_conv_forward.5} parent=5 // pred_region
      %s133 = ssub.s32 %s9, 1
      // Predicated region
      $region13: #{double_conv_forward.5} parent=11 // pred_check
        %p134 = pneg %p70
      $region14: #{double_conv_forward.5} parent=11 // pred_check_branch
        %136 = sbr.rel (%p134) target = $region16
      $region15: #{double_conv_forward.5} parent=11 // pred_region
        _
      $region16: #{double_conv_forward.5} parent=11 // pred_fallthru
        _
      // Predicated region
      $region17: #{double_conv_forward.5} parent=11 // pred_check
        %p137 = pneg %p91
      $region18: #{double_conv_forward.5} parent=11 // pred_check_branch
        %139 = sbr.rel (%p137) target = $region20
      $region19: #{double_conv_forward.5} parent=11 // pred_region
        _
      $region20: #{double_conv_forward.5} parent=11 // pred_fallthru
        _
    $region12: #{double_conv_forward.5} parent=5 // pred_fallthru
      _
    %p140 = scmp.lt.s32.totalorder %s9, 2
    // Predicated region
    $region21: #{double_conv_forward.5} parent=5 // pred_check
      %p141 = pneg %p140
    $region22: #{double_conv_forward.5} parent=5 // pred_check_branch
      %143 = sbr.rel (%p141) target = $region24
    $region23: #{double_conv_forward.5} parent=5 // pred_region
      // Predicated region
      $region25: #{double_conv_forward.5} parent=23 // pred_check
        %p144 = pneg %p43
      $region26: #{double_conv_forward.5} parent=23 // pred_check_branch
        %146 = sbr.rel (%p144) target = $region28
      $region27: #{double_conv_forward.5} parent=23 // pred_region
        %s147 = smul.u32 2, %s17
        %p148 = scmp.lt.s32.totalorder %s16, 1
        %s149 = scalar_select %p148, %s16, 1
        %p150 = scmp.lt.s32.totalorder %s147, 1
        %s151 = scalar_select %p150, %s147, 1
        %s152 = smul.addr %s149, 2
        %s153 = sadd.s32 %s151, %s152
        %s154 = smul.addr %s153, 8
        %s155 = scalar_lea.vmem %s0, %s154
        %s156 = smul.u32 2, %s17
      $region28: #{double_conv_forward.5} parent=23 // pred_fallthru
        _
    $region24: #{double_conv_forward.5} parent=5 // pred_fallthru
      _
    %p157 = scmp.le.s32.totalorder 1, %s9
    %p158 = scmp.lt.s32.totalorder %s9, 3
    %p159 = pnand %p157, %p158
    %p160 = pneg %p159
    // Predicated region
    $region29: #{double_conv_forward.5} parent=5 // pred_check
      _
    $region30: #{double_conv_forward.5} parent=5 // pred_check_branch
      %162 = sbr.rel (%p159) target = $region32
    $region31: #{double_conv_forward.5} parent=5 // pred_region
      %s163 = ssub.s32 %s9, 1
      %s164 = smul.u32 2, %s19
      %p165 = scmp.lt.s32.totalorder %s18, 1
      %s166 = scalar_select %p165, %s18, 1
      %p167 = scmp.lt.s32.totalorder %s164, 1
      %s168 = scalar_select %p167, %s164, 1
      %s169 = smul.addr %s166, 2
      %s170 = sadd.s32 %s168, %s169
      %s171 = smul.addr %s170, 8
      %s172 = scalar_lea.vmem %s0, %s171
      %p173 = pneg %p49
      %p174 = pneg %p46
      %p175 = pneg %p70
      %p176 = pneg %p67
      %p177 = pneg %p91
      %p178 = pneg %p88
      %p179 = pneg %p119
      %p180 = pneg %p116
      %s181 = smul.u32 2, %s19
      %p182 = scmp.lt.s32.totalorder %s18, 1
      %s183 = scalar_select %p182, %s18, 1
      %p184 = scmp.lt.s32.totalorder %s181, 1
      %s185 = scalar_select %p184, %s181, 1
      %s186 = smul.addr %s183, 2
      %s187 = sadd.s32 %s185, %s186
      %s188 = smul.addr %s187, 8
      %s189 = scalar_lea.vmem %s3, %s188
      %s190 = smul.u32 2, %s19
      %p191 = scmp.lt.s32.totalorder %s18, 1
      %s192 = scalar_select %p191, %s18, 1
      %p193 = scmp.lt.s32.totalorder %s190, 1
      %s194 = scalar_select %p193, %s190, 1
      %s195 = smul.addr %s192, 2
      %s196 = sadd.s32 %s194, %s195
      %s197 = smul.addr %s196, 8
      %s198 = scalar_lea.vmem %s0, %s197
      %s199 = smul.u32 2, %s19
      %s200 = smul.u32 2, %s19
      %p201 = scmp.lt.s32.totalorder %s18, 1
      %s202 = scalar_select %p201, %s18, 1
      %p203 = scmp.lt.s32.totalorder %s200, 1
      %s204 = scalar_select %p203, %s200, 1
      %s205 = smul.addr %s202, 2
      %s206 = sadd.s32 %s204, %s205
      %s207 = smul.addr %s206, 8
      %s208 = scalar_lea.vmem %s3, %s207
      %s209 = smul.u32 2, %s19
      %v210 = vld [vmem:[%s198] sm:$0xff]
      %v211 = vld [vmem:[%s198 + $0x8] sm:$0xff]
      %v212 = vld [vmem:[%s1] sm:$0x1]
      %v214 = vlaneseq
      %v215 = vshrl.u32 %v214, 7
      %v216 = vsub.s32 0, %v215
      %v217 = vrot.slane %v212, %v216
      %v219 = vmul.f32 %v210, %v217
      %v220 = vmul.f32 %v211, %v217
      %v221 = vld [vmem:[%s2] sm:$0x1]
      %v223 = vlaneseq
      %v224 = vshrl.u32 %v223, 7
      %v225 = vsub.s32 0, %v224
      %v226 = vrot.slane %v221, %v225
      %v228 = vadd.f32 %v219, %v226
      %v229 = vadd.f32 %v220, %v226
      %vm230 = vcmp.gt.f32.partialorder %v228, 0.0
      %vm231 = vcmp.gt.f32.partialorder %v229, 0.0
      %v232 = vmul.f32 %v228, 0.02
      %v233 = vmul.f32 %v229, 0.02
      %v234 = vsel %vm230, %v228, %v232
      %v235 = vsel %vm231, %v229, %v233
      %236 = vst [vmem:[%s208] sm:$0xff] %v234
      %237 = vst [vmem:[%s208 + $0x8] sm:$0xff] %v235
      %s238 = smul.u32 2, %s19
      %p239 = scmp.lt.s32.totalorder %s18, 1
      %s240 = scalar_select %p239, %s18, 1
      %p241 = scmp.lt.s32.totalorder %s238, 1
      %s242 = scalar_select %p241, %s238, 1
      %s243 = smul.addr %s240, 2
      %s244 = sadd.s32 %s242, %s243
      %s245 = smul.addr %s244, 8
      %s246 = scalar_lea.vmem %s3, %s245
      // Predicated region
      $region33: #{double_conv_forward.5} parent=31 // pred_check
        %p247 = pneg %p116
      $region34: #{double_conv_forward.5} parent=31 // pred_check_branch
        %249 = sbr.rel (%p247) target = $region36
      $region35: #{double_conv_forward.5} parent=31 // pred_region
        %s250 = smul.u32 2, %s19
      $region36: #{double_conv_forward.5} parent=31 // pred_fallthru
        _
    $region32: #{double_conv_forward.5} parent=5 // pred_fallthru
      _
    %p251 = scmp.le.s32.totalorder 2, %s9
    // Predicated region
    $region37: #{double_conv_forward.5} parent=5 // pred_check
      %p252 = pneg %p251
    $region38: #{double_conv_forward.5} parent=5 // pred_check_branch
      %254 = sbr.rel (%p252) target = $region40
    $region39: #{double_conv_forward.5} parent=5 // pred_region
      %s255 = ssub.s32 %s9, 2
      // Predicated region
      $region41: #{double_conv_forward.5} parent=39 // pred_check
        %p256 = pneg %p122
      $region42: #{double_conv_forward.5} parent=39 // pred_check_branch
        %258 = sbr.rel (%p256) target = $region44
      $region43: #{double_conv_forward.5} parent=39 // pred_region
        %s259 = smul.u32 2, %s21
        %p260 = scmp.lt.s32.totalorder %s20, 1
        %s261 = scalar_select %p260, %s20, 1
        %p262 = scmp.lt.s32.totalorder %s259, 1
        %s263 = scalar_select %p262, %s259, 1
        %s264 = smul.addr %s261, 2
        %s265 = sadd.s32 %s263, %s264
        %s266 = smul.addr %s265, 8
        %s267 = scalar_lea.vmem %s3, %s266
      $region44: #{double_conv_forward.5} parent=39 // pred_fallthru
        _
    $region40: #{double_conv_forward.5} parent=5 // pred_fallthru
      _
  $region6: #{double_conv_forward.5} parent=0 // loop_footer
    %s13 = sadd.s32 1, %s9
  $region7: #{double_conv_forward.5} parent=0 // loop_footer_branch
    %8 = sbr.rel target = $region3
  $region8: #{double_conv_forward.5} parent=0 // loop_exit
    _

// kernel: double_conv_forward.3
$region0: #{double_conv_forward.3}
  #allocation0 [shape = 'u32[]', space=smem, size = 0x4, offset = 0x4, fixed_abs, tag = 'smem constant byte address 0x4 - core index']
  #allocation1 [shape = 'u32[144,128]{1,0:T(1,128)}', space=vmem, size = 0x12000, scoped, tag = 'internal scratch']
  #allocation2 [shape = 'f32[18,18,4]{2,1,0:T(8,128)}', space=vmem, size = 0x36000, scoped, tag = 'scratch operand']
  %s0 = inlined_call_operand.vmem [shape: f32[2,16,16,4], index: 0, kind: input, shape index: {}]
  %s1 = inlined_call_operand.vmem [shape: f32[9,4,8], index: 1, kind: input, shape index: {}]
  %s2 = inlined_call_operand.vmem [shape: f32[2,16,16,8], index: 2, kind: output, shape index: {0}]
  %s3 = inlined_call_operand.vmem [shape: f32[2,1,8], index: 3, kind: output, shape index: {1}]
  %s4 = inlined_call_operand.vmem [shape: f32[2,1,8], index: 4, kind: output, shape index: {2}]
  %5 = xla_tuple %s2, %s3, %s4
  %s6 = sld [smem:[#allocation0]]
  $region57: #{double_conv_forward.3} parent=0
    _
  %s8 = ssub.s32 1, %s6
  %s9 = scalar_select 0, %s8, %s6
  loop: start=0, step=1, limit=4
  $region2: #{double_conv_forward.3} parent=0 // loop_pre_header
    _
  $region3: #{double_conv_forward.3} parent=0 // loop_header
    %s11 = sphi 0, %s15
    %p12 = scmp.ge.s32.totalorder %s11, 4
    %s21 = sphi 0, %s23
    %s24 = sphi 0, %s21
    %s25 = sphi 0, %s24
    %s41 = sphi 0, %s25
    %s45 = sphi 0, %s45
    %s47 = sphi 0, %s45
    %s48 = sphi 0, %s47
    %s62 = sphi 0, %s48
    %s68 = sphi 0, %s70
    %s71 = sphi 0, %s68
    %s72 = sphi 0, %s71
    %s88 = sphi 0, %s72
    %s94 = sphi 0, %s96
    %s97 = sphi 0, %s94
    %s98 = sphi 0, %s97
    %s114 = sphi 0, %s98
    %s120 = sphi 0, %s122
    %s123 = sphi 0, %s120
    %s124 = sphi 0, %s123
    %s140 = sphi 0, %s124
  $region4: #{double_conv_forward.3} parent=0 // loop_header_branch
    %14 = sbr.rel (%p12) target = $region8
  $region5: #{double_conv_forward.3} parent=0 // loop_body
    %s16 = ssub.s32 %s11, 1
    %s17 = ssub.s32 %s11, 2
    %s18 = sadd.s32 %s11, 1
    %s19 = ssub.s32 %s11, %s18
    %p20 = scmp.eq.s32.totalorder %s19, 0
    %s22 = sadd.s32 %s21, 1
    %s23 = scalar_select %p20, %s21, %s22
    %p26 = pneg %p20
    %p27 = scmp.eq.s32.totalorder %s11, 1
    %p28 = por %p26, %p27
    %p29 = scmp.ne.s32.totalorder %s21, %s24
    %p30 = scmp.eq.s32.totalorder %s11, 0
    %p31 = por %p29, %p30
    %p32 = scmp.ne.s32.totalorder %s21, %s24
    %p33 = scmp.eq.s32.totalorder %s16, 1
    %p34 = por %p32, %p33
    %p35 = scmp.ne.s32.totalorder %s24, %s25
    %p36 = scmp.eq.s32.totalorder %s16, 0
    %p37 = por %p35, %p36
    %p38 = scmp.ne.s32.totalorder %s24, %s25
    %p39 = scmp.eq.s32.totalorder %s17, 1
    %p40 = por %p38, %p39
    %p42 = scmp.ne.s32.totalorder %s25, %s41
    %p43 = scmp.eq.s32.totalorder %s17, 0
    %p44 = por %p42, %p43
    %s46 = sadd.s32 %s45, 1
    %p49 = scmp.eq.s32.totalorder %s11, 1
    %p50 = scmp.ne.s32.totalorder %s45, %s47
    %p51 = scmp.eq.s32.totalorder %s11, 0
    %p52 = por %p50, %p51
    %p53 = scmp.ne.s32.totalorder %s45, %s47
    %p54 = scmp.eq.s32.totalorder %s16, 1
    %p55 = por %p53, %p54
    %p56 = scmp.ne.s32.totalorder %s47, %s48
    %p57 = scmp.eq.s32.totalorder %s16, 0
    %p58 = por %p56, %p57
    %p59 = scmp.ne.s32.totalorder %s47, %s48
    %p60 = scmp.eq.s32.totalorder %s17, 1
    %p61 = por %p59, %p60
    %p63 = scmp.ne.s32.totalorder %s48, %s62
    %p64 = scmp.eq.s32.totalorder %s17, 0
    %p65 = por %p63, %p64
    %s66 = ssub.s32 %s11, %s18
    %p67 = scmp.eq.s32.totalorder %s66, 0
    %s69 = sadd.s32 %s68, 1
    %s70 = scalar_select %p67, %s68, %s69
    %p73 = pneg %p67
    %p74 = scmp.eq.s32.totalorder %s11, 1
    %p75 = por %p73, %p74
    %p76 = scmp.ne.s32.totalorder %s68, %s71
    %p77 = scmp.eq.s32.totalorder %s11, 0
    %p78 = por %p76, %p77
    %p79 = scmp.ne.s32.totalorder %s68, %s71
    %p80 = scmp.eq.s32.totalorder %s16, 1
    %p81 = por %p79, %p80
    %p82 = scmp.ne.s32.totalorder %s71, %s72
    %p83 = scmp.eq.s32.totalorder %s16, 0
    %p84 = por %p82, %p83
    %p85 = scmp.ne.s32.totalorder %s71, %s72
    %p86 = scmp.eq.s32.totalorder %s17, 1
    %p87 = por %p85, %p86
    %p89 = scmp.ne.s32.totalorder %s72, %s88
    %p90 = scmp.eq.s32.totalorder %s17, 0
    %p91 = por %p89, %p90
    %s92 = ssub.s32 %s11, %s18
    %p93 = scmp.eq.s32.totalorder %s92, 0
    %s95 = sadd.s32 %s94, 1
    %s96 = scalar_select %p93, %s94, %s95
    %p99 = pneg %p93
    %p100 = scmp.eq.s32.totalorder %s11, 1
    %p101 = por %p99, %p100
    %p102 = scmp.ne.s32.totalorder %s94, %s97
    %p103 = scmp.eq.s32.totalorder %s11, 0
    %p104 = por %p102, %p103
    %p105 = scmp.ne.s32.totalorder %s94, %s97
    %p106 = scmp.eq.s32.totalorder %s16, 1
    %p107 = por %p105, %p106
    %p108 = scmp.ne.s32.totalorder %s97, %s98
    %p109 = scmp.eq.s32.totalorder %s16, 0
    %p110 = por %p108, %p109
    %p111 = scmp.ne.s32.totalorder %s97, %s98
    %p112 = scmp.eq.s32.totalorder %s17, 1
    %p113 = por %p111, %p112
    %p115 = scmp.ne.s32.totalorder %s98, %s114
    %p116 = scmp.eq.s32.totalorder %s17, 0
    %p117 = por %p115, %p116
    %s118 = ssub.s32 %s11, %s18
    %p119 = scmp.eq.s32.totalorder %s118, 0
    %s121 = sadd.s32 %s120, 1
    %s122 = scalar_select %p119, %s120, %s121
    %p125 = pneg %p119
    %p126 = scmp.eq.s32.totalorder %s11, 1
    %p127 = por %p125, %p126
    %p128 = scmp.ne.s32.totalorder %s120, %s123
    %p129 = scmp.eq.s32.totalorder %s11, 0
    %p130 = por %p128, %p129
    %p131 = scmp.ne.s32.totalorder %s120, %s123
    %p132 = scmp.eq.s32.totalorder %s16, 1
    %p133 = por %p131, %p132
    %p134 = scmp.ne.s32.totalorder %s123, %s124
    %p135 = scmp.eq.s32.totalorder %s16, 0
    %p136 = por %p134, %p135
    %p137 = scmp.ne.s32.totalorder %s123, %s124
    %p138 = scmp.eq.s32.totalorder %s17, 1
    %p139 = por %p137, %p138
    %p141 = scmp.ne.s32.totalorder %s124, %s140
    %p142 = scmp.eq.s32.totalorder %s17, 0
    %p143 = por %p141, %p142
    %p144 = scmp.le.s32.totalorder 1, %s11
    %p145 = scmp.lt.s32.totalorder %s11, 3
    %p146 = pnand %p144, %p145
    %p147 = pneg %p146
    // Predicated region
    $region9: #{double_conv_forward.3} parent=5 // pred_check
      _
    $region10: #{double_conv_forward.3} parent=5 // pred_check_branch
      %149 = sbr.rel (%p146) target = $region12
    $region11: #{double_conv_forward.3} parent=5 // pred_region
      %s150 = ssub.s32 %s11, 1
      // Predicated region
      $region13: #{double_conv_forward.3} parent=11 // pred_check
        %p151 = pneg %p58
      $region14: #{double_conv_forward.3} parent=11 // pred_check_branch
        %153 = sbr.rel (%p151) target = $region16
      $region15: #{double_conv_forward.3} parent=11 // pred_region
        _
      $region16: #{double_conv_forward.3} parent=11 // pred_fallthru
        _
    $region12: #{double_conv_forward.3} parent=5 // pred_fallthru
      _
    %p154 = scmp.lt.s32.totalorder %s11, 2
    // Predicated region
    $region17: #{double_conv_forward.3} parent=5 // pred_check
      %p155 = pneg %p154
    $region18: #{double_conv_forward.3} parent=5 // pred_check_branch
      %157 = sbr.rel (%p155) target = $region20
    $region19: #{double_conv_forward.3} parent=5 // pred_region
      // Predicated region
      $region21: #{double_conv_forward.3} parent=19 // pred_check
        %p158 = pneg %p31
      $region22: #{double_conv_forward.3} parent=19 // pred_check_branch
        %160 = sbr.rel (%p158) target = $region24
      $region23: #{double_conv_forward.3} parent=19 // pred_region
        %p161 = scmp.lt.s32.totalorder %s11, 1
        %s162 = scalar_select %p161, %s11, 1
        %s163 = smul.addr %s162, 32
        %s164 = smul.addr %s163, 8
        %s165 = scalar_lea.vmem %s0, %s164
      $region24: #{double_conv_forward.3} parent=19 // pred_fallthru
        _
    $region20: #{double_conv_forward.3} parent=5 // pred_fallthru
      _
    %p166 = scmp.le.s32.totalorder 1, %s11
    %p167 = scmp.lt.s32.totalorder %s11, 3
    %p168 = pnand %p166, %p167
    %p169 = pneg %p168
    // Predicated region
    $region25: #{double_conv_forward.3} parent=5 // pred_check
      _
    $region26: #{double_conv_forward.3} parent=5 // pred_check_branch
      %171 = sbr.rel (%p168) target = $region28
    $region27: #{double_conv_forward.3} parent=5 // pred_region
      %s172 = ssub.s32 %s11, 1
      %p173 = scmp.lt.s32.totalorder %s16, 1
      %s174 = scalar_select %p173, %s16, 1
      %s175 = smul.addr %s174, 32
      %s176 = smul.addr %s175, 8
      %s177 = scalar_lea.vmem %s0, %s176
      %p178 = pneg %p37
      %p179 = pneg %p34
      %p180 = pneg %p58
      %p181 = pneg %p55
      %p182 = pneg %p84
      %p183 = pneg %p81
      %p184 = scmp.lt.s32.totalorder %s16, 1
      %s185 = scalar_select %p184, %s16, 1
      %s186 = smul.addr %s185, 32
      %s187 = smul.addr %s186, 8
      %s188 = scalar_lea.vmem %s2, %s187
      %p189 = pneg %p110
      %p190 = pneg %p107
      %p191 = scmp.lt.s32.totalorder %s16, 1
      %s192 = scalar_select %p191, %s16, 1
      %s193 = scalar_lea.vmem %s3, %s192
      %p194 = pneg %p136
      %p195 = pneg %p133
      %p196 = scmp.lt.s32.totalorder %s16, 1
      %s197 = scalar_select %p196, %s16, 1
      %s198 = scalar_lea.vmem %s4, %s197
      %p199 = scmp.lt.s32.totalorder %s16, 1
      %s200 = scalar_select %p199, %s16, 1
      %s201 = smul.addr %s200, 32
      %s202 = smul.addr %s201, 8
      %s203 = scalar_lea.vmem %s0, %s202
      %p204 = scmp.lt.s32.totalorder %s16, 1
      %s205 = scalar_select %p204, %s16, 1
      %s206 = smul.addr %s205, 32
      %s207 = smul.addr %s206, 8
      %s208 = scalar_lea.vmem %s2, %s207
      %p209 = scmp.lt.s32.totalorder %s16, 1
      %s210 = scalar_select %p209, %s16, 1
      %s211 = scalar_lea.vmem %s3, %s210
      %p212 = scmp.lt.s32.totalorder %s16, 1
      %s213 = scalar_select %p212, %s16, 1
      %s214 = scalar_lea.vmem %s4, %s213
      %vm215 = vcmask 31744
      %216 = vst.msk [vmem:[#allocation2] sm:$0xff] %vm215, 0.0
      %217 = vst.msk [vmem:[#allocation2 + $0x8] sm:$0xff] %vm215, 0.0
      %vm218 = vcmask 25600
      %219 = vst.msk [vmem:[#allocation2 + $0x10] sm:$0x3] %vm218, 0.0
      %s220 = scalar_lea.vmem [#allocation2], 408
      %221 = vst.msk [vmem:[%s220] sm:$0xff] %vm215, 0.0
      %222 = vst.msk [vmem:[%s220 + $0x8] sm:$0xff] %vm215, 0.0
      %223 = vst.msk [vmem:[%s220 + $0x10] sm:$0x3] %vm218, 0.0
      %vm224 = vcmask 24576
      %225 = vst.msk [vmem:[#allocation2] sm:$0x1] %vm224, 0.0
      %226 = vst.msk [vmem:[#allocation2 + $0x18] sm:$0x1] %vm224, 0.0
      %227 = vst.msk [vmem:[#allocation2 + $0x30] sm:$0x1] %vm224, 0.0
      %228 = vst.msk [vmem:[#allocation2 + $0x48] sm:$0x1] %vm224, 0.0
      %229 = vst.msk [vmem:[#allocation2 + $0x60] sm:$0x1] %vm224, 0.0
      %230 = vst.msk [vmem:[#allocation2 + $0x78] sm:$0x1] %vm224, 0.0
      %231 = vst.msk [vmem:[#allocation2 + $0x90] sm:$0x1] %vm224, 0.0
      %232 = vst.msk [vmem:[#allocation2 + $0xa8] sm:$0x1] %vm224, 0.0
      %233 = vst.msk [vmem:[#allocation2 + $0xc0] sm:$0x1] %vm224, 0.0
      %234 = vst.msk [vmem:[#allocation2 + $0xd8] sm:$0x1] %vm224, 0.0
      %235 = vst.msk [vmem:[#allocation2 + $0xf0] sm:$0x1] %vm224, 0.0
      %236 = vst.msk [vmem:[#allocation2 + $0x108] sm:$0x1] %vm224, 0.0
      %237 = vst.msk [vmem:[#allocation2 + $0x120] sm:$0x1] %vm224, 0.0
      %238 = vst.msk [vmem:[#allocation2 + $0x138] sm:$0x1] %vm224, 0.0
      %239 = vst.msk [vmem:[#allocation2 + $0x150] sm:$0x1] %vm224, 0.0
      %240 = vst.msk [vmem:[#allocation2 + $0x168] sm:$0x1] %vm224, 0.0
      %241 = vst.msk [vmem:[#allocation2 + $0x180] sm:$0x1] %vm224, 0.0
      %242 = vst.msk [vmem:[#allocation2 + $0x198] sm:$0x1] %vm224, 0.0
      %243 = vst.msk [vmem:[#allocation2 + $0x11] sm:$0x1] %vm224, 0.0
      %244 = vst.msk [vmem:[#allocation2 + $0x29] sm:$0x1] %vm224, 0.0
      %245 = vst.msk [vmem:[#allocation2 + $0x41] sm:$0x1] %vm224, 0.0
      %246 = vst.msk [vmem:[#allocation2 + $0x59] sm:$0x1] %vm224, 0.0
      %247 = vst.msk [vmem:[#allocation2 + $0x71] sm:$0x1] %vm224, 0.0
      %248 = vst.msk [vmem:[#allocation2 + $0x89] sm:$0x1] %vm224, 0.0
      %249 = vst.msk [vmem:[#allocation2 + $0xa1] sm:$0x1] %vm224, 0.0
      %250 = vst.msk [vmem:[#allocation2 + $0xb9] sm:$0x1] %vm224, 0.0
      %251 = vst.msk [vmem:[#allocation2 + $0xd1] sm:$0x1] %vm224, 0.0
      %252 = vst.msk [vmem:[#allocation2 + $0xe9] sm:$0x1] %vm224, 0.0
      %253 = vst.msk [vmem:[#allocation2 + $0x101] sm:$0x1] %vm224, 0.0
      %254 = vst.msk [vmem:[#allocation2 + $0x119] sm:$0x1] %vm224, 0.0
      %255 = vst.msk [vmem:[#allocation2 + $0x131] sm:$0x1] %vm224, 0.0
      %256 = vst.msk [vmem:[#allocation2 + $0x149] sm:$0x1] %vm224, 0.0
      %257 = vst.msk [vmem:[#allocation2 + $0x161] sm:$0x1] %vm224, 0.0
      %258 = vst.msk [vmem:[#allocation2 + $0x179] sm:$0x1] %vm224, 0.0
      %259 = vst.msk [vmem:[#allocation2 + $0x191] sm:$0x1] %vm224, 0.0
      %260 = vst.msk [vmem:[#allocation2 + $0x1a9] sm:$0x1] %vm224, 0.0
      %v261 = vld [vmem:[%s203] sm:$0xff]
      %v262 = vld [vmem:[%s203 + $0x8] sm:$0xff]
      %v263 = vld [vmem:[%s203 + $0x10] sm:$0xff]
      %v264 = vld [vmem:[%s203 + $0x18] sm:$0xff]
      %v265 = vld [vmem:[%s203 + $0x20] sm:$0xff]
      %v266 = vld [vmem:[%s203 + $0x28] sm:$0xff]
      %v267 = vld [vmem:[%s203 + $0x30] sm:$0xff]
      %v268 = vld [vmem:[%s203 + $0x38] sm:$0xff]
      %v269 = vld [vmem:[%s203 + $0x40] sm:$0xff]
      %v270 = vld [vmem:[%s203 + $0x48] sm:$0xff]
      %v271 = vld [vmem:[%s203 + $0x50] sm:$0xff]
      %v272 = vld [vmem:[%s203 + $0x58] sm:$0xff]
      %v273 = vld [vmem:[%s203 + $0x60] sm:$0xff]
      %v274 = vld [vmem:[%s203 + $0x68] sm:$0xff]
      %v275 = vld [vmem:[%s203 + $0x70] sm:$0xff]
      %v276 = vld [vmem:[%s203 + $0x78] sm:$0xff]
      %v277 = vld [vmem:[%s203 + $0x80] sm:$0xff]
      %v278 = vld [vmem:[%s203 + $0x88] sm:$0xff]
      %v279 = vld [vmem:[%s203 + $0x90] sm:$0xff]
      %v280 = vld [vmem:[%s203 + $0x98] sm:$0xff]
      %v281 = vld [vmem:[%s203 + $0xa0] sm:$0xff]
      %v282 = vld [vmem:[%s203 + $0xa8] sm:$0xff]
      %v283 = vld [vmem:[%s203 + $0xb0] sm:$0xff]
      %v284 = vld [vmem:[%s203 + $0xb8] sm:$0xff]
      %v285 = vld [vmem:[%s203 + $0xc0] sm:$0xff]
      %v286 = vld [vmem:[%s203 + $0xc8] sm:$0xff]
      %v287 = vld [vmem:[%s203 + $0xd0] sm:$0xff]
      %v288 = vld [vmem:[%s203 + $0xd8] sm:$0xff]
      %v289 = vld [vmem:[%s203 + $0xe0] sm:$0xff]
      %v290 = vld [vmem:[%s203 + $0xe8] sm:$0xff]
      %v291 = vld [vmem:[%s203 + $0xf0] sm:$0xff]
      %v292 = vld [vmem:[%s203 + $0xf8] sm:$0xff]
      %s293 = scalar_lea.vmem [#allocation2], 24
      %294 = vst.msk [vmem:[%s293 + $0x1] sm:$0xff] %vm215, %v261
      %295 = vst.msk [vmem:[%s293 + $0x9] sm:$0xff] %vm215, %v262
      %296 = vst.msk [vmem:[%s293 + $0x19] sm:$0xff] %vm215, %v263
      %297 = vst.msk [vmem:[%s293 + $0x21] sm:$0xff] %vm215, %v264
      %298 = vst.msk [vmem:[%s293 + $0x31] sm:$0xff] %vm215, %v265
      %299 = vst.msk [vmem:[%s293 + $0x39] sm:$0xff] %vm215, %v266
      %300 = vst.msk [vmem:[%s293 + $0x49] sm:$0xff] %vm215, %v267
      %301 = vst.msk [vmem:[%s293 + $0x51] sm:$0xff] %vm215, %v268
      %302 = vst.msk [vmem:[%s293 + $0x61] sm:$0xff] %vm215, %v269
      %303 = vst.msk [vmem:[%s293 + $0x69] sm:$0xff] %vm215, %v270
      %304 = vst.msk [vmem:[%s293 + $0x79] sm:$0xff] %vm215, %v271
      %305 = vst.msk [vmem:[%s293 + $0x81] sm:$0xff] %vm215, %v272
      %306 = vst.msk [vmem:[%s293 + $0x91] sm:$0xff] %vm215, %v273
      %307 = vst.msk [vmem:[%s293 + $0x99] sm:$0xff] %vm215, %v274
      %308 = vst.msk [vmem:[%s293 + $0xa9] sm:$0xff] %vm215, %v275
      %309 = vst.msk [vmem:[%s293 + $0xb1] sm:$0xff] %vm215, %v276
      %310 = vst.msk [vmem:[%s293 + $0xc1] sm:$0xff] %vm215, %v277
      %311 = vst.msk [vmem:[%s293 + $0xc9] sm:$0xff] %vm215, %v278
      %312 = vst.msk [vmem:[%s293 + $0xd9] sm:$0xff] %vm215, %v279
      %313 = vst.msk [vmem:[%s293 + $0xe1] sm:$0xff] %vm215, %v280
      %314 = vst.msk [vmem:[%s293 + $0xf1] sm:$0xff] %vm215, %v281
      %315 = vst.msk [vmem:[%s293 + $0xf9] sm:$0xff] %vm215, %v282
      %316 = vst.msk [vmem:[%s293 + $0x109] sm:$0xff] %vm215, %v283
      %317 = vst.msk [vmem:[%s293 + $0x111] sm:$0xff] %vm215, %v284
      %318 = vst.msk [vmem:[%s293 + $0x121] sm:$0xff] %vm215, %v285
      %319 = vst.msk [vmem:[%s293 + $0x129] sm:$0xff] %vm215, %v286
      %320 = vst.msk [vmem:[%s293 + $0x139] sm:$0xff] %vm215, %v287
      %321 = vst.msk [vmem:[%s293 + $0x141] sm:$0xff] %vm215, %v288
      %322 = vst.msk [vmem:[%s293 + $0x151] sm:$0xff] %vm215, %v289
      %323 = vst.msk [vmem:[%s293 + $0x159] sm:$0xff] %vm215, %v290
      %324 = vst.msk [vmem:[%s293 + $0x169] sm:$0xff] %vm215, %v291
      %325 = vst.msk [vmem:[%s293 + $0x171] sm:$0xff] %vm215, %v292
      %v326 = vld [vmem:[#allocation2] sm:$0xff]
      %v327 = vld [vmem:[#allocation2 + $0x8] sm:$0xff]
      %v328 = vld [vmem:[#allocation2 + $0x10] sm:$0x3]
      %v329 = vld [vmem:[#allocation2 + $0x18] sm:$0xff]
      %v330 = vld [vmem:[#allocation2 + $0x20] sm:$0xff]
      %v331 = vld [vmem:[#allocation2 + $0x28] sm:$0x3]
      %v332 = vld [vmem:[#allocation2 + $0x30] sm:$0xff]
      %v333 = vld [vmem:[#allocation2 + $0x38] sm:$0xff]
      %v334 = vld [vmem:[#allocation2 + $0x40] sm:$0x3]
      %v335 = vld [vmem:[#allocation2 + $0x48] sm:$0xff]
      %v336 = vld [vmem:[#allocation2 + $0x50] sm:$0xff]
      %v337 = vld [vmem:[#allocation2 + $0x58] sm:$0x3]
      %v338 = vld [vmem:[#allocation2 + $0x60] sm:$0xff]
      %v339 = vld [vmem:[#allocation2 + $0x68] sm:$0xff]
      %v340 = vld [vmem:[#allocation2 + $0x70] sm:$0x3]
      %v341 = vld [vmem:[#allocation2 + $0x78] sm:$0xff]
      %v342 = vld [vmem:[#allocation2 + $0x80] sm:$0xff]
      %v343 = vld [vmem:[#allocation2 + $0x88] sm:$0x3]
      %v344 = vld [vmem:[#allocation2 + $0x90] sm:$0xff]
      %v345 = vld [vmem:[#allocation2 + $0x98] sm:$0xff]
      %v346 = vld [vmem:[#allocation2 + $0xa0] sm:$0x3]
      %v347 = vld [vmem:[#allocation2 + $0xa8] sm:$0xff]
      %v348 = vld [vmem:[#allocation2 + $0xb0] sm:$0xff]
      %v349 = vld [vmem:[#allocation2 + $0xb8] sm:$0x3]
      %v350 = vld [vmem:[#allocation2 + $0xc0] sm:$0xff]
      %v351 = vld [vmem:[#allocation2 + $0xc8] sm:$0xff]
      %v352 = vld [vmem:[#allocation2 + $0xd0] sm:$0x3]
      %v353 = vld [vmem:[#allocation2 + $0xd8] sm:$0xff]
      %v354 = vld [vmem:[#allocation2 + $0xe0] sm:$0xff]
      %v355 = vld [vmem:[#allocation2 + $0xe8] sm:$0x3]
      %v356 = vld [vmem:[#allocation2 + $0xf0] sm:$0xff]
      %v357 = vld [vmem:[#allocation2 + $0xf8] sm:$0xff]
      %v358 = vld [vmem:[#allocation2 + $0x100] sm:$0x3]
      %v359 = vld [vmem:[#allocation2 + $0x108] sm:$0xff]
      %v360 = vld [vmem:[#allocation2 + $0x110] sm:$0xff]
      %v361 = vld [vmem:[#allocation2 + $0x118] sm:$0x3]
      %v362 = vld [vmem:[#allocation2 + $0x120] sm:$0xff]
      %v363 = vld [vmem:[#allocation2 + $0x128] sm:$0xff]
      %v364 = vld [vmem:[#allocation2 + $0x130] sm:$0x3]
      %v365 = vld [vmem:[#allocation2 + $0x138] sm:$0xff]
      %v366 = vld [vmem:[#allocation2 + $0x140] sm:$0xff]
      %v367 = vld [vmem:[#allocation2 + $0x148] sm:$0x3]
      %v368 = vld [vmem:[#allocation2 + $0x150] sm:$0xff]
      %v369 = vld [vmem:[#allocation2 + $0x158] sm:$0xff]
      %v370 = vld [vmem:[#allocation2 + $0x160] sm:$0x3]
      %v371 = vld [vmem:[#allocation2 + $0x168] sm:$0xff]
      %v372 = vld [vmem:[#allocation2 + $0x170] sm:$0xff]
      %v373 = vld [vmem:[#allocation2 + $0x178] sm:$0x3]
      %v374 = vld [vmem:[%s1] sm:$0xf]
      %vm423 = vcmask 1046528
      %v424 = vrot.slane %v326, 1
      %v425 = vrot.slane %v327, 1
      %v426 = vsel %vm423, %v424, %v425
      %v427 = vrot.slane %v328, 1
      %v428 = vsel %vm423, %v425, %v427
      %v429 = vrot.slane %v329, 1
      %v430 = vrot.slane %v330, 1
      %v431 = vsel %vm423, %v429, %v430
      %v432 = vrot.slane %v331, 1
      %v433 = vsel %vm423, %v430, %v432
      %v434 = vrot.slane %v332, 1
      %v435 = vrot.slane %v333, 1
      %v436 = vsel %vm423, %v434, %v435
      %v437 = vrot.slane %v334, 1
      %v438 = vsel %vm423, %v435, %v437
      %v439 = vrot.slane %v335, 1
      %v440 = vrot.slane %v336, 1
      %v441 = vsel %vm423, %v439, %v440
      %v442 = vrot.slane %v337, 1
      %v443 = vsel %vm423, %v440, %v442
      %v444 = vrot.slane %v338, 1
      %v445 = vrot.slane %v339, 1
      %v446 = vsel %vm423, %v444, %v445
      %v447 = vrot.slane %v340, 1
      %v448 = vsel %vm423, %v445, %v447
      %v449 = vrot.slane %v341, 1
      %v450 = vrot.slane %v342, 1
      %v451 = vsel %vm423, %v449, %v450
      %v452 = vrot.slane %v343, 1
      %v453 = vsel %vm423, %v450, %v452
      %v454 = vrot.slane %v344, 1
      %v455 = vrot.slane %v345, 1
      %v456 = vsel %vm423, %v454, %v455
      %v457 = vrot.slane %v346, 1
      %v458 = vsel %vm423, %v455, %v457
      %v459 = vrot.slane %v347, 1
      %v460 = vrot.slane %v348, 1
      %v461 = vsel %vm423, %v459, %v460
      %v462 = vrot.slane %v349, 1
      %v463 = vsel %vm423, %v460, %v462
      %v464 = vrot.slane %v350, 1
      %v465 = vrot.slane %v351, 1
      %v466 = vsel %vm423, %v464, %v465
      %v467 = vrot.slane %v352, 1
      %v468 = vsel %vm423, %v465, %v467
      %v469 = vrot.slane %v353, 1
      %v470 = vrot.slane %v354, 1
      %v471 = vsel %vm423, %v469, %v470
      %v472 = vrot.slane %v355, 1
      %v473 = vsel %vm423, %v470, %v472
      %v474 = vrot.slane %v356, 1
      %v475 = vrot.slane %v357, 1
      %v476 = vsel %vm423, %v474, %v475
      %v477 = vrot.slane %v358, 1
      %v478 = vsel %vm423, %v475, %v477
      %v479 = vrot.slane %v359, 1
      %v480 = vrot.slane %v360, 1
      %v481 = vsel %vm423, %v479, %v480
      %v482 = vrot.slane %v361, 1
      %v483 = vsel %vm423, %v480, %v482
      %v484 = vrot.slane %v362, 1
      %v485 = vrot.slane %v363, 1
      %v486 = vsel %vm423, %v484, %v485
      %v487 = vrot.slane %v364, 1
      %v488 = vsel %vm423, %v485, %v487
      %v489 = vrot.slane %v365, 1
      %v490 = vrot.slane %v366, 1
      %v491 = vsel %vm423, %v489, %v490
      %v492 = vrot.slane %v367, 1
      %v493 = vsel %vm423, %v490, %v492
      %v494 = vrot.slane %v368, 1
      %v495 = vrot.slane %v369, 1
      %v496 = vsel %vm423, %v494, %v495
      %v497 = vrot.slane %v370, 1
      %v498 = vsel %vm423, %v495, %v497
      %v499 = vrot.slane %v371, 1
      %v500 = vrot.slane %v372, 1
      %v501 = vsel %vm423, %v499, %v500
      %v502 = vrot.slane %v373, 1
      %v503 = vsel %vm423, %v500, %v502
      %s504 = scalar_lea.vmem %s1, 4
      %v505 = vld [vmem:[%s504] sm:$0xf]
      %v506 = vsel %vm215, %v426, 0
      %v508 = vsel %vm215, %v428, 0
      %v510 = vsel %vm215, %v431, 0
      %v512 = vsel %vm215, %v433, 0
      %v514 = vsel %vm215, %v436, 0
      %v516 = vsel %vm215, %v438, 0
      %v518 = vsel %vm215, %v441, 0
      %v520 = vsel %vm215, %v443, 0
      %v522 = vsel %vm215, %v446, 0
      %v524 = vsel %vm215, %v448, 0
      %v526 = vsel %vm215, %v451, 0
      %v528 = vsel %vm215, %v453, 0
      %v530 = vsel %vm215, %v456, 0
      %v532 = vsel %vm215, %v458, 0
      %v534 = vsel %vm215, %v461, 0
      %v536 = vsel %vm215, %v463, 0
      %v538 = vsel %vm215, %v466, 0
      %v540 = vsel %vm215, %v468, 0
      %v542 = vsel %vm215, %v471, 0
      %v544 = vsel %vm215, %v473, 0
      %v546 = vsel %vm215, %v476, 0
      %v548 = vsel %vm215, %v478, 0
      %v550 = vsel %vm215, %v481, 0
      %v552 = vsel %vm215, %v483, 0
      %v554 = vsel %vm215, %v486, 0
      %v556 = vsel %vm215, %v488, 0
      %v558 = vsel %vm215, %v491, 0
      %v560 = vsel %vm215, %v493, 0
      %v562 = vsel %vm215, %v496, 0
      %v564 = vsel %vm215, %v498, 0
      %v566 = vsel %vm215, %v501, 0
      %v568 = vsel %vm215, %v503, 0
      %vm570 = vcmask 1043456
      %v572 = vsel %vm570, %v505, 0
      %574 = vmatprep.subr.mxu0 0.0
      %575 = vmatpush1.msra.mxu0 0.0
      %576 = vmatprep.subr.mxu0 0.0
      %577 = vmatpush1.msra.mxu0 0.0
      %578 = vmatprep.subr.mxu0 0.0
      %579 = vmatpush1.msra.mxu0 0.0
      %580 = vmatprep.subr.mxu0 0.0
      %581 = vmatpush1.msra.mxu0 0.0
      %582 = vmatprep.subr.mxu0 0.0
      %583 = vmatpush1.msra.mxu0 0.0
      %584 = vmatprep.subr.mxu0 0.0
      %585 = vmatpush1.msra.mxu0 0.0
      %586 = vmatprep.subr.mxu0 0.0
      %587 = vmatpush1.msra.mxu0 0.0
      %588 = vmatprep.subr.mxu0 0.0
      %589 = vmatpush1.msra.mxu0 0.0
      %590 = vmatprep.subr.mxu0 0.0
      %591 = vmatpush1.msra.mxu0 0.0
      %592 = vmatprep.subr.mxu0 0.0
      %593 = vmatpush1.msra.mxu0 0.0
      %594 = vmatprep.subr.mxu0 0.0
      %595 = vmatpush1.msra.mxu0 0.0
      %596 = vmatprep.subr.mxu0 0.0
      %597 = vmatpush1.msra.mxu0 0.0
      %598 = vmatprep.subr.mxu0 0.0
      %599 = vmatpush1.msra.mxu0 0.0
      %600 = vmatprep.subr.mxu0 0.0
      %601 = vmatpush1.msra.mxu0 0.0
      %602 = vmatprep.subr.mxu0 0.0
      %603 = vmatpush1.msra.mxu0 0.0
      %604 = vmatprep.subr.mxu0 0.0
      %605 = vmatpush1.msra.mxu0 %v572
      %606 = vmatprep.subr.mxu0 0.0
      %607 = vmatpush2.msra.mxu0 0.0
      %608 = vmatprep.subr.mxu0 0.0
      %609 = vmatpush2.msra.mxu0 0.0
      %610 = vmatprep.subr.mxu0 0.0
      %611 = vmatpush2.msra.mxu0 0.0
      %612 = vmatprep.subr.mxu0 0.0
      %613 = vmatpush2.msra.mxu0 0.0
      %614 = vmatprep.subr.mxu0 0.0
      %615 = vmatpush2.msra.mxu0 0.0
      %616 = vmatprep.subr.mxu0 0.0
      %617 = vmatpush2.msra.mxu0 0.0
      %618 = vmatprep.subr.mxu0 0.0
      %619 = vmatpush2.msra.mxu0 0.0
      %620 = vmatprep.subr.mxu0 0.0
      %621 = vmatpush2.msra.mxu0 0.0
      %622 = vmatprep.subr.mxu0 0.0
      %623 = vmatpush2.msra.mxu0 0.0
      %624 = vmatprep.subr.mxu0 0.0
      %625 = vmatpush2.msra.mxu0 0.0
      %626 = vmatprep.subr.mxu0 0.0
      %627 = vmatpush2.msra.mxu0 0.0
      %628 = vmatprep.subr.mxu0 0.0
      %629 = vmatpush2.msra.mxu0 0.0
      %630 = vmatprep.subr.mxu0 0.0
      %631 = vmatpush2.msra.mxu0 0.0
      %632 = vmatprep.subr.mxu0 0.0
      %633 = vmatpush2.msra.mxu0 0.0
      %634 = vmatprep.subr.mxu0 0.0
      %635 = vmatpush2.msra.mxu0 0.0
      %636 = vmatprep.subr.mxu0 0.0
      %637 = vmatpush2.msra.mxu0 0.0
      %638 = vmatprep.mubr.f32.mxu0 0.0
      %639 = vmatmul.mubr.f32.gmra.mxu0 %v506
      %v640 = vpop.f32.mrf.mxu0
      %v641 = vadd.f32 0.0, %v640
      %v642 = vpop.f32.mrf.mxu0
      %643 = vmatprep.mubr.f32.mxu0 0.0
      %644 = vmatmul.mubr.f32.gmra.mxu0 %v508
      %v645 = vpop.f32.mrf.mxu0
      %v646 = vadd.f32 0.0, %v645
      %v647 = vpop.f32.mrf.mxu0
      %648 = vmatprep.mubr.f32.mxu0 0.0
      %649 = vmatmul.mubr.f32.gmra.mxu0 %v510
      %v650 = vpop.f32.mrf.mxu0
      %v651 = vadd.f32 0.0, %v650
      %v652 = vpop.f32.mrf.mxu0
      %653 = vmatprep.mubr.f32.mxu0 0.0
      %654 = vmatmul.mubr.f32.gmra.mxu0 %v512
      %v655 = vpop.f32.mrf.mxu0
      %v656 = vadd.f32 0.0, %v655
      %v657 = vpop.f32.mrf.mxu0
      %658 = vmatprep.mubr.f32.mxu0 0.0
      %659 = vmatmul.mubr.f32.gmra.mxu0 %v514
      %v660 = vpop.f32.mrf.mxu0
      %v661 = vadd.f32 0.0, %v660
      %v662 = vpop.f32.mrf.mxu0
      %663 = vmatprep.mubr.f32.mxu0 0.0
      %664 = vmatmul.mubr.f32.gmra.mxu0 %v516
      %v665 = vpop.f32.mrf.mxu0
      %v666 = vadd.f32 0.0, %v665
      %v667 = vpop.f32.mrf.mxu0
      %668 = vmatprep.mubr.f32.mxu0 0.0
      %669 = vmatmul.mubr.f32.gmra.mxu0 %v518
      %v670 = vpop.f32.mrf.mxu0
      %v671 = vadd.f32 0.0, %v670
      %v672 = vpop.f32.mrf.mxu0
      %673 = vmatprep.mubr.f32.mxu0 0.0
      %674 = vmatmul.mubr.f32.gmra.mxu0 %v520
      %v675 = vpop.f32.mrf.mxu0
      %v676 = vadd.f32 0.0, %v675
      %v677 = vpop.f32.mrf.mxu0
      %678 = vmatprep.mubr.f32.mxu0 0.0
      %679 = vmatmul.mubr.f32.gmra.mxu0 %v522
      %v680 = vpop.f32.mrf.mxu0
      %v681 = vadd.f32 0.0, %v680
      %v682 = vpop.f32.mrf.mxu0
      %683 = vmatprep.mubr.f32.mxu0 0.0
      %684 = vmatmul.mubr.f32.gmra.mxu0 %v524
      %v685 = vpop.f32.mrf.mxu0
      %v686 = vadd.f32 0.0, %v685
      %v687 = vpop.f32.mrf.mxu0
      %688 = vmatprep.mubr.f32.mxu0 0.0
      %689 = vmatmul.mubr.f32.gmra.mxu0 %v526
      %v690 = vpop.f32.mrf.mxu0
      %v691 = vadd.f32 0.0, %v690
      %v692 = vpop.f32.mrf.mxu0
      %693 = vmatprep.mubr.f32.mxu0 0.0
      %694 = vmatmul.mubr.f32.gmra.mxu0 %v528
      %v695 = vpop.f32.mrf.mxu0
      %v696 = vadd.f32 0.0, %v695
      %v697 = vpop.f32.mrf.mxu0
      %698 = vmatprep.mubr.f32.mxu0 0.0
      %699 = vmatmul.mubr.f32.gmra.mxu0 %v530
      %v700 = vpop.f32.mrf.mxu0
      %v701 = vadd.f32 0.0, %v700
      %v702 = vpop.f32.mrf.mxu0
      %703 = vmatprep.mubr.f32.mxu0 0.0
      %704 = vmatmul.mubr.f32.gmra.mxu0 %v532
      %v705 = vpop.f32.mrf.mxu0
      %v706 = vadd.f32 0.0, %v705
      %v707 = vpop.f32.mrf.mxu0
      %708 = vmatprep.mubr.f32.mxu0 0.0
      %709 = vmatmul.mubr.f32.gmra.mxu0 %v534
      %v710 = vpop.f32.mrf.mxu0
      %v711 = vadd.f32 0.0, %v710
      %v712 = vpop.f32.mrf.mxu0
      %713 = vmatprep.mubr.f32.mxu0 0.0
      %714 = vmatmul.mubr.f32.gmra.mxu0 %v536
      %v715 = vpop.f32.mrf.mxu0
      %v716 = vadd.f32 0.0, %v715
      %v717 = vpop.f32.mrf.mxu0
      %718 = vmatprep.mubr.f32.mxu0 0.0
      %719 = vmatmul.mubr.f32.gmra.mxu0 %v538
      %v720 = vpop.f32.mrf.mxu0
      %v721 = vadd.f32 0.0, %v720
      %v722 = vpop.f32.mrf.mxu0
      %723 = vmatprep.mubr.f32.mxu0 0.0
      %724 = vmatmul.mubr.f32.gmra.mxu0 %v540
      %v725 = vpop.f32.mrf.mxu0
      %v726 = vadd.f32 0.0, %v725
      %v727 = vpop.f32.mrf.mxu0
      %728 = vmatprep.mubr.f32.mxu0 0.0
      %729 = vmatmul.mubr.f32.gmra.mxu0 %v542
      %v730 = vpop.f32.mrf.mxu0
      %v731 = vadd.f32 0.0, %v730
      %v732 = vpop.f32.mrf.mxu0
      %733 = vmatprep.mubr.f32.mxu0 0.0
      %734 = vmatmul.mubr.f32.gmra.mxu0 %v544
      %v735 = vpop.f32.mrf.mxu0
      %v736 = vadd.f32 0.0, %v735
      %v737 = vpop.f32.mrf.mxu0
      %738 = vmatprep.mubr.f32.mxu0 0.0
      %739 = vmatmul.mubr.f32.gmra.mxu0 %v546
      %v740 = vpop.f32.mrf.mxu0
      %v741 = vadd.f32 0.0, %v740
      %v742 = vpop.f32.mrf.mxu0
      %743 = vmatprep.mubr.f32.mxu0 0.0
      %744 = vmatmul.mubr.f32.gmra.mxu0 %v548
      %v745 = vpop.f32.mrf.mxu0
      %v746 = vadd.f32 0.0, %v745
      %v747 = vpop.f32.mrf.mxu0
      %748 = vmatprep.mubr.f32.mxu0 0.0
      %749 = vmatmul.mubr.f32.gmra.mxu0 %v550
      %v750 = vpop.f32.mrf.mxu0
      %v751 = vadd.f32 0.0, %v750
      %v752 = vpop.f32.mrf.mxu0
      %753 = vmatprep.mubr.f32.mxu0 0.0
      %754 = vmatmul.mubr.f32.gmra.mxu0 %v552
      %v755 = vpop.f32.mrf.mxu0
      %v756 = vadd.f32 0.0, %v755
      %v757 = vpop.f32.mrf.mxu0
      %758 = vmatprep.mubr.f32.mxu0 0.0
      %759 = vmatmul.mubr.f32.gmra.mxu0 %v554
      %v760 = vpop.f32.mrf.mxu0
      %v761 = vadd.f32 0.0, %v760
      %v762 = vpop.f32.mrf.mxu0
      %763 = vmatprep.mubr.f32.mxu0 0.0
      %764 = vmatmul.mubr.f32.gmra.mxu0 %v556
      %v765 = vpop.f32.mrf.mxu0
      %v766 = vadd.f32 0.0, %v765
      %v767 = vpop.f32.mrf.mxu0
      %768 = vmatprep.mubr.f32.mxu0 0.0
      %769 = vmatmul.mubr.f32.gmra.mxu0 %v558
      %v770 = vpop.f32.mrf.mxu0
      %v771 = vadd.f32 0.0, %v770
      %v772 = vpop.f32.mrf.mxu0
      %773 = vmatprep.mubr.f32.mxu0 0.0
      %774 = vmatmul.mubr.f32.gmra.mxu0 %v560
      %v775 = vpop.f32.mrf.mxu0
      %v776 = vadd.f32 0.0, %v775
      %v777 = vpop.f32.mrf.mxu0
      %778 = vmatprep.mubr.f32.mxu0 0.0
      %779 = vmatmul.mubr.f32.gmra.mxu0 %v562
      %v780 = vpop.f32.mrf.mxu0
      %v781 = vadd.f32 0.0, %v780
      %v782 = vpop.f32.mrf.mxu0
      %783 = vmatprep.mubr.f32.mxu0 0.0
      %784 = vmatmul.mubr.f32.gmra.mxu0 %v564
      %v785 = vpop.f32.mrf.mxu0
      %v786 = vadd.f32 0.0, %v785
      %v787 = vpop.f32.mrf.mxu0
      %788 = vmatprep.mubr.f32.mxu0 0.0
      %789 = vmatmul.mubr.f32.gmra.mxu0 %v566
      %v790 = vpop.f32.mrf.mxu0
      %v791 = vadd.f32 0.0, %v790
      %v792 = vpop.f32.mrf.mxu0
      %793 = vmatprep.mubr.f32.mxu0 0.0
      %794 = vmatmul.mubr.f32.gmra.mxu0 %v568
      %v795 = vpop.f32.mrf.mxu0
      %v796 = vadd.f32 0.0, %v795
      %v797 = vpop.f32.mrf.mxu0
      %798 = vdwg.mxu0
      %v799 = vsel %vm215, %v326, 0
      %v801 = vsel %vm215, %v327, 0
      %v803 = vsel %vm215, %v329, 0
      %v805 = vsel %vm215, %v330, 0
      %v807 = vsel %vm215, %v332, 0
      %v809 = vsel %vm215, %v333, 0
      %v811 = vsel %vm215, %v335, 0
      %v813 = vsel %vm215, %v336, 0
      %v815 = vsel %vm215, %v338, 0
      %v817 = vsel %vm215, %v339, 0
      %v819 = vsel %vm215, %v341, 0
      %v821 = vsel %vm215, %v342, 0
      %v823 = vsel %vm215, %v344, 0
      %v825 = vsel %vm215, %v345, 0
      %v827 = vsel %vm215, %v347, 0
      %v829 = vsel %vm215, %v348, 0
      %v831 = vsel %vm215, %v350, 0
      %v833 = vsel %vm215, %v351, 0
      %v835 = vsel %vm215, %v353, 0
      %v837 = vsel %vm215, %v354, 0
      %v839 = vsel %vm215, %v356, 0
      %v841 = vsel %vm215, %v357, 0
      %v843 = vsel %vm215, %v359, 0
      %v845 = vsel %vm215, %v360, 0
      %v847 = vsel %vm215, %v362, 0
      %v849 = vsel %vm215, %v363, 0
      %v851 = vsel %vm215, %v365, 0
      %v853 = vsel %vm215, %v366, 0
      %v855 = vsel %vm215, %v368, 0
      %v857 = vsel %vm215, %v369, 0
      %v859 = vsel %vm215, %v371, 0
      %v861 = vsel %vm215, %v372, 0
      %v864 = vsel %vm570, %v374, 0
      %866 = vmatprep.subr.mxu0 0.0
      %867 = vmatpush1.msra.mxu0 0.0
      %868 = vmatprep.subr.mxu0 0.0
      %869 = vmatpush1.msra.mxu0 0.0
      %870 = vmatprep.subr.mxu0 0.0
      %871 = vmatpush1.msra.mxu0 0.0
      %872 = vmatprep.subr.mxu0 0.0
      %873 = vmatpush1.msra.mxu0 0.0
      %874 = vmatprep.subr.mxu0 0.0
      %875 = vmatpush1.msra.mxu0 0.0
      %876 = vmatprep.subr.mxu0 0.0
      %877 = vmatpush1.msra.mxu0 0.0
      %878 = vmatprep.subr.mxu0 0.0
      %879 = vmatpush1.msra.mxu0 0.0
      %880 = vmatprep.subr.mxu0 0.0
      %881 = vmatpush1.msra.mxu0 0.0
      %882 = vmatprep.subr.mxu0 0.0
      %883 = vmatpush1.msra.mxu0 0.0
      %884 = vmatprep.subr.mxu0 0.0
      %885 = vmatpush1.msra.mxu0 0.0
      %886 = vmatprep.subr.mxu0 0.0
      %887 = vmatpush1.msra.mxu0 0.0
      %888 = vmatprep.subr.mxu0 0.0
      %889 = vmatpush1.msra.mxu0 0.0
      %890 = vmatprep.subr.mxu0 0.0
      %891 = vmatpush1.msra.mxu0 0.0
      %892 = vmatprep.subr.mxu0 0.0
      %893 = vmatpush1.msra.mxu0 0.0
      %894 = vmatprep.subr.mxu0 0.0
      %895 = vmatpush1.msra.mxu0 0.0
      %896 = vmatprep.subr.mxu0 0.0
      %897 = vmatpush1.msra.mxu0 %v864
      %898 = vmatprep.subr.mxu0 0.0
      %899 = vmatpush2.msra.mxu0 0.0
      %900 = vmatprep.subr.mxu0 0.0
      %901 = vmatpush2.msra.mxu0 0.0
      %902 = vmatprep.subr.mxu0 0.0
      %903 = vmatpush2.msra.mxu0 0.0
      %904 = vmatprep.subr.mxu0 0.0
      %905 = vmatpush2.msra.mxu0 0.0
      %906 = vmatprep.subr.mxu0 0.0
      %907 = vmatpush2.msra.mxu0 0.0
      %908 = vmatprep.subr.mxu0 0.0
      %909 = vmatpush2.msra.mxu0 0.0
      %910 = vmatprep.subr.mxu0 0.0
      %911 = vmatpush2.msra.mxu0 0.0
      %912 = vmatprep.subr.mxu0 0.0
      %913 = vmatpush2.msra.mxu0 0.0
      %914 = vmatprep.subr.mxu0 0.0
      %915 = vmatpush2.msra.mxu0 0.0
      %916 = vmatprep.subr.mxu0 0.0
      %917 = vmatpush2.msra.mxu0 0.0
      %918 = vmatprep.subr.mxu0 0.0
      %919 = vmatpush2.msra.mxu0 0.0
      %920 = vmatprep.subr.mxu0 0.0
      %921 = vmatpush2.msra.mxu0 0.0
      %922 = vmatprep.subr.mxu0 0.0
      %923 = vmatpush2.msra.mxu0 0.0
      %924 = vmatprep.subr.mxu0 0.0
      %925 = vmatpush2.msra.mxu0 0.0
      %926 = vmatprep.subr.mxu0 0.0
      %927 = vmatpush2.msra.mxu0 0.0
      %928 = vmatprep.subr.mxu0 0.0
      %929 = vmatpush2.msra.mxu0 0.0
      %930 = vmatprep.mubr.f32.mxu0 0.0
      %931 = vmatmul.mubr.f32.gmra.mxu0 %v799
      %v932 = vpop.f32.mrf.mxu0
      %v933 = vadd.f32 %v641, %v932
      %v934 = vpop.f32.mrf.mxu0
      %935 = vmatprep.mubr.f32.mxu0 0.0
      %936 = vmatmul.mubr.f32.gmra.mxu0 %v801
      %v937 = vpop.f32.mrf.mxu0
      %v938 = vadd.f32 %v646, %v937
      %v939 = vpop.f32.mrf.mxu0
      %940 = vmatprep.mubr.f32.mxu0 0.0
      %941 = vmatmul.mubr.f32.gmra.mxu0 %v803
      %v942 = vpop.f32.mrf.mxu0
      %v943 = vadd.f32 %v651, %v942
      %v944 = vpop.f32.mrf.mxu0
      %945 = vmatprep.mubr.f32.mxu0 0.0
      %946 = vmatmul.mubr.f32.gmra.mxu0 %v805
      %v947 = vpop.f32.mrf.mxu0
      %v948 = vadd.f32 %v656, %v947
      %v949 = vpop.f32.mrf.mxu0
      %950 = vmatprep.mubr.f32.mxu0 0.0
      %951 = vmatmul.mubr.f32.gmra.mxu0 %v807
      %v952 = vpop.f32.mrf.mxu0
      %v953 = vadd.f32 %v661, %v952
      %v954 = vpop.f32.mrf.mxu0
      %955 = vmatprep.mubr.f32.mxu0 0.0
      %956 = vmatmul.mubr.f32.gmra.mxu0 %v809
      %v957 = vpop.f32.mrf.mxu0
      %v958 = vadd.f32 %v666, %v957
      %v959 = vpop.f32.mrf.mxu0
      %960 = vmatprep.mubr.f32.mxu0 0.0
      %961 = vmatmul.mubr.f32.gmra.mxu0 %v811
      %v962 = vpop.f32.mrf.mxu0
      %v963 = vadd.f32 %v671, %v962
      %v964 = vpop.f32.mrf.mxu0
      %965 = vmatprep.mubr.f32.mxu0 0.0
      %966 = vmatmul.mubr.f32.gmra.mxu0 %v813
      %v967 = vpop.f32.mrf.mxu0
      %v968 = vadd.f32 %v676, %v967
      %v969 = vpop.f32.mrf.mxu0
      %970 = vmatprep.mubr.f32.mxu0 0.0
      %971 = vmatmul.mubr.f32.gmra.mxu0 %v815
      %v972 = vpop.f32.mrf.mxu0
      %v973 = vadd.f32 %v681, %v972
      %v974 = vpop.f32.mrf.mxu0
      %975 = vmatprep.mubr.f32.mxu0 0.0
      %976 = vmatmul.mubr.f32.gmra.mxu0 %v817
      %v977 = vpop.f32.mrf.mxu0
      %v978 = vadd.f32 %v686, %v977
      %v979 = vpop.f32.mrf.mxu0
      %980 = vmatprep.mubr.f32.mxu0 0.0
      %981 = vmatmul.mubr.f32.gmra.mxu0 %v819
      %v982 = vpop.f32.mrf.mxu0
      %v983 = vadd.f32 %v691, %v982
      %v984 = vpop.f32.mrf.mxu0
      %985 = vmatprep.mubr.f32.mxu0 0.0
      %986 = vmatmul.mubr.f32.gmra.mxu0 %v821
      %v987 = vpop.f32.mrf.mxu0
      %v988 = vadd.f32 %v696, %v987
      %v989 = vpop.f32.mrf.mxu0
      %990 = vmatprep.mubr.f32.mxu0 0.0
      %991 = vmatmul.mubr.f32.gmra.mxu0 %v823
      %v992 = vpop.f32.mrf.mxu0
      %v993 = vadd.f32 %v701, %v992
      %v994 = vpop.f32.mrf.mxu0
      %995 = vmatprep.mubr.f32.mxu0 0.0
      %996 = vmatmul.mubr.f32.gmra.mxu0 %v825
      %v997 = vpop.f32.mrf.mxu0
      %v998 = vadd.f32 %v706, %v997
      %v999 = vpop.f32.mrf.mxu0
      %1000 = vmatprep.mubr.f32.mxu0 0.0
      %1001 = vmatmul.mubr.f32.gmra.mxu0 %v827
      %v1002 = vpop.f32.mrf.mxu0
      %v1003 = vadd.f32 %v711, %v1002
      %v1004 = vpop.f32.mrf.mxu0
      %1005 = vmatprep.mubr.f32.mxu0 0.0
      %1006 = vmatmul.mubr.f32.gmra.mxu0 %v829
      %v1007 = vpop.f32.mrf.mxu0
      %v1008 = vadd.f32 %v716, %v1007
      %v1009 = vpop.f32.mrf.mxu0
      %1010 = vmatprep.mubr.f32.mxu0 0.0
      %1011 = vmatmul.mubr.f32.gmra.mxu0 %v831
      %v1012 = vpop.f32.mrf.mxu0
      %v1013 = vadd.f32 %v721, %v1012
      %v1014 = vpop.f32.mrf.mxu0
      %1015 = vmatprep.mubr.f32.mxu0 0.0
      %1016 = vmatmul.mubr.f32.gmra.mxu0 %v833
      %v1017 = vpop.f32.mrf.mxu0
      %v1018 = vadd.f32 %v726, %v1017
      %v1019 = vpop.f32.mrf.mxu0
      %1020 = vmatprep.mubr.f32.mxu0 0.0
      %1021 = vmatmul.mubr.f32.gmra.mxu0 %v835
      %v1022 = vpop.f32.mrf.mxu0
      %v1023 = vadd.f32 %v731, %v1022
      %v1024 = vpop.f32.mrf.mxu0
      %1025 = vmatprep.mubr.f32.mxu0 0.0
      %1026 = vmatmul.mubr.f32.gmra.mxu0 %v837
      %v1027 = vpop.f32.mrf.mxu0
      %v1028 = vadd.f32 %v736, %v1027
      %v1029 = vpop.f32.mrf.mxu0
      %1030 = vmatprep.mubr.f32.mxu0 0.0
      %1031 = vmatmul.mubr.f32.gmra.mxu0 %v839
      %v1032 = vpop.f32.mrf.mxu0
      %v1033 = vadd.f32 %v741, %v1032
      %v1034 = vpop.f32.mrf.mxu0
      %1035 = vmatprep.mubr.f32.mxu0 0.0
      %1036 = vmatmul.mubr.f32.gmra.mxu0 %v841
      %v1037 = vpop.f32.mrf.mxu0
      %v1038 = vadd.f32 %v746, %v1037
      %v1039 = vpop.f32.mrf.mxu0
      %1040 = vmatprep.mubr.f32.mxu0 0.0
      %1041 = vmatmul.mubr.f32.gmra.mxu0 %v843
      %v1042 = vpop.f32.mrf.mxu0
      %v1043 = vadd.f32 %v751, %v1042
      %v1044 = vpop.f32.mrf.mxu0
      %1045 = vmatprep.mubr.f32.mxu0 0.0
      %1046 = vmatmul.mubr.f32.gmra.mxu0 %v845
      %v1047 = vpop.f32.mrf.mxu0
      %v1048 = vadd.f32 %v756, %v1047
      %v1049 = vpop.f32.mrf.mxu0
      %1050 = vmatprep.mubr.f32.mxu0 0.0
      %1051 = vmatmul.mubr.f32.gmra.mxu0 %v847
      %v1052 = vpop.f32.mrf.mxu0
      %v1053 = vadd.f32 %v761, %v1052
      %v1054 = vpop.f32.mrf.mxu0
      %1055 = vmatprep.mubr.f32.mxu0 0.0
      %1056 = vmatmul.mubr.f32.gmra.mxu0 %v849
      %v1057 = vpop.f32.mrf.mxu0
      %v1058 = vadd.f32 %v766, %v1057
      %v1059 = vpop.f32.mrf.mxu0
      %1060 = vmatprep.mubr.f32.mxu0 0.0
      %1061 = vmatmul.mubr.f32.gmra.mxu0 %v851
      %v1062 = vpop.f32.mrf.mxu0
      %v1063 = vadd.f32 %v771, %v1062
      %v1064 = vpop.f32.mrf.mxu0
      %1065 = vmatprep.mubr.f32.mxu0 0.0
      %1066 = vmatmul.mubr.f32.gmra.mxu0 %v853
      %v1067 = vpop.f32.mrf.mxu0
      %v1068 = vadd.f32 %v776, %v1067
      %v1069 = vpop.f32.mrf.mxu0
      %1070 = vmatprep.mubr.f32.mxu0 0.0
      %1071 = vmatmul.mubr.f32.gmra.mxu0 %v855
      %v1072 = vpop.f32.mrf.mxu0
      %v1073 = vadd.f32 %v781, %v1072
      %v1074 = vpop.f32.mrf.mxu0
      %1075 = vmatprep.mubr.f32.mxu0 0.0
      %1076 = vmatmul.mubr.f32.gmra.mxu0 %v857
      %v1077 = vpop.f32.mrf.mxu0
      %v1078 = vadd.f32 %v786, %v1077
      %v1079 = vpop.f32.mrf.mxu0
      %1080 = vmatprep.mubr.f32.mxu0 0.0
      %1081 = vmatmul.mubr.f32.gmra.mxu0 %v859
      %v1082 = vpop.f32.mrf.mxu0
      %v1083 = vadd.f32 %v791, %v1082
      %v1084 = vpop.f32.mrf.mxu0
      %1085 = vmatprep.mubr.f32.mxu0 0.0
      %1086 = vmatmul.mubr.f32.gmra.mxu0 %v861
      %v1087 = vpop.f32.mrf.mxu0
      %v1088 = vadd.f32 %v796, %v1087
      %v1089 = vpop.f32.mrf.mxu0
      %1090 = vdwg.mxu0
      %vm1091 = vcmask 1045504
      %v1092 = vrot.slane %v326, 2
      %v1093 = vrot.slane %v327, 2
      %v1094 = vsel %vm1091, %v1092, %v1093
      %v1095 = vrot.slane %v328, 2
      %v1096 = vsel %vm1091, %v1093, %v1095
      %v1097 = vrot.slane %v329, 2
      %v1098 = vrot.slane %v330, 2
      %v1099 = vsel %vm1091, %v1097, %v1098
      %v1100 = vrot.slane %v331, 2
      %v1101 = vsel %vm1091, %v1098, %v1100
      %v1102 = vrot.slane %v332, 2
      %v1103 = vrot.slane %v333, 2
      %v1104 = vsel %vm1091, %v1102, %v1103
      %v1105 = vrot.slane %v334, 2
      %v1106 = vsel %vm1091, %v1103, %v1105
      %v1107 = vrot.slane %v335, 2
      %v1108 = vrot.slane %v336, 2
      %v1109 = vsel %vm1091, %v1107, %v1108
      %v1110 = vrot.slane %v337, 2
      %v1111 = vsel %vm1091, %v1108, %v1110
      %v1112 = vrot.slane %v338, 2
      %v1113 = vrot.slane %v339, 2
      %v1114 = vsel %vm1091, %v1112, %v1113
      %v1115 = vrot.slane %v340, 2
      %v1116 = vsel %vm1091, %v1113, %v1115
      %v1117 = vrot.slane %v341, 2
      %v1118 = vrot.slane %v342, 2
      %v1119 = vsel %vm1091, %v1117, %v1118
      %v1120 = vrot.slane %v343, 2
      %v1121 = vsel %vm1091, %v1118, %v1120
      %v1122 = vrot.slane %v344, 2
      %v1123 = vrot.slane %v345, 2
      %v1124 = vsel %vm1091, %v1122, %v1123
      %v1125 = vrot.slane %v346, 2
      %v1126 = vsel %vm1091, %v1123, %v1125
      %v1127 = vrot.slane %v347, 2
      %v1128 = vrot.slane %v348, 2
      %v1129 = vsel %vm1091, %v1127, %v1128
      %v1130 = vrot.slane %v349, 2
      %v1131 = vsel %vm1091, %v1128, %v1130
      %v1132 = vrot.slane %v350, 2
      %v1133 = vrot.slane %v351, 2
      %v1134 = vsel %vm1091, %v1132, %v1133
      %v1135 = vrot.slane %v352, 2
      %v1136 = vsel %vm1091, %v1133, %v1135
      %v1137 = vrot.slane %v353, 2
      %v1138 = vrot.slane %v354, 2
      %v1139 = vsel %vm1091, %v1137, %v1138
      %v1140 = vrot.slane %v355, 2
      %v1141 = vsel %vm1091, %v1138, %v1140
      %v1142 = vrot.slane %v356, 2
      %v1143 = vrot.slane %v357, 2
      %v1144 = vsel %vm1091, %v1142, %v1143
      %v1145 = vrot.slane %v358, 2
      %v1146 = vsel %vm1091, %v1143, %v1145
      %v1147 = vrot.slane %v359, 2
      %v1148 = vrot.slane %v360, 2
      %v1149 = vsel %vm1091, %v1147, %v1148
      %v1150 = vrot.slane %v361, 2
      %v1151 = vsel %vm1091, %v1148, %v1150
      %v1152 = vrot.slane %v362, 2
      %v1153 = vrot.slane %v363, 2
      %v1154 = vsel %vm1091, %v1152, %v1153
      %v1155 = vrot.slane %v364, 2
      %v1156 = vsel %vm1091, %v1153, %v1155
      %v1157 = vrot.slane %v365, 2
      %v1158 = vrot.slane %v366, 2
      %v1159 = vsel %vm1091, %v1157, %v1158
      %v1160 = vrot.slane %v367, 2
      %v1161 = vsel %vm1091, %v1158, %v1160
      %v1162 = vrot.slane %v368, 2
      %v1163 = vrot.slane %v369, 2
      %v1164 = vsel %vm1091, %v1162, %v1163
      %v1165 = vrot.slane %v370, 2
      %v1166 = vsel %vm1091, %v1163, %v1165
      %v1167 = vrot.slane %v371, 2
      %v1168 = vrot.slane %v372, 2
      %v1169 = vsel %vm1091, %v1167, %v1168
      %v1170 = vrot.slane %v373, 2
      %v1171 = vsel %vm1091, %v1168, %v1170
      %s1172 = scalar_lea.vmem %s1, 8
      %v1173 = vld [vmem:[%s1172] sm:$0xf]
      %v1174 = vsel %vm215, %v1094, 0
      %v1176 = vsel %vm215, %v1096, 0
      %v1178 = vsel %vm215, %v1099, 0
      %v1180 = vsel %vm215, %v1101, 0
      %v1182 = vsel %vm215, %v1104, 0
      %v1184 = vsel %vm215, %v1106, 0
      %v1186 = vsel %vm215, %v1109, 0
      %v1188 = vsel %vm215, %v1111, 0
      %v1190 = vsel %vm215, %v1114, 0
      %v1192 = vsel %vm215, %v1116, 0
      %v1194 = vsel %vm215, %v1119, 0
      %v1196 = vsel %vm215, %v1121, 0
      %v1198 = vsel %vm215, %v1124, 0
      %v1200 = vsel %vm215, %v1126, 0
      %v1202 = vsel %vm215, %v1129, 0
      %v1204 = vsel %vm215, %v1131, 0
      %v1206 = vsel %vm215, %v1134, 0
      %v1208 = vsel %vm215, %v1136, 0
      %v1210 = vsel %vm215, %v1139, 0
      %v1212 = vsel %vm215, %v1141, 0
      %v1214 = vsel %vm215, %v1144, 0
      %v1216 = vsel %vm215, %v1146, 0
      %v1218 = vsel %vm215, %v1149, 0
      %v1220 = vsel %vm215, %v1151, 0
      %v1222 = vsel %vm215, %v1154, 0
      %v1224 = vsel %vm215, %v1156, 0
      %v1226 = vsel %vm215, %v1159, 0
      %v1228 = vsel %vm215, %v1161, 0
      %v1230 = vsel %vm215, %v1164, 0
      %v1232 = vsel %vm215, %v1166, 0
      %v1234 = vsel %vm215, %v1169, 0
      %v1236 = vsel %vm215, %v1171, 0
      %v1239 = vsel %vm570, %v1173, 0
      %1241 = vmatprep.subr.mxu0 0.0
      %1242 = vmatpush1.msra.mxu0 0.0
      %1243 = vmatprep.subr.mxu0 0.0
      %1244 = vmatpush1.msra.mxu0 0.0
      %1245 = vmatprep.subr.mxu0 0.0
      %1246 = vmatpush1.msra.mxu0 0.0
      %1247 = vmatprep.subr.mxu0 0.0
      %1248 = vmatpush1.msra.mxu0 0.0
      %1249 = vmatprep.subr.mxu0 0.0
      %1250 = vmatpush1.msra.mxu0 0.0
      %1251 = vmatprep.subr.mxu0 0.0
      %1252 = vmatpush1.msra.mxu0 0.0
      %1253 = vmatprep.subr.mxu0 0.0
      %1254 = vmatpush1.msra.mxu0 0.0
      %1255 = vmatprep.subr.mxu0 0.0
      %1256 = vmatpush1.msra.mxu0 0.0
      %1257 = vmatprep.subr.mxu0 0.0
      %1258 = vmatpush1.msra.mxu0 0.0
      %1259 = vmatprep.subr.mxu0 0.0
      %1260 = vmatpush1.msra.mxu0 0.0
      %1261 = vmatprep.subr.mxu0 0.0
      %1262 = vmatpush1.msra.mxu0 0.0
      %1263 = vmatprep.subr.mxu0 0.0
      %1264 = vmatpush1.msra.mxu0 0.0
      %1265 = vmatprep.subr.mxu0 0.0
      %1266 = vmatpush1.msra.mxu0 0.0
      %1267 = vmatprep.subr.mxu0 0.0
      %1268 = vmatpush1.msra.mxu0 0.0
      %1269 = vmatprep.subr.mxu0 0.0
      %1270 = vmatpush1.msra.mxu0 0.0
      %1271 = vmatprep.subr.mxu0 0.0
      %1272 = vmatpush1.msra.mxu0 %v1239
      %1273 = vmatprep.subr.mxu0 0.0
      %1274 = vmatpush2.msra.mxu0 0.0
      %1275 = vmatprep.subr.mxu0 0.0
      %1276 = vmatpush2.msra.mxu0 0.0
      %1277 = vmatprep.subr.mxu0 0.0
      %1278 = vmatpush2.msra.mxu0 0.0
      %1279 = vmatprep.subr.mxu0 0.0
      %1280 = vmatpush2.msra.mxu0 0.0
      %1281 = vmatprep.subr.mxu0 0.0
      %1282 = vmatpush2.msra.mxu0 0.0
      %1283 = vmatprep.subr.mxu0 0.0
      %1284 = vmatpush2.msra.mxu0 0.0
      %1285 = vmatprep.subr.mxu0 0.0
      %1286 = vmatpush2.msra.mxu0 0.0
      %1287 = vmatprep.subr.mxu0 0.0
      %1288 = vmatpush2.msra.mxu0 0.0
      %1289 = vmatprep.subr.mxu0 0.0
      %1290 = vmatpush2.msra.mxu0 0.0
      %1291 = vmatprep.subr.mxu0 0.0
      %1292 = vmatpush2.msra.mxu0 0.0
      %1293 = vmatprep.subr.mxu0 0.0
      %1294 = vmatpush2.msra.mxu0 0.0
      %1295 = vmatprep.subr.mxu0 0.0
      %1296 = vmatpush2.msra.mxu0 0.0
      %1297 = vmatprep.subr.mxu0 0.0
      %1298 = vmatpush2.msra.mxu0 0.0
      %1299 = vmatprep.subr.mxu0 0.0
      %1300 = vmatpush2.msra.mxu0 0.0
      %1301 = vmatprep.subr.mxu0 0.0
      %1302 = vmatpush2.msra.mxu0 0.0
      %1303 = vmatprep.subr.mxu0 0.0
      %1304 = vmatpush2.msra.mxu0 0.0
      %1305 = vmatprep.mubr.f32.mxu0 0.0
      %1306 = vmatmul.mubr.f32.gmra.mxu0 %v1174
      %v1307 = vpop.f32.mrf.mxu0
      %v1308 = vadd.f32 0.0, %v1307
      %v1309 = vpop.f32.mrf.mxu0
      %1310 = vmatprep.mubr.f32.mxu0 0.0
      %1311 = vmatmul.mubr.f32.gmra.mxu0 %v1176
      %v1312 = vpop.f32.mrf.mxu0
      %v1313 = vadd.f32 0.0, %v1312
      %v1314 = vpop.f32.mrf.mxu0
      %1315 = vmatprep.mubr.f32.mxu0 0.0
      %1316 = vmatmul.mubr.f32.gmra.mxu0 %v1178
      %v1317 = vpop.f32.mrf.mxu0
      %v1318 = vadd.f32 0.0, %v1317
      %v1319 = vpop.f32.mrf.mxu0
      %1320 = vmatprep.mubr.f32.mxu0 0.0
      %1321 = vmatmul.mubr.f32.gmra.mxu0 %v1180
      %v1322 = vpop.f32.mrf.mxu0
      %v1323 = vadd.f32 0.0, %v1322
      %v1324 = vpop.f32.mrf.mxu0
      %1325 = vmatprep.mubr.f32.mxu0 0.0
      %1326 = vmatmul.mubr.f32.gmra.mxu0 %v1182
      %v1327 = vpop.f32.mrf.mxu0
      %v1328 = vadd.f32 0.0, %v1327
      %v1329 = vpop.f32.mrf.mxu0
      %1330 = vmatprep.mubr.f32.mxu0 0.0
      %1331 = vmatmul.mubr.f32.gmra.mxu0 %v1184
      %v1332 = vpop.f32.mrf.mxu0
      %v1333 = vadd.f32 0.0, %v1332
      %v1334 = vpop.f32.mrf.mxu0
      %1335 = vmatprep.mubr.f32.mxu0 0.0
      %1336 = vmatmul.mubr.f32.gmra.mxu0 %v1186
      %v1337 = vpop.f32.mrf.mxu0
      %v1338 = vadd.f32 0.0, %v1337
      %v1339 = vpop.f32.mrf.mxu0
      %1340 = vmatprep.mubr.f32.mxu0 0.0
      %1341 = vmatmul.mubr.f32.gmra.mxu0 %v1188
      %v1342 = vpop.f32.mrf.mxu0
      %v1343 = vadd.f32 0.0, %v1342
      %v1344 = vpop.f32.mrf.mxu0
      %1345 = vmatprep.mubr.f32.mxu0 0.0
      %1346 = vmatmul.mubr.f32.gmra.mxu0 %v1190
      %v1347 = vpop.f32.mrf.mxu0
      %v1348 = vadd.f32 0.0, %v1347
      %v1349 = vpop.f32.mrf.mxu0
      %1350 = vmatprep.mubr.f32.mxu0 0.0
      %1351 = vmatmul.mubr.f32.gmra.mxu0 %v1192
      %v1352 = vpop.f32.mrf.mxu0
      %v1353 = vadd.f32 0.0, %v1352
      %v1354 = vpop.f32.mrf.mxu0
      %1355 = vmatprep.mubr.f32.mxu0 0.0
      %1356 = vmatmul.mubr.f32.gmra.mxu0 %v1194
      %v1357 = vpop.f32.mrf.mxu0
      %v1358 = vadd.f32 0.0, %v1357
      %v1359 = vpop.f32.mrf.mxu0
      %1360 = vmatprep.mubr.f32.mxu0 0.0
      %1361 = vmatmul.mubr.f32.gmra.mxu0 %v1196
      %v1362 = vpop.f32.mrf.mxu0
      %v1363 = vadd.f32 0.0, %v1362
      %v1364 = vpop.f32.mrf.mxu0
      %1365 = vmatprep.mubr.f32.mxu0 0.0
      %1366 = vmatmul.mubr.f32.gmra.mxu0 %v1198
      %v1367 = vpop.f32.mrf.mxu0
      %v1368 = vadd.f32 0.0, %v1367
      %v1369 = vpop.f32.mrf.mxu0
      %1370 = vmatprep.mubr.f32.mxu0 0.0
      %1371 = vmatmul.mubr.f32.gmra.mxu0 %v1200
      %v1372 = vpop.f32.mrf.mxu0
      %v1373 = vadd.f32 0.0, %v1372
      %v1374 = vpop.f32.mrf.mxu0
      %1375 = vmatprep.mubr.f32.mxu0 0.0
      %1376 = vmatmul.mubr.f32.gmra.mxu0 %v1202
      %v1377 = vpop.f32.mrf.mxu0
      %v1378 = vadd.f32 0.0, %v1377
      %v1379 = vpop.f32.mrf.mxu0
      %1380 = vmatprep.mubr.f32.mxu0 0.0
      %1381 = vmatmul.mubr.f32.gmra.mxu0 %v1204
      %v1382 = vpop.f32.mrf.mxu0
      %v1383 = vadd.f32 0.0, %v1382
      %v1384 = vpop.f32.mrf.mxu0
      %1385 = vmatprep.mubr.f32.mxu0 0.0
      %1386 = vmatmul.mubr.f32.gmra.mxu0 %v1206
      %v1387 = vpop.f32.mrf.mxu0
      %v1388 = vadd.f32 0.0, %v1387
      %v1389 = vpop.f32.mrf.mxu0
      %1390 = vmatprep.mubr.f32.mxu0 0.0
      %1391 = vmatmul.mubr.f32.gmra.mxu0 %v1208
      %v1392 = vpop.f32.mrf.mxu0
      %v1393 = vadd.f32 0.0, %v1392
      %v1394 = vpop.f32.mrf.mxu0
      %1395 = vmatprep.mubr.f32.mxu0 0.0
      %1396 = vmatmul.mubr.f32.gmra.mxu0 %v1210
      %v1397 = vpop.f32.mrf.mxu0
      %v1398 = vadd.f32 0.0, %v1397
      %v1399 = vpop.f32.mrf.mxu0
      %1400 = vmatprep.mubr.f32.mxu0 0.0
      %1401 = vmatmul.mubr.f32.gmra.mxu0 %v1212
      %v1402 = vpop.f32.mrf.mxu0
      %v1403 = vadd.f32 0.0, %v1402
      %v1404 = vpop.f32.mrf.mxu0
      %1405 = vmatprep.mubr.f32.mxu0 0.0
      %1406 = vmatmul.mubr.f32.gmra.mxu0 %v1214
      %v1407 = vpop.f32.mrf.mxu0
      %v1408 = vadd.f32 0.0, %v1407
      %v1409 = vpop.f32.mrf.mxu0
      %1410 = vmatprep.mubr.f32.mxu0 0.0
      %1411 = vmatmul.mubr.f32.gmra.mxu0 %v1216
      %v1412 = vpop.f32.mrf.mxu0
      %v1413 = vadd.f32 0.0, %v1412
      %v1414 = vpop.f32.mrf.mxu0
      %1415 = vmatprep.mubr.f32.mxu0 0.0
      %1416 = vmatmul.mubr.f32.gmra.mxu0 %v1218
      %v1417 = vpop.f32.mrf.mxu0
      %v1418 = vadd.f32 0.0, %v1417
      %v1419 = vpop.f32.mrf.mxu0
      %1420 = vmatprep.mubr.f32.mxu0 0.0
      %1421 = vmatmul.mubr.f32.gmra.mxu0 %v1220
      %v1422 = vpop.f32.mrf.mxu0
      %v1423 = vadd.f32 0.0, %v1422
      %v1424 = vpop.f32.mrf.mxu0
      %1425 = vmatprep.mubr.f32.mxu0 0.0
      %1426 = vmatmul.mubr.f32.gmra.mxu0 %v1222
      %v1427 = vpop.f32.mrf.mxu0
      %v1428 = vadd.f32 0.0, %v1427
      %v1429 = vpop.f32.mrf.mxu0
      %1430 = vmatprep.mubr.f32.mxu0 0.0
      %1431 = vmatmul.mubr.f32.gmra.mxu0 %v1224
      %v1432 = vpop.f32.mrf.mxu0
      %v1433 = vadd.f32 0.0, %v1432
      %v1434 = vpop.f32.mrf.mxu0
      %1435 = vmatprep.mubr.f32.mxu0 0.0
      %1436 = vmatmul.mubr.f32.gmra.mxu0 %v1226
      %v1437 = vpop.f32.mrf.mxu0
      %v1438 = vadd.f32 0.0, %v1437
      %v1439 = vpop.f32.mrf.mxu0
      %1440 = vmatprep.mubr.f32.mxu0 0.0
      %1441 = vmatmul.mubr.f32.gmra.mxu0 %v1228
      %v1442 = vpop.f32.mrf.mxu0
      %v1443 = vadd.f32 0.0, %v1442
      %v1444 = vpop.f32.mrf.mxu0
      %1445 = vmatprep.mubr.f32.mxu0 0.0
      %1446 = vmatmul.mubr.f32.gmra.mxu0 %v1230
      %v1447 = vpop.f32.mrf.mxu0
      %v1448 = vadd.f32 0.0, %v1447
      %v1449 = vpop.f32.mrf.mxu0
      %1450 = vmatprep.mubr.f32.mxu0 0.0
      %1451 = vmatmul.mubr.f32.gmra.mxu0 %v1232
      %v1452 = vpop.f32.mrf.mxu0
      %v1453 = vadd.f32 0.0, %v1452
      %v1454 = vpop.f32.mrf.mxu0
      %1455 = vmatprep.mubr.f32.mxu0 0.0
      %1456 = vmatmul.mubr.f32.gmra.mxu0 %v1234
      %v1457 = vpop.f32.mrf.mxu0
      %v1458 = vadd.f32 0.0, %v1457
      %v1459 = vpop.f32.mrf.mxu0
      %1460 = vmatprep.mubr.f32.mxu0 0.0
      %1461 = vmatmul.mubr.f32.gmra.mxu0 %v1236
      %v1462 = vpop.f32.mrf.mxu0
      %v1463 = vadd.f32 0.0, %v1462
      %v1464 = vpop.f32.mrf.mxu0
      %1465 = vdwg.mxu0
      %v1466 = vadd.f32 %v933, %v1308
      %v1467 = vadd.f32 %v938, %v1313
      %v1468 = vadd.f32 %v943, %v1318
      %v1469 = vadd.f32 %v948, %v1323
      %v1470 = vadd.f32 %v953, %v1328
      %v1471 = vadd.f32 %v958, %v1333
      %v1472 = vadd.f32 %v963, %v1338
      %v1473 = vadd.f32 %v968, %v1343
      %v1474 = vadd.f32 %v973, %v1348
      %v1475 = vadd.f32 %v978, %v1353
      %v1476 = vadd.f32 %v983, %v1358
      %v1477 = vadd.f32 %v988, %v1363
      %v1478 = vadd.f32 %v993, %v1368
      %v1479 = vadd.f32 %v998, %v1373
      %v1480 = vadd.f32 %v1003, %v1378
      %v1481 = vadd.f32 %v1008, %v1383
      %v1482 = vadd.f32 %v1013, %v1388
      %v1483 = vadd.f32 %v1018, %v1393
      %v1484 = vadd.f32 %v1023, %v1398
      %v1485 = vadd.f32 %v1028, %v1403
      %v1486 = vadd.f32 %v1033, %v1408
      %v1487 = vadd.f32 %v1038, %v1413
      %v1488 = vadd.f32 %v1043, %v1418
      %v1489 = vadd.f32 %v1048, %v1423
      %v1490 = vadd.f32 %v1053, %v1428
      %v1491 = vadd.f32 %v1058, %v1433
      %v1492 = vadd.f32 %v1063, %v1438
      %v1493 = vadd.f32 %v1068, %v1443
      %v1494 = vadd.f32 %v1073, %v1448
      %v1495 = vadd.f32 %v1078, %v1453
      %v1496 = vadd.f32 %v1083, %v1458
      %v1497 = vadd.f32 %v1088, %v1463
      %v1498 = vld [vmem:[%s293] sm:$0xff]
      %v1499 = vld [vmem:[%s293 + $0x8] sm:$0xff]
      %v1500 = vld [vmem:[%s293 + $0x10] sm:$0x3]
      %v1501 = vld [vmem:[%s293 + $0x18] sm:$0xff]
      %v1502 = vld [vmem:[%s293 + $0x20] sm:$0xff]
      %v1503 = vld [vmem:[%s293 + $0x28] sm:$0x3]
      %v1504 = vld [vmem:[%s293 + $0x30] sm:$0xff]
      %v1505 = vld [vmem:[%s293 + $0x38] sm:$0xff]
      %v1506 = vld [vmem:[%s293 + $0x40] sm:$0x3]
      %v1507 = vld [vmem:[%s293 + $0x48] sm:$0xff]
      %v1508 = vld [vmem:[%s293 + $0x50] sm:$0xff]
      %v1509 = vld [vmem:[%s293 + $0x58] sm:$0x3]
      %v1510 = vld [vmem:[%s293 + $0x60] sm:$0xff]
      %v1511 = vld [vmem:[%s293 + $0x68] sm:$0xff]
      %v1512 = vld [vmem:[%s293 + $0x70] sm:$0x3]
      %v1513 = vld [vmem:[%s293 + $0x78] sm:$0xff]
      %v1514 = vld [vmem:[%s293 + $0x80] sm:$0xff]
      %v1515 = vld [vmem:[%s293 + $0x88] sm:$0x3]
      %v1516 = vld [vmem:[%s293 + $0x90] sm:$0xff]
      %v1517 = vld [vmem:[%s293 + $0x98] sm:$0xff]
      %v1518 = vld [vmem:[%s293 + $0xa0] sm:$0x3]
      %v1519 = vld [vmem:[%s293 + $0xa8] sm:$0xff]
      %v1520 = vld [vmem:[%s293 + $0xb0] sm:$0xff]
      %v1521 = vld [vmem:[%s293 + $0xb8] sm:$0x3]
      %v1522 = vld [vmem:[%s293 + $0xc0] sm:$0xff]
      %v1523 = vld [vmem:[%s293 + $0xc8] sm:$0xff]
      %v1524 = vld [vmem:[%s293 + $0xd0] sm:$0x3]
      %v1525 = vld [vmem:[%s293 + $0xd8] sm:$0xff]
      %v1526 = vld [vmem:[%s293 + $0xe0] sm:$0xff]
      %v1527 = vld [vmem:[%s293 + $0xe8] sm:$0x3]
      %v1528 = vld [vmem:[%s293 + $0xf0] sm:$0xff]
      %v1529 = vld [vmem:[%s293 + $0xf8] sm:$0xff]
      %v1530 = vld [vmem:[%s293 + $0x100] sm:$0x3]
      %v1531 = vld [vmem:[%s293 + $0x108] sm:$0xff]
      %v1532 = vld [vmem:[%s293 + $0x110] sm:$0xff]
      %v1533 = vld [vmem:[%s293 + $0x118] sm:$0x3]
      %v1534 = vld [vmem:[%s293 + $0x120] sm:$0xff]
      %v1535 = vld [vmem:[%s293 + $0x128] sm:$0xff]
      %v1536 = vld [vmem:[%s293 + $0x130] sm:$0x3]
      %v1537 = vld [vmem:[%s293 + $0x138] sm:$0xff]
      %v1538 = vld [vmem:[%s293 + $0x140] sm:$0xff]
      %v1539 = vld [vmem:[%s293 + $0x148] sm:$0x3]
      %v1540 = vld [vmem:[%s293 + $0x150] sm:$0xff]
      %v1541 = vld [vmem:[%s293 + $0x158] sm:$0xff]
      %v1542 = vld [vmem:[%s293 + $0x160] sm:$0x3]
      %v1543 = vld [vmem:[%s293 + $0x168] sm:$0xff]
      %v1544 = vld [vmem:[%s293 + $0x170] sm:$0xff]
      %v1545 = vld [vmem:[%s293 + $0x178] sm:$0x3]
      %s1546 = scalar_lea.vmem %s1, 12
      %v1547 = vld [vmem:[%s1546] sm:$0xf]
      %v1549 = vsel %vm215, %v1498, 0
      %v1552 = vsel %vm215, %v1499, 0
      %v1555 = vsel %vm215, %v1501, 0
      %v1558 = vsel %vm215, %v1502, 0
      %v1561 = vsel %vm215, %v1504, 0
      %v1564 = vsel %vm215, %v1505, 0
      %v1567 = vsel %vm215, %v1507, 0
      %v1570 = vsel %vm215, %v1508, 0
      %v1573 = vsel %vm215, %v1510, 0
      %v1576 = vsel %vm215, %v1511, 0
      %v1579 = vsel %vm215, %v1513, 0
      %v1582 = vsel %vm215, %v1514, 0
      %v1585 = vsel %vm215, %v1516, 0
      %v1588 = vsel %vm215, %v1517, 0
      %v1591 = vsel %vm215, %v1519, 0
      %v1594 = vsel %vm215, %v1520, 0
      %v1597 = vsel %vm215, %v1522, 0
      %v1600 = vsel %vm215, %v1523, 0
      %v1603 = vsel %vm215, %v1525, 0
      %v1606 = vsel %vm215, %v1526, 0
      %v1609 = vsel %vm215, %v1528, 0
      %v1612 = vsel %vm215, %v1529, 0
      %v1615 = vsel %vm215, %v1531, 0
      %v1618 = vsel %vm215, %v1532, 0
      %v1621 = vsel %vm215, %v1534, 0
      %v1624 = vsel %vm215, %v1535, 0
      %v1627 = vsel %vm215, %v1537, 0
      %v1630 = vsel %vm215, %v1538, 0
      %v1633 = vsel %vm215, %v1540, 0
      %v1636 = vsel %vm215, %v1541, 0
      %v1639 = vsel %vm215, %v1543, 0
      %v1642 = vsel %vm215, %v1544, 0
      %v1645 = vsel %vm570, %v1547, 0
      %1647 = vmatprep.subr.mxu0 0.0
      %1648 = vmatpush1.msra.mxu0 0.0
      %1649 = vmatprep.subr.mxu0 0.0
      %1650 = vmatpush1.msra.mxu0 0.0
      %1651 = vmatprep.subr.mxu0 0.0
      %1652 = vmatpush1.msra.mxu0 0.0
      %1653 = vmatprep.subr.mxu0 0.0
      %1654 = vmatpush1.msra.mxu0 0.0
      %1655 = vmatprep.subr.mxu0 0.0
      %1656 = vmatpush1.msra.mxu0 0.0
      %1657 = vmatprep.subr.mxu0 0.0
      %1658 = vmatpush1.msra.mxu0 0.0
      %1659 = vmatprep.subr.mxu0 0.0
      %1660 = vmatpush1.msra.mxu0 0.0
      %1661 = vmatprep.subr.mxu0 0.0
      %1662 = vmatpush1.msra.mxu0 0.0
      %1663 = vmatprep.subr.mxu0 0.0
      %1664 = vmatpush1.msra.mxu0 0.0
      %1665 = vmatprep.subr.mxu0 0.0
      %1666 = vmatpush1.msra.mxu0 0.0
      %1667 = vmatprep.subr.mxu0 0.0
      %1668 = vmatpush1.msra.mxu0 0.0
      %1669 = vmatprep.subr.mxu0 0.0
      %1670 = vmatpush1.msra.mxu0 0.0
      %1671 = vmatprep.subr.mxu0 0.0
      %1672 = vmatpush1.msra.mxu0 0.0
      %1673 = vmatprep.subr.mxu0 0.0
      %1674 = vmatpush1.msra.mxu0 0.0
      %1675 = vmatprep.subr.mxu0 0.0
      %1676 = vmatpush1.msra.mxu0 0.0
      %1677 = vmatprep.subr.mxu0 0.0
      %1678 = vmatpush1.msra.mxu0 %v1645
      %1679 = vmatprep.subr.mxu0 0.0
      %1680 = vmatpush2.msra.mxu0 0.0
      %1681 = vmatprep.subr.mxu0 0.0
      %1682 = vmatpush2.msra.mxu0 0.0
      %1683 = vmatprep.subr.mxu0 0.0
      %1684 = vmatpush2.msra.mxu0 0.0
      %1685 = vmatprep.subr.mxu0 0.0
      %1686 = vmatpush2.msra.mxu0 0.0
      %1687 = vmatprep.subr.mxu0 0.0
      %1688 = vmatpush2.msra.mxu0 0.0
      %1689 = vmatprep.subr.mxu0 0.0
      %1690 = vmatpush2.msra.mxu0 0.0
      %1691 = vmatprep.subr.mxu0 0.0
      %1692 = vmatpush2.msra.mxu0 0.0
      %1693 = vmatprep.subr.mxu0 0.0
      %1694 = vmatpush2.msra.mxu0 0.0
      %1695 = vmatprep.subr.mxu0 0.0
      %1696 = vmatpush2.msra.mxu0 0.0
      %1697 = vmatprep.subr.mxu0 0.0
      %1698 = vmatpush2.msra.mxu0 0.0
      %1699 = vmatprep.subr.mxu0 0.0
      %1700 = vmatpush2.msra.mxu0 0.0
      %1701 = vmatprep.subr.mxu0 0.0
      %1702 = vmatpush2.msra.mxu0 0.0
      %1703 = vmatprep.subr.mxu0 0.0
      %1704 = vmatpush2.msra.mxu0 0.0
      %1705 = vmatprep.subr.mxu0 0.0
      %1706 = vmatpush2.msra.mxu0 0.0
      %1707 = vmatprep.subr.mxu0 0.0
      %1708 = vmatpush2.msra.mxu0 0.0
      %1709 = vmatprep.subr.mxu0 0.0
      %1710 = vmatpush2.msra.mxu0 0.0
      %1711 = vmatprep.mubr.f32.mxu0 0.0
      %1712 = vmatmul.mubr.f32.gmra.mxu0 %v1549
      %v1713 = vpop.f32.mrf.mxu0
      %v1714 = vadd.f32 0.0, %v1713
      %v1715 = vpop.f32.mrf.mxu0
      %1716 = vmatprep.mubr.f32.mxu0 0.0
      %1717 = vmatmul.mubr.f32.gmra.mxu0 %v1552
      %v1718 = vpop.f32.mrf.mxu0
      %v1719 = vadd.f32 0.0, %v1718
      %v1720 = vpop.f32.mrf.mxu0
      %1721 = vmatprep.mubr.f32.mxu0 0.0
      %1722 = vmatmul.mubr.f32.gmra.mxu0 %v1555
      %v1723 = vpop.f32.mrf.mxu0
      %v1724 = vadd.f32 0.0, %v1723
      %v1725 = vpop.f32.mrf.mxu0
      %1726 = vmatprep.mubr.f32.mxu0 0.0
      %1727 = vmatmul.mubr.f32.gmra.mxu0 %v1558
      %v1728 = vpop.f32.mrf.mxu0
      %v1729 = vadd.f32 0.0, %v1728
      %v1730 = vpop.f32.mrf.mxu0
      %1731 = vmatprep.mubr.f32.mxu0 0.0
      %1732 = vmatmul.mubr.f32.gmra.mxu0 %v1561
      %v1733 = vpop.f32.mrf.mxu0
      %v1734 = vadd.f32 0.0, %v1733
      %v1735 = vpop.f32.mrf.mxu0
      %1736 = vmatprep.mubr.f32.mxu0 0.0
      %1737 = vmatmul.mubr.f32.gmra.mxu0 %v1564
      %v1738 = vpop.f32.mrf.mxu0
      %v1739 = vadd.f32 0.0, %v1738
      %v1740 = vpop.f32.mrf.mxu0
      %1741 = vmatprep.mubr.f32.mxu0 0.0
      %1742 = vmatmul.mubr.f32.gmra.mxu0 %v1567
      %v1743 = vpop.f32.mrf.mxu0
      %v1744 = vadd.f32 0.0, %v1743
      %v1745 = vpop.f32.mrf.mxu0
      %1746 = vmatprep.mubr.f32.mxu0 0.0
      %1747 = vmatmul.mubr.f32.gmra.mxu0 %v1570
      %v1748 = vpop.f32.mrf.mxu0
      %v1749 = vadd.f32 0.0, %v1748
      %v1750 = vpop.f32.mrf.mxu0
      %1751 = vmatprep.mubr.f32.mxu0 0.0
      %1752 = vmatmul.mubr.f32.gmra.mxu0 %v1573
      %v1753 = vpop.f32.mrf.mxu0
      %v1754 = vadd.f32 0.0, %v1753
      %v1755 = vpop.f32.mrf.mxu0
      %1756 = vmatprep.mubr.f32.mxu0 0.0
      %1757 = vmatmul.mubr.f32.gmra.mxu0 %v1576
      %v1758 = vpop.f32.mrf.mxu0
      %v1759 = vadd.f32 0.0, %v1758
      %v1760 = vpop.f32.mrf.mxu0
      %1761 = vmatprep.mubr.f32.mxu0 0.0
      %1762 = vmatmul.mubr.f32.gmra.mxu0 %v1579
      %v1763 = vpop.f32.mrf.mxu0
      %v1764 = vadd.f32 0.0, %v1763
      %v1765 = vpop.f32.mrf.mxu0
      %1766 = vmatprep.mubr.f32.mxu0 0.0
      %1767 = vmatmul.mubr.f32.gmra.mxu0 %v1582
      %v1768 = vpop.f32.mrf.mxu0
      %v1769 = vadd.f32 0.0, %v1768
      %v1770 = vpop.f32.mrf.mxu0
      %1771 = vmatprep.mubr.f32.mxu0 0.0
      %1772 = vmatmul.mubr.f32.gmra.mxu0 %v1585
      %v1773 = vpop.f32.mrf.mxu0
      %v1774 = vadd.f32 0.0, %v1773
      %v1775 = vpop.f32.mrf.mxu0
      %1776 = vmatprep.mubr.f32.mxu0 0.0
      %1777 = vmatmul.mubr.f32.gmra.mxu0 %v1588
      %v1778 = vpop.f32.mrf.mxu0
      %v1779 = vadd.f32 0.0, %v1778
      %v1780 = vpop.f32.mrf.mxu0
      %1781 = vmatprep.mubr.f32.mxu0 0.0
      %1782 = vmatmul.mubr.f32.gmra.mxu0 %v1591
      %v1783 = vpop.f32.mrf.mxu0
      %v1784 = vadd.f32 0.0, %v1783
      %v1785 = vpop.f32.mrf.mxu0
      %1786 = vmatprep.mubr.f32.mxu0 0.0
      %1787 = vmatmul.mubr.f32.gmra.mxu0 %v1594
      %v1788 = vpop.f32.mrf.mxu0
      %v1789 = vadd.f32 0.0, %v1788
      %v1790 = vpop.f32.mrf.mxu0
      %1791 = vmatprep.mubr.f32.mxu0 0.0
      %1792 = vmatmul.mubr.f32.gmra.mxu0 %v1597
      %v1793 = vpop.f32.mrf.mxu0
      %v1794 = vadd.f32 0.0, %v1793
      %v1795 = vpop.f32.mrf.mxu0
      %1796 = vmatprep.mubr.f32.mxu0 0.0
      %1797 = vmatmul.mubr.f32.gmra.mxu0 %v1600
      %v1798 = vpop.f32.mrf.mxu0
      %v1799 = vadd.f32 0.0, %v1798
      %v1800 = vpop.f32.mrf.mxu0
      %1801 = vmatprep.mubr.f32.mxu0 0.0
      %1802 = vmatmul.mubr.f32.gmra.mxu0 %v1603
      %v1803 = vpop.f32.mrf.mxu0
      %v1804 = vadd.f32 0.0, %v1803
      %v1805 = vpop.f32.mrf.mxu0
      %1806 = vmatprep.mubr.f32.mxu0 0.0
      %1807 = vmatmul.mubr.f32.gmra.mxu0 %v1606
      %v1808 = vpop.f32.mrf.mxu0
      %v1809 = vadd.f32 0.0, %v1808
      %v1810 = vpop.f32.mrf.mxu0
      %1811 = vmatprep.mubr.f32.mxu0 0.0
      %1812 = vmatmul.mubr.f32.gmra.mxu0 %v1609
      %v1813 = vpop.f32.mrf.mxu0
      %v1814 = vadd.f32 0.0, %v1813
      %v1815 = vpop.f32.mrf.mxu0
      %1816 = vmatprep.mubr.f32.mxu0 0.0
      %1817 = vmatmul.mubr.f32.gmra.mxu0 %v1612
      %v1818 = vpop.f32.mrf.mxu0
      %v1819 = vadd.f32 0.0, %v1818
      %v1820 = vpop.f32.mrf.mxu0
      %1821 = vmatprep.mubr.f32.mxu0 0.0
      %1822 = vmatmul.mubr.f32.gmra.mxu0 %v1615
      %v1823 = vpop.f32.mrf.mxu0
      %v1824 = vadd.f32 0.0, %v1823
      %v1825 = vpop.f32.mrf.mxu0
      %1826 = vmatprep.mubr.f32.mxu0 0.0
      %1827 = vmatmul.mubr.f32.gmra.mxu0 %v1618
      %v1828 = vpop.f32.mrf.mxu0
      %v1829 = vadd.f32 0.0, %v1828
      %v1830 = vpop.f32.mrf.mxu0
      %1831 = vmatprep.mubr.f32.mxu0 0.0
      %1832 = vmatmul.mubr.f32.gmra.mxu0 %v1621
      %v1833 = vpop.f32.mrf.mxu0
      %v1834 = vadd.f32 0.0, %v1833
      %v1835 = vpop.f32.mrf.mxu0
      %1836 = vmatprep.mubr.f32.mxu0 0.0
      %1837 = vmatmul.mubr.f32.gmra.mxu0 %v1624
      %v1838 = vpop.f32.mrf.mxu0
      %v1839 = vadd.f32 0.0, %v1838
      %v1840 = vpop.f32.mrf.mxu0
      %1841 = vmatprep.mubr.f32.mxu0 0.0
      %1842 = vmatmul.mubr.f32.gmra.mxu0 %v1627
      %v1843 = vpop.f32.mrf.mxu0
      %v1844 = vadd.f32 0.0, %v1843
      %v1845 = vpop.f32.mrf.mxu0
      %1846 = vmatprep.mubr.f32.mxu0 0.0
      %1847 = vmatmul.mubr.f32.gmra.mxu0 %v1630
      %v1848 = vpop.f32.mrf.mxu0
      %v1849 = vadd.f32 0.0, %v1848
      %v1850 = vpop.f32.mrf.mxu0
      %1851 = vmatprep.mubr.f32.mxu0 0.0
      %1852 = vmatmul.mubr.f32.gmra.mxu0 %v1633
      %v1853 = vpop.f32.mrf.mxu0
      %v1854 = vadd.f32 0.0, %v1853
      %v1855 = vpop.f32.mrf.mxu0
      %1856 = vmatprep.mubr.f32.mxu0 0.0
      %1857 = vmatmul.mubr.f32.gmra.mxu0 %v1636
      %v1858 = vpop.f32.mrf.mxu0
      %v1859 = vadd.f32 0.0, %v1858
      %v1860 = vpop.f32.mrf.mxu0
      %1861 = vmatprep.mubr.f32.mxu0 0.0
      %1862 = vmatmul.mubr.f32.gmra.mxu0 %v1639
      %v1863 = vpop.f32.mrf.mxu0
      %v1864 = vadd.f32 0.0, %v1863
      %v1865 = vpop.f32.mrf.mxu0
      %1866 = vmatprep.mubr.f32.mxu0 0.0
      %1867 = vmatmul.mubr.f32.gmra.mxu0 %v1642
      %v1868 = vpop.f32.mrf.mxu0
      %v1869 = vadd.f32 0.0, %v1868
      %v1870 = vpop.f32.mrf.mxu0
      %1871 = vdwg.mxu0
      %v1872 = vadd.f32 %v1466, %v1714
      %v1873 = vadd.f32 %v1467, %v1719
      %v1874 = vadd.f32 %v1468, %v1724
      %v1875 = vadd.f32 %v1469, %v1729
      %v1876 = vadd.f32 %v1470, %v1734
      %v1877 = vadd.f32 %v1471, %v1739
      %v1878 = vadd.f32 %v1472, %v1744
      %v1879 = vadd.f32 %v1473, %v1749
      %v1880 = vadd.f32 %v1474, %v1754
      %v1881 = vadd.f32 %v1475, %v1759
      %v1882 = vadd.f32 %v1476, %v1764
      %v1883 = vadd.f32 %v1477, %v1769
      %v1884 = vadd.f32 %v1478, %v1774
      %v1885 = vadd.f32 %v1479, %v1779
      %v1886 = vadd.f32 %v1480, %v1784
      %v1887 = vadd.f32 %v1481, %v1789
      %v1888 = vadd.f32 %v1482, %v1794
      %v1889 = vadd.f32 %v1483, %v1799
      %v1890 = vadd.f32 %v1484, %v1804
      %v1891 = vadd.f32 %v1485, %v1809
      %v1892 = vadd.f32 %v1486, %v1814
      %v1893 = vadd.f32 %v1487, %v1819
      %v1894 = vadd.f32 %v1488, %v1824
      %v1895 = vadd.f32 %v1489, %v1829
      %v1896 = vadd.f32 %v1490, %v1834
      %v1897 = vadd.f32 %v1491, %v1839
      %v1898 = vadd.f32 %v1492, %v1844
      %v1899 = vadd.f32 %v1493, %v1849
      %v1900 = vadd.f32 %v1494, %v1854
      %v1901 = vadd.f32 %v1495, %v1859
      %v1902 = vadd.f32 %v1496, %v1864
      %v1903 = vadd.f32 %v1497, %v1869
      %v1920 = vrot.slane %v1498, 1
      %v1921 = vrot.slane %v1499, 1
      %v1922 = vsel %vm423, %v1920, %v1921
      %v1923 = vrot.slane %v1500, 1
      %v1924 = vsel %vm423, %v1921, %v1923
      %v1925 = vrot.slane %v1501, 1
      %v1926 = vrot.slane %v1502, 1
      %v1927 = vsel %vm423, %v1925, %v1926
      %v1928 = vrot.slane %v1503, 1
      %v1929 = vsel %vm423, %v1926, %v1928
      %v1930 = vrot.slane %v1504, 1
      %v1931 = vrot.slane %v1505, 1
      %v1932 = vsel %vm423, %v1930, %v1931
      %v1933 = vrot.slane %v1506, 1
      %v1934 = vsel %vm423, %v1931, %v1933
      %v1935 = vrot.slane %v1507, 1
      %v1936 = vrot.slane %v1508, 1
      %v1937 = vsel %vm423, %v1935, %v1936
      %v1938 = vrot.slane %v1509, 1
      %v1939 = vsel %vm423, %v1936, %v1938
      %v1940 = vrot.slane %v1510, 1
      %v1941 = vrot.slane %v1511, 1
      %v1942 = vsel %vm423, %v1940, %v1941
      %v1943 = vrot.slane %v1512, 1
      %v1944 = vsel %vm423, %v1941, %v1943
      %v1945 = vrot.slane %v1513, 1
      %v1946 = vrot.slane %v1514, 1
      %v1947 = vsel %vm423, %v1945, %v1946
      %v1948 = vrot.slane %v1515, 1
      %v1949 = vsel %vm423, %v1946, %v1948
      %v1950 = vrot.slane %v1516, 1
      %v1951 = vrot.slane %v1517, 1
      %v1952 = vsel %vm423, %v1950, %v1951
      %v1953 = vrot.slane %v1518, 1
      %v1954 = vsel %vm423, %v1951, %v1953
      %v1955 = vrot.slane %v1519, 1
      %v1956 = vrot.slane %v1520, 1
      %v1957 = vsel %vm423, %v1955, %v1956
      %v1958 = vrot.slane %v1521, 1
      %v1959 = vsel %vm423, %v1956, %v1958
      %v1960 = vrot.slane %v1522, 1
      %v1961 = vrot.slane %v1523, 1
      %v1962 = vsel %vm423, %v1960, %v1961
      %v1963 = vrot.slane %v1524, 1
      %v1964 = vsel %vm423, %v1961, %v1963
      %v1965 = vrot.slane %v1525, 1
      %v1966 = vrot.slane %v1526, 1
      %v1967 = vsel %vm423, %v1965, %v1966
      %v1968 = vrot.slane %v1527, 1
      %v1969 = vsel %vm423, %v1966, %v1968
      %v1970 = vrot.slane %v1528, 1
      %v1971 = vrot.slane %v1529, 1
      %v1972 = vsel %vm423, %v1970, %v1971
      %v1973 = vrot.slane %v1530, 1
      %v1974 = vsel %vm423, %v1971, %v1973
      %v1975 = vrot.slane %v1531, 1
      %v1976 = vrot.slane %v1532, 1
      %v1977 = vsel %vm423, %v1975, %v1976
      %v1978 = vrot.slane %v1533, 1
      %v1979 = vsel %vm423, %v1976, %v1978
      %v1980 = vrot.slane %v1534, 1
      %v1981 = vrot.slane %v1535, 1
      %v1982 = vsel %vm423, %v1980, %v1981
      %v1983 = vrot.slane %v1536, 1
      %v1984 = vsel %vm423, %v1981, %v1983
      %v1985 = vrot.slane %v1537, 1
      %v1986 = vrot.slane %v1538, 1
      %v1987 = vsel %vm423, %v1985, %v1986
      %v1988 = vrot.slane %v1539, 1
      %v1989 = vsel %vm423, %v1986, %v1988
      %v1990 = vrot.slane %v1540, 1
      %v1991 = vrot.slane %v1541, 1
      %v1992 = vsel %vm423, %v1990, %v1991
      %v1993 = vrot.slane %v1542, 1
      %v1994 = vsel %vm423, %v1991, %v1993
      %v1995 = vrot.slane %v1543, 1
      %v1996 = vrot.slane %v1544, 1
      %v1997 = vsel %vm423, %v1995, %v1996
      %v1998 = vrot.slane %v1545, 1
      %v1999 = vsel %vm423, %v1996, %v1998
      %s2000 = scalar_lea.vmem %s1, 16
      %v2001 = vld [vmem:[%s2000] sm:$0xf]
      %v2002 = vsel %vm215, %v1922, 0
      %v2004 = vsel %vm215, %v1924, 0
      %v2006 = vsel %vm215, %v1927, 0
      %v2008 = vsel %vm215, %v1929, 0
      %v2010 = vsel %vm215, %v1932, 0
      %v2012 = vsel %vm215, %v1934, 0
      %v2014 = vsel %vm215, %v1937, 0
      %v2016 = vsel %vm215, %v1939, 0
      %v2018 = vsel %vm215, %v1942, 0
      %v2020 = vsel %vm215, %v1944, 0
      %v2022 = vsel %vm215, %v1947, 0
      %v2024 = vsel %vm215, %v1949, 0
      %v2026 = vsel %vm215, %v1952, 0
      %v2028 = vsel %vm215, %v1954, 0
      %v2030 = vsel %vm215, %v1957, 0
      %v2032 = vsel %vm215, %v1959, 0
      %v2034 = vsel %vm215, %v1962, 0
      %v2036 = vsel %vm215, %v1964, 0
      %v2038 = vsel %vm215, %v1967, 0
      %v2040 = vsel %vm215, %v1969, 0
      %v2042 = vsel %vm215, %v1972, 0
      %v2044 = vsel %vm215, %v1974, 0
      %v2046 = vsel %vm215, %v1977, 0
      %v2048 = vsel %vm215, %v1979, 0
      %v2050 = vsel %vm215, %v1982, 0
      %v2052 = vsel %vm215, %v1984, 0
      %v2054 = vsel %vm215, %v1987, 0
      %v2056 = vsel %vm215, %v1989, 0
      %v2058 = vsel %vm215, %v1992, 0
      %v2060 = vsel %vm215, %v1994, 0
      %v2062 = vsel %vm215, %v1997, 0
      %v2064 = vsel %vm215, %v1999, 0
      %v2067 = vsel %vm570, %v2001, 0
      %2069 = vmatprep.subr.mxu0 0.0
      %2070 = vmatpush1.msra.mxu0 0.0
      %2071 = vmatprep.subr.mxu0 0.0
      %2072 = vmatpush1.msra.mxu0 0.0
      %2073 = vmatprep.subr.mxu0 0.0
      %2074 = vmatpush1.msra.mxu0 0.0
      %2075 = vmatprep.subr.mxu0 0.0
      %2076 = vmatpush1.msra.mxu0 0.0
      %2077 = vmatprep.subr.mxu0 0.0
      %2078 = vmatpush1.msra.mxu0 0.0
      %2079 = vmatprep.subr.mxu0 0.0
      %2080 = vmatpush1.msra.mxu0 0.0
      %2081 = vmatprep.subr.mxu0 0.0
      %2082 = vmatpush1.msra.mxu0 0.0
      %2083 = vmatprep.subr.mxu0 0.0
      %2084 = vmatpush1.msra.mxu0 0.0
      %2085 = vmatprep.subr.mxu0 0.0
      %2086 = vmatpush1.msra.mxu0 0.0
      %2087 = vmatprep.subr.mxu0 0.0
      %2088 = vmatpush1.msra.mxu0 0.0
      %2089 = vmatprep.subr.mxu0 0.0
      %2090 = vmatpush1.msra.mxu0 0.0
      %2091 = vmatprep.subr.mxu0 0.0
      %2092 = vmatpush1.msra.mxu0 0.0
      %2093 = vmatprep.subr.mxu0 0.0
      %2094 = vmatpush1.msra.mxu0 0.0
      %2095 = vmatprep.subr.mxu0 0.0
      %2096 = vmatpush1.msra.mxu0 0.0
      %2097 = vmatprep.subr.mxu0 0.0
      %2098 = vmatpush1.msra.mxu0 0.0
      %2099 = vmatprep.subr.mxu0 0.0
      %2100 = vmatpush1.msra.mxu0 %v2067
      %2101 = vmatprep.subr.mxu0 0.0
      %2102 = vmatpush2.msra.mxu0 0.0
      %2103 = vmatprep.subr.mxu0 0.0
      %2104 = vmatpush2.msra.mxu0 0.0
      %2105 = vmatprep.subr.mxu0 0.0
      %2106 = vmatpush2.msra.mxu0 0.0
      %2107 = vmatprep.subr.mxu0 0.0
      %2108 = vmatpush2.msra.mxu0 0.0
      %2109 = vmatprep.subr.mxu0 0.0
      %2110 = vmatpush2.msra.mxu0 0.0
      %2111 = vmatprep.subr.mxu0 0.0
      %2112 = vmatpush2.msra.mxu0 0.0
      %2113 = vmatprep.subr.mxu0 0.0
      %2114 = vmatpush2.msra.mxu0 0.0
      %2115 = vmatprep.subr.mxu0 0.0
      %2116 = vmatpush2.msra.mxu0 0.0
      %2117 = vmatprep.subr.mxu0 0.0
      %2118 = vmatpush2.msra.mxu0 0.0
      %2119 = vmatprep.subr.mxu0 0.0
      %2120 = vmatpush2.msra.mxu0 0.0
      %2121 = vmatprep.subr.mxu0 0.0
      %2122 = vmatpush2.msra.mxu0 0.0
      %2123 = vmatprep.subr.mxu0 0.0
      %2124 = vmatpush2.msra.mxu0 0.0
      %2125 = vmatprep.subr.mxu0 0.0
      %2126 = vmatpush2.msra.mxu0 0.0
      %2127 = vmatprep.subr.mxu0 0.0
      %2128 = vmatpush2.msra.mxu0 0.0
      %2129 = vmatprep.subr.mxu0 0.0
      %2130 = vmatpush2.msra.mxu0 0.0
      %2131 = vmatprep.subr.mxu0 0.0
      %2132 = vmatpush2.msra.mxu0 0.0
      %2133 = vmatprep.mubr.f32.mxu0 0.0
      %2134 = vmatmul.mubr.f32.gmra.mxu0 %v2002
      %v2135 = vpop.f32.mrf.mxu0
      %v2136 = vadd.f32 0.0, %v2135
      %v2137 = vpop.f32.mrf.mxu0
      %2138 = vmatprep.mubr.f32.mxu0 0.0
      %2139 = vmatmul.mubr.f32.gmra.mxu0 %v2004
      %v2140 = vpop.f32.mrf.mxu0
      %v2141 = vadd.f32 0.0, %v2140
      %v2142 = vpop.f32.mrf.mxu0
      %2143 = vmatprep.mubr.f32.mxu0 0.0
      %2144 = vmatmul.mubr.f32.gmra.mxu0 %v2006
      %v2145 = vpop.f32.mrf.mxu0
      %v2146 = vadd.f32 0.0, %v2145
      %v2147 = vpop.f32.mrf.mxu0
      %2148 = vmatprep.mubr.f32.mxu0 0.0
      %2149 = vmatmul.mubr.f32.gmra.mxu0 %v2008
      %v2150 = vpop.f32.mrf.mxu0
      %v2151 = vadd.f32 0.0, %v2150
      %v2152 = vpop.f32.mrf.mxu0
      %2153 = vmatprep.mubr.f32.mxu0 0.0
      %2154 = vmatmul.mubr.f32.gmra.mxu0 %v2010
      %v2155 = vpop.f32.mrf.mxu0
      %v2156 = vadd.f32 0.0, %v2155
      %v2157 = vpop.f32.mrf.mxu0
      %2158 = vmatprep.mubr.f32.mxu0 0.0
      %2159 = vmatmul.mubr.f32.gmra.mxu0 %v2012
      %v2160 = vpop.f32.mrf.mxu0
      %v2161 = vadd.f32 0.0, %v2160
      %v2162 = vpop.f32.mrf.mxu0
      %2163 = vmatprep.mubr.f32.mxu0 0.0
      %2164 = vmatmul.mubr.f32.gmra.mxu0 %v2014
      %v2165 = vpop.f32.mrf.mxu0
      %v2166 = vadd.f32 0.0, %v2165
      %v2167 = vpop.f32.mrf.mxu0
      %2168 = vmatprep.mubr.f32.mxu0 0.0
      %2169 = vmatmul.mubr.f32.gmra.mxu0 %v2016
      %v2170 = vpop.f32.mrf.mxu0
      %v2171 = vadd.f32 0.0, %v2170
      %v2172 = vpop.f32.mrf.mxu0
      %2173 = vmatprep.mubr.f32.mxu0 0.0
      %2174 = vmatmul.mubr.f32.gmra.mxu0 %v2018
      %v2175 = vpop.f32.mrf.mxu0
      %v2176 = vadd.f32 0.0, %v2175
      %v2177 = vpop.f32.mrf.mxu0
      %2178 = vmatprep.mubr.f32.mxu0 0.0
      %2179 = vmatmul.mubr.f32.gmra.mxu0 %v2020
      %v2180 = vpop.f32.mrf.mxu0
      %v2181 = vadd.f32 0.0, %v2180
      %v2182 = vpop.f32.mrf.mxu0
      %2183 = vmatprep.mubr.f32.mxu0 0.0
      %2184 = vmatmul.mubr.f32.gmra.mxu0 %v2022
      %v2185 = vpop.f32.mrf.mxu0
      %v2186 = vadd.f32 0.0, %v2185
      %v2187 = vpop.f32.mrf.mxu0
      %2188 = vmatprep.mubr.f32.mxu0 0.0
      %2189 = vmatmul.mubr.f32.gmra.mxu0 %v2024
      %v2190 = vpop.f32.mrf.mxu0
      %v2191 = vadd.f32 0.0, %v2190
      %v2192 = vpop.f32.mrf.mxu0
      %2193 = vmatprep.mubr.f32.mxu0 0.0
      %2194 = vmatmul.mubr.f32.gmra.mxu0 %v2026
      %v2195 = vpop.f32.mrf.mxu0
      %v2196 = vadd.f32 0.0, %v2195
      %v2197 = vpop.f32.mrf.mxu0
      %2198 = vmatprep.mubr.f32.mxu0 0.0
      %2199 = vmatmul.mubr.f32.gmra.mxu0 %v2028
      %v2200 = vpop.f32.mrf.mxu0
      %v2201 = vadd.f32 0.0, %v2200
      %v2202 = vpop.f32.mrf.mxu0
      %2203 = vmatprep.mubr.f32.mxu0 0.0
      %2204 = vmatmul.mubr.f32.gmra.mxu0 %v2030
      %v2205 = vpop.f32.mrf.mxu0
      %v2206 = vadd.f32 0.0, %v2205
      %v2207 = vpop.f32.mrf.mxu0
      %2208 = vmatprep.mubr.f32.mxu0 0.0
      %2209 = vmatmul.mubr.f32.gmra.mxu0 %v2032
      %v2210 = vpop.f32.mrf.mxu0
      %v2211 = vadd.f32 0.0, %v2210
      %v2212 = vpop.f32.mrf.mxu0
      %2213 = vmatprep.mubr.f32.mxu0 0.0
      %2214 = vmatmul.mubr.f32.gmra.mxu0 %v2034
      %v2215 = vpop.f32.mrf.mxu0
      %v2216 = vadd.f32 0.0, %v2215
      %v2217 = vpop.f32.mrf.mxu0
      %2218 = vmatprep.mubr.f32.mxu0 0.0
      %2219 = vmatmul.mubr.f32.gmra.mxu0 %v2036
      %v2220 = vpop.f32.mrf.mxu0
      %v2221 = vadd.f32 0.0, %v2220
      %v2222 = vpop.f32.mrf.mxu0
      %2223 = vmatprep.mubr.f32.mxu0 0.0
      %2224 = vmatmul.mubr.f32.gmra.mxu0 %v2038
      %v2225 = vpop.f32.mrf.mxu0
      %v2226 = vadd.f32 0.0, %v2225
      %v2227 = vpop.f32.mrf.mxu0
      %2228 = vmatprep.mubr.f32.mxu0 0.0
      %2229 = vmatmul.mubr.f32.gmra.mxu0 %v2040
      %v2230 = vpop.f32.mrf.mxu0
      %v2231 = vadd.f32 0.0, %v2230
      %v2232 = vpop.f32.mrf.mxu0
      %2233 = vmatprep.mubr.f32.mxu0 0.0
      %2234 = vmatmul.mubr.f32.gmra.mxu0 %v2042
      %v2235 = vpop.f32.mrf.mxu0
      %v2236 = vadd.f32 0.0, %v2235
      %v2237 = vpop.f32.mrf.mxu0
      %2238 = vmatprep.mubr.f32.mxu0 0.0
      %2239 = vmatmul.mubr.f32.gmra.mxu0 %v2044
      %v2240 = vpop.f32.mrf.mxu0
      %v2241 = vadd.f32 0.0, %v2240
      %v2242 = vpop.f32.mrf.mxu0
      %2243 = vmatprep.mubr.f32.mxu0 0.0
      %2244 = vmatmul.mubr.f32.gmra.mxu0 %v2046
      %v2245 = vpop.f32.mrf.mxu0
      %v2246 = vadd.f32 0.0, %v2245
      %v2247 = vpop.f32.mrf.mxu0
      %2248 = vmatprep.mubr.f32.mxu0 0.0
      %2249 = vmatmul.mubr.f32.gmra.mxu0 %v2048
      %v2250 = vpop.f32.mrf.mxu0
      %v2251 = vadd.f32 0.0, %v2250
      %v2252 = vpop.f32.mrf.mxu0
      %2253 = vmatprep.mubr.f32.mxu0 0.0
      %2254 = vmatmul.mubr.f32.gmra.mxu0 %v2050
      %v2255 = vpop.f32.mrf.mxu0
      %v2256 = vadd.f32 0.0, %v2255
      %v2257 = vpop.f32.mrf.mxu0
      %2258 = vmatprep.mubr.f32.mxu0 0.0
      %2259 = vmatmul.mubr.f32.gmra.mxu0 %v2052
      %v2260 = vpop.f32.mrf.mxu0
      %v2261 = vadd.f32 0.0, %v2260
      %v2262 = vpop.f32.mrf.mxu0
      %2263 = vmatprep.mubr.f32.mxu0 0.0
      %2264 = vmatmul.mubr.f32.gmra.mxu0 %v2054
      %v2265 = vpop.f32.mrf.mxu0
      %v2266 = vadd.f32 0.0, %v2265
      %v2267 = vpop.f32.mrf.mxu0
      %2268 = vmatprep.mubr.f32.mxu0 0.0
      %2269 = vmatmul.mubr.f32.gmra.mxu0 %v2056
      %v2270 = vpop.f32.mrf.mxu0
      %v2271 = vadd.f32 0.0, %v2270
      %v2272 = vpop.f32.mrf.mxu0
      %2273 = vmatprep.mubr.f32.mxu0 0.0
      %2274 = vmatmul.mubr.f32.gmra.mxu0 %v2058
      %v2275 = vpop.f32.mrf.mxu0
      %v2276 = vadd.f32 0.0, %v2275
      %v2277 = vpop.f32.mrf.mxu0
      %2278 = vmatprep.mubr.f32.mxu0 0.0
      %2279 = vmatmul.mubr.f32.gmra.mxu0 %v2060
      %v2280 = vpop.f32.mrf.mxu0
      %v2281 = vadd.f32 0.0, %v2280
      %v2282 = vpop.f32.mrf.mxu0
      %2283 = vmatprep.mubr.f32.mxu0 0.0
      %2284 = vmatmul.mubr.f32.gmra.mxu0 %v2062
      %v2285 = vpop.f32.mrf.mxu0
      %v2286 = vadd.f32 0.0, %v2285
      %v2287 = vpop.f32.mrf.mxu0
      %2288 = vmatprep.mubr.f32.mxu0 0.0
      %2289 = vmatmul.mubr.f32.gmra.mxu0 %v2064
      %v2290 = vpop.f32.mrf.mxu0
      %v2291 = vadd.f32 0.0, %v2290
      %v2292 = vpop.f32.mrf.mxu0
      %2293 = vdwg.mxu0
      %v2294 = vadd.f32 %v1872, %v2136
      %v2295 = vadd.f32 %v1873, %v2141
      %v2296 = vadd.f32 %v1874, %v2146
      %v2297 = vadd.f32 %v1875, %v2151
      %v2298 = vadd.f32 %v1876, %v2156
      %v2299 = vadd.f32 %v1877, %v2161
      %v2300 = vadd.f32 %v1878, %v2166
      %v2301 = vadd.f32 %v1879, %v2171
      %v2302 = vadd.f32 %v1880, %v2176
      %v2303 = vadd.f32 %v1881, %v2181
      %v2304 = vadd.f32 %v1882, %v2186
      %v2305 = vadd.f32 %v1883, %v2191
      %v2306 = vadd.f32 %v1884, %v2196
      %v2307 = vadd.f32 %v1885, %v2201
      %v2308 = vadd.f32 %v1886, %v2206
      %v2309 = vadd.f32 %v1887, %v2211
      %v2310 = vadd.f32 %v1888, %v2216
      %v2311 = vadd.f32 %v1889, %v2221
      %v2312 = vadd.f32 %v1890, %v2226
      %v2313 = vadd.f32 %v1891, %v2231
      %v2314 = vadd.f32 %v1892, %v2236
      %v2315 = vadd.f32 %v1893, %v2241
      %v2316 = vadd.f32 %v1894, %v2246
      %v2317 = vadd.f32 %v1895, %v2251
      %v2318 = vadd.f32 %v1896, %v2256
      %v2319 = vadd.f32 %v1897, %v2261
      %v2320 = vadd.f32 %v1898, %v2266
      %v2321 = vadd.f32 %v1899, %v2271
      %v2322 = vadd.f32 %v1900, %v2276
      %v2323 = vadd.f32 %v1901, %v2281
      %v2324 = vadd.f32 %v1902, %v2286
      %v2325 = vadd.f32 %v1903, %v2291
      %v2326 = vrot.slane %v1498, 2
      %v2327 = vrot.slane %v1499, 2
      %v2328 = vsel %vm1091, %v2326, %v2327
      %v2329 = vrot.slane %v1500, 2
      %v2330 = vsel %vm1091, %v2327, %v2329
      %v2331 = vrot.slane %v1501, 2
      %v2332 = vrot.slane %v1502, 2
      %v2333 = vsel %vm1091, %v2331, %v2332
      %v2334 = vrot.slane %v1503, 2
      %v2335 = vsel %vm1091, %v2332, %v2334
      %v2336 = vrot.slane %v1504, 2
      %v2337 = vrot.slane %v1505, 2
      %v2338 = vsel %vm1091, %v2336, %v2337
      %v2339 = vrot.slane %v1506, 2
      %v2340 = vsel %vm1091, %v2337, %v2339
      %v2341 = vrot.slane %v1507, 2
      %v2342 = vrot.slane %v1508, 2
      %v2343 = vsel %vm1091, %v2341, %v2342
      %v2344 = vrot.slane %v1509, 2
      %v2345 = vsel %vm1091, %v2342, %v2344
      %v2346 = vrot.slane %v1510, 2
      %v2347 = vrot.slane %v1511, 2
      %v2348 = vsel %vm1091, %v2346, %v2347
      %v2349 = vrot.slane %v1512, 2
      %v2350 = vsel %vm1091, %v2347, %v2349
      %v2351 = vrot.slane %v1513, 2
      %v2352 = vrot.slane %v1514, 2
      %v2353 = vsel %vm1091, %v2351, %v2352
      %v2354 = vrot.slane %v1515, 2
      %v2355 = vsel %vm1091, %v2352, %v2354
      %v2356 = vrot.slane %v1516, 2
      %v2357 = vrot.slane %v1517, 2
      %v2358 = vsel %vm1091, %v2356, %v2357
      %v2359 = vrot.slane %v1518, 2
      %v2360 = vsel %vm1091, %v2357, %v2359
      %v2361 = vrot.slane %v1519, 2
      %v2362 = vrot.slane %v1520, 2
      %v2363 = vsel %vm1091, %v2361, %v2362
      %v2364 = vrot.slane %v1521, 2
      %v2365 = vsel %vm1091, %v2362, %v2364
      %v2366 = vrot.slane %v1522, 2
      %v2367 = vrot.slane %v1523, 2
      %v2368 = vsel %vm1091, %v2366, %v2367
      %v2369 = vrot.slane %v1524, 2
      %v2370 = vsel %vm1091, %v2367, %v2369
      %v2371 = vrot.slane %v1525, 2
      %v2372 = vrot.slane %v1526, 2
      %v2373 = vsel %vm1091, %v2371, %v2372
      %v2374 = vrot.slane %v1527, 2
      %v2375 = vsel %vm1091, %v2372, %v2374
      %v2376 = vrot.slane %v1528, 2
      %v2377 = vrot.slane %v1529, 2
      %v2378 = vsel %vm1091, %v2376, %v2377
      %v2379 = vrot.slane %v1530, 2
      %v2380 = vsel %vm1091, %v2377, %v2379
      %v2381 = vrot.slane %v1531, 2
      %v2382 = vrot.slane %v1532, 2
      %v2383 = vsel %vm1091, %v2381, %v2382
      %v2384 = vrot.slane %v1533, 2
      %v2385 = vsel %vm1091, %v2382, %v2384
      %v2386 = vrot.slane %v1534, 2
      %v2387 = vrot.slane %v1535, 2
      %v2388 = vsel %vm1091, %v2386, %v2387
      %v2389 = vrot.slane %v1536, 2
      %v2390 = vsel %vm1091, %v2387, %v2389
      %v2391 = vrot.slane %v1537, 2
      %v2392 = vrot.slane %v1538, 2
      %v2393 = vsel %vm1091, %v2391, %v2392
      %v2394 = vrot.slane %v1539, 2
      %v2395 = vsel %vm1091, %v2392, %v2394
      %v2396 = vrot.slane %v1540, 2
      %v2397 = vrot.slane %v1541, 2
      %v2398 = vsel %vm1091, %v2396, %v2397
      %v2399 = vrot.slane %v1542, 2
      %v2400 = vsel %vm1091, %v2397, %v2399
      %v2401 = vrot.slane %v1543, 2
      %v2402 = vrot.slane %v1544, 2
      %v2403 = vsel %vm1091, %v2401, %v2402
      %v2404 = vrot.slane %v1545, 2
      %v2405 = vsel %vm1091, %v2402, %v2404
      %s2406 = scalar_lea.vmem %s1, 20
      %v2407 = vld [vmem:[%s2406] sm:$0xf]
      %v2408 = vsel %vm215, %v2328, 0
      %v2410 = vsel %vm215, %v2330, 0
      %v2412 = vsel %vm215, %v2333, 0
      %v2414 = vsel %vm215, %v2335, 0
      %v2416 = vsel %vm215, %v2338, 0
      %v2418 = vsel %vm215, %v2340, 0
      %v2420 = vsel %vm215, %v2343, 0
      %v2422 = vsel %vm215, %v2345, 0
      %v2424 = vsel %vm215, %v2348, 0
      %v2426 = vsel %vm215, %v2350, 0
      %v2428 = vsel %vm215, %v2353, 0
      %v2430 = vsel %vm215, %v2355, 0
      %v2432 = vsel %vm215, %v2358, 0
      %v2434 = vsel %vm215, %v2360, 0
      %v2436 = vsel %vm215, %v2363, 0
      %v2438 = vsel %vm215, %v2365, 0
      %v2440 = vsel %vm215, %v2368, 0
      %v2442 = vsel %vm215, %v2370, 0
      %v2444 = vsel %vm215, %v2373, 0
      %v2446 = vsel %vm215, %v2375, 0
      %v2448 = vsel %vm215, %v2378, 0
      %v2450 = vsel %vm215, %v2380, 0
      %v2452 = vsel %vm215, %v2383, 0
      %v2454 = vsel %vm215, %v2385, 0
      %v2456 = vsel %vm215, %v2388, 0
      %v2458 = vsel %vm215, %v2390, 0
      %v2460 = vsel %vm215, %v2393, 0
      %v2462 = vsel %vm215, %v2395, 0
      %v2464 = vsel %vm215, %v2398, 0
      %v2466 = vsel %vm215, %v2400, 0
      %v2468 = vsel %vm215, %v2403, 0
      %v2470 = vsel %vm215, %v2405, 0
      %v2473 = vsel %vm570, %v2407, 0
      %2475 = vmatprep.subr.mxu0 0.0
      %2476 = vmatpush1.msra.mxu0 0.0
      %2477 = vmatprep.subr.mxu0 0.0
      %2478 = vmatpush1.msra.mxu0 0.0
      %2479 = vmatprep.subr.mxu0 0.0
      %2480 = vmatpush1.msra.mxu0 0.0
      %2481 = vmatprep.subr.mxu0 0.0
      %2482 = vmatpush1.msra.mxu0 0.0
      %2483 = vmatprep.subr.mxu0 0.0
      %2484 = vmatpush1.msra.mxu0 0.0
      %2485 = vmatprep.subr.mxu0 0.0
      %2486 = vmatpush1.msra.mxu0 0.0
      %2487 = vmatprep.subr.mxu0 0.0
      %2488 = vmatpush1.msra.mxu0 0.0
      %2489 = vmatprep.subr.mxu0 0.0
      %2490 = vmatpush1.msra.mxu0 0.0
      %2491 = vmatprep.subr.mxu0 0.0
      %2492 = vmatpush1.msra.mxu0 0.0
      %2493 = vmatprep.subr.mxu0 0.0
      %2494 = vmatpush1.msra.mxu0 0.0
      %2495 = vmatprep.subr.mxu0 0.0
      %2496 = vmatpush1.msra.mxu0 0.0
      %2497 = vmatprep.subr.mxu0 0.0
      %2498 = vmatpush1.msra.mxu0 0.0
      %2499 = vmatprep.subr.mxu0 0.0
      %2500 = vmatpush1.msra.mxu0 0.0
      %2501 = vmatprep.subr.mxu0 0.0
      %2502 = vmatpush1.msra.mxu0 0.0
      %2503 = vmatprep.subr.mxu0 0.0
      %2504 = vmatpush1.msra.mxu0 0.0
      %2505 = vmatprep.subr.mxu0 0.0
      %2506 = vmatpush1.msra.mxu0 %v2473
      %2507 = vmatprep.subr.mxu0 0.0
      %2508 = vmatpush2.msra.mxu0 0.0
      %2509 = vmatprep.subr.mxu0 0.0
      %2510 = vmatpush2.msra.mxu0 0.0
      %2511 = vmatprep.subr.mxu0 0.0
      %2512 = vmatpush2.msra.mxu0 0.0
      %2513 = vmatprep.subr.mxu0 0.0
      %2514 = vmatpush2.msra.mxu0 0.0
      %2515 = vmatprep.subr.mxu0 0.0
      %2516 = vmatpush2.msra.mxu0 0.0
      %2517 = vmatprep.subr.mxu0 0.0
      %2518 = vmatpush2.msra.mxu0 0.0
      %2519 = vmatprep.subr.mxu0 0.0
      %2520 = vmatpush2.msra.mxu0 0.0
      %2521 = vmatprep.subr.mxu0 0.0
      %2522 = vmatpush2.msra.mxu0 0.0
      %2523 = vmatprep.subr.mxu0 0.0
      %2524 = vmatpush2.msra.mxu0 0.0
      %2525 = vmatprep.subr.mxu0 0.0
      %2526 = vmatpush2.msra.mxu0 0.0
      %2527 = vmatprep.subr.mxu0 0.0
      %2528 = vmatpush2.msra.mxu0 0.0
      %2529 = vmatprep.subr.mxu0 0.0
      %2530 = vmatpush2.msra.mxu0 0.0
      %2531 = vmatprep.subr.mxu0 0.0
      %2532 = vmatpush2.msra.mxu0 0.0
      %2533 = vmatprep.subr.mxu0 0.0
      %2534 = vmatpush2.msra.mxu0 0.0
      %2535 = vmatprep.subr.mxu0 0.0
      %2536 = vmatpush2.msra.mxu0 0.0
      %2537 = vmatprep.subr.mxu0 0.0
      %2538 = vmatpush2.msra.mxu0 0.0
      %2539 = vmatprep.mubr.f32.mxu0 0.0
      %2540 = vmatmul.mubr.f32.gmra.mxu0 %v2408
      %v2541 = vpop.f32.mrf.mxu0
      %v2542 = vadd.f32 0.0, %v2541
      %v2543 = vpop.f32.mrf.mxu0
      %2544 = vmatprep.mubr.f32.mxu0 0.0
      %2545 = vmatmul.mubr.f32.gmra.mxu0 %v2410
      %v2546 = vpop.f32.mrf.mxu0
      %v2547 = vadd.f32 0.0, %v2546
      %v2548 = vpop.f32.mrf.mxu0
      %2549 = vmatprep.mubr.f32.mxu0 0.0
      %2550 = vmatmul.mubr.f32.gmra.mxu0 %v2412
      %v2551 = vpop.f32.mrf.mxu0
      %v2552 = vadd.f32 0.0, %v2551
      %v2553 = vpop.f32.mrf.mxu0
      %2554 = vmatprep.mubr.f32.mxu0 0.0
      %2555 = vmatmul.mubr.f32.gmra.mxu0 %v2414
      %v2556 = vpop.f32.mrf.mxu0
      %v2557 = vadd.f32 0.0, %v2556
      %v2558 = vpop.f32.mrf.mxu0
      %2559 = vmatprep.mubr.f32.mxu0 0.0
      %2560 = vmatmul.mubr.f32.gmra.mxu0 %v2416
      %v2561 = vpop.f32.mrf.mxu0
      %v2562 = vadd.f32 0.0, %v2561
      %v2563 = vpop.f32.mrf.mxu0
      %2564 = vmatprep.mubr.f32.mxu0 0.0
      %2565 = vmatmul.mubr.f32.gmra.mxu0 %v2418
      %v2566 = vpop.f32.mrf.mxu0
      %v2567 = vadd.f32 0.0, %v2566
      %v2568 = vpop.f32.mrf.mxu0
      %2569 = vmatprep.mubr.f32.mxu0 0.0
      %2570 = vmatmul.mubr.f32.gmra.mxu0 %v2420
      %v2571 = vpop.f32.mrf.mxu0
      %v2572 = vadd.f32 0.0, %v2571
      %v2573 = vpop.f32.mrf.mxu0
      %2574 = vmatprep.mubr.f32.mxu0 0.0
      %2575 = vmatmul.mubr.f32.gmra.mxu0 %v2422
      %v2576 = vpop.f32.mrf.mxu0
      %v2577 = vadd.f32 0.0, %v2576
      %v2578 = vpop.f32.mrf.mxu0
      %2579 = vmatprep.mubr.f32.mxu0 0.0
      %2580 = vmatmul.mubr.f32.gmra.mxu0 %v2424
      %v2581 = vpop.f32.mrf.mxu0
      %v2582 = vadd.f32 0.0, %v2581
      %v2583 = vpop.f32.mrf.mxu0
      %2584 = vmatprep.mubr.f32.mxu0 0.0
      %2585 = vmatmul.mubr.f32.gmra.mxu0 %v2426
      %v2586 = vpop.f32.mrf.mxu0
      %v2587 = vadd.f32 0.0, %v2586
      %v2588 = vpop.f32.mrf.mxu0
      %2589 = vmatprep.mubr.f32.mxu0 0.0
      %2590 = vmatmul.mubr.f32.gmra.mxu0 %v2428
      %v2591 = vpop.f32.mrf.mxu0
      %v2592 = vadd.f32 0.0, %v2591
      %v2593 = vpop.f32.mrf.mxu0
      %2594 = vmatprep.mubr.f32.mxu0 0.0
      %2595 = vmatmul.mubr.f32.gmra.mxu0 %v2430
      %v2596 = vpop.f32.mrf.mxu0
      %v2597 = vadd.f32 0.0, %v2596
      %v2598 = vpop.f32.mrf.mxu0
      %2599 = vmatprep.mubr.f32.mxu0 0.0
      %2600 = vmatmul.mubr.f32.gmra.mxu0 %v2432
      %v2601 = vpop.f32.mrf.mxu0
      %v2602 = vadd.f32 0.0, %v2601
      %v2603 = vpop.f32.mrf.mxu0
      %2604 = vmatprep.mubr.f32.mxu0 0.0
      %2605 = vmatmul.mubr.f32.gmra.mxu0 %v2434
      %v2606 = vpop.f32.mrf.mxu0
      %v2607 = vadd.f32 0.0, %v2606
      %v2608 = vpop.f32.mrf.mxu0
      %2609 = vmatprep.mubr.f32.mxu0 0.0
      %2610 = vmatmul.mubr.f32.gmra.mxu0 %v2436
      %v2611 = vpop.f32.mrf.mxu0
      %v2612 = vadd.f32 0.0, %v2611
      %v2613 = vpop.f32.mrf.mxu0
      %2614 = vmatprep.mubr.f32.mxu0 0.0
      %2615 = vmatmul.mubr.f32.gmra.mxu0 %v2438
      %v2616 = vpop.f32.mrf.mxu0
      %v2617 = vadd.f32 0.0, %v2616
      %v2618 = vpop.f32.mrf.mxu0
      %2619 = vmatprep.mubr.f32.mxu0 0.0
      %2620 = vmatmul.mubr.f32.gmra.mxu0 %v2440
      %v2621 = vpop.f32.mrf.mxu0
      %v2622 = vadd.f32 0.0, %v2621
      %v2623 = vpop.f32.mrf.mxu0
      %2624 = vmatprep.mubr.f32.mxu0 0.0
      %2625 = vmatmul.mubr.f32.gmra.mxu0 %v2442
      %v2626 = vpop.f32.mrf.mxu0
      %v2627 = vadd.f32 0.0, %v2626
      %v2628 = vpop.f32.mrf.mxu0
      %2629 = vmatprep.mubr.f32.mxu0 0.0
      %2630 = vmatmul.mubr.f32.gmra.mxu0 %v2444
      %v2631 = vpop.f32.mrf.mxu0
      %v2632 = vadd.f32 0.0, %v2631
      %v2633 = vpop.f32.mrf.mxu0
      %2634 = vmatprep.mubr.f32.mxu0 0.0
      %2635 = vmatmul.mubr.f32.gmra.mxu0 %v2446
      %v2636 = vpop.f32.mrf.mxu0
      %v2637 = vadd.f32 0.0, %v2636
      %v2638 = vpop.f32.mrf.mxu0
      %2639 = vmatprep.mubr.f32.mxu0 0.0
      %2640 = vmatmul.mubr.f32.gmra.mxu0 %v2448
      %v2641 = vpop.f32.mrf.mxu0
      %v2642 = vadd.f32 0.0, %v2641
      %v2643 = vpop.f32.mrf.mxu0
      %2644 = vmatprep.mubr.f32.mxu0 0.0
      %2645 = vmatmul.mubr.f32.gmra.mxu0 %v2450
      %v2646 = vpop.f32.mrf.mxu0
      %v2647 = vadd.f32 0.0, %v2646
      %v2648 = vpop.f32.mrf.mxu0
      %2649 = vmatprep.mubr.f32.mxu0 0.0
      %2650 = vmatmul.mubr.f32.gmra.mxu0 %v2452
      %v2651 = vpop.f32.mrf.mxu0
      %v2652 = vadd.f32 0.0, %v2651
      %v2653 = vpop.f32.mrf.mxu0
      %2654 = vmatprep.mubr.f32.mxu0 0.0
      %2655 = vmatmul.mubr.f32.gmra.mxu0 %v2454
      %v2656 = vpop.f32.mrf.mxu0
      %v2657 = vadd.f32 0.0, %v2656
      %v2658 = vpop.f32.mrf.mxu0
      %2659 = vmatprep.mubr.f32.mxu0 0.0
      %2660 = vmatmul.mubr.f32.gmra.mxu0 %v2456
      %v2661 = vpop.f32.mrf.mxu0
      %v2662 = vadd.f32 0.0, %v2661
      %v2663 = vpop.f32.mrf.mxu0
      %2664 = vmatprep.mubr.f32.mxu0 0.0
      %2665 = vmatmul.mubr.f32.gmra.mxu0 %v2458
      %v2666 = vpop.f32.mrf.mxu0
      %v2667 = vadd.f32 0.0, %v2666
      %v2668 = vpop.f32.mrf.mxu0
      %2669 = vmatprep.mubr.f32.mxu0 0.0
      %2670 = vmatmul.mubr.f32.gmra.mxu0 %v2460
      %v2671 = vpop.f32.mrf.mxu0
      %v2672 = vadd.f32 0.0, %v2671
      %v2673 = vpop.f32.mrf.mxu0
      %2674 = vmatprep.mubr.f32.mxu0 0.0
      %2675 = vmatmul.mubr.f32.gmra.mxu0 %v2462
      %v2676 = vpop.f32.mrf.mxu0
      %v2677 = vadd.f32 0.0, %v2676
      %v2678 = vpop.f32.mrf.mxu0
      %2679 = vmatprep.mubr.f32.mxu0 0.0
      %2680 = vmatmul.mubr.f32.gmra.mxu0 %v2464
      %v2681 = vpop.f32.mrf.mxu0
      %v2682 = vadd.f32 0.0, %v2681
      %v2683 = vpop.f32.mrf.mxu0
      %2684 = vmatprep.mubr.f32.mxu0 0.0
      %2685 = vmatmul.mubr.f32.gmra.mxu0 %v2466
      %v2686 = vpop.f32.mrf.mxu0
      %v2687 = vadd.f32 0.0, %v2686
      %v2688 = vpop.f32.mrf.mxu0
      %2689 = vmatprep.mubr.f32.mxu0 0.0
      %2690 = vmatmul.mubr.f32.gmra.mxu0 %v2468
      %v2691 = vpop.f32.mrf.mxu0
      %v2692 = vadd.f32 0.0, %v2691
      %v2693 = vpop.f32.mrf.mxu0
      %2694 = vmatprep.mubr.f32.mxu0 0.0
      %2695 = vmatmul.mubr.f32.gmra.mxu0 %v2470
      %v2696 = vpop.f32.mrf.mxu0
      %v2697 = vadd.f32 0.0, %v2696
      %v2698 = vpop.f32.mrf.mxu0
      %2699 = vdwg.mxu0
      %v2700 = vadd.f32 %v2294, %v2542
      %v2701 = vadd.f32 %v2295, %v2547
      %v2702 = vadd.f32 %v2296, %v2552
      %v2703 = vadd.f32 %v2297, %v2557
      %v2704 = vadd.f32 %v2298, %v2562
      %v2705 = vadd.f32 %v2299, %v2567
      %v2706 = vadd.f32 %v2300, %v2572
      %v2707 = vadd.f32 %v2301, %v2577
      %v2708 = vadd.f32 %v2302, %v2582
      %v2709 = vadd.f32 %v2303, %v2587
      %v2710 = vadd.f32 %v2304, %v2592
      %v2711 = vadd.f32 %v2305, %v2597
      %v2712 = vadd.f32 %v2306, %v2602
      %v2713 = vadd.f32 %v2307, %v2607
      %v2714 = vadd.f32 %v2308, %v2612
      %v2715 = vadd.f32 %v2309, %v2617
      %v2716 = vadd.f32 %v2310, %v2622
      %v2717 = vadd.f32 %v2311, %v2627
      %v2718 = vadd.f32 %v2312, %v2632
      %v2719 = vadd.f32 %v2313, %v2637
      %v2720 = vadd.f32 %v2314, %v2642
      %v2721 = vadd.f32 %v2315, %v2647
      %v2722 = vadd.f32 %v2316, %v2652
      %v2723 = vadd.f32 %v2317, %v2657
      %v2724 = vadd.f32 %v2318, %v2662
      %v2725 = vadd.f32 %v2319, %v2667
      %v2726 = vadd.f32 %v2320, %v2672
      %v2727 = vadd.f32 %v2321, %v2677
      %v2728 = vadd.f32 %v2322, %v2682
      %v2729 = vadd.f32 %v2323, %v2687
      %v2730 = vadd.f32 %v2324, %v2692
      %v2731 = vadd.f32 %v2325, %v2697
      %s2732 = scalar_lea.vmem [#allocation2], 48
      %v2733 = vld [vmem:[%s2732] sm:$0xff]
      %v2734 = vld [vmem:[%s2732 + $0x8] sm:$0xff]
      %v2735 = vld [vmem:[%s2732 + $0x10] sm:$0x3]
      %v2736 = vld [vmem:[%s2732 + $0x18] sm:$0xff]
      %v2737 = vld [vmem:[%s2732 + $0x20] sm:$0xff]
      %v2738 = vld [vmem:[%s2732 + $0x28] sm:$0x3]
      %v2739 = vld [vmem:[%s2732 + $0x30] sm:$0xff]
      %v2740 = vld [vmem:[%s2732 + $0x38] sm:$0xff]
      %v2741 = vld [vmem:[%s2732 + $0x40] sm:$0x3]
      %v2742 = vld [vmem:[%s2732 + $0x48] sm:$0xff]
      %v2743 = vld [vmem:[%s2732 + $0x50] sm:$0xff]
      %v2744 = vld [vmem:[%s2732 + $0x58] sm:$0x3]
      %v2745 = vld [vmem:[%s2732 + $0x60] sm:$0xff]
      %v2746 = vld [vmem:[%s2732 + $0x68] sm:$0xff]
      %v2747 = vld [vmem:[%s2732 + $0x70] sm:$0x3]
      %v2748 = vld [vmem:[%s2732 + $0x78] sm:$0xff]
      %v2749 = vld [vmem:[%s2732 + $0x80] sm:$0xff]
      %v2750 = vld [vmem:[%s2732 + $0x88] sm:$0x3]
      %v2751 = vld [vmem:[%s2732 + $0x90] sm:$0xff]
      %v2752 = vld [vmem:[%s2732 + $0x98] sm:$0xff]
      %v2753 = vld [vmem:[%s2732 + $0xa0] sm:$0x3]
      %v2754 = vld [vmem:[%s2732 + $0xa8] sm:$0xff]
      %v2755 = vld [vmem:[%s2732 + $0xb0] sm:$0xff]
      %v2756 = vld [vmem:[%s2732 + $0xb8] sm:$0x3]
      %v2757 = vld [vmem:[%s2732 + $0xc0] sm:$0xff]
      %v2758 = vld [vmem:[%s2732 + $0xc8] sm:$0xff]
      %v2759 = vld [vmem:[%s2732 + $0xd0] sm:$0x3]
      %v2760 = vld [vmem:[%s2732 + $0xd8] sm:$0xff]
      %v2761 = vld [vmem:[%s2732 + $0xe0] sm:$0xff]
      %v2762 = vld [vmem:[%s2732 + $0xe8] sm:$0x3]
      %v2763 = vld [vmem:[%s2732 + $0xf0] sm:$0xff]
      %v2764 = vld [vmem:[%s2732 + $0xf8] sm:$0xff]
      %v2765 = vld [vmem:[%s2732 + $0x100] sm:$0x3]
      %v2766 = vld [vmem:[%s2732 + $0x108] sm:$0xff]
      %v2767 = vld [vmem:[%s2732 + $0x110] sm:$0xff]
      %v2768 = vld [vmem:[%s2732 + $0x118] sm:$0x3]
      %v2769 = vld [vmem:[%s2732 + $0x120] sm:$0xff]
      %v2770 = vld [vmem:[%s2732 + $0x128] sm:$0xff]
      %v2771 = vld [vmem:[%s2732 + $0x130] sm:$0x3]
      %v2772 = vld [vmem:[%s2732 + $0x138] sm:$0xff]
      %v2773 = vld [vmem:[%s2732 + $0x140] sm:$0xff]
      %v2774 = vld [vmem:[%s2732 + $0x148] sm:$0x3]
      %v2775 = vld [vmem:[%s2732 + $0x150] sm:$0xff]
      %v2776 = vld [vmem:[%s2732 + $0x158] sm:$0xff]
      %v2777 = vld [vmem:[%s2732 + $0x160] sm:$0x3]
      %v2778 = vld [vmem:[%s2732 + $0x168] sm:$0xff]
      %v2779 = vld [vmem:[%s2732 + $0x170] sm:$0xff]
      %v2780 = vld [vmem:[%s2732 + $0x178] sm:$0x3]
      %s2781 = scalar_lea.vmem %s1, 24
      %v2782 = vld [vmem:[%s2781] sm:$0xf]
      %v2784 = vsel %vm215, %v2733, 0
      %v2787 = vsel %vm215, %v2734, 0
      %v2790 = vsel %vm215, %v2736, 0
      %v2793 = vsel %vm215, %v2737, 0
      %v2796 = vsel %vm215, %v2739, 0
      %v2799 = vsel %vm215, %v2740, 0
      %v2802 = vsel %vm215, %v2742, 0
      %v2805 = vsel %vm215, %v2743, 0
      %v2808 = vsel %vm215, %v2745, 0
      %v2811 = vsel %vm215, %v2746, 0
      %v2814 = vsel %vm215, %v2748, 0
      %v2817 = vsel %vm215, %v2749, 0
      %v2820 = vsel %vm215, %v2751, 0
      %v2823 = vsel %vm215, %v2752, 0
      %v2826 = vsel %vm215, %v2754, 0
      %v2829 = vsel %vm215, %v2755, 0
      %v2832 = vsel %vm215, %v2757, 0
      %v2835 = vsel %vm215, %v2758, 0
      %v2838 = vsel %vm215, %v2760, 0
      %v2841 = vsel %vm215, %v2761, 0
      %v2844 = vsel %vm215, %v2763, 0
      %v2847 = vsel %vm215, %v2764, 0
      %v2850 = vsel %vm215, %v2766, 0
      %v2853 = vsel %vm215, %v2767, 0
      %v2856 = vsel %vm215, %v2769, 0
      %v2859 = vsel %vm215, %v2770, 0
      %v2862 = vsel %vm215, %v2772, 0
      %v2865 = vsel %vm215, %v2773, 0
      %v2868 = vsel %vm215, %v2775, 0
      %v2871 = vsel %vm215, %v2776, 0
      %v2874 = vsel %vm215, %v2778, 0
      %v2877 = vsel %vm215, %v2779, 0
      %v2880 = vsel %vm570, %v2782, 0
      %2882 = vmatprep.subr.mxu0 0.0
      %2883 = vmatpush1.msra.mxu0 0.0
      %2884 = vmatprep.subr.mxu0 0.0
      %2885 = vmatpush1.msra.mxu0 0.0
      %2886 = vmatprep.subr.mxu0 0.0
      %2887 = vmatpush1.msra.mxu0 0.0
      %2888 = vmatprep.subr.mxu0 0.0
      %2889 = vmatpush1.msra.mxu0 0.0
      %2890 = vmatprep.subr.mxu0 0.0
      %2891 = vmatpush1.msra.mxu0 0.0
      %2892 = vmatprep.subr.mxu0 0.0
      %2893 = vmatpush1.msra.mxu0 0.0
      %2894 = vmatprep.subr.mxu0 0.0
      %2895 = vmatpush1.msra.mxu0 0.0
      %2896 = vmatprep.subr.mxu0 0.0
      %2897 = vmatpush1.msra.mxu0 0.0
      %2898 = vmatprep.subr.mxu0 0.0
      %2899 = vmatpush1.msra.mxu0 0.0
      %2900 = vmatprep.subr.mxu0 0.0
      %2901 = vmatpush1.msra.mxu0 0.0
      %2902 = vmatprep.subr.mxu0 0.0
      %2903 = vmatpush1.msra.mxu0 0.0
      %2904 = vmatprep.subr.mxu0 0.0
      %2905 = vmatpush1.msra.mxu0 0.0
      %2906 = vmatprep.subr.mxu0 0.0
      %2907 = vmatpush1.msra.mxu0 0.0
      %2908 = vmatprep.subr.mxu0 0.0
      %2909 = vmatpush1.msra.mxu0 0.0
      %2910 = vmatprep.subr.mxu0 0.0
      %2911 = vmatpush1.msra.mxu0 0.0
      %2912 = vmatprep.subr.mxu0 0.0
      %2913 = vmatpush1.msra.mxu0 %v2880
      %2914 = vmatprep.subr.mxu0 0.0
      %2915 = vmatpush2.msra.mxu0 0.0
      %2916 = vmatprep.subr.mxu0 0.0
      %2917 = vmatpush2.msra.mxu0 0.0
      %2918 = vmatprep.subr.mxu0 0.0
      %2919 = vmatpush2.msra.mxu0 0.0
      %2920 = vmatprep.subr.mxu0 0.0
      %2921 = vmatpush2.msra.mxu0 0.0
      %2922 = vmatprep.subr.mxu0 0.0
      %2923 = vmatpush2.msra.mxu0 0.0
      %2924 = vmatprep.subr.mxu0 0.0
      %2925 = vmatpush2.msra.mxu0 0.0
      %2926 = vmatprep.subr.mxu0 0.0
      %2927 = vmatpush2.msra.mxu0 0.0
      %2928 = vmatprep.subr.mxu0 0.0
      %2929 = vmatpush2.msra.mxu0 0.0
      %2930 = vmatprep.subr.mxu0 0.0
      %2931 = vmatpush2.msra.mxu0 0.0
      %2932 = vmatprep.subr.mxu0 0.0
      %2933 = vmatpush2.msra.mxu0 0.0
      %2934 = vmatprep.subr.mxu0 0.0
      %2935 = vmatpush2.msra.mxu0 0.0
      %2936 = vmatprep.subr.mxu0 0.0
      %2937 = vmatpush2.msra.mxu0 0.0
      %2938 = vmatprep.subr.mxu0 0.0
      %2939 = vmatpush2.msra.mxu0 0.0
      %2940 = vmatprep.subr.mxu0 0.0
      %2941 = vmatpush2.msra.mxu0 0.0
      %2942 = vmatprep.subr.mxu0 0.0
      %2943 = vmatpush2.msra.mxu0 0.0
      %2944 = vmatprep.subr.mxu0 0.0
      %2945 = vmatpush2.msra.mxu0 0.0
      %2946 = vmatprep.mubr.f32.mxu0 0.0
      %2947 = vmatmul.mubr.f32.gmra.mxu0 %v2784
      %v2948 = vpop.f32.mrf.mxu0
      %v2949 = vadd.f32 0.0, %v2948
      %v2950 = vpop.f32.mrf.mxu0
      %2951 = vmatprep.mubr.f32.mxu0 0.0
      %2952 = vmatmul.mubr.f32.gmra.mxu0 %v2787
      %v2953 = vpop.f32.mrf.mxu0
      %v2954 = vadd.f32 0.0, %v2953
      %v2955 = vpop.f32.mrf.mxu0
      %2956 = vmatprep.mubr.f32.mxu0 0.0
      %2957 = vmatmul.mubr.f32.gmra.mxu0 %v2790
      %v2958 = vpop.f32.mrf.mxu0
      %v2959 = vadd.f32 0.0, %v2958
      %v2960 = vpop.f32.mrf.mxu0
      %2961 = vmatprep.mubr.f32.mxu0 0.0
      %2962 = vmatmul.mubr.f32.gmra.mxu0 %v2793
      %v2963 = vpop.f32.mrf.mxu0
      %v2964 = vadd.f32 0.0, %v2963
      %v2965 = vpop.f32.mrf.mxu0
      %2966 = vmatprep.mubr.f32.mxu0 0.0
      %2967 = vmatmul.mubr.f32.gmra.mxu0 %v2796
      %v2968 = vpop.f32.mrf.mxu0
      %v2969 = vadd.f32 0.0, %v2968
      %v2970 = vpop.f32.mrf.mxu0
      %2971 = vmatprep.mubr.f32.mxu0 0.0
      %2972 = vmatmul.mubr.f32.gmra.mxu0 %v2799
      %v2973 = vpop.f32.mrf.mxu0
      %v2974 = vadd.f32 0.0, %v2973
      %v2975 = vpop.f32.mrf.mxu0
      %2976 = vmatprep.mubr.f32.mxu0 0.0
      %2977 = vmatmul.mubr.f32.gmra.mxu0 %v2802
      %v2978 = vpop.f32.mrf.mxu0
      %v2979 = vadd.f32 0.0, %v2978
      %v2980 = vpop.f32.mrf.mxu0
      %2981 = vmatprep.mubr.f32.mxu0 0.0
      %2982 = vmatmul.mubr.f32.gmra.mxu0 %v2805
      %v2983 = vpop.f32.mrf.mxu0
      %v2984 = vadd.f32 0.0, %v2983
      %v2985 = vpop.f32.mrf.mxu0
      %2986 = vmatprep.mubr.f32.mxu0 0.0
      %2987 = vmatmul.mubr.f32.gmra.mxu0 %v2808
      %v2988 = vpop.f32.mrf.mxu0
      %v2989 = vadd.f32 0.0, %v2988
      %v2990 = vpop.f32.mrf.mxu0
      %2991 = vmatprep.mubr.f32.mxu0 0.0
      %2992 = vmatmul.mubr.f32.gmra.mxu0 %v2811
      %v2993 = vpop.f32.mrf.mxu0
      %v2994 = vadd.f32 0.0, %v2993
      %v2995 = vpop.f32.mrf.mxu0
      %2996 = vmatprep.mubr.f32.mxu0 0.0
      %2997 = vmatmul.mubr.f32.gmra.mxu0 %v2814
      %v2998 = vpop.f32.mrf.mxu0
      %v2999 = vadd.f32 0.0, %v2998
      %v3000 = vpop.f32.mrf.mxu0
      %3001 = vmatprep.mubr.f32.mxu0 0.0
      %3002 = vmatmul.mubr.f32.gmra.mxu0 %v2817
      %v3003 = vpop.f32.mrf.mxu0
      %v3004 = vadd.f32 0.0, %v3003
      %v3005 = vpop.f32.mrf.mxu0
      %3006 = vmatprep.mubr.f32.mxu0 0.0
      %3007 = vmatmul.mubr.f32.gmra.mxu0 %v2820
      %v3008 = vpop.f32.mrf.mxu0
      %v3009 = vadd.f32 0.0, %v3008
      %v3010 = vpop.f32.mrf.mxu0
      %3011 = vmatprep.mubr.f32.mxu0 0.0
      %3012 = vmatmul.mubr.f32.gmra.mxu0 %v2823
      %v3013 = vpop.f32.mrf.mxu0
      %v3014 = vadd.f32 0.0, %v3013
      %v3015 = vpop.f32.mrf.mxu0
      %3016 = vmatprep.mubr.f32.mxu0 0.0
      %3017 = vmatmul.mubr.f32.gmra.mxu0 %v2826
      %v3018 = vpop.f32.mrf.mxu0
      %v3019 = vadd.f32 0.0, %v3018
      %v3020 = vpop.f32.mrf.mxu0
      %3021 = vmatprep.mubr.f32.mxu0 0.0
      %3022 = vmatmul.mubr.f32.gmra.mxu0 %v2829
      %v3023 = vpop.f32.mrf.mxu0
      %v3024 = vadd.f32 0.0, %v3023
      %v3025 = vpop.f32.mrf.mxu0
      %3026 = vmatprep.mubr.f32.mxu0 0.0
      %3027 = vmatmul.mubr.f32.gmra.mxu0 %v2832
      %v3028 = vpop.f32.mrf.mxu0
      %v3029 = vadd.f32 0.0, %v3028
      %v3030 = vpop.f32.mrf.mxu0
      %3031 = vmatprep.mubr.f32.mxu0 0.0
      %3032 = vmatmul.mubr.f32.gmra.mxu0 %v2835
      %v3033 = vpop.f32.mrf.mxu0
      %v3034 = vadd.f32 0.0, %v3033
      %v3035 = vpop.f32.mrf.mxu0
      %3036 = vmatprep.mubr.f32.mxu0 0.0
      %3037 = vmatmul.mubr.f32.gmra.mxu0 %v2838
      %v3038 = vpop.f32.mrf.mxu0
      %v3039 = vadd.f32 0.0, %v3038
      %v3040 = vpop.f32.mrf.mxu0
      %3041 = vmatprep.mubr.f32.mxu0 0.0
      %3042 = vmatmul.mubr.f32.gmra.mxu0 %v2841
      %v3043 = vpop.f32.mrf.mxu0
      %v3044 = vadd.f32 0.0, %v3043
      %v3045 = vpop.f32.mrf.mxu0
      %3046 = vmatprep.mubr.f32.mxu0 0.0
      %3047 = vmatmul.mubr.f32.gmra.mxu0 %v2844
      %v3048 = vpop.f32.mrf.mxu0
      %v3049 = vadd.f32 0.0, %v3048
      %v3050 = vpop.f32.mrf.mxu0
      %3051 = vmatprep.mubr.f32.mxu0 0.0
      %3052 = vmatmul.mubr.f32.gmra.mxu0 %v2847
      %v3053 = vpop.f32.mrf.mxu0
      %v3054 = vadd.f32 0.0, %v3053
      %v3055 = vpop.f32.mrf.mxu0
      %3056 = vmatprep.mubr.f32.mxu0 0.0
      %3057 = vmatmul.mubr.f32.gmra.mxu0 %v2850
      %v3058 = vpop.f32.mrf.mxu0
      %v3059 = vadd.f32 0.0, %v3058
      %v3060 = vpop.f32.mrf.mxu0
      %3061 = vmatprep.mubr.f32.mxu0 0.0
      %3062 = vmatmul.mubr.f32.gmra.mxu0 %v2853
      %v3063 = vpop.f32.mrf.mxu0
      %v3064 = vadd.f32 0.0, %v3063
      %v3065 = vpop.f32.mrf.mxu0
      %3066 = vmatprep.mubr.f32.mxu0 0.0
      %3067 = vmatmul.mubr.f32.gmra.mxu0 %v2856
      %v3068 = vpop.f32.mrf.mxu0
      %v3069 = vadd.f32 0.0, %v3068
      %v3070 = vpop.f32.mrf.mxu0
      %3071 = vmatprep.mubr.f32.mxu0 0.0
      %3072 = vmatmul.mubr.f32.gmra.mxu0 %v2859
      %v3073 = vpop.f32.mrf.mxu0
      %v3074 = vadd.f32 0.0, %v3073
      %v3075 = vpop.f32.mrf.mxu0
      %3076 = vmatprep.mubr.f32.mxu0 0.0
      %3077 = vmatmul.mubr.f32.gmra.mxu0 %v2862
      %v3078 = vpop.f32.mrf.mxu0
      %v3079 = vadd.f32 0.0, %v3078
      %v3080 = vpop.f32.mrf.mxu0
      %3081 = vmatprep.mubr.f32.mxu0 0.0
      %3082 = vmatmul.mubr.f32.gmra.mxu0 %v2865
      %v3083 = vpop.f32.mrf.mxu0
      %v3084 = vadd.f32 0.0, %v3083
      %v3085 = vpop.f32.mrf.mxu0
      %3086 = vmatprep.mubr.f32.mxu0 0.0
      %3087 = vmatmul.mubr.f32.gmra.mxu0 %v2868
      %v3088 = vpop.f32.mrf.mxu0
      %v3089 = vadd.f32 0.0, %v3088
      %v3090 = vpop.f32.mrf.mxu0
      %3091 = vmatprep.mubr.f32.mxu0 0.0
      %3092 = vmatmul.mubr.f32.gmra.mxu0 %v2871
      %v3093 = vpop.f32.mrf.mxu0
      %v3094 = vadd.f32 0.0, %v3093
      %v3095 = vpop.f32.mrf.mxu0
      %3096 = vmatprep.mubr.f32.mxu0 0.0
      %3097 = vmatmul.mubr.f32.gmra.mxu0 %v2874
      %v3098 = vpop.f32.mrf.mxu0
      %v3099 = vadd.f32 0.0, %v3098
      %v3100 = vpop.f32.mrf.mxu0
      %3101 = vmatprep.mubr.f32.mxu0 0.0
      %3102 = vmatmul.mubr.f32.gmra.mxu0 %v2877
      %v3103 = vpop.f32.mrf.mxu0
      %v3104 = vadd.f32 0.0, %v3103
      %v3105 = vpop.f32.mrf.mxu0
      %3106 = vdwg.mxu0
      %v3107 = vadd.f32 %v2700, %v2949
      %v3108 = vadd.f32 %v2701, %v2954
      %v3109 = vadd.f32 %v2702, %v2959
      %v3110 = vadd.f32 %v2703, %v2964
      %v3111 = vadd.f32 %v2704, %v2969
      %v3112 = vadd.f32 %v2705, %v2974
      %v3113 = vadd.f32 %v2706, %v2979
      %v3114 = vadd.f32 %v2707, %v2984
      %v3115 = vadd.f32 %v2708, %v2989
      %v3116 = vadd.f32 %v2709, %v2994
      %v3117 = vadd.f32 %v2710, %v2999
      %v3118 = vadd.f32 %v2711, %v3004
      %v3119 = vadd.f32 %v2712, %v3009
      %v3120 = vadd.f32 %v2713, %v3014
      %v3121 = vadd.f32 %v2714, %v3019
      %v3122 = vadd.f32 %v2715, %v3024
      %v3123 = vadd.f32 %v2716, %v3029
      %v3124 = vadd.f32 %v2717, %v3034
      %v3125 = vadd.f32 %v2718, %v3039
      %v3126 = vadd.f32 %v2719, %v3044
      %v3127 = vadd.f32 %v2720, %v3049
      %v3128 = vadd.f32 %v2721, %v3054
      %v3129 = vadd.f32 %v2722, %v3059
      %v3130 = vadd.f32 %v2723, %v3064
      %v3131 = vadd.f32 %v2724, %v3069
      %v3132 = vadd.f32 %v2725, %v3074
      %v3133 = vadd.f32 %v2726, %v3079
      %v3134 = vadd.f32 %v2727, %v3084
      %v3135 = vadd.f32 %v2728, %v3089
      %v3136 = vadd.f32 %v2729, %v3094
      %v3137 = vadd.f32 %v2730, %v3099
      %v3138 = vadd.f32 %v2731, %v3104
      %v3155 = vrot.slane %v2733, 1
      %v3156 = vrot.slane %v2734, 1
      %v3157 = vsel %vm423, %v3155, %v3156
      %v3158 = vrot.slane %v2735, 1
      %v3159 = vsel %vm423, %v3156, %v3158
      %v3160 = vrot.slane %v2736, 1
      %v3161 = vrot.slane %v2737, 1
      %v3162 = vsel %vm423, %v3160, %v3161
      %v3163 = vrot.slane %v2738, 1
      %v3164 = vsel %vm423, %v3161, %v3163
      %v3165 = vrot.slane %v2739, 1
      %v3166 = vrot.slane %v2740, 1
      %v3167 = vsel %vm423, %v3165, %v3166
      %v3168 = vrot.slane %v2741, 1
      %v3169 = vsel %vm423, %v3166, %v3168
      %v3170 = vrot.slane %v2742, 1
      %v3171 = vrot.slane %v2743, 1
      %v3172 = vsel %vm423, %v3170, %v3171
      %v3173 = vrot.slane %v2744, 1
      %v3174 = vsel %vm423, %v3171, %v3173
      %v3175 = vrot.slane %v2745, 1
      %v3176 = vrot.slane %v2746, 1
      %v3177 = vsel %vm423, %v3175, %v3176
      %v3178 = vrot.slane %v2747, 1
      %v3179 = vsel %vm423, %v3176, %v3178
      %v3180 = vrot.slane %v2748, 1
      %v3181 = vrot.slane %v2749, 1
      %v3182 = vsel %vm423, %v3180, %v3181
      %v3183 = vrot.slane %v2750, 1
      %v3184 = vsel %vm423, %v3181, %v3183
      %v3185 = vrot.slane %v2751, 1
      %v3186 = vrot.slane %v2752, 1
      %v3187 = vsel %vm423, %v3185, %v3186
      %v3188 = vrot.slane %v2753, 1
      %v3189 = vsel %vm423, %v3186, %v3188
      %v3190 = vrot.slane %v2754, 1
      %v3191 = vrot.slane %v2755, 1
      %v3192 = vsel %vm423, %v3190, %v3191
      %v3193 = vrot.slane %v2756, 1
      %v3194 = vsel %vm423, %v3191, %v3193
      %v3195 = vrot.slane %v2757, 1
      %v3196 = vrot.slane %v2758, 1
      %v3197 = vsel %vm423, %v3195, %v3196
      %v3198 = vrot.slane %v2759, 1
      %v3199 = vsel %vm423, %v3196, %v3198
      %v3200 = vrot.slane %v2760, 1
      %v3201 = vrot.slane %v2761, 1
      %v3202 = vsel %vm423, %v3200, %v3201
      %v3203 = vrot.slane %v2762, 1
      %v3204 = vsel %vm423, %v3201, %v3203
      %v3205 = vrot.slane %v2763, 1
      %v3206 = vrot.slane %v2764, 1
      %v3207 = vsel %vm423, %v3205, %v3206
      %v3208 = vrot.slane %v2765, 1
      %v3209 = vsel %vm423, %v3206, %v3208
      %v3210 = vrot.slane %v2766, 1
      %v3211 = vrot.slane %v2767, 1
      %v3212 = vsel %vm423, %v3210, %v3211
      %v3213 = vrot.slane %v2768, 1
      %v3214 = vsel %vm423, %v3211, %v3213
      %v3215 = vrot.slane %v2769, 1
      %v3216 = vrot.slane %v2770, 1
      %v3217 = vsel %vm423, %v3215, %v3216
      %v3218 = vrot.slane %v2771, 1
      %v3219 = vsel %vm423, %v3216, %v3218
      %v3220 = vrot.slane %v2772, 1
      %v3221 = vrot.slane %v2773, 1
      %v3222 = vsel %vm423, %v3220, %v3221
      %v3223 = vrot.slane %v2774, 1
      %v3224 = vsel %vm423, %v3221, %v3223
      %v3225 = vrot.slane %v2775, 1
      %v3226 = vrot.slane %v2776, 1
      %v3227 = vsel %vm423, %v3225, %v3226
      %v3228 = vrot.slane %v2777, 1
      %v3229 = vsel %vm423, %v3226, %v3228
      %v3230 = vrot.slane %v2778, 1
      %v3231 = vrot.slane %v2779, 1
      %v3232 = vsel %vm423, %v3230, %v3231
      %v3233 = vrot.slane %v2780, 1
      %v3234 = vsel %vm423, %v3231, %v3233
      %s3235 = scalar_lea.vmem %s1, 28
      %v3236 = vld [vmem:[%s3235] sm:$0xf]
      %v3237 = vsel %vm215, %v3157, 0
      %v3239 = vsel %vm215, %v3159, 0
      %v3241 = vsel %vm215, %v3162, 0
      %v3243 = vsel %vm215, %v3164, 0
      %v3245 = vsel %vm215, %v3167, 0
      %v3247 = vsel %vm215, %v3169, 0
      %v3249 = vsel %vm215, %v3172, 0
      %v3251 = vsel %vm215, %v3174, 0
      %v3253 = vsel %vm215, %v3177, 0
      %v3255 = vsel %vm215, %v3179, 0
      %v3257 = vsel %vm215, %v3182, 0
      %v3259 = vsel %vm215, %v3184, 0
      %v3261 = vsel %vm215, %v3187, 0
      %v3263 = vsel %vm215, %v3189, 0
      %v3265 = vsel %vm215, %v3192, 0
      %v3267 = vsel %vm215, %v3194, 0
      %v3269 = vsel %vm215, %v3197, 0
      %v3271 = vsel %vm215, %v3199, 0
      %v3273 = vsel %vm215, %v3202, 0
      %v3275 = vsel %vm215, %v3204, 0
      %v3277 = vsel %vm215, %v3207, 0
      %v3279 = vsel %vm215, %v3209, 0
      %v3281 = vsel %vm215, %v3212, 0
      %v3283 = vsel %vm215, %v3214, 0
      %v3285 = vsel %vm215, %v3217, 0
      %v3287 = vsel %vm215, %v3219, 0
      %v3289 = vsel %vm215, %v3222, 0
      %v3291 = vsel %vm215, %v3224, 0
      %v3293 = vsel %vm215, %v3227, 0
      %v3295 = vsel %vm215, %v3229, 0
      %v3297 = vsel %vm215, %v3232, 0
      %v3299 = vsel %vm215, %v3234, 0
      %v3302 = vsel %vm570, %v3236, 0
      %3304 = vmatprep.subr.mxu0 0.0
      %3305 = vmatpush1.msra.mxu0 0.0
      %3306 = vmatprep.subr.mxu0 0.0
      %3307 = vmatpush1.msra.mxu0 0.0
      %3308 = vmatprep.subr.mxu0 0.0
      %3309 = vmatpush1.msra.mxu0 0.0
      %3310 = vmatprep.subr.mxu0 0.0
      %3311 = vmatpush1.msra.mxu0 0.0
      %3312 = vmatprep.subr.mxu0 0.0
      %3313 = vmatpush1.msra.mxu0 0.0
      %3314 = vmatprep.subr.mxu0 0.0
      %3315 = vmatpush1.msra.mxu0 0.0
      %3316 = vmatprep.subr.mxu0 0.0
      %3317 = vmatpush1.msra.mxu0 0.0
      %3318 = vmatprep.subr.mxu0 0.0
      %3319 = vmatpush1.msra.mxu0 0.0
      %3320 = vmatprep.subr.mxu0 0.0
      %3321 = vmatpush1.msra.mxu0 0.0
      %3322 = vmatprep.subr.mxu0 0.0
      %3323 = vmatpush1.msra.mxu0 0.0
      %3324 = vmatprep.subr.mxu0 0.0
      %3325 = vmatpush1.msra.mxu0 0.0
      %3326 = vmatprep.subr.mxu0 0.0
      %3327 = vmatpush1.msra.mxu0 0.0
      %3328 = vmatprep.subr.mxu0 0.0
      %3329 = vmatpush1.msra.mxu0 0.0
      %3330 = vmatprep.subr.mxu0 0.0
      %3331 = vmatpush1.msra.mxu0 0.0
      %3332 = vmatprep.subr.mxu0 0.0
      %3333 = vmatpush1.msra.mxu0 0.0
      %3334 = vmatprep.subr.mxu0 0.0
      %3335 = vmatpush1.msra.mxu0 %v3302
      %3336 = vmatprep.subr.mxu0 0.0
      %3337 = vmatpush2.msra.mxu0 0.0
      %3338 = vmatprep.subr.mxu0 0.0
      %3339 = vmatpush2.msra.mxu0 0.0
      %3340 = vmatprep.subr.mxu0 0.0
      %3341 = vmatpush2.msra.mxu0 0.0
      %3342 = vmatprep.subr.mxu0 0.0
      %3343 = vmatpush2.msra.mxu0 0.0
      %3344 = vmatprep.subr.mxu0 0.0
      %3345 = vmatpush2.msra.mxu0 0.0
      %3346 = vmatprep.subr.mxu0 0.0
      %3347 = vmatpush2.msra.mxu0 0.0
      %3348 = vmatprep.subr.mxu0 0.0
      %3349 = vmatpush2.msra.mxu0 0.0
      %3350 = vmatprep.subr.mxu0 0.0
      %3351 = vmatpush2.msra.mxu0 0.0
      %3352 = vmatprep.subr.mxu0 0.0
      %3353 = vmatpush2.msra.mxu0 0.0
      %3354 = vmatprep.subr.mxu0 0.0
      %3355 = vmatpush2.msra.mxu0 0.0
      %3356 = vmatprep.subr.mxu0 0.0
      %3357 = vmatpush2.msra.mxu0 0.0
      %3358 = vmatprep.subr.mxu0 0.0
      %3359 = vmatpush2.msra.mxu0 0.0
      %3360 = vmatprep.subr.mxu0 0.0
      %3361 = vmatpush2.msra.mxu0 0.0
      %3362 = vmatprep.subr.mxu0 0.0
      %3363 = vmatpush2.msra.mxu0 0.0
      %3364 = vmatprep.subr.mxu0 0.0
      %3365 = vmatpush2.msra.mxu0 0.0
      %3366 = vmatprep.subr.mxu0 0.0
      %3367 = vmatpush2.msra.mxu0 0.0
      %3368 = vmatprep.mubr.f32.mxu0 0.0
      %3369 = vmatmul.mubr.f32.gmra.mxu0 %v3237
      %v3370 = vpop.f32.mrf.mxu0
      %v3371 = vadd.f32 0.0, %v3370
      %v3372 = vpop.f32.mrf.mxu0
      %3373 = vmatprep.mubr.f32.mxu0 0.0
      %3374 = vmatmul.mubr.f32.gmra.mxu0 %v3239
      %v3375 = vpop.f32.mrf.mxu0
      %v3376 = vadd.f32 0.0, %v3375
      %v3377 = vpop.f32.mrf.mxu0
      %3378 = vmatprep.mubr.f32.mxu0 0.0
      %3379 = vmatmul.mubr.f32.gmra.mxu0 %v3241
      %v3380 = vpop.f32.mrf.mxu0
      %v3381 = vadd.f32 0.0, %v3380
      %v3382 = vpop.f32.mrf.mxu0
      %3383 = vmatprep.mubr.f32.mxu0 0.0
      %3384 = vmatmul.mubr.f32.gmra.mxu0 %v3243
      %v3385 = vpop.f32.mrf.mxu0
      %v3386 = vadd.f32 0.0, %v3385
      %v3387 = vpop.f32.mrf.mxu0
      %3388 = vmatprep.mubr.f32.mxu0 0.0
      %3389 = vmatmul.mubr.f32.gmra.mxu0 %v3245
      %v3390 = vpop.f32.mrf.mxu0
      %v3391 = vadd.f32 0.0, %v3390
      %v3392 = vpop.f32.mrf.mxu0
      %3393 = vmatprep.mubr.f32.mxu0 0.0
      %3394 = vmatmul.mubr.f32.gmra.mxu0 %v3247
      %v3395 = vpop.f32.mrf.mxu0
      %v3396 = vadd.f32 0.0, %v3395
      %v3397 = vpop.f32.mrf.mxu0
      %3398 = vmatprep.mubr.f32.mxu0 0.0
      %3399 = vmatmul.mubr.f32.gmra.mxu0 %v3249
      %v3400 = vpop.f32.mrf.mxu0
      %v3401 = vadd.f32 0.0, %v3400
      %v3402 = vpop.f32.mrf.mxu0
      %3403 = vmatprep.mubr.f32.mxu0 0.0
      %3404 = vmatmul.mubr.f32.gmra.mxu0 %v3251
      %v3405 = vpop.f32.mrf.mxu0
      %v3406 = vadd.f32 0.0, %v3405
      %v3407 = vpop.f32.mrf.mxu0
      %3408 = vmatprep.mubr.f32.mxu0 0.0
      %3409 = vmatmul.mubr.f32.gmra.mxu0 %v3253
      %v3410 = vpop.f32.mrf.mxu0
      %v3411 = vadd.f32 0.0, %v3410
      %v3412 = vpop.f32.mrf.mxu0
      %3413 = vmatprep.mubr.f32.mxu0 0.0
      %3414 = vmatmul.mubr.f32.gmra.mxu0 %v3255
      %v3415 = vpop.f32.mrf.mxu0
      %v3416 = vadd.f32 0.0, %v3415
      %v3417 = vpop.f32.mrf.mxu0
      %3418 = vmatprep.mubr.f32.mxu0 0.0
      %3419 = vmatmul.mubr.f32.gmra.mxu0 %v3257
      %v3420 = vpop.f32.mrf.mxu0
      %v3421 = vadd.f32 0.0, %v3420
      %v3422 = vpop.f32.mrf.mxu0
      %3423 = vmatprep.mubr.f32.mxu0 0.0
      %3424 = vmatmul.mubr.f32.gmra.mxu0 %v3259
      %v3425 = vpop.f32.mrf.mxu0
      %v3426 = vadd.f32 0.0, %v3425
      %v3427 = vpop.f32.mrf.mxu0
      %3428 = vmatprep.mubr.f32.mxu0 0.0
      %3429 = vmatmul.mubr.f32.gmra.mxu0 %v3261
      %v3430 = vpop.f32.mrf.mxu0
      %v3431 = vadd.f32 0.0, %v3430
      %v3432 = vpop.f32.mrf.mxu0
      %3433 = vmatprep.mubr.f32.mxu0 0.0
      %3434 = vmatmul.mubr.f32.gmra.mxu0 %v3263
      %v3435 = vpop.f32.mrf.mxu0
      %v3436 = vadd.f32 0.0, %v3435
      %v3437 = vpop.f32.mrf.mxu0
      %3438 = vmatprep.mubr.f32.mxu0 0.0
      %3439 = vmatmul.mubr.f32.gmra.mxu0 %v3265
      %v3440 = vpop.f32.mrf.mxu0
      %v3441 = vadd.f32 0.0, %v3440
      %v3442 = vpop.f32.mrf.mxu0
      %3443 = vmatprep.mubr.f32.mxu0 0.0
      %3444 = vmatmul.mubr.f32.gmra.mxu0 %v3267
      %v3445 = vpop.f32.mrf.mxu0
      %v3446 = vadd.f32 0.0, %v3445
      %v3447 = vpop.f32.mrf.mxu0
      %3448 = vmatprep.mubr.f32.mxu0 0.0
      %3449 = vmatmul.mubr.f32.gmra.mxu0 %v3269
      %v3450 = vpop.f32.mrf.mxu0
      %v3451 = vadd.f32 0.0, %v3450
      %v3452 = vpop.f32.mrf.mxu0
      %3453 = vmatprep.mubr.f32.mxu0 0.0
      %3454 = vmatmul.mubr.f32.gmra.mxu0 %v3271
      %v3455 = vpop.f32.mrf.mxu0
      %v3456 = vadd.f32 0.0, %v3455
      %v3457 = vpop.f32.mrf.mxu0
      %3458 = vmatprep.mubr.f32.mxu0 0.0
      %3459 = vmatmul.mubr.f32.gmra.mxu0 %v3273
      %v3460 = vpop.f32.mrf.mxu0
      %v3461 = vadd.f32 0.0, %v3460
      %v3462 = vpop.f32.mrf.mxu0
      %3463 = vmatprep.mubr.f32.mxu0 0.0
      %3464 = vmatmul.mubr.f32.gmra.mxu0 %v3275
      %v3465 = vpop.f32.mrf.mxu0
      %v3466 = vadd.f32 0.0, %v3465
      %v3467 = vpop.f32.mrf.mxu0
      %3468 = vmatprep.mubr.f32.mxu0 0.0
      %3469 = vmatmul.mubr.f32.gmra.mxu0 %v3277
      %v3470 = vpop.f32.mrf.mxu0
      %v3471 = vadd.f32 0.0, %v3470
      %v3472 = vpop.f32.mrf.mxu0
      %3473 = vmatprep.mubr.f32.mxu0 0.0
      %3474 = vmatmul.mubr.f32.gmra.mxu0 %v3279
      %v3475 = vpop.f32.mrf.mxu0
      %v3476 = vadd.f32 0.0, %v3475
      %v3477 = vpop.f32.mrf.mxu0
      %3478 = vmatprep.mubr.f32.mxu0 0.0
      %3479 = vmatmul.mubr.f32.gmra.mxu0 %v3281
      %v3480 = vpop.f32.mrf.mxu0
      %v3481 = vadd.f32 0.0, %v3480
      %v3482 = vpop.f32.mrf.mxu0
      %3483 = vmatprep.mubr.f32.mxu0 0.0
      %3484 = vmatmul.mubr.f32.gmra.mxu0 %v3283
      %v3485 = vpop.f32.mrf.mxu0
      %v3486 = vadd.f32 0.0, %v3485
      %v3487 = vpop.f32.mrf.mxu0
      %3488 = vmatprep.mubr.f32.mxu0 0.0
      %3489 = vmatmul.mubr.f32.gmra.mxu0 %v3285
      %v3490 = vpop.f32.mrf.mxu0
      %v3491 = vadd.f32 0.0, %v3490
      %v3492 = vpop.f32.mrf.mxu0
      %3493 = vmatprep.mubr.f32.mxu0 0.0
      %3494 = vmatmul.mubr.f32.gmra.mxu0 %v3287
      %v3495 = vpop.f32.mrf.mxu0
      %v3496 = vadd.f32 0.0, %v3495
      %v3497 = vpop.f32.mrf.mxu0
      %3498 = vmatprep.mubr.f32.mxu0 0.0
      %3499 = vmatmul.mubr.f32.gmra.mxu0 %v3289
      %v3500 = vpop.f32.mrf.mxu0
      %v3501 = vadd.f32 0.0, %v3500
      %v3502 = vpop.f32.mrf.mxu0
      %3503 = vmatprep.mubr.f32.mxu0 0.0
      %3504 = vmatmul.mubr.f32.gmra.mxu0 %v3291
      %v3505 = vpop.f32.mrf.mxu0
      %v3506 = vadd.f32 0.0, %v3505
      %v3507 = vpop.f32.mrf.mxu0
      %3508 = vmatprep.mubr.f32.mxu0 0.0
      %3509 = vmatmul.mubr.f32.gmra.mxu0 %v3293
      %v3510 = vpop.f32.mrf.mxu0
      %v3511 = vadd.f32 0.0, %v3510
      %v3512 = vpop.f32.mrf.mxu0
      %3513 = vmatprep.mubr.f32.mxu0 0.0
      %3514 = vmatmul.mubr.f32.gmra.mxu0 %v3295
      %v3515 = vpop.f32.mrf.mxu0
      %v3516 = vadd.f32 0.0, %v3515
      %v3517 = vpop.f32.mrf.mxu0
      %3518 = vmatprep.mubr.f32.mxu0 0.0
      %3519 = vmatmul.mubr.f32.gmra.mxu0 %v3297
      %v3520 = vpop.f32.mrf.mxu0
      %v3521 = vadd.f32 0.0, %v3520
      %v3522 = vpop.f32.mrf.mxu0
      %3523 = vmatprep.mubr.f32.mxu0 0.0
      %3524 = vmatmul.mubr.f32.gmra.mxu0 %v3299
      %v3525 = vpop.f32.mrf.mxu0
      %v3526 = vadd.f32 0.0, %v3525
      %v3527 = vpop.f32.mrf.mxu0
      %3528 = vdwg.mxu0
      %v3529 = vadd.f32 %v3107, %v3371
      %v3530 = vadd.f32 %v3108, %v3376
      %v3531 = vadd.f32 %v3109, %v3381
      %v3532 = vadd.f32 %v3110, %v3386
      %v3533 = vadd.f32 %v3111, %v3391
      %v3534 = vadd.f32 %v3112, %v3396
      %v3535 = vadd.f32 %v3113, %v3401
      %v3536 = vadd.f32 %v3114, %v3406
      %v3537 = vadd.f32 %v3115, %v3411
      %v3538 = vadd.f32 %v3116, %v3416
      %v3539 = vadd.f32 %v3117, %v3421
      %v3540 = vadd.f32 %v3118, %v3426
      %v3541 = vadd.f32 %v3119, %v3431
      %v3542 = vadd.f32 %v3120, %v3436
      %v3543 = vadd.f32 %v3121, %v3441
      %v3544 = vadd.f32 %v3122, %v3446
      %v3545 = vadd.f32 %v3123, %v3451
      %v3546 = vadd.f32 %v3124, %v3456
      %v3547 = vadd.f32 %v3125, %v3461
      %v3548 = vadd.f32 %v3126, %v3466
      %v3549 = vadd.f32 %v3127, %v3471
      %v3550 = vadd.f32 %v3128, %v3476
      %v3551 = vadd.f32 %v3129, %v3481
      %v3552 = vadd.f32 %v3130, %v3486
      %v3553 = vadd.f32 %v3131, %v3491
      %v3554 = vadd.f32 %v3132, %v3496
      %v3555 = vadd.f32 %v3133, %v3501
      %v3556 = vadd.f32 %v3134, %v3506
      %v3557 = vadd.f32 %v3135, %v3511
      %v3558 = vadd.f32 %v3136, %v3516
      %v3559 = vadd.f32 %v3137, %v3521
      %v3560 = vadd.f32 %v3138, %v3526
      %v3561 = vrot.slane %v2733, 2
      %v3562 = vrot.slane %v2734, 2
      %v3563 = vsel %vm1091, %v3561, %v3562
      %v3564 = vrot.slane %v2735, 2
      %v3565 = vsel %vm1091, %v3562, %v3564
      %v3566 = vrot.slane %v2736, 2
      %v3567 = vrot.slane %v2737, 2
      %v3568 = vsel %vm1091, %v3566, %v3567
      %v3569 = vrot.slane %v2738, 2
      %v3570 = vsel %vm1091, %v3567, %v3569
      %v3571 = vrot.slane %v2739, 2
      %v3572 = vrot.slane %v2740, 2
      %v3573 = vsel %vm1091, %v3571, %v3572
      %v3574 = vrot.slane %v2741, 2
      %v3575 = vsel %vm1091, %v3572, %v3574
      %v3576 = vrot.slane %v2742, 2
      %v3577 = vrot.slane %v2743, 2
      %v3578 = vsel %vm1091, %v3576, %v3577
      %v3579 = vrot.slane %v2744, 2
      %v3580 = vsel %vm1091, %v3577, %v3579
      %v3581 = vrot.slane %v2745, 2
      %v3582 = vrot.slane %v2746, 2
      %v3583 = vsel %vm1091, %v3581, %v3582
      %v3584 = vrot.slane %v2747, 2
      %v3585 = vsel %vm1091, %v3582, %v3584
      %v3586 = vrot.slane %v2748, 2
      %v3587 = vrot.slane %v2749, 2
      %v3588 = vsel %vm1091, %v3586, %v3587
      %v3589 = vrot.slane %v2750, 2
      %v3590 = vsel %vm1091, %v3587, %v3589
      %v3591 = vrot.slane %v2751, 2
      %v3592 = vrot.slane %v2752, 2
      %v3593 = vsel %vm1091, %v3591, %v3592
      %v3594 = vrot.slane %v2753, 2
      %v3595 = vsel %vm1091, %v3592, %v3594
      %v3596 = vrot.slane %v2754, 2
      %v3597 = vrot.slane %v2755, 2
      %v3598 = vsel %vm1091, %v3596, %v3597
      %v3599 = vrot.slane %v2756, 2
      %v3600 = vsel %vm1091, %v3597, %v3599
      %v3601 = vrot.slane %v2757, 2
      %v3602 = vrot.slane %v2758, 2
      %v3603 = vsel %vm1091, %v3601, %v3602
      %v3604 = vrot.slane %v2759, 2
      %v3605 = vsel %vm1091, %v3602, %v3604
      %v3606 = vrot.slane %v2760, 2
      %v3607 = vrot.slane %v2761, 2
      %v3608 = vsel %vm1091, %v3606, %v3607
      %v3609 = vrot.slane %v2762, 2
      %v3610 = vsel %vm1091, %v3607, %v3609
      %v3611 = vrot.slane %v2763, 2
      %v3612 = vrot.slane %v2764, 2
      %v3613 = vsel %vm1091, %v3611, %v3612
      %v3614 = vrot.slane %v2765, 2
      %v3615 = vsel %vm1091, %v3612, %v3614
      %v3616 = vrot.slane %v2766, 2
      %v3617 = vrot.slane %v2767, 2
      %v3618 = vsel %vm1091, %v3616, %v3617
      %v3619 = vrot.slane %v2768, 2
      %v3620 = vsel %vm1091, %v3617, %v3619
      %v3621 = vrot.slane %v2769, 2
      %v3622 = vrot.slane %v2770, 2
      %v3623 = vsel %vm1091, %v3621, %v3622
      %v3624 = vrot.slane %v2771, 2
      %v3625 = vsel %vm1091, %v3622, %v3624
      %v3626 = vrot.slane %v2772, 2
      %v3627 = vrot.slane %v2773, 2
      %v3628 = vsel %vm1091, %v3626, %v3627
      %v3629 = vrot.slane %v2774, 2
      %v3630 = vsel %vm1091, %v3627, %v3629
      %v3631 = vrot.slane %v2775, 2
      %v3632 = vrot.slane %v2776, 2
      %v3633 = vsel %vm1091, %v3631, %v3632
      %v3634 = vrot.slane %v2777, 2
      %v3635 = vsel %vm1091, %v3632, %v3634
      %v3636 = vrot.slane %v2778, 2
      %v3637 = vrot.slane %v2779, 2
      %v3638 = vsel %vm1091, %v3636, %v3637
      %v3639 = vrot.slane %v2780, 2
      %v3640 = vsel %vm1091, %v3637, %v3639
      %s3641 = scalar_lea.vmem %s1, 32
      %v3642 = vld [vmem:[%s3641] sm:$0xf]
      %v3643 = vsel %vm215, %v3563, 0
      %v3645 = vsel %vm215, %v3565, 0
      %v3647 = vsel %vm215, %v3568, 0
      %v3649 = vsel %vm215, %v3570, 0
      %v3651 = vsel %vm215, %v3573, 0
      %v3653 = vsel %vm215, %v3575, 0
      %v3655 = vsel %vm215, %v3578, 0
      %v3657 = vsel %vm215, %v3580, 0
      %v3659 = vsel %vm215, %v3583, 0
      %v3661 = vsel %vm215, %v3585, 0
      %v3663 = vsel %vm215, %v3588, 0
      %v3665 = vsel %vm215, %v3590, 0
      %v3667 = vsel %vm215, %v3593, 0
      %v3669 = vsel %vm215, %v3595, 0
      %v3671 = vsel %vm215, %v3598, 0
      %v3673 = vsel %vm215, %v3600, 0
      %v3675 = vsel %vm215, %v3603, 0
      %v3677 = vsel %vm215, %v3605, 0
      %v3679 = vsel %vm215, %v3608, 0
      %v3681 = vsel %vm215, %v3610, 0
      %v3683 = vsel %vm215, %v3613, 0
      %v3685 = vsel %vm215, %v3615, 0
      %v3687 = vsel %vm215, %v3618, 0
      %v3689 = vsel %vm215, %v3620, 0
      %v3691 = vsel %vm215, %v3623, 0
      %v3693 = vsel %vm215, %v3625, 0
      %v3695 = vsel %vm215, %v3628, 0
      %v3697 = vsel %vm215, %v3630, 0
      %v3699 = vsel %vm215, %v3633, 0
      %v3701 = vsel %vm215, %v3635, 0
      %v3703 = vsel %vm215, %v3638, 0
      %v3705 = vsel %vm215, %v3640, 0
      %v3708 = vsel %vm570, %v3642, 0
      %3710 = vmatprep.subr.mxu0 0.0
      %3711 = vmatpush1.msra.mxu0 0.0
      %3712 = vmatprep.subr.mxu0 0.0
      %3713 = vmatpush1.msra.mxu0 0.0
      %3714 = vmatprep.subr.mxu0 0.0
      %3715 = vmatpush1.msra.mxu0 0.0
      %3716 = vmatprep.subr.mxu0 0.0
      %3717 = vmatpush1.msra.mxu0 0.0
      %3718 = vmatprep.subr.mxu0 0.0
      %3719 = vmatpush1.msra.mxu0 0.0
      %3720 = vmatprep.subr.mxu0 0.0
      %3721 = vmatpush1.msra.mxu0 0.0
      %3722 = vmatprep.subr.mxu0 0.0
      %3723 = vmatpush1.msra.mxu0 0.0
      %3724 = vmatprep.subr.mxu0 0.0
      %3725 = vmatpush1.msra.mxu0 0.0
      %3726 = vmatprep.subr.mxu0 0.0
      %3727 = vmatpush1.msra.mxu0 0.0
      %3728 = vmatprep.subr.mxu0 0.0
      %3729 = vmatpush1.msra.mxu0 0.0
      %3730 = vmatprep.subr.mxu0 0.0
      %3731 = vmatpush1.msra.mxu0 0.0
      %3732 = vmatprep.subr.mxu0 0.0
      %3733 = vmatpush1.msra.mxu0 0.0
      %3734 = vmatprep.subr.mxu0 0.0
      %3735 = vmatpush1.msra.mxu0 0.0
      %3736 = vmatprep.subr.mxu0 0.0
      %3737 = vmatpush1.msra.mxu0 0.0
      %3738 = vmatprep.subr.mxu0 0.0
      %3739 = vmatpush1.msra.mxu0 0.0
      %3740 = vmatprep.subr.mxu0 0.0
      %3741 = vmatpush1.msra.mxu0 %v3708
      %3742 = vmatprep.subr.mxu0 0.0
      %3743 = vmatpush2.msra.mxu0 0.0
      %3744 = vmatprep.subr.mxu0 0.0
      %3745 = vmatpush2.msra.mxu0 0.0
      %3746 = vmatprep.subr.mxu0 0.0
      %3747 = vmatpush2.msra.mxu0 0.0
      %3748 = vmatprep.subr.mxu0 0.0
      %3749 = vmatpush2.msra.mxu0 0.0
      %3750 = vmatprep.subr.mxu0 0.0
      %3751 = vmatpush2.msra.mxu0 0.0
      %3752 = vmatprep.subr.mxu0 0.0
      %3753 = vmatpush2.msra.mxu0 0.0
      %3754 = vmatprep.subr.mxu0 0.0
      %3755 = vmatpush2.msra.mxu0 0.0
      %3756 = vmatprep.subr.mxu0 0.0
      %3757 = vmatpush2.msra.mxu0 0.0
      %3758 = vmatprep.subr.mxu0 0.0
      %3759 = vmatpush2.msra.mxu0 0.0
      %3760 = vmatprep.subr.mxu0 0.0
      %3761 = vmatpush2.msra.mxu0 0.0
      %3762 = vmatprep.subr.mxu0 0.0
      %3763 = vmatpush2.msra.mxu0 0.0
      %3764 = vmatprep.subr.mxu0 0.0
      %3765 = vmatpush2.msra.mxu0 0.0
      %3766 = vmatprep.subr.mxu0 0.0
      %3767 = vmatpush2.msra.mxu0 0.0
      %3768 = vmatprep.subr.mxu0 0.0
      %3769 = vmatpush2.msra.mxu0 0.0
      %3770 = vmatprep.subr.mxu0 0.0
      %3771 = vmatpush2.msra.mxu0 0.0
      %3772 = vmatprep.subr.mxu0 0.0
      %3773 = vmatpush2.msra.mxu0 0.0
      %3774 = vmatprep.mubr.f32.mxu0 0.0
      %3775 = vmatmul.mubr.f32.gmra.mxu0 %v3643
      %v3776 = vpop.f32.mrf.mxu0
      %v3777 = vadd.f32 0.0, %v3776
      %v3778 = vpop.f32.mrf.mxu0
      %3779 = vmatprep.mubr.f32.mxu0 0.0
      %3780 = vmatmul.mubr.f32.gmra.mxu0 %v3645
      %v3781 = vpop.f32.mrf.mxu0
      %v3782 = vadd.f32 0.0, %v3781
      %v3783 = vpop.f32.mrf.mxu0
      %3784 = vmatprep.mubr.f32.mxu0 0.0
      %3785 = vmatmul.mubr.f32.gmra.mxu0 %v3647
      %v3786 = vpop.f32.mrf.mxu0
      %v3787 = vadd.f32 0.0, %v3786
      %v3788 = vpop.f32.mrf.mxu0
      %3789 = vmatprep.mubr.f32.mxu0 0.0
      %3790 = vmatmul.mubr.f32.gmra.mxu0 %v3649
      %v3791 = vpop.f32.mrf.mxu0
      %v3792 = vadd.f32 0.0, %v3791
      %v3793 = vpop.f32.mrf.mxu0
      %3794 = vmatprep.mubr.f32.mxu0 0.0
      %3795 = vmatmul.mubr.f32.gmra.mxu0 %v3651
      %v3796 = vpop.f32.mrf.mxu0
      %v3797 = vadd.f32 0.0, %v3796
      %v3798 = vpop.f32.mrf.mxu0
      %3799 = vmatprep.mubr.f32.mxu0 0.0
      %3800 = vmatmul.mubr.f32.gmra.mxu0 %v3653
      %v3801 = vpop.f32.mrf.mxu0
      %v3802 = vadd.f32 0.0, %v3801
      %v3803 = vpop.f32.mrf.mxu0
      %3804 = vmatprep.mubr.f32.mxu0 0.0
      %3805 = vmatmul.mubr.f32.gmra.mxu0 %v3655
      %v3806 = vpop.f32.mrf.mxu0
      %v3807 = vadd.f32 0.0, %v3806
      %v3808 = vpop.f32.mrf.mxu0
      %3809 = vmatprep.mubr.f32.mxu0 0.0
      %3810 = vmatmul.mubr.f32.gmra.mxu0 %v3657
      %v3811 = vpop.f32.mrf.mxu0
      %v3812 = vadd.f32 0.0, %v3811
      %v3813 = vpop.f32.mrf.mxu0
      %3814 = vmatprep.mubr.f32.mxu0 0.0
      %3815 = vmatmul.mubr.f32.gmra.mxu0 %v3659
      %v3816 = vpop.f32.mrf.mxu0
      %v3817 = vadd.f32 0.0, %v3816
      %v3818 = vpop.f32.mrf.mxu0
      %3819 = vmatprep.mubr.f32.mxu0 0.0
      %3820 = vmatmul.mubr.f32.gmra.mxu0 %v3661
      %v3821 = vpop.f32.mrf.mxu0
      %v3822 = vadd.f32 0.0, %v3821
      %v3823 = vpop.f32.mrf.mxu0
      %3824 = vmatprep.mubr.f32.mxu0 0.0
      %3825 = vmatmul.mubr.f32.gmra.mxu0 %v3663
      %v3826 = vpop.f32.mrf.mxu0
      %v3827 = vadd.f32 0.0, %v3826
      %v3828 = vpop.f32.mrf.mxu0
      %3829 = vmatprep.mubr.f32.mxu0 0.0
      %3830 = vmatmul.mubr.f32.gmra.mxu0 %v3665
      %v3831 = vpop.f32.mrf.mxu0
      %v3832 = vadd.f32 0.0, %v3831
      %v3833 = vpop.f32.mrf.mxu0
      %3834 = vmatprep.mubr.f32.mxu0 0.0
      %3835 = vmatmul.mubr.f32.gmra.mxu0 %v3667
      %v3836 = vpop.f32.mrf.mxu0
      %v3837 = vadd.f32 0.0, %v3836
      %v3838 = vpop.f32.mrf.mxu0
      %3839 = vmatprep.mubr.f32.mxu0 0.0
      %3840 = vmatmul.mubr.f32.gmra.mxu0 %v3669
      %v3841 = vpop.f32.mrf.mxu0
      %v3842 = vadd.f32 0.0, %v3841
      %v3843 = vpop.f32.mrf.mxu0
      %3844 = vmatprep.mubr.f32.mxu0 0.0
      %3845 = vmatmul.mubr.f32.gmra.mxu0 %v3671
      %v3846 = vpop.f32.mrf.mxu0
      %v3847 = vadd.f32 0.0, %v3846
      %v3848 = vpop.f32.mrf.mxu0
      %3849 = vmatprep.mubr.f32.mxu0 0.0
      %3850 = vmatmul.mubr.f32.gmra.mxu0 %v3673
      %v3851 = vpop.f32.mrf.mxu0
      %v3852 = vadd.f32 0.0, %v3851
      %v3853 = vpop.f32.mrf.mxu0
      %3854 = vmatprep.mubr.f32.mxu0 0.0
      %3855 = vmatmul.mubr.f32.gmra.mxu0 %v3675
      %v3856 = vpop.f32.mrf.mxu0
      %v3857 = vadd.f32 0.0, %v3856
      %v3858 = vpop.f32.mrf.mxu0
      %3859 = vmatprep.mubr.f32.mxu0 0.0
      %3860 = vmatmul.mubr.f32.gmra.mxu0 %v3677
      %v3861 = vpop.f32.mrf.mxu0
      %v3862 = vadd.f32 0.0, %v3861
      %v3863 = vpop.f32.mrf.mxu0
      %3864 = vmatprep.mubr.f32.mxu0 0.0
      %3865 = vmatmul.mubr.f32.gmra.mxu0 %v3679
      %v3866 = vpop.f32.mrf.mxu0
      %v3867 = vadd.f32 0.0, %v3866
      %v3868 = vpop.f32.mrf.mxu0
      %3869 = vmatprep.mubr.f32.mxu0 0.0
      %3870 = vmatmul.mubr.f32.gmra.mxu0 %v3681
      %v3871 = vpop.f32.mrf.mxu0
      %v3872 = vadd.f32 0.0, %v3871
      %v3873 = vpop.f32.mrf.mxu0
      %3874 = vmatprep.mubr.f32.mxu0 0.0
      %3875 = vmatmul.mubr.f32.gmra.mxu0 %v3683
      %v3876 = vpop.f32.mrf.mxu0
      %v3877 = vadd.f32 0.0, %v3876
      %v3878 = vpop.f32.mrf.mxu0
      %3879 = vmatprep.mubr.f32.mxu0 0.0
      %3880 = vmatmul.mubr.f32.gmra.mxu0 %v3685
      %v3881 = vpop.f32.mrf.mxu0
      %v3882 = vadd.f32 0.0, %v3881
      %v3883 = vpop.f32.mrf.mxu0
      %3884 = vmatprep.mubr.f32.mxu0 0.0
      %3885 = vmatmul.mubr.f32.gmra.mxu0 %v3687
      %v3886 = vpop.f32.mrf.mxu0
      %v3887 = vadd.f32 0.0, %v3886
      %v3888 = vpop.f32.mrf.mxu0
      %3889 = vmatprep.mubr.f32.mxu0 0.0
      %3890 = vmatmul.mubr.f32.gmra.mxu0 %v3689
      %v3891 = vpop.f32.mrf.mxu0
      %v3892 = vadd.f32 0.0, %v3891
      %v3893 = vpop.f32.mrf.mxu0
      %3894 = vmatprep.mubr.f32.mxu0 0.0
      %3895 = vmatmul.mubr.f32.gmra.mxu0 %v3691
      %v3896 = vpop.f32.mrf.mxu0
      %v3897 = vadd.f32 0.0, %v3896
      %v3898 = vpop.f32.mrf.mxu0
      %3899 = vmatprep.mubr.f32.mxu0 0.0
      %3900 = vmatmul.mubr.f32.gmra.mxu0 %v3693
      %v3901 = vpop.f32.mrf.mxu0
      %v3902 = vadd.f32 0.0, %v3901
      %v3903 = vpop.f32.mrf.mxu0
      %3904 = vmatprep.mubr.f32.mxu0 0.0
      %3905 = vmatmul.mubr.f32.gmra.mxu0 %v3695
      %v3906 = vpop.f32.mrf.mxu0
      %v3907 = vadd.f32 0.0, %v3906
      %v3908 = vpop.f32.mrf.mxu0
      %3909 = vmatprep.mubr.f32.mxu0 0.0
      %3910 = vmatmul.mubr.f32.gmra.mxu0 %v3697
      %v3911 = vpop.f32.mrf.mxu0
      %v3912 = vadd.f32 0.0, %v3911
      %v3913 = vpop.f32.mrf.mxu0
      %3914 = vmatprep.mubr.f32.mxu0 0.0
      %3915 = vmatmul.mubr.f32.gmra.mxu0 %v3699
      %v3916 = vpop.f32.mrf.mxu0
      %v3917 = vadd.f32 0.0, %v3916
      %v3918 = vpop.f32.mrf.mxu0
      %3919 = vmatprep.mubr.f32.mxu0 0.0
      %3920 = vmatmul.mubr.f32.gmra.mxu0 %v3701
      %v3921 = vpop.f32.mrf.mxu0
      %v3922 = vadd.f32 0.0, %v3921
      %v3923 = vpop.f32.mrf.mxu0
      %3924 = vmatprep.mubr.f32.mxu0 0.0
      %3925 = vmatmul.mubr.f32.gmra.mxu0 %v3703
      %v3926 = vpop.f32.mrf.mxu0
      %v3927 = vadd.f32 0.0, %v3926
      %v3928 = vpop.f32.mrf.mxu0
      %3929 = vmatprep.mubr.f32.mxu0 0.0
      %3930 = vmatmul.mubr.f32.gmra.mxu0 %v3705
      %v3931 = vpop.f32.mrf.mxu0
      %v3932 = vadd.f32 0.0, %v3931
      %v3933 = vpop.f32.mrf.mxu0
      %3934 = vdwg.mxu0
      %v3935 = vadd.f32 %v3529, %v3777
      %v3936 = vadd.f32 %v3530, %v3782
      %v3937 = vadd.f32 %v3531, %v3787
      %v3938 = vadd.f32 %v3532, %v3792
      %v3939 = vadd.f32 %v3533, %v3797
      %v3940 = vadd.f32 %v3534, %v3802
      %v3941 = vadd.f32 %v3535, %v3807
      %v3942 = vadd.f32 %v3536, %v3812
      %v3943 = vadd.f32 %v3537, %v3817
      %v3944 = vadd.f32 %v3538, %v3822
      %v3945 = vadd.f32 %v3539, %v3827
      %v3946 = vadd.f32 %v3540, %v3832
      %v3947 = vadd.f32 %v3541, %v3837
      %v3948 = vadd.f32 %v3542, %v3842
      %v3949 = vadd.f32 %v3543, %v3847
      %v3950 = vadd.f32 %v3544, %v3852
      %v3951 = vadd.f32 %v3545, %v3857
      %v3952 = vadd.f32 %v3546, %v3862
      %v3953 = vadd.f32 %v3547, %v3867
      %v3954 = vadd.f32 %v3548, %v3872
      %v3955 = vadd.f32 %v3549, %v3877
      %v3956 = vadd.f32 %v3550, %v3882
      %v3957 = vadd.f32 %v3551, %v3887
      %v3958 = vadd.f32 %v3552, %v3892
      %v3959 = vadd.f32 %v3553, %v3897
      %v3960 = vadd.f32 %v3554, %v3902
      %v3961 = vadd.f32 %v3555, %v3907
      %v3962 = vadd.f32 %v3556, %v3912
      %v3963 = vadd.f32 %v3557, %v3917
      %v3964 = vadd.f32 %v3558, %v3922
      %v3965 = vadd.f32 %v3559, %v3927
      %v3966 = vadd.f32 %v3560, %v3932
      %vm3967 = vcmask 64512
      %v3968 = vsel %vm3967, %v3935, 0.0
      %v3969 = vsel %vm3967, %v3936, 0.0
      %v3970 = vadd.f32 %v3968, %v3969
      %v3971 = vsel %vm3967, %v3937, 0.0
      %v3972 = vadd.f32 %v3970, %v3971
      %v3973 = vsel %vm3967, %v3938, 0.0
      %v3974 = vadd.f32 %v3972, %v3973
      %v3975 = vsel %vm3967, %v3939, 0.0
      %v3976 = vadd.f32 %v3974, %v3975
      %v3977 = vsel %vm3967, %v3940, 0.0
      %v3978 = vadd.f32 %v3976, %v3977
      %v3979 = vsel %vm3967, %v3941, 0.0
      %v3980 = vadd.f32 %v3978, %v3979
      %v3981 = vsel %vm3967, %v3942, 0.0
      %v3982 = vadd.f32 %v3980, %v3981
      %v3983 = vsel %vm3967, %v3943, 0.0
      %v3984 = vadd.f32 %v3982, %v3983
      %v3985 = vsel %vm3967, %v3944, 0.0
      %v3986 = vadd.f32 %v3984, %v3985
      %v3987 = vsel %vm3967, %v3945, 0.0
      %v3988 = vadd.f32 %v3986, %v3987
      %v3989 = vsel %vm3967, %v3946, 0.0
      %v3990 = vadd.f32 %v3988, %v3989
      %v3991 = vsel %vm3967, %v3947, 0.0
      %v3992 = vadd.f32 %v3990, %v3991
      %v3993 = vsel %vm3967, %v3948, 0.0
      %v3994 = vadd.f32 %v3992, %v3993
      %v3995 = vsel %vm3967, %v3949, 0.0
      %v3996 = vadd.f32 %v3994, %v3995
      %v3997 = vsel %vm3967, %v3950, 0.0
      %v3998 = vadd.f32 %v3996, %v3997
      %v3999 = vsel %vm3967, %v3951, 0.0
      %v4000 = vadd.f32 %v3998, %v3999
      %v4001 = vsel %vm3967, %v3952, 0.0
      %v4002 = vadd.f32 %v4000, %v4001
      %v4003 = vsel %vm3967, %v3953, 0.0
      %v4004 = vadd.f32 %v4002, %v4003
      %v4005 = vsel %vm3967, %v3954, 0.0
      %v4006 = vadd.f32 %v4004, %v4005
      %v4007 = vsel %vm3967, %v3955, 0.0
      %v4008 = vadd.f32 %v4006, %v4007
      %v4009 = vsel %vm3967, %v3956, 0.0
      %v4010 = vadd.f32 %v4008, %v4009
      %v4011 = vsel %vm3967, %v3957, 0.0
      %v4012 = vadd.f32 %v4010, %v4011
      %v4013 = vsel %vm3967, %v3958, 0.0
      %v4014 = vadd.f32 %v4012, %v4013
      %v4015 = vsel %vm3967, %v3959, 0.0
      %v4016 = vadd.f32 %v4014, %v4015
      %v4017 = vsel %vm3967, %v3960, 0.0
      %v4018 = vadd.f32 %v4016, %v4017
      %v4019 = vsel %vm3967, %v3961, 0.0
      %v4020 = vadd.f32 %v4018, %v4019
      %v4021 = vsel %vm3967, %v3962, 0.0
      %v4022 = vadd.f32 %v4020, %v4021
      %v4023 = vsel %vm3967, %v3963, 0.0
      %v4024 = vadd.f32 %v4022, %v4023
      %v4025 = vsel %vm3967, %v3964, 0.0
      %v4026 = vadd.f32 %v4024, %v4025
      %v4027 = vsel %vm3967, %v3965, 0.0
      %v4028 = vadd.f32 %v4026, %v4027
      %v4029 = vsel %vm3967, %v3966, 0.0
      %v4030 = vadd.f32 %v4028, %v4029
      %v4031 = vrot.slane %v4030, 4
      %v4032 = vadd.f32 %v4030, %v4031
      %v4033 = vrot.slane %v4032, 2
      %v4034 = vadd.f32 %v4032, %v4033
      %v4035 = vrot.slane %v4034, 1
      %v4036 = vadd.f32 %v4034, %v4035
      %vm4037 = vcmask 57344
      %4038 = vst.msk [vmem:[%s211] sm:$0x1] %vm4037, %v4036
      %v4039 = vmul.f32 %v3935, %v3935
      %v4040 = vmul.f32 %v3936, %v3936
      %v4041 = vmul.f32 %v3937, %v3937
      %v4042 = vmul.f32 %v3938, %v3938
      %v4043 = vmul.f32 %v3939, %v3939
      %v4044 = vmul.f32 %v3940, %v3940
      %v4045 = vmul.f32 %v3941, %v3941
      %v4046 = vmul.f32 %v3942, %v3942
      %v4047 = vmul.f32 %v3943, %v3943
      %v4048 = vmul.f32 %v3944, %v3944
      %v4049 = vmul.f32 %v3945, %v3945
      %v4050 = vmul.f32 %v3946, %v3946
      %v4051 = vmul.f32 %v3947, %v3947
      %v4052 = vmul.f32 %v3948, %v3948
      %v4053 = vmul.f32 %v3949, %v3949
      %v4054 = vmul.f32 %v3950, %v3950
      %v4055 = vmul.f32 %v3951, %v3951
      %v4056 = vmul.f32 %v3952, %v3952
      %v4057 = vmul.f32 %v3953, %v3953
      %v4058 = vmul.f32 %v3954, %v3954
      %v4059 = vmul.f32 %v3955, %v3955
      %v4060 = vmul.f32 %v3956, %v3956
      %v4061 = vmul.f32 %v3957, %v3957
      %v4062 = vmul.f32 %v3958, %v3958
      %v4063 = vmul.f32 %v3959, %v3959
      %v4064 = vmul.f32 %v3960, %v3960
      %v4065 = vmul.f32 %v3961, %v3961
      %v4066 = vmul.f32 %v3962, %v3962
      %v4067 = vmul.f32 %v3963, %v3963
      %v4068 = vmul.f32 %v3964, %v3964
      %v4069 = vmul.f32 %v3965, %v3965
      %v4070 = vmul.f32 %v3966, %v3966
      %v4071 = vsel %vm3967, %v4039, 0.0
      %v4072 = vsel %vm3967, %v4040, 0.0
      %v4073 = vadd.f32 %v4071, %v4072
      %v4074 = vsel %vm3967, %v4041, 0.0
      %v4075 = vadd.f32 %v4073, %v4074
      %v4076 = vsel %vm3967, %v4042, 0.0
      %v4077 = vadd.f32 %v4075, %v4076
      %v4078 = vsel %vm3967, %v4043, 0.0
      %v4079 = vadd.f32 %v4077, %v4078
      %v4080 = vsel %vm3967, %v4044, 0.0
      %v4081 = vadd.f32 %v4079, %v4080
      %v4082 = vsel %vm3967, %v4045, 0.0
      %v4083 = vadd.f32 %v4081, %v4082
      %v4084 = vsel %vm3967, %v4046, 0.0
      %v4085 = vadd.f32 %v4083, %v4084
      %v4086 = vsel %vm3967, %v4047, 0.0
      %v4087 = vadd.f32 %v4085, %v4086
      %v4088 = vsel %vm3967, %v4048, 0.0
      %v4089 = vadd.f32 %v4087, %v4088
      %v4090 = vsel %vm3967, %v4049, 0.0
      %v4091 = vadd.f32 %v4089, %v4090
      %v4092 = vsel %vm3967, %v4050, 0.0
      %v4093 = vadd.f32 %v4091, %v4092
      %v4094 = vsel %vm3967, %v4051, 0.0
      %v4095 = vadd.f32 %v4093, %v4094
      %v4096 = vsel %vm3967, %v4052, 0.0
      %v4097 = vadd.f32 %v4095, %v4096
      %v4098 = vsel %vm3967, %v4053, 0.0
      %v4099 = vadd.f32 %v4097, %v4098
      %v4100 = vsel %vm3967, %v4054, 0.0
      %v4101 = vadd.f32 %v4099, %v4100
      %v4102 = vsel %vm3967, %v4055, 0.0
      %v4103 = vadd.f32 %v4101, %v4102
      %v4104 = vsel %vm3967, %v4056, 0.0
      %v4105 = vadd.f32 %v4103, %v4104
      %v4106 = vsel %vm3967, %v4057, 0.0
      %v4107 = vadd.f32 %v4105, %v4106
      %v4108 = vsel %vm3967, %v4058, 0.0
      %v4109 = vadd.f32 %v4107, %v4108
      %v4110 = vsel %vm3967, %v4059, 0.0
      %v4111 = vadd.f32 %v4109, %v4110
      %v4112 = vsel %vm3967, %v4060, 0.0
      %v4113 = vadd.f32 %v4111, %v4112
      %v4114 = vsel %vm3967, %v4061, 0.0
      %v4115 = vadd.f32 %v4113, %v4114
      %v4116 = vsel %vm3967, %v4062, 0.0
      %v4117 = vadd.f32 %v4115, %v4116
      %v4118 = vsel %vm3967, %v4063, 0.0
      %v4119 = vadd.f32 %v4117, %v4118
      %v4120 = vsel %vm3967, %v4064, 0.0
      %v4121 = vadd.f32 %v4119, %v4120
      %v4122 = vsel %vm3967, %v4065, 0.0
      %v4123 = vadd.f32 %v4121, %v4122
      %v4124 = vsel %vm3967, %v4066, 0.0
      %v4125 = vadd.f32 %v4123, %v4124
      %v4126 = vsel %vm3967, %v4067, 0.0
      %v4127 = vadd.f32 %v4125, %v4126
      %v4128 = vsel %vm3967, %v4068, 0.0
      %v4129 = vadd.f32 %v4127, %v4128
      %v4130 = vsel %vm3967, %v4069, 0.0
      %v4131 = vadd.f32 %v4129, %v4130
      %v4132 = vsel %vm3967, %v4070, 0.0
      %v4133 = vadd.f32 %v4131, %v4132
      %v4134 = vrot.slane %v4133, 4
      %v4135 = vadd.f32 %v4133, %v4134
      %v4136 = vrot.slane %v4135, 2
      %v4137 = vadd.f32 %v4135, %v4136
      %v4138 = vrot.slane %v4137, 1
      %v4139 = vadd.f32 %v4137, %v4138
      %4140 = vst.msk [vmem:[%s214] sm:$0x1] %vm4037, %v4139
      %4141 = vst.msk [vmem:[%s208] sm:$0xff] %vm3967, %v3935
      %4142 = vst.msk [vmem:[%s208 + $0x8] sm:$0xff] %vm3967, %v3936
      %4143 = vst.msk [vmem:[%s208 + $0x10] sm:$0xff] %vm3967, %v3937
      %4144 = vst.msk [vmem:[%s208 + $0x18] sm:$0xff] %vm3967, %v3938
      %4145 = vst.msk [vmem:[%s208 + $0x20] sm:$0xff] %vm3967, %v3939
      %4146 = vst.msk [vmem:[%s208 + $0x28] sm:$0xff] %vm3967, %v3940
      %4147 = vst.msk [vmem:[%s208 + $0x30] sm:$0xff] %vm3967, %v3941
      %4148 = vst.msk [vmem:[%s208 + $0x38] sm:$0xff] %vm3967, %v3942
      %4149 = vst.msk [vmem:[%s208 + $0x40] sm:$0xff] %vm3967, %v3943
      %4150 = vst.msk [vmem:[%s208 + $0x48] sm:$0xff] %vm3967, %v3944
      %4151 = vst.msk [vmem:[%s208 + $0x50] sm:$0xff] %vm3967, %v3945
      %4152 = vst.msk [vmem:[%s208 + $0x58] sm:$0xff] %vm3967, %v3946
      %4153 = vst.msk [vmem:[%s208 + $0x60] sm:$0xff] %vm3967, %v3947
      %4154 = vst.msk [vmem:[%s208 + $0x68] sm:$0xff] %vm3967, %v3948
      %4155 = vst.msk [vmem:[%s208 + $0x70] sm:$0xff] %vm3967, %v3949
      %4156 = vst.msk [vmem:[%s208 + $0x78] sm:$0xff] %vm3967, %v3950
      %4157 = vst.msk [vmem:[%s208 + $0x80] sm:$0xff] %vm3967, %v3951
      %4158 = vst.msk [vmem:[%s208 + $0x88] sm:$0xff] %vm3967, %v3952
      %4159 = vst.msk [vmem:[%s208 + $0x90] sm:$0xff] %vm3967, %v3953
      %4160 = vst.msk [vmem:[%s208 + $0x98] sm:$0xff] %vm3967, %v3954
      %4161 = vst.msk [vmem:[%s208 + $0xa0] sm:$0xff] %vm3967, %v3955
      %4162 = vst.msk [vmem:[%s208 + $0xa8] sm:$0xff] %vm3967, %v3956
      %4163 = vst.msk [vmem:[%s208 + $0xb0] sm:$0xff] %vm3967, %v3957
      %4164 = vst.msk [vmem:[%s208 + $0xb8] sm:$0xff] %vm3967, %v3958
      %4165 = vst.msk [vmem:[%s208 + $0xc0] sm:$0xff] %vm3967, %v3959
      %4166 = vst.msk [vmem:[%s208 + $0xc8] sm:$0xff] %vm3967, %v3960
      %4167 = vst.msk [vmem:[%s208 + $0xd0] sm:$0xff] %vm3967, %v3961
      %4168 = vst.msk [vmem:[%s208 + $0xd8] sm:$0xff] %vm3967, %v3962
      %4169 = vst.msk [vmem:[%s208 + $0xe0] sm:$0xff] %vm3967, %v3963
      %4170 = vst.msk [vmem:[%s208 + $0xe8] sm:$0xff] %vm3967, %v3964
      %4171 = vst.msk [vmem:[%s208 + $0xf0] sm:$0xff] %vm3967, %v3965
      %4172 = vst.msk [vmem:[%s208 + $0xf8] sm:$0xff] %vm3967, %v3966
      %p4173 = scmp.lt.s32.totalorder %s16, 1
      %s4174 = scalar_select %p4173, %s16, 1
      %s4175 = smul.addr %s4174, 32
      %s4176 = smul.addr %s4175, 8
      %s4177 = scalar_lea.vmem %s2, %s4176
      %p4178 = scmp.lt.s32.totalorder %s16, 1
      %s4179 = scalar_select %p4178, %s16, 1
      %s4180 = scalar_lea.vmem %s3, %s4179
      %p4181 = scmp.lt.s32.totalorder %s16, 1
      %s4182 = scalar_select %p4181, %s16, 1
      %s4183 = scalar_lea.vmem %s4, %s4182
      // Predicated region
      $region29: #{double_conv_forward.3} parent=27 // pred_check
        %p4184 = pneg %p81
      $region30: #{double_conv_forward.3} parent=27 // pred_check_branch
        %4186 = sbr.rel (%p4184) target = $region32
      $region31: #{double_conv_forward.3} parent=27 // pred_region
        _
      $region32: #{double_conv_forward.3} parent=27 // pred_fallthru
        _
      // Predicated region
      $region33: #{double_conv_forward.3} parent=27 // pred_check
        %p4187 = pneg %p107
      $region34: #{double_conv_forward.3} parent=27 // pred_check_branch
        %4189 = sbr.rel (%p4187) target = $region36
      $region35: #{double_conv_forward.3} parent=27 // pred_region
        _
      $region36: #{double_conv_forward.3} parent=27 // pred_fallthru
        _
      // Predicated region
      $region37: #{double_conv_forward.3} parent=27 // pred_check
        %p4190 = pneg %p133
      $region38: #{double_conv_forward.3} parent=27 // pred_check_branch
        %4192 = sbr.rel (%p4190) target = $region40
      $region39: #{double_conv_forward.3} parent=27 // pred_region
        _
      $region40: #{double_conv_forward.3} parent=27 // pred_fallthru
        _
    $region28: #{double_conv_forward.3} parent=5 // pred_fallthru
      _
    %p4193 = scmp.le.s32.totalorder 2, %s11
    // Predicated region
    $region41: #{double_conv_forward.3} parent=5 // pred_check
      %p4194 = pneg %p4193
    $region42: #{double_conv_forward.3} parent=5 // pred_check_branch
      %4196 = sbr.rel (%p4194) target = $region44
    $region43: #{double_conv_forward.3} parent=5 // pred_region
      %s4197 = ssub.s32 %s11, 2
      // Predicated region
      $region45: #{double_conv_forward.3} parent=43 // pred_check
        %p4198 = pneg %p87
      $region46: #{double_conv_forward.3} parent=43 // pred_check_branch
        %4200 = sbr.rel (%p4198) target = $region48
      $region47: #{double_conv_forward.3} parent=43 // pred_region
        %p4201 = scmp.lt.s32.totalorder %s17, 1
        %s4202 = scalar_select %p4201, %s17, 1
        %s4203 = smul.addr %s4202, 32
        %s4204 = smul.addr %s4203, 8
        %s4205 = scalar_lea.vmem %s2, %s4204
      $region48: #{double_conv_forward.3} parent=43 // pred_fallthru
        _
      // Predicated region
      $region49: #{double_conv_forward.3} parent=43 // pred_check
        %p4206 = pneg %p113
      $region50: #{double_conv_forward.3} parent=43 // pred_check_branch
        %4208 = sbr.rel (%p4206) target = $region52
      $region51: #{double_conv_forward.3} parent=43 // pred_region
        %p4209 = scmp.lt.s32.totalorder %s17, 1
        %s4210 = scalar_select %p4209, %s17, 1
        %s4211 = scalar_lea.vmem %s3, %s4210
      $region52: #{double_conv_forward.3} parent=43 // pred_fallthru
        _
      // Predicated region
      $region53: #{double_conv_forward.3} parent=43 // pred_check
        %p4212 = pneg %p139
      $region54: #{double_conv_forward.3} parent=43 // pred_check_branch
        %4214 = sbr.rel (%p4212) target = $region56
      $region55: #{double_conv_forward.3} parent=43 // pred_region
        %p4215 = scmp.lt.s32.totalorder %s17, 1
        %s4216 = scalar_select %p4215, %s17, 1
        %s4217 = scalar_lea.vmem %s4, %s4216
      $region56: #{double_conv_forward.3} parent=43 // pred_fallthru
        _
    $region44: #{double_conv_forward.3} parent=5 // pred_fallthru
      _
  $region6: #{double_conv_forward.3} parent=0 // loop_footer
    %s15 = sadd.s32 1, %s11
  $region7: #{double_conv_forward.3} parent=0 // loop_footer_branch
    %10 = sbr.rel target = $region3
  $region8: #{double_conv_forward.3} parent=0 // loop_exit
    _

// kernel: double_conv_forward.4
$region0: #{double_conv_forward.4}
  #allocation0 [shape = 'u32[]', space=smem, size = 0x4, offset = 0x4, fixed_abs, tag = 'smem constant byte address 0x4 - core index']
  #allocation1 [shape = 'u32[144,128]{1,0:T(1,128)}', space=vmem, size = 0x12000, scoped, tag = 'internal scratch']
  #allocation2 [shape = 'f32[18,18,8]{2,1,0:T(8,128)}', space=vmem, size = 0x36000, scoped, tag = 'scratch operand']
  %s0 = inlined_call_operand.vmem [shape: f32[2,16,16,8], index: 0, kind: input, shape index: {}]
  %s1 = inlined_call_operand.vmem [shape: f32[1,8], index: 1, kind: input, shape index: {}]
  %s2 = inlined_call_operand.vmem [shape: f32[1,8], index: 2, kind: input, shape index: {}]
  %s3 = inlined_call_operand.vmem [shape: f32[9,8,8], index: 3, kind: input, shape index: {}]
  %s4 = inlined_call_operand.vmem [shape: f32[2,16,16,8], index: 4, kind: output, shape index: {0}]
  %s5 = inlined_call_operand.vmem [shape: f32[2,1,8], index: 5, kind: output, shape index: {1}]
  %s6 = inlined_call_operand.vmem [shape: f32[2,1,8], index: 6, kind: output, shape index: {2}]
  %7 = xla_tuple %s4, %s5, %s6
  %s8 = sld [smem:[#allocation0]]
  $region65: #{double_conv_forward.4} parent=0
    _
  %s10 = ssub.s32 1, %s8
  %s11 = scalar_select 0, %s10, %s8
  loop: start=0, step=1, limit=4
  $region2: #{double_conv_forward.4} parent=0 // loop_pre_header
    _
  $region3: #{double_conv_forward.4} parent=0 // loop_header
    %s13 = sphi 0, %s17
    %p14 = scmp.ge.s32.totalorder %s13, 4
    %s23 = sphi 0, %s25
    %s26 = sphi 0, %s23
    %s27 = sphi 0, %s26
    %s43 = sphi 0, %s27
    %s47 = sphi 0, %s47
    %s49 = sphi 0, %s47
    %s50 = sphi 0, %s49
    %s64 = sphi 0, %s50
    %s68 = sphi 0, %s68
    %s70 = sphi 0, %s68
    %s71 = sphi 0, %s70
    %s85 = sphi 0, %s71
    %s89 = sphi 0, %s89
    %s91 = sphi 0, %s89
    %s92 = sphi 0, %s91
    %s106 = sphi 0, %s92
    %s112 = sphi 0, %s114
    %s115 = sphi 0, %s112
    %s116 = sphi 0, %s115
    %s132 = sphi 0, %s116
    %s138 = sphi 0, %s140
    %s141 = sphi 0, %s138
    %s142 = sphi 0, %s141
    %s158 = sphi 0, %s142
    %s164 = sphi 0, %s166
    %s167 = sphi 0, %s164
    %s168 = sphi 0, %s167
    %s184 = sphi 0, %s168
  $region4: #{double_conv_forward.4} parent=0 // loop_header_branch
    %16 = sbr.rel (%p14) target = $region8
  $region5: #{double_conv_forward.4} parent=0 // loop_body
    %s18 = ssub.s32 %s13, 1
    %s19 = ssub.s32 %s13, 2
    %s20 = sadd.s32 %s13, 1
    %s21 = ssub.s32 %s13, %s20
    %p22 = scmp.eq.s32.totalorder %s21, 0
    %s24 = sadd.s32 %s23, 1
    %s25 = scalar_select %p22, %s23, %s24
    %p28 = pneg %p22
    %p29 = scmp.eq.s32.totalorder %s13, 1
    %p30 = por %p28, %p29
    %p31 = scmp.ne.s32.totalorder %s23, %s26
    %p32 = scmp.eq.s32.totalorder %s13, 0
    %p33 = por %p31, %p32
    %p34 = scmp.ne.s32.totalorder %s23, %s26
    %p35 = scmp.eq.s32.totalorder %s18, 1
    %p36 = por %p34, %p35
    %p37 = scmp.ne.s32.totalorder %s26, %s27
    %p38 = scmp.eq.s32.totalorder %s18, 0
    %p39 = por %p37, %p38
    %p40 = scmp.ne.s32.totalorder %s26, %s27
    %p41 = scmp.eq.s32.totalorder %s19, 1
    %p42 = por %p40, %p41
    %p44 = scmp.ne.s32.totalorder %s27, %s43
    %p45 = scmp.eq.s32.totalorder %s19, 0
    %p46 = por %p44, %p45
    %s48 = sadd.s32 %s47, 1
    %p51 = scmp.eq.s32.totalorder %s13, 1
    %p52 = scmp.ne.s32.totalorder %s47, %s49
    %p53 = scmp.eq.s32.totalorder %s13, 0
    %p54 = por %p52, %p53
    %p55 = scmp.ne.s32.totalorder %s47, %s49
    %p56 = scmp.eq.s32.totalorder %s18, 1
    %p57 = por %p55, %p56
    %p58 = scmp.ne.s32.totalorder %s49, %s50
    %p59 = scmp.eq.s32.totalorder %s18, 0
    %p60 = por %p58, %p59
    %p61 = scmp.ne.s32.totalorder %s49, %s50
    %p62 = scmp.eq.s32.totalorder %s19, 1
    %p63 = por %p61, %p62
    %p65 = scmp.ne.s32.totalorder %s50, %s64
    %p66 = scmp.eq.s32.totalorder %s19, 0
    %p67 = por %p65, %p66
    %s69 = sadd.s32 %s68, 1
    %p72 = scmp.eq.s32.totalorder %s13, 1
    %p73 = scmp.ne.s32.totalorder %s68, %s70
    %p74 = scmp.eq.s32.totalorder %s13, 0
    %p75 = por %p73, %p74
    %p76 = scmp.ne.s32.totalorder %s68, %s70
    %p77 = scmp.eq.s32.totalorder %s18, 1
    %p78 = por %p76, %p77
    %p79 = scmp.ne.s32.totalorder %s70, %s71
    %p80 = scmp.eq.s32.totalorder %s18, 0
    %p81 = por %p79, %p80
    %p82 = scmp.ne.s32.totalorder %s70, %s71
    %p83 = scmp.eq.s32.totalorder %s19, 1
    %p84 = por %p82, %p83
    %p86 = scmp.ne.s32.totalorder %s71, %s85
    %p87 = scmp.eq.s32.totalorder %s19, 0
    %p88 = por %p86, %p87
    %s90 = sadd.s32 %s89, 1
    %p93 = scmp.eq.s32.totalorder %s13, 1
    %p94 = scmp.ne.s32.totalorder %s89, %s91
    %p95 = scmp.eq.s32.totalorder %s13, 0
    %p96 = por %p94, %p95
    %p97 = scmp.ne.s32.totalorder %s89, %s91
    %p98 = scmp.eq.s32.totalorder %s18, 1
    %p99 = por %p97, %p98
    %p100 = scmp.ne.s32.totalorder %s91, %s92
    %p101 = scmp.eq.s32.totalorder %s18, 0
    %p102 = por %p100, %p101
    %p103 = scmp.ne.s32.totalorder %s91, %s92
    %p104 = scmp.eq.s32.totalorder %s19, 1
    %p105 = por %p103, %p104
    %p107 = scmp.ne.s32.totalorder %s92, %s106
    %p108 = scmp.eq.s32.totalorder %s19, 0
    %p109 = por %p107, %p108
    %s110 = ssub.s32 %s13, %s20
    %p111 = scmp.eq.s32.totalorder %s110, 0
    %s113 = sadd.s32 %s112, 1
    %s114 = scalar_select %p111, %s112, %s113
    %p117 = pneg %p111
    %p118 = scmp.eq.s32.totalorder %s13, 1
    %p119 = por %p117, %p118
    %p120 = scmp.ne.s32.totalorder %s112, %s115
    %p121 = scmp.eq.s32.totalorder %s13, 0
    %p122 = por %p120, %p121
    %p123 = scmp.ne.s32.totalorder %s112, %s115
    %p124 = scmp.eq.s32.totalorder %s18, 1
    %p125 = por %p123, %p124
    %p126 = scmp.ne.s32.totalorder %s115, %s116
    %p127 = scmp.eq.s32.totalorder %s18, 0
    %p128 = por %p126, %p127
    %p129 = scmp.ne.s32.totalorder %s115, %s116
    %p130 = scmp.eq.s32.totalorder %s19, 1
    %p131 = por %p129, %p130
    %p133 = scmp.ne.s32.totalorder %s116, %s132
    %p134 = scmp.eq.s32.totalorder %s19, 0
    %p135 = por %p133, %p134
    %s136 = ssub.s32 %s13, %s20
    %p137 = scmp.eq.s32.totalorder %s136, 0
    %s139 = sadd.s32 %s138, 1
    %s140 = scalar_select %p137, %s138, %s139
    %p143 = pneg %p137
    %p144 = scmp.eq.s32.totalorder %s13, 1
    %p145 = por %p143, %p144
    %p146 = scmp.ne.s32.totalorder %s138, %s141
    %p147 = scmp.eq.s32.totalorder %s13, 0
    %p148 = por %p146, %p147
    %p149 = scmp.ne.s32.totalorder %s138, %s141
    %p150 = scmp.eq.s32.totalorder %s18, 1
    %p151 = por %p149, %p150
    %p152 = scmp.ne.s32.totalorder %s141, %s142
    %p153 = scmp.eq.s32.totalorder %s18, 0
    %p154 = por %p152, %p153
    %p155 = scmp.ne.s32.totalorder %s141, %s142
    %p156 = scmp.eq.s32.totalorder %s19, 1
    %p157 = por %p155, %p156
    %p159 = scmp.ne.s32.totalorder %s142, %s158
    %p160 = scmp.eq.s32.totalorder %s19, 0
    %p161 = por %p159, %p160
    %s162 = ssub.s32 %s13, %s20
    %p163 = scmp.eq.s32.totalorder %s162, 0
    %s165 = sadd.s32 %s164, 1
    %s166 = scalar_select %p163, %s164, %s165
    %p169 = pneg %p163
    %p170 = scmp.eq.s32.totalorder %s13, 1
    %p171 = por %p169, %p170
    %p172 = scmp.ne.s32.totalorder %s164, %s167
    %p173 = scmp.eq.s32.totalorder %s13, 0
    %p174 = por %p172, %p173
    %p175 = scmp.ne.s32.totalorder %s164, %s167
    %p176 = scmp.eq.s32.totalorder %s18, 1
    %p177 = por %p175, %p176
    %p178 = scmp.ne.s32.totalorder %s167, %s168
    %p179 = scmp.eq.s32.totalorder %s18, 0
    %p180 = por %p178, %p179
    %p181 = scmp.ne.s32.totalorder %s167, %s168
    %p182 = scmp.eq.s32.totalorder %s19, 1
    %p183 = por %p181, %p182
    %p185 = scmp.ne.s32.totalorder %s168, %s184
    %p186 = scmp.eq.s32.totalorder %s19, 0
    %p187 = por %p185, %p186
    %p188 = scmp.le.s32.totalorder 1, %s13
    %p189 = scmp.lt.s32.totalorder %s13, 3
    %p190 = pnand %p188, %p189
    %p191 = pneg %p190
    // Predicated region
    $region9: #{double_conv_forward.4} parent=5 // pred_check
      _
    $region10: #{double_conv_forward.4} parent=5 // pred_check_branch
      %193 = sbr.rel (%p190) target = $region12
    $region11: #{double_conv_forward.4} parent=5 // pred_region
      %s194 = ssub.s32 %s13, 1
      // Predicated region
      $region13: #{double_conv_forward.4} parent=11 // pred_check
        %p195 = pneg %p60
      $region14: #{double_conv_forward.4} parent=11 // pred_check_branch
        %197 = sbr.rel (%p195) target = $region16
      $region15: #{double_conv_forward.4} parent=11 // pred_region
        _
      $region16: #{double_conv_forward.4} parent=11 // pred_fallthru
        _
      // Predicated region
      $region17: #{double_conv_forward.4} parent=11 // pred_check
        %p198 = pneg %p81
      $region18: #{double_conv_forward.4} parent=11 // pred_check_branch
        %200 = sbr.rel (%p198) target = $region20
      $region19: #{double_conv_forward.4} parent=11 // pred_region
        _
      $region20: #{double_conv_forward.4} parent=11 // pred_fallthru
        _
      // Predicated region
      $region21: #{double_conv_forward.4} parent=11 // pred_check
        %p201 = pneg %p102
      $region22: #{double_conv_forward.4} parent=11 // pred_check_branch
        %203 = sbr.rel (%p201) target = $region24
      $region23: #{double_conv_forward.4} parent=11 // pred_region
        _
      $region24: #{double_conv_forward.4} parent=11 // pred_fallthru
        _
    $region12: #{double_conv_forward.4} parent=5 // pred_fallthru
      _
    %p204 = scmp.lt.s32.totalorder %s13, 2
    // Predicated region
    $region25: #{double_conv_forward.4} parent=5 // pred_check
      %p205 = pneg %p204
    $region26: #{double_conv_forward.4} parent=5 // pred_check_branch
      %207 = sbr.rel (%p205) target = $region28
    $region27: #{double_conv_forward.4} parent=5 // pred_region
      // Predicated region
      $region29: #{double_conv_forward.4} parent=27 // pred_check
        %p208 = pneg %p33
      $region30: #{double_conv_forward.4} parent=27 // pred_check_branch
        %210 = sbr.rel (%p208) target = $region32
      $region31: #{double_conv_forward.4} parent=27 // pred_region
        %p211 = scmp.lt.s32.totalorder %s13, 1
        %s212 = scalar_select %p211, %s13, 1
        %s213 = smul.addr %s212, 32
        %s214 = smul.addr %s213, 8
        %s215 = scalar_lea.vmem %s0, %s214
      $region32: #{double_conv_forward.4} parent=27 // pred_fallthru
        _
    $region28: #{double_conv_forward.4} parent=5 // pred_fallthru
      _
    %p216 = scmp.le.s32.totalorder 1, %s13
    %p217 = scmp.lt.s32.totalorder %s13, 3
    %p218 = pnand %p216, %p217
    %p219 = pneg %p218
    // Predicated region
    $region33: #{double_conv_forward.4} parent=5 // pred_check
      _
    $region34: #{double_conv_forward.4} parent=5 // pred_check_branch
      %221 = sbr.rel (%p218) target = $region36
    $region35: #{double_conv_forward.4} parent=5 // pred_region
      %s222 = ssub.s32 %s13, 1
      %p223 = scmp.lt.s32.totalorder %s18, 1
      %s224 = scalar_select %p223, %s18, 1
      %s225 = smul.addr %s224, 32
      %s226 = smul.addr %s225, 8
      %s227 = scalar_lea.vmem %s0, %s226
      %p228 = pneg %p39
      %p229 = pneg %p36
      %p230 = pneg %p60
      %p231 = pneg %p57
      %p232 = pneg %p81
      %p233 = pneg %p78
      %p234 = pneg %p102
      %p235 = pneg %p99
      %p236 = pneg %p128
      %p237 = pneg %p125
      %p238 = scmp.lt.s32.totalorder %s18, 1
      %s239 = scalar_select %p238, %s18, 1
      %s240 = smul.addr %s239, 32
      %s241 = smul.addr %s240, 8
      %s242 = scalar_lea.vmem %s4, %s241
      %p243 = pneg %p154
      %p244 = pneg %p151
      %p245 = scmp.lt.s32.totalorder %s18, 1
      %s246 = scalar_select %p245, %s18, 1
      %s247 = scalar_lea.vmem %s5, %s246
      %p248 = pneg %p180
      %p249 = pneg %p177
      %p250 = scmp.lt.s32.totalorder %s18, 1
      %s251 = scalar_select %p250, %s18, 1
      %s252 = scalar_lea.vmem %s6, %s251
      %p253 = scmp.lt.s32.totalorder %s18, 1
      %s254 = scalar_select %p253, %s18, 1
      %s255 = smul.addr %s254, 32
      %s256 = smul.addr %s255, 8
      %s257 = scalar_lea.vmem %s0, %s256
      %p258 = scmp.lt.s32.totalorder %s18, 1
      %s259 = scalar_select %p258, %s18, 1
      %s260 = smul.addr %s259, 32
      %s261 = smul.addr %s260, 8
      %s262 = scalar_lea.vmem %s4, %s261
      %p263 = scmp.lt.s32.totalorder %s18, 1
      %s264 = scalar_select %p263, %s18, 1
      %s265 = scalar_lea.vmem %s5, %s264
      %p266 = scmp.lt.s32.totalorder %s18, 1
      %s267 = scalar_select %p266, %s18, 1
      %s268 = scalar_lea.vmem %s6, %s267
      %vm269 = vcmask 64512
      %270 = vst.msk [vmem:[#allocation2] sm:$0xff] %vm269, 0.0
      %271 = vst.msk [vmem:[#allocation2 + $0x8] sm:$0xff] %vm269, 0.0
      %vm272 = vcmask 58368
      %273 = vst.msk [vmem:[#allocation2 + $0x10] sm:$0x3] %vm272, 0.0
      %s274 = scalar_lea.vmem [#allocation2], 408
      %275 = vst.msk [vmem:[%s274] sm:$0xff] %vm269, 0.0
      %276 = vst.msk [vmem:[%s274 + $0x8] sm:$0xff] %vm269, 0.0
      %277 = vst.msk [vmem:[%s274 + $0x10] sm:$0x3] %vm272, 0.0
      %vm278 = vcmask 57344
      %279 = vst.msk [vmem:[#allocation2] sm:$0x1] %vm278, 0.0
      %280 = vst.msk [vmem:[#allocation2 + $0x18] sm:$0x1] %vm278, 0.0
      %281 = vst.msk [vmem:[#allocation2 + $0x30] sm:$0x1] %vm278, 0.0
      %282 = vst.msk [vmem:[#allocation2 + $0x48] sm:$0x1] %vm278, 0.0
      %283 = vst.msk [vmem:[#allocation2 + $0x60] sm:$0x1] %vm278, 0.0
      %284 = vst.msk [vmem:[#allocation2 + $0x78] sm:$0x1] %vm278, 0.0
      %285 = vst.msk [vmem:[#allocation2 + $0x90] sm:$0x1] %vm278, 0.0
      %286 = vst.msk [vmem:[#allocation2 + $0xa8] sm:$0x1] %vm278, 0.0
      %287 = vst.msk [vmem:[#allocation2 + $0xc0] sm:$0x1] %vm278, 0.0
      %288 = vst.msk [vmem:[#allocation2 + $0xd8] sm:$0x1] %vm278, 0.0
      %289 = vst.msk [vmem:[#allocation2 + $0xf0] sm:$0x1] %vm278, 0.0
      %290 = vst.msk [vmem:[#allocation2 + $0x108] sm:$0x1] %vm278, 0.0
      %291 = vst.msk [vmem:[#allocation2 + $0x120] sm:$0x1] %vm278, 0.0
      %292 = vst.msk [vmem:[#allocation2 + $0x138] sm:$0x1] %vm278, 0.0
      %293 = vst.msk [vmem:[#allocation2 + $0x150] sm:$0x1] %vm278, 0.0
      %294 = vst.msk [vmem:[#allocation2 + $0x168] sm:$0x1] %vm278, 0.0
      %295 = vst.msk [vmem:[#allocation2 + $0x180] sm:$0x1] %vm278, 0.0
      %296 = vst.msk [vmem:[#allocation2 + $0x198] sm:$0x1] %vm278, 0.0
      %297 = vst.msk [vmem:[#allocation2 + $0x11] sm:$0x1] %vm278, 0.0
      %298 = vst.msk [vmem:[#allocation2 + $0x29] sm:$0x1] %vm278, 0.0
      %299 = vst.msk [vmem:[#allocation2 + $0x41] sm:$0x1] %vm278, 0.0
      %300 = vst.msk [vmem:[#allocation2 + $0x59] sm:$0x1] %vm278, 0.0
      %301 = vst.msk [vmem:[#allocation2 + $0x71] sm:$0x1] %vm278, 0.0
      %302 = vst.msk [vmem:[#allocation2 + $0x89] sm:$0x1] %vm278, 0.0
      %303 = vst.msk [vmem:[#allocation2 + $0xa1] sm:$0x1] %vm278, 0.0
      %304 = vst.msk [vmem:[#allocation2 + $0xb9] sm:$0x1] %vm278, 0.0
      %305 = vst.msk [vmem:[#allocation2 + $0xd1] sm:$0x1] %vm278, 0.0
      %306 = vst.msk [vmem:[#allocation2 + $0xe9] sm:$0x1] %vm278, 0.0
      %307 = vst.msk [vmem:[#allocation2 + $0x101] sm:$0x1] %vm278, 0.0
      %308 = vst.msk [vmem:[#allocation2 + $0x119] sm:$0x1] %vm278, 0.0
      %309 = vst.msk [vmem:[#allocation2 + $0x131] sm:$0x1] %vm278, 0.0
      %310 = vst.msk [vmem:[#allocation2 + $0x149] sm:$0x1] %vm278, 0.0
      %311 = vst.msk [vmem:[#allocation2 + $0x161] sm:$0x1] %vm278, 0.0
      %312 = vst.msk [vmem:[#allocation2 + $0x179] sm:$0x1] %vm278, 0.0
      %313 = vst.msk [vmem:[#allocation2 + $0x191] sm:$0x1] %vm278, 0.0
      %314 = vst.msk [vmem:[#allocation2 + $0x1a9] sm:$0x1] %vm278, 0.0
      %v315 = vld [vmem:[%s257] sm:$0xff]
      %v316 = vld [vmem:[%s257 + $0x8] sm:$0xff]
      %v317 = vld [vmem:[%s257 + $0x10] sm:$0xff]
      %v318 = vld [vmem:[%s257 + $0x18] sm:$0xff]
      %v319 = vld [vmem:[%s257 + $0x20] sm:$0xff]
      %v320 = vld [vmem:[%s257 + $0x28] sm:$0xff]
      %v321 = vld [vmem:[%s257 + $0x30] sm:$0xff]
      %v322 = vld [vmem:[%s257 + $0x38] sm:$0xff]
      %v323 = vld [vmem:[%s257 + $0x40] sm:$0xff]
      %v324 = vld [vmem:[%s257 + $0x48] sm:$0xff]
      %v325 = vld [vmem:[%s257 + $0x50] sm:$0xff]
      %v326 = vld [vmem:[%s257 + $0x58] sm:$0xff]
      %v327 = vld [vmem:[%s257 + $0x60] sm:$0xff]
      %v328 = vld [vmem:[%s257 + $0x68] sm:$0xff]
      %v329 = vld [vmem:[%s257 + $0x70] sm:$0xff]
      %v330 = vld [vmem:[%s257 + $0x78] sm:$0xff]
      %v331 = vld [vmem:[%s257 + $0x80] sm:$0xff]
      %v332 = vld [vmem:[%s257 + $0x88] sm:$0xff]
      %v333 = vld [vmem:[%s257 + $0x90] sm:$0xff]
      %v334 = vld [vmem:[%s257 + $0x98] sm:$0xff]
      %v335 = vld [vmem:[%s257 + $0xa0] sm:$0xff]
      %v336 = vld [vmem:[%s257 + $0xa8] sm:$0xff]
      %v337 = vld [vmem:[%s257 + $0xb0] sm:$0xff]
      %v338 = vld [vmem:[%s257 + $0xb8] sm:$0xff]
      %v339 = vld [vmem:[%s257 + $0xc0] sm:$0xff]
      %v340 = vld [vmem:[%s257 + $0xc8] sm:$0xff]
      %v341 = vld [vmem:[%s257 + $0xd0] sm:$0xff]
      %v342 = vld [vmem:[%s257 + $0xd8] sm:$0xff]
      %v343 = vld [vmem:[%s257 + $0xe0] sm:$0xff]
      %v344 = vld [vmem:[%s257 + $0xe8] sm:$0xff]
      %v345 = vld [vmem:[%s257 + $0xf0] sm:$0xff]
      %v346 = vld [vmem:[%s257 + $0xf8] sm:$0xff]
      %v347 = vld [vmem:[%s1] sm:$0x1]
      %v349 = vlaneseq
      %v350 = vshrl.u32 %v349, 7
      %v351 = vsub.s32 0, %v350
      %v352 = vrot.slane %v347, %v351
      %v354 = vmul.f32 %v315, %v352
      %v355 = vmul.f32 %v316, %v352
      %v356 = vmul.f32 %v317, %v352
      %v357 = vmul.f32 %v318, %v352
      %v358 = vmul.f32 %v319, %v352
      %v359 = vmul.f32 %v320, %v352
      %v360 = vmul.f32 %v321, %v352
      %v361 = vmul.f32 %v322, %v352
      %v362 = vmul.f32 %v323, %v352
      %v363 = vmul.f32 %v324, %v352
      %v364 = vmul.f32 %v325, %v352
      %v365 = vmul.f32 %v326, %v352
      %v366 = vmul.f32 %v327, %v352
      %v367 = vmul.f32 %v328, %v352
      %v368 = vmul.f32 %v329, %v352
      %v369 = vmul.f32 %v330, %v352
      %v370 = vmul.f32 %v331, %v352
      %v371 = vmul.f32 %v332, %v352
      %v372 = vmul.f32 %v333, %v352
      %v373 = vmul.f32 %v334, %v352
      %v374 = vmul.f32 %v335, %v352
      %v375 = vmul.f32 %v336, %v352
      %v376 = vmul.f32 %v337, %v352
      %v377 = vmul.f32 %v338, %v352
      %v378 = vmul.f32 %v339, %v352
      %v379 = vmul.f32 %v340, %v352
      %v380 = vmul.f32 %v341, %v352
      %v381 = vmul.f32 %v342, %v352
      %v382 = vmul.f32 %v343, %v352
      %v383 = vmul.f32 %v344, %v352
      %v384 = vmul.f32 %v345, %v352
      %v385 = vmul.f32 %v346, %v352
      %v386 = vld [vmem:[%s2] sm:$0x1]
      %v388 = vlaneseq
      %v389 = vshrl.u32 %v388, 7
      %v390 = vsub.s32 0, %v389
      %v391 = vrot.slane %v386, %v390
      %v393 = vadd.f32 %v354, %v391
      %v394 = vadd.f32 %v355, %v391
      %v395 = vadd.f32 %v356, %v391
      %v396 = vadd.f32 %v357, %v391
      %v397 = vadd.f32 %v358, %v391
      %v398 = vadd.f32 %v359, %v391
      %v399 = vadd.f32 %v360, %v391
      %v400 = vadd.f32 %v361, %v391
      %v401 = vadd.f32 %v362, %v391
      %v402 = vadd.f32 %v363, %v391
      %v403 = vadd.f32 %v364, %v391
      %v404 = vadd.f32 %v365, %v391
      %v405 = vadd.f32 %v366, %v391
      %v406 = vadd.f32 %v367, %v391
      %v407 = vadd.f32 %v368, %v391
      %v408 = vadd.f32 %v369, %v391
      %v409 = vadd.f32 %v370, %v391
      %v410 = vadd.f32 %v371, %v391
      %v411 = vadd.f32 %v372, %v391
      %v412 = vadd.f32 %v373, %v391
      %v413 = vadd.f32 %v374, %v391
      %v414 = vadd.f32 %v375, %v391
      %v415 = vadd.f32 %v376, %v391
      %v416 = vadd.f32 %v377, %v391
      %v417 = vadd.f32 %v378, %v391
      %v418 = vadd.f32 %v379, %v391
      %v419 = vadd.f32 %v380, %v391
      %v420 = vadd.f32 %v381, %v391
      %v421 = vadd.f32 %v382, %v391
      %v422 = vadd.f32 %v383, %v391
      %v423 = vadd.f32 %v384, %v391
      %v424 = vadd.f32 %v385, %v391
      %vm425 = vcmp.gt.f32.partialorder %v393, 0.0
      %vm426 = vcmp.gt.f32.partialorder %v394, 0.0
      %vm427 = vcmp.gt.f32.partialorder %v395, 0.0
      %vm428 = vcmp.gt.f32.partialorder %v396, 0.0
      %vm429 = vcmp.gt.f32.partialorder %v397, 0.0
      %vm430 = vcmp.gt.f32.partialorder %v398, 0.0
      %vm431 = vcmp.gt.f32.partialorder %v399, 0.0
      %vm432 = vcmp.gt.f32.partialorder %v400, 0.0
      %vm433 = vcmp.gt.f32.partialorder %v401, 0.0
      %vm434 = vcmp.gt.f32.partialorder %v402, 0.0
      %vm435 = vcmp.gt.f32.partialorder %v403, 0.0
      %vm436 = vcmp.gt.f32.partialorder %v404, 0.0
      %vm437 = vcmp.gt.f32.partialorder %v405, 0.0
      %vm438 = vcmp.gt.f32.partialorder %v406, 0.0
      %vm439 = vcmp.gt.f32.partialorder %v407, 0.0
      %vm440 = vcmp.gt.f32.partialorder %v408, 0.0
      %vm441 = vcmp.gt.f32.partialorder %v409, 0.0
      %vm442 = vcmp.gt.f32.partialorder %v410, 0.0
      %vm443 = vcmp.gt.f32.partialorder %v411, 0.0
      %vm444 = vcmp.gt.f32.partialorder %v412, 0.0
      %vm445 = vcmp.gt.f32.partialorder %v413, 0.0
      %vm446 = vcmp.gt.f32.partialorder %v414, 0.0
      %vm447 = vcmp.gt.f32.partialorder %v415, 0.0
      %vm448 = vcmp.gt.f32.partialorder %v416, 0.0
      %vm449 = vcmp.gt.f32.partialorder %v417, 0.0
      %vm450 = vcmp.gt.f32.partialorder %v418, 0.0
      %vm451 = vcmp.gt.f32.partialorder %v419, 0.0
      %vm452 = vcmp.gt.f32.partialorder %v420, 0.0
      %vm453 = vcmp.gt.f32.partialorder %v421, 0.0
      %vm454 = vcmp.gt.f32.partialorder %v422, 0.0
      %vm455 = vcmp.gt.f32.partialorder %v423, 0.0
      %vm456 = vcmp.gt.f32.partialorder %v424, 0.0
      %v457 = vmul.f32 %v393, 0.02
      %v458 = vmul.f32 %v394, 0.02
      %v459 = vmul.f32 %v395, 0.02
      %v460 = vmul.f32 %v396, 0.02
      %v461 = vmul.f32 %v397, 0.02
      %v462 = vmul.f32 %v398, 0.02
      %v463 = vmul.f32 %v399, 0.02
      %v464 = vmul.f32 %v400, 0.02
      %v465 = vmul.f32 %v401, 0.02
      %v466 = vmul.f32 %v402, 0.02
      %v467 = vmul.f32 %v403, 0.02
      %v468 = vmul.f32 %v404, 0.02
      %v469 = vmul.f32 %v405, 0.02
      %v470 = vmul.f32 %v406, 0.02
      %v471 = vmul.f32 %v407, 0.02
      %v472 = vmul.f32 %v408, 0.02
      %v473 = vmul.f32 %v409, 0.02
      %v474 = vmul.f32 %v410, 0.02
      %v475 = vmul.f32 %v411, 0.02
      %v476 = vmul.f32 %v412, 0.02
      %v477 = vmul.f32 %v413, 0.02
      %v478 = vmul.f32 %v414, 0.02
      %v479 = vmul.f32 %v415, 0.02
      %v480 = vmul.f32 %v416, 0.02
      %v481 = vmul.f32 %v417, 0.02
      %v482 = vmul.f32 %v418, 0.02
      %v483 = vmul.f32 %v419, 0.02
      %v484 = vmul.f32 %v420, 0.02
      %v485 = vmul.f32 %v421, 0.02
      %v486 = vmul.f32 %v422, 0.02
      %v487 = vmul.f32 %v423, 0.02
      %v488 = vmul.f32 %v424, 0.02
      %v489 = vsel %vm425, %v393, %v457
      %v490 = vsel %vm426, %v394, %v458
      %v491 = vsel %vm427, %v395, %v459
      %v492 = vsel %vm428, %v396, %v460
      %v493 = vsel %vm429, %v397, %v461
      %v494 = vsel %vm430, %v398, %v462
      %v495 = vsel %vm431, %v399, %v463
      %v496 = vsel %vm432, %v400, %v464
      %v497 = vsel %vm433, %v401, %v465
      %v498 = vsel %vm434, %v402, %v466
      %v499 = vsel %vm435, %v403, %v467
      %v500 = vsel %vm436, %v404, %v468
      %v501 = vsel %vm437, %v405, %v469
      %v502 = vsel %vm438, %v406, %v470
      %v503 = vsel %vm439, %v407, %v471
      %v504 = vsel %vm440, %v408, %v472
      %v505 = vsel %vm441, %v409, %v473
      %v506 = vsel %vm442, %v410, %v474
      %v507 = vsel %vm443, %v411, %v475
      %v508 = vsel %vm444, %v412, %v476
      %v509 = vsel %vm445, %v413, %v477
      %v510 = vsel %vm446, %v414, %v478
      %v511 = vsel %vm447, %v415, %v479
      %v512 = vsel %vm448, %v416, %v480
      %v513 = vsel %vm449, %v417, %v481
      %v514 = vsel %vm450, %v418, %v482
      %v515 = vsel %vm451, %v419, %v483
      %v516 = vsel %vm452, %v420, %v484
      %v517 = vsel %vm453, %v421, %v485
      %v518 = vsel %vm454, %v422, %v486
      %v519 = vsel %vm455, %v423, %v487
      %v520 = vsel %vm456, %v424, %v488
      %s521 = scalar_lea.vmem [#allocation2], 24
      %522 = vst.msk [vmem:[%s521 + $0x1] sm:$0xff] %vm269, %v489
      %523 = vst.msk [vmem:[%s521 + $0x9] sm:$0xff] %vm269, %v490
      %524 = vst.msk [vmem:[%s521 + $0x19] sm:$0xff] %vm269, %v491
      %525 = vst.msk [vmem:[%s521 + $0x21] sm:$0xff] %vm269, %v492
      %526 = vst.msk [vmem:[%s521 + $0x31] sm:$0xff] %vm269, %v493
      %527 = vst.msk [vmem:[%s521 + $0x39] sm:$0xff] %vm269, %v494
      %528 = vst.msk [vmem:[%s521 + $0x49] sm:$0xff] %vm269, %v495
      %529 = vst.msk [vmem:[%s521 + $0x51] sm:$0xff] %vm269, %v496
      %530 = vst.msk [vmem:[%s521 + $0x61] sm:$0xff] %vm269, %v497
      %531 = vst.msk [vmem:[%s521 + $0x69] sm:$0xff] %vm269, %v498
      %532 = vst.msk [vmem:[%s521 + $0x79] sm:$0xff] %vm269, %v499
      %533 = vst.msk [vmem:[%s521 + $0x81] sm:$0xff] %vm269, %v500
      %534 = vst.msk [vmem:[%s521 + $0x91] sm:$0xff] %vm269, %v501
      %535 = vst.msk [vmem:[%s521 + $0x99] sm:$0xff] %vm269, %v502
      %536 = vst.msk [vmem:[%s521 + $0xa9] sm:$0xff] %vm269, %v503
      %537 = vst.msk [vmem:[%s521 + $0xb1] sm:$0xff] %vm269, %v504
      %538 = vst.msk [vmem:[%s521 + $0xc1] sm:$0xff] %vm269, %v505
      %539 = vst.msk [vmem:[%s521 + $0xc9] sm:$0xff] %vm269, %v506
      %540 = vst.msk [vmem:[%s521 + $0xd9] sm:$0xff] %vm269, %v507
      %541 = vst.msk [vmem:[%s521 + $0xe1] sm:$0xff] %vm269, %v508
      %542 = vst.msk [vmem:[%s521 + $0xf1] sm:$0xff] %vm269, %v509
      %543 = vst.msk [vmem:[%s521 + $0xf9] sm:$0xff] %vm269, %v510
      %544 = vst.msk [vmem:[%s521 + $0x109] sm:$0xff] %vm269, %v511
      %545 = vst.msk [vmem:[%s521 + $0x111] sm:$0xff] %vm269, %v512
      %546 = vst.msk [vmem:[%s521 + $0x121] sm:$0xff] %vm269, %v513
      %547 = vst.msk [vmem:[%s521 + $0x129] sm:$0xff] %vm269, %v514
      %548 = vst.msk [vmem:[%s521 + $0x139] sm:$0xff] %vm269, %v515
      %549 = vst.msk [vmem:[%s521 + $0x141] sm:$0xff] %vm269, %v516
      %550 = vst.msk [vmem:[%s521 + $0x151] sm:$0xff] %vm269, %v517
      %551 = vst.msk [vmem:[%s521 + $0x159] sm:$0xff] %vm269, %v518
      %552 = vst.msk [vmem:[%s521 + $0x169] sm:$0xff] %vm269, %v519
      %553 = vst.msk [vmem:[%s521 + $0x171] sm:$0xff] %vm269, %v520
      %v554 = vld [vmem:[#allocation2] sm:$0xff]
      %v555 = vld [vmem:[#allocation2 + $0x8] sm:$0xff]
      %v556 = vld [vmem:[#allocation2 + $0x10] sm:$0x3]
      %v557 = vld [vmem:[#allocation2 + $0x18] sm:$0xff]
      %v558 = vld [vmem:[#allocation2 + $0x20] sm:$0xff]
      %v559 = vld [vmem:[#allocation2 + $0x28] sm:$0x3]
      %v560 = vld [vmem:[#allocation2 + $0x30] sm:$0xff]
      %v561 = vld [vmem:[#allocation2 + $0x38] sm:$0xff]
      %v562 = vld [vmem:[#allocation2 + $0x40] sm:$0x3]
      %v563 = vld [vmem:[#allocation2 + $0x48] sm:$0xff]
      %v564 = vld [vmem:[#allocation2 + $0x50] sm:$0xff]
      %v565 = vld [vmem:[#allocation2 + $0x58] sm:$0x3]
      %v566 = vld [vmem:[#allocation2 + $0x60] sm:$0xff]
      %v567 = vld [vmem:[#allocation2 + $0x68] sm:$0xff]
      %v568 = vld [vmem:[#allocation2 + $0x70] sm:$0x3]
      %v569 = vld [vmem:[#allocation2 + $0x78] sm:$0xff]
      %v570 = vld [vmem:[#allocation2 + $0x80] sm:$0xff]
      %v571 = vld [vmem:[#allocation2 + $0x88] sm:$0x3]
      %v572 = vld [vmem:[#allocation2 + $0x90] sm:$0xff]
      %v573 = vld [vmem:[#allocation2 + $0x98] sm:$0xff]
      %v574 = vld [vmem:[#allocation2 + $0xa0] sm:$0x3]
      %v575 = vld [vmem:[#allocation2 + $0xa8] sm:$0xff]
      %v576 = vld [vmem:[#allocation2 + $0xb0] sm:$0xff]
      %v577 = vld [vmem:[#allocation2 + $0xb8] sm:$0x3]
      %v578 = vld [vmem:[#allocation2 + $0xc0] sm:$0xff]
      %v579 = vld [vmem:[#allocation2 + $0xc8] sm:$0xff]
      %v580 = vld [vmem:[#allocation2 + $0xd0] sm:$0x3]
      %v581 = vld [vmem:[#allocation2 + $0xd8] sm:$0xff]
      %v582 = vld [vmem:[#allocation2 + $0xe0] sm:$0xff]
      %v583 = vld [vmem:[#allocation2 + $0xe8] sm:$0x3]
      %v584 = vld [vmem:[#allocation2 + $0xf0] sm:$0xff]
      %v585 = vld [vmem:[#allocation2 + $0xf8] sm:$0xff]
      %v586 = vld [vmem:[#allocation2 + $0x100] sm:$0x3]
      %v587 = vld [vmem:[#allocation2 + $0x108] sm:$0xff]
      %v588 = vld [vmem:[#allocation2 + $0x110] sm:$0xff]
      %v589 = vld [vmem:[#allocation2 + $0x118] sm:$0x3]
      %v590 = vld [vmem:[#allocation2 + $0x120] sm:$0xff]
      %v591 = vld [vmem:[#allocation2 + $0x128] sm:$0xff]
      %v592 = vld [vmem:[#allocation2 + $0x130] sm:$0x3]
      %v593 = vld [vmem:[#allocation2 + $0x138] sm:$0xff]
      %v594 = vld [vmem:[#allocation2 + $0x140] sm:$0xff]
      %v595 = vld [vmem:[#allocation2 + $0x148] sm:$0x3]
      %v596 = vld [vmem:[#allocation2 + $0x150] sm:$0xff]
      %v597 = vld [vmem:[#allocation2 + $0x158] sm:$0xff]
      %v598 = vld [vmem:[#allocation2 + $0x160] sm:$0x3]
      %v599 = vld [vmem:[#allocation2 + $0x168] sm:$0xff]
      %v600 = vld [vmem:[#allocation2 + $0x170] sm:$0xff]
      %v601 = vld [vmem:[#allocation2 + $0x178] sm:$0x3]
      %v602 = vld [vmem:[%s3] sm:$0xff]
      %vm651 = vcmask 1046528
      %v652 = vrot.slane %v554, 1
      %v653 = vrot.slane %v555, 1
      %v654 = vsel %vm651, %v652, %v653
      %v655 = vrot.slane %v556, 1
      %v656 = vsel %vm651, %v653, %v655
      %v657 = vrot.slane %v557, 1
      %v658 = vrot.slane %v558, 1
      %v659 = vsel %vm651, %v657, %v658
      %v660 = vrot.slane %v559, 1
      %v661 = vsel %vm651, %v658, %v660
      %v662 = vrot.slane %v560, 1
      %v663 = vrot.slane %v561, 1
      %v664 = vsel %vm651, %v662, %v663
      %v665 = vrot.slane %v562, 1
      %v666 = vsel %vm651, %v663, %v665
      %v667 = vrot.slane %v563, 1
      %v668 = vrot.slane %v564, 1
      %v669 = vsel %vm651, %v667, %v668
      %v670 = vrot.slane %v565, 1
      %v671 = vsel %vm651, %v668, %v670
      %v672 = vrot.slane %v566, 1
      %v673 = vrot.slane %v567, 1
      %v674 = vsel %vm651, %v672, %v673
      %v675 = vrot.slane %v568, 1
      %v676 = vsel %vm651, %v673, %v675
      %v677 = vrot.slane %v569, 1
      %v678 = vrot.slane %v570, 1
      %v679 = vsel %vm651, %v677, %v678
      %v680 = vrot.slane %v571, 1
      %v681 = vsel %vm651, %v678, %v680
      %v682 = vrot.slane %v572, 1
      %v683 = vrot.slane %v573, 1
      %v684 = vsel %vm651, %v682, %v683
      %v685 = vrot.slane %v574, 1
      %v686 = vsel %vm651, %v683, %v685
      %v687 = vrot.slane %v575, 1
      %v688 = vrot.slane %v576, 1
      %v689 = vsel %vm651, %v687, %v688
      %v690 = vrot.slane %v577, 1
      %v691 = vsel %vm651, %v688, %v690
      %v692 = vrot.slane %v578, 1
      %v693 = vrot.slane %v579, 1
      %v694 = vsel %vm651, %v692, %v693
      %v695 = vrot.slane %v580, 1
      %v696 = vsel %vm651, %v693, %v695
      %v697 = vrot.slane %v581, 1
      %v698 = vrot.slane %v582, 1
      %v699 = vsel %vm651, %v697, %v698
      %v700 = vrot.slane %v583, 1
      %v701 = vsel %vm651, %v698, %v700
      %v702 = vrot.slane %v584, 1
      %v703 = vrot.slane %v585, 1
      %v704 = vsel %vm651, %v702, %v703
      %v705 = vrot.slane %v586, 1
      %v706 = vsel %vm651, %v703, %v705
      %v707 = vrot.slane %v587, 1
      %v708 = vrot.slane %v588, 1
      %v709 = vsel %vm651, %v707, %v708
      %v710 = vrot.slane %v589, 1
      %v711 = vsel %vm651, %v708, %v710
      %v712 = vrot.slane %v590, 1
      %v713 = vrot.slane %v591, 1
      %v714 = vsel %vm651, %v712, %v713
      %v715 = vrot.slane %v592, 1
      %v716 = vsel %vm651, %v713, %v715
      %v717 = vrot.slane %v593, 1
      %v718 = vrot.slane %v594, 1
      %v719 = vsel %vm651, %v717, %v718
      %v720 = vrot.slane %v595, 1
      %v721 = vsel %vm651, %v718, %v720
      %v722 = vrot.slane %v596, 1
      %v723 = vrot.slane %v597, 1
      %v724 = vsel %vm651, %v722, %v723
      %v725 = vrot.slane %v598, 1
      %v726 = vsel %vm651, %v723, %v725
      %v727 = vrot.slane %v599, 1
      %v728 = vrot.slane %v600, 1
      %v729 = vsel %vm651, %v727, %v728
      %v730 = vrot.slane %v601, 1
      %v731 = vsel %vm651, %v728, %v730
      %s732 = scalar_lea.vmem %s3, 8
      %v733 = vld [vmem:[%s732] sm:$0xff]
      %v734 = vsel %vm269, %v654, 0
      %v736 = vsel %vm269, %v656, 0
      %v738 = vsel %vm269, %v659, 0
      %v740 = vsel %vm269, %v661, 0
      %v742 = vsel %vm269, %v664, 0
      %v744 = vsel %vm269, %v666, 0
      %v746 = vsel %vm269, %v669, 0
      %v748 = vsel %vm269, %v671, 0
      %v750 = vsel %vm269, %v674, 0
      %v752 = vsel %vm269, %v676, 0
      %v754 = vsel %vm269, %v679, 0
      %v756 = vsel %vm269, %v681, 0
      %v758 = vsel %vm269, %v684, 0
      %v760 = vsel %vm269, %v686, 0
      %v762 = vsel %vm269, %v689, 0
      %v764 = vsel %vm269, %v691, 0
      %v766 = vsel %vm269, %v694, 0
      %v768 = vsel %vm269, %v696, 0
      %v770 = vsel %vm269, %v699, 0
      %v772 = vsel %vm269, %v701, 0
      %v774 = vsel %vm269, %v704, 0
      %v776 = vsel %vm269, %v706, 0
      %v778 = vsel %vm269, %v709, 0
      %v780 = vsel %vm269, %v711, 0
      %v782 = vsel %vm269, %v714, 0
      %v784 = vsel %vm269, %v716, 0
      %v786 = vsel %vm269, %v719, 0
      %v788 = vsel %vm269, %v721, 0
      %v790 = vsel %vm269, %v724, 0
      %v792 = vsel %vm269, %v726, 0
      %v794 = vsel %vm269, %v729, 0
      %v796 = vsel %vm269, %v731, 0
      %798 = vmatprep.subr.mxu0 0.0
      %799 = vmatpush1.msra.mxu0 0.0
      %800 = vmatprep.subr.mxu0 0.0
      %801 = vmatpush1.msra.mxu0 0.0
      %802 = vmatprep.subr.mxu0 0.0
      %803 = vmatpush1.msra.mxu0 0.0
      %804 = vmatprep.subr.mxu0 0.0
      %805 = vmatpush1.msra.mxu0 0.0
      %806 = vmatprep.subr.mxu0 0.0
      %807 = vmatpush1.msra.mxu0 0.0
      %808 = vmatprep.subr.mxu0 0.0
      %809 = vmatpush1.msra.mxu0 0.0
      %810 = vmatprep.subr.mxu0 0.0
      %811 = vmatpush1.msra.mxu0 0.0
      %812 = vmatprep.subr.mxu0 0.0
      %813 = vmatpush1.msra.mxu0 0.0
      %814 = vmatprep.subr.mxu0 0.0
      %815 = vmatpush1.msra.mxu0 0.0
      %816 = vmatprep.subr.mxu0 0.0
      %817 = vmatpush1.msra.mxu0 0.0
      %818 = vmatprep.subr.mxu0 0.0
      %819 = vmatpush1.msra.mxu0 0.0
      %820 = vmatprep.subr.mxu0 0.0
      %821 = vmatpush1.msra.mxu0 0.0
      %822 = vmatprep.subr.mxu0 0.0
      %823 = vmatpush1.msra.mxu0 0.0
      %824 = vmatprep.subr.mxu0 0.0
      %825 = vmatpush1.msra.mxu0 0.0
      %826 = vmatprep.subr.mxu0 0.0
      %827 = vmatpush1.msra.mxu0 0.0
      %828 = vmatprep.subr.mxu0 0.0
      %829 = vmatpush1.msra.mxu0 %v733
      %830 = vmatprep.subr.mxu0 0.0
      %831 = vmatpush2.msra.mxu0 0.0
      %832 = vmatprep.subr.mxu0 0.0
      %833 = vmatpush2.msra.mxu0 0.0
      %834 = vmatprep.subr.mxu0 0.0
      %835 = vmatpush2.msra.mxu0 0.0
      %836 = vmatprep.subr.mxu0 0.0
      %837 = vmatpush2.msra.mxu0 0.0
      %838 = vmatprep.subr.mxu0 0.0
      %839 = vmatpush2.msra.mxu0 0.0
      %840 = vmatprep.subr.mxu0 0.0
      %841 = vmatpush2.msra.mxu0 0.0
      %842 = vmatprep.subr.mxu0 0.0
      %843 = vmatpush2.msra.mxu0 0.0
      %844 = vmatprep.subr.mxu0 0.0
      %845 = vmatpush2.msra.mxu0 0.0
      %846 = vmatprep.subr.mxu0 0.0
      %847 = vmatpush2.msra.mxu0 0.0
      %848 = vmatprep.subr.mxu0 0.0
      %849 = vmatpush2.msra.mxu0 0.0
      %850 = vmatprep.subr.mxu0 0.0
      %851 = vmatpush2.msra.mxu0 0.0
      %852 = vmatprep.subr.mxu0 0.0
      %853 = vmatpush2.msra.mxu0 0.0
      %854 = vmatprep.subr.mxu0 0.0
      %855 = vmatpush2.msra.mxu0 0.0
      %856 = vmatprep.subr.mxu0 0.0
      %857 = vmatpush2.msra.mxu0 0.0
      %858 = vmatprep.subr.mxu0 0.0
      %859 = vmatpush2.msra.mxu0 0.0
      %860 = vmatprep.subr.mxu0 0.0
      %861 = vmatpush2.msra.mxu0 0.0
      %862 = vmatprep.mubr.f32.mxu0 0.0
      %863 = vmatmul.mubr.f32.gmra.mxu0 %v734
      %v864 = vpop.f32.mrf.mxu0
      %v865 = vadd.f32 0.0, %v864
      %v866 = vpop.f32.mrf.mxu0
      %867 = vmatprep.mubr.f32.mxu0 0.0
      %868 = vmatmul.mubr.f32.gmra.mxu0 %v736
      %v869 = vpop.f32.mrf.mxu0
      %v870 = vadd.f32 0.0, %v869
      %v871 = vpop.f32.mrf.mxu0
      %872 = vmatprep.mubr.f32.mxu0 0.0
      %873 = vmatmul.mubr.f32.gmra.mxu0 %v738
      %v874 = vpop.f32.mrf.mxu0
      %v875 = vadd.f32 0.0, %v874
      %v876 = vpop.f32.mrf.mxu0
      %877 = vmatprep.mubr.f32.mxu0 0.0
      %878 = vmatmul.mubr.f32.gmra.mxu0 %v740
      %v879 = vpop.f32.mrf.mxu0
      %v880 = vadd.f32 0.0, %v879
      %v881 = vpop.f32.mrf.mxu0
      %882 = vmatprep.mubr.f32.mxu0 0.0
      %883 = vmatmul.mubr.f32.gmra.mxu0 %v742
      %v884 = vpop.f32.mrf.mxu0
      %v885 = vadd.f32 0.0, %v884
      %v886 = vpop.f32.mrf.mxu0
      %887 = vmatprep.mubr.f32.mxu0 0.0
      %888 = vmatmul.mubr.f32.gmra.mxu0 %v744
      %v889 = vpop.f32.mrf.mxu0
      %v890 = vadd.f32 0.0, %v889
      %v891 = vpop.f32.mrf.mxu0
      %892 = vmatprep.mubr.f32.mxu0 0.0
      %893 = vmatmul.mubr.f32.gmra.mxu0 %v746
      %v894 = vpop.f32.mrf.mxu0
      %v895 = vadd.f32 0.0, %v894
      %v896 = vpop.f32.mrf.mxu0
      %897 = vmatprep.mubr.f32.mxu0 0.0
      %898 = vmatmul.mubr.f32.gmra.mxu0 %v748
      %v899 = vpop.f32.mrf.mxu0
      %v900 = vadd.f32 0.0, %v899
      %v901 = vpop.f32.mrf.mxu0
      %902 = vmatprep.mubr.f32.mxu0 0.0
      %903 = vmatmul.mubr.f32.gmra.mxu0 %v750
      %v904 = vpop.f32.mrf.mxu0
      %v905 = vadd.f32 0.0, %v904
      %v906 = vpop.f32.mrf.mxu0
      %907 = vmatprep.mubr.f32.mxu0 0.0
      %908 = vmatmul.mubr.f32.gmra.mxu0 %v752
      %v909 = vpop.f32.mrf.mxu0
      %v910 = vadd.f32 0.0, %v909
      %v911 = vpop.f32.mrf.mxu0
      %912 = vmatprep.mubr.f32.mxu0 0.0
      %913 = vmatmul.mubr.f32.gmra.mxu0 %v754
      %v914 = vpop.f32.mrf.mxu0
      %v915 = vadd.f32 0.0, %v914
      %v916 = vpop.f32.mrf.mxu0
      %917 = vmatprep.mubr.f32.mxu0 0.0
      %918 = vmatmul.mubr.f32.gmra.mxu0 %v756
      %v919 = vpop.f32.mrf.mxu0
      %v920 = vadd.f32 0.0, %v919
      %v921 = vpop.f32.mrf.mxu0
      %922 = vmatprep.mubr.f32.mxu0 0.0
      %923 = vmatmul.mubr.f32.gmra.mxu0 %v758
      %v924 = vpop.f32.mrf.mxu0
      %v925 = vadd.f32 0.0, %v924
      %v926 = vpop.f32.mrf.mxu0
      %927 = vmatprep.mubr.f32.mxu0 0.0
      %928 = vmatmul.mubr.f32.gmra.mxu0 %v760
      %v929 = vpop.f32.mrf.mxu0
      %v930 = vadd.f32 0.0, %v929
      %v931 = vpop.f32.mrf.mxu0
      %932 = vmatprep.mubr.f32.mxu0 0.0
      %933 = vmatmul.mubr.f32.gmra.mxu0 %v762
      %v934 = vpop.f32.mrf.mxu0
      %v935 = vadd.f32 0.0, %v934
      %v936 = vpop.f32.mrf.mxu0
      %937 = vmatprep.mubr.f32.mxu0 0.0
      %938 = vmatmul.mubr.f32.gmra.mxu0 %v764
      %v939 = vpop.f32.mrf.mxu0
      %v940 = vadd.f32 0.0, %v939
      %v941 = vpop.f32.mrf.mxu0
      %942 = vmatprep.mubr.f32.mxu0 0.0
      %943 = vmatmul.mubr.f32.gmra.mxu0 %v766
      %v944 = vpop.f32.mrf.mxu0
      %v945 = vadd.f32 0.0, %v944
      %v946 = vpop.f32.mrf.mxu0
      %947 = vmatprep.mubr.f32.mxu0 0.0
      %948 = vmatmul.mubr.f32.gmra.mxu0 %v768
      %v949 = vpop.f32.mrf.mxu0
      %v950 = vadd.f32 0.0, %v949
      %v951 = vpop.f32.mrf.mxu0
      %952 = vmatprep.mubr.f32.mxu0 0.0
      %953 = vmatmul.mubr.f32.gmra.mxu0 %v770
      %v954 = vpop.f32.mrf.mxu0
      %v955 = vadd.f32 0.0, %v954
      %v956 = vpop.f32.mrf.mxu0
      %957 = vmatprep.mubr.f32.mxu0 0.0
      %958 = vmatmul.mubr.f32.gmra.mxu0 %v772
      %v959 = vpop.f32.mrf.mxu0
      %v960 = vadd.f32 0.0, %v959
      %v961 = vpop.f32.mrf.mxu0
      %962 = vmatprep.mubr.f32.mxu0 0.0
      %963 = vmatmul.mubr.f32.gmra.mxu0 %v774
      %v964 = vpop.f32.mrf.mxu0
      %v965 = vadd.f32 0.0, %v964
      %v966 = vpop.f32.mrf.mxu0
      %967 = vmatprep.mubr.f32.mxu0 0.0
      %968 = vmatmul.mubr.f32.gmra.mxu0 %v776
      %v969 = vpop.f32.mrf.mxu0
      %v970 = vadd.f32 0.0, %v969
      %v971 = vpop.f32.mrf.mxu0
      %972 = vmatprep.mubr.f32.mxu0 0.0
      %973 = vmatmul.mubr.f32.gmra.mxu0 %v778
      %v974 = vpop.f32.mrf.mxu0
      %v975 = vadd.f32 0.0, %v974
      %v976 = vpop.f32.mrf.mxu0
      %977 = vmatprep.mubr.f32.mxu0 0.0
      %978 = vmatmul.mubr.f32.gmra.mxu0 %v780
      %v979 = vpop.f32.mrf.mxu0
      %v980 = vadd.f32 0.0, %v979
      %v981 = vpop.f32.mrf.mxu0
      %982 = vmatprep.mubr.f32.mxu0 0.0
      %983 = vmatmul.mubr.f32.gmra.mxu0 %v782
      %v984 = vpop.f32.mrf.mxu0
      %v985 = vadd.f32 0.0, %v984
      %v986 = vpop.f32.mrf.mxu0
      %987 = vmatprep.mubr.f32.mxu0 0.0
      %988 = vmatmul.mubr.f32.gmra.mxu0 %v784
      %v989 = vpop.f32.mrf.mxu0
      %v990 = vadd.f32 0.0, %v989
      %v991 = vpop.f32.mrf.mxu0
      %992 = vmatprep.mubr.f32.mxu0 0.0
      %993 = vmatmul.mubr.f32.gmra.mxu0 %v786
      %v994 = vpop.f32.mrf.mxu0
      %v995 = vadd.f32 0.0, %v994
      %v996 = vpop.f32.mrf.mxu0
      %997 = vmatprep.mubr.f32.mxu0 0.0
      %998 = vmatmul.mubr.f32.gmra.mxu0 %v788
      %v999 = vpop.f32.mrf.mxu0
      %v1000 = vadd.f32 0.0, %v999
      %v1001 = vpop.f32.mrf.mxu0
      %1002 = vmatprep.mubr.f32.mxu0 0.0
      %1003 = vmatmul.mubr.f32.gmra.mxu0 %v790
      %v1004 = vpop.f32.mrf.mxu0
      %v1005 = vadd.f32 0.0, %v1004
      %v1006 = vpop.f32.mrf.mxu0
      %1007 = vmatprep.mubr.f32.mxu0 0.0
      %1008 = vmatmul.mubr.f32.gmra.mxu0 %v792
      %v1009 = vpop.f32.mrf.mxu0
      %v1010 = vadd.f32 0.0, %v1009
      %v1011 = vpop.f32.mrf.mxu0
      %1012 = vmatprep.mubr.f32.mxu0 0.0
      %1013 = vmatmul.mubr.f32.gmra.mxu0 %v794
      %v1014 = vpop.f32.mrf.mxu0
      %v1015 = vadd.f32 0.0, %v1014
      %v1016 = vpop.f32.mrf.mxu0
      %1017 = vmatprep.mubr.f32.mxu0 0.0
      %1018 = vmatmul.mubr.f32.gmra.mxu0 %v796
      %v1019 = vpop.f32.mrf.mxu0
      %v1020 = vadd.f32 0.0, %v1019
      %v1021 = vpop.f32.mrf.mxu0
      %1022 = vdwg.mxu0
      %v1023 = vsel %vm269, %v554, 0
      %v1025 = vsel %vm269, %v555, 0
      %v1027 = vsel %vm269, %v557, 0
      %v1029 = vsel %vm269, %v558, 0
      %v1031 = vsel %vm269, %v560, 0
      %v1033 = vsel %vm269, %v561, 0
      %v1035 = vsel %vm269, %v563, 0
      %v1037 = vsel %vm269, %v564, 0
      %v1039 = vsel %vm269, %v566, 0
      %v1041 = vsel %vm269, %v567, 0
      %v1043 = vsel %vm269, %v569, 0
      %v1045 = vsel %vm269, %v570, 0
      %v1047 = vsel %vm269, %v572, 0
      %v1049 = vsel %vm269, %v573, 0
      %v1051 = vsel %vm269, %v575, 0
      %v1053 = vsel %vm269, %v576, 0
      %v1055 = vsel %vm269, %v578, 0
      %v1057 = vsel %vm269, %v579, 0
      %v1059 = vsel %vm269, %v581, 0
      %v1061 = vsel %vm269, %v582, 0
      %v1063 = vsel %vm269, %v584, 0
      %v1065 = vsel %vm269, %v585, 0
      %v1067 = vsel %vm269, %v587, 0
      %v1069 = vsel %vm269, %v588, 0
      %v1071 = vsel %vm269, %v590, 0
      %v1073 = vsel %vm269, %v591, 0
      %v1075 = vsel %vm269, %v593, 0
      %v1077 = vsel %vm269, %v594, 0
      %v1079 = vsel %vm269, %v596, 0
      %v1081 = vsel %vm269, %v597, 0
      %v1083 = vsel %vm269, %v599, 0
      %v1085 = vsel %vm269, %v600, 0
      %1087 = vmatprep.subr.mxu0 0.0
      %1088 = vmatpush1.msra.mxu0 0.0
      %1089 = vmatprep.subr.mxu0 0.0
      %1090 = vmatpush1.msra.mxu0 0.0
      %1091 = vmatprep.subr.mxu0 0.0
      %1092 = vmatpush1.msra.mxu0 0.0
      %1093 = vmatprep.subr.mxu0 0.0
      %1094 = vmatpush1.msra.mxu0 0.0
      %1095 = vmatprep.subr.mxu0 0.0
      %1096 = vmatpush1.msra.mxu0 0.0
      %1097 = vmatprep.subr.mxu0 0.0
      %1098 = vmatpush1.msra.mxu0 0.0
      %1099 = vmatprep.subr.mxu0 0.0
      %1100 = vmatpush1.msra.mxu0 0.0
      %1101 = vmatprep.subr.mxu0 0.0
      %1102 = vmatpush1.msra.mxu0 0.0
      %1103 = vmatprep.subr.mxu0 0.0
      %1104 = vmatpush1.msra.mxu0 0.0
      %1105 = vmatprep.subr.mxu0 0.0
      %1106 = vmatpush1.msra.mxu0 0.0
      %1107 = vmatprep.subr.mxu0 0.0
      %1108 = vmatpush1.msra.mxu0 0.0
      %1109 = vmatprep.subr.mxu0 0.0
      %1110 = vmatpush1.msra.mxu0 0.0
      %1111 = vmatprep.subr.mxu0 0.0
      %1112 = vmatpush1.msra.mxu0 0.0
      %1113 = vmatprep.subr.mxu0 0.0
      %1114 = vmatpush1.msra.mxu0 0.0
      %1115 = vmatprep.subr.mxu0 0.0
      %1116 = vmatpush1.msra.mxu0 0.0
      %1117 = vmatprep.subr.mxu0 0.0
      %1118 = vmatpush1.msra.mxu0 %v602
      %1119 = vmatprep.subr.mxu0 0.0
      %1120 = vmatpush2.msra.mxu0 0.0
      %1121 = vmatprep.subr.mxu0 0.0
      %1122 = vmatpush2.msra.mxu0 0.0
      %1123 = vmatprep.subr.mxu0 0.0
      %1124 = vmatpush2.msra.mxu0 0.0
      %1125 = vmatprep.subr.mxu0 0.0
      %1126 = vmatpush2.msra.mxu0 0.0
      %1127 = vmatprep.subr.mxu0 0.0
      %1128 = vmatpush2.msra.mxu0 0.0
      %1129 = vmatprep.subr.mxu0 0.0
      %1130 = vmatpush2.msra.mxu0 0.0
      %1131 = vmatprep.subr.mxu0 0.0
      %1132 = vmatpush2.msra.mxu0 0.0
      %1133 = vmatprep.subr.mxu0 0.0
      %1134 = vmatpush2.msra.mxu0 0.0
      %1135 = vmatprep.subr.mxu0 0.0
      %1136 = vmatpush2.msra.mxu0 0.0
      %1137 = vmatprep.subr.mxu0 0.0
      %1138 = vmatpush2.msra.mxu0 0.0
      %1139 = vmatprep.subr.mxu0 0.0
      %1140 = vmatpush2.msra.mxu0 0.0
      %1141 = vmatprep.subr.mxu0 0.0
      %1142 = vmatpush2.msra.mxu0 0.0
      %1143 = vmatprep.subr.mxu0 0.0
      %1144 = vmatpush2.msra.mxu0 0.0
      %1145 = vmatprep.subr.mxu0 0.0
      %1146 = vmatpush2.msra.mxu0 0.0
      %1147 = vmatprep.subr.mxu0 0.0
      %1148 = vmatpush2.msra.mxu0 0.0
      %1149 = vmatprep.subr.mxu0 0.0
      %1150 = vmatpush2.msra.mxu0 0.0
      %1151 = vmatprep.mubr.f32.mxu0 0.0
      %1152 = vmatmul.mubr.f32.gmra.mxu0 %v1023
      %v1153 = vpop.f32.mrf.mxu0
      %v1154 = vadd.f32 %v865, %v1153
      %v1155 = vpop.f32.mrf.mxu0
      %1156 = vmatprep.mubr.f32.mxu0 0.0
      %1157 = vmatmul.mubr.f32.gmra.mxu0 %v1025
      %v1158 = vpop.f32.mrf.mxu0
      %v1159 = vadd.f32 %v870, %v1158
      %v1160 = vpop.f32.mrf.mxu0
      %1161 = vmatprep.mubr.f32.mxu0 0.0
      %1162 = vmatmul.mubr.f32.gmra.mxu0 %v1027
      %v1163 = vpop.f32.mrf.mxu0
      %v1164 = vadd.f32 %v875, %v1163
      %v1165 = vpop.f32.mrf.mxu0
      %1166 = vmatprep.mubr.f32.mxu0 0.0
      %1167 = vmatmul.mubr.f32.gmra.mxu0 %v1029
      %v1168 = vpop.f32.mrf.mxu0
      %v1169 = vadd.f32 %v880, %v1168
      %v1170 = vpop.f32.mrf.mxu0
      %1171 = vmatprep.mubr.f32.mxu0 0.0
      %1172 = vmatmul.mubr.f32.gmra.mxu0 %v1031
      %v1173 = vpop.f32.mrf.mxu0
      %v1174 = vadd.f32 %v885, %v1173
      %v1175 = vpop.f32.mrf.mxu0
      %1176 = vmatprep.mubr.f32.mxu0 0.0
      %1177 = vmatmul.mubr.f32.gmra.mxu0 %v1033
      %v1178 = vpop.f32.mrf.mxu0
      %v1179 = vadd.f32 %v890, %v1178
      %v1180 = vpop.f32.mrf.mxu0
      %1181 = vmatprep.mubr.f32.mxu0 0.0
      %1182 = vmatmul.mubr.f32.gmra.mxu0 %v1035
      %v1183 = vpop.f32.mrf.mxu0
      %v1184 = vadd.f32 %v895, %v1183
      %v1185 = vpop.f32.mrf.mxu0
      %1186 = vmatprep.mubr.f32.mxu0 0.0
      %1187 = vmatmul.mubr.f32.gmra.mxu0 %v1037
      %v1188 = vpop.f32.mrf.mxu0
      %v1189 = vadd.f32 %v900, %v1188
      %v1190 = vpop.f32.mrf.mxu0
      %1191 = vmatprep.mubr.f32.mxu0 0.0
      %1192 = vmatmul.mubr.f32.gmra.mxu0 %v1039
      %v1193 = vpop.f32.mrf.mxu0
      %v1194 = vadd.f32 %v905, %v1193
      %v1195 = vpop.f32.mrf.mxu0
      %1196 = vmatprep.mubr.f32.mxu0 0.0
      %1197 = vmatmul.mubr.f32.gmra.mxu0 %v1041
      %v1198 = vpop.f32.mrf.mxu0
      %v1199 = vadd.f32 %v910, %v1198
      %v1200 = vpop.f32.mrf.mxu0
      %1201 = vmatprep.mubr.f32.mxu0 0.0
      %1202 = vmatmul.mubr.f32.gmra.mxu0 %v1043
      %v1203 = vpop.f32.mrf.mxu0
      %v1204 = vadd.f32 %v915, %v1203
      %v1205 = vpop.f32.mrf.mxu0
      %1206 = vmatprep.mubr.f32.mxu0 0.0
      %1207 = vmatmul.mubr.f32.gmra.mxu0 %v1045
      %v1208 = vpop.f32.mrf.mxu0
      %v1209 = vadd.f32 %v920, %v1208
      %v1210 = vpop.f32.mrf.mxu0
      %1211 = vmatprep.mubr.f32.mxu0 0.0
      %1212 = vmatmul.mubr.f32.gmra.mxu0 %v1047
      %v1213 = vpop.f32.mrf.mxu0
      %v1214 = vadd.f32 %v925, %v1213
      %v1215 = vpop.f32.mrf.mxu0
      %1216 = vmatprep.mubr.f32.mxu0 0.0
      %1217 = vmatmul.mubr.f32.gmra.mxu0 %v1049
      %v1218 = vpop.f32.mrf.mxu0
      %v1219 = vadd.f32 %v930, %v1218
      %v1220 = vpop.f32.mrf.mxu0
      %1221 = vmatprep.mubr.f32.mxu0 0.0
      %1222 = vmatmul.mubr.f32.gmra.mxu0 %v1051
      %v1223 = vpop.f32.mrf.mxu0
      %v1224 = vadd.f32 %v935, %v1223
      %v1225 = vpop.f32.mrf.mxu0
      %1226 = vmatprep.mubr.f32.mxu0 0.0
      %1227 = vmatmul.mubr.f32.gmra.mxu0 %v1053
      %v1228 = vpop.f32.mrf.mxu0
      %v1229 = vadd.f32 %v940, %v1228
      %v1230 = vpop.f32.mrf.mxu0
      %1231 = vmatprep.mubr.f32.mxu0 0.0
      %1232 = vmatmul.mubr.f32.gmra.mxu0 %v1055
      %v1233 = vpop.f32.mrf.mxu0
      %v1234 = vadd.f32 %v945, %v1233
      %v1235 = vpop.f32.mrf.mxu0
      %1236 = vmatprep.mubr.f32.mxu0 0.0
      %1237 = vmatmul.mubr.f32.gmra.mxu0 %v1057
      %v1238 = vpop.f32.mrf.mxu0
      %v1239 = vadd.f32 %v950, %v1238
      %v1240 = vpop.f32.mrf.mxu0
      %1241 = vmatprep.mubr.f32.mxu0 0.0
      %1242 = vmatmul.mubr.f32.gmra.mxu0 %v1059
      %v1243 = vpop.f32.mrf.mxu0
      %v1244 = vadd.f32 %v955, %v1243
      %v1245 = vpop.f32.mrf.mxu0
      %1246 = vmatprep.mubr.f32.mxu0 0.0
      %1247 = vmatmul.mubr.f32.gmra.mxu0 %v1061
      %v1248 = vpop.f32.mrf.mxu0
      %v1249 = vadd.f32 %v960, %v1248
      %v1250 = vpop.f32.mrf.mxu0
      %1251 = vmatprep.mubr.f32.mxu0 0.0
      %1252 = vmatmul.mubr.f32.gmra.mxu0 %v1063
      %v1253 = vpop.f32.mrf.mxu0
      %v1254 = vadd.f32 %v965, %v1253
      %v1255 = vpop.f32.mrf.mxu0
      %1256 = vmatprep.mubr.f32.mxu0 0.0
      %1257 = vmatmul.mubr.f32.gmra.mxu0 %v1065
      %v1258 = vpop.f32.mrf.mxu0
      %v1259 = vadd.f32 %v970, %v1258
      %v1260 = vpop.f32.mrf.mxu0
      %1261 = vmatprep.mubr.f32.mxu0 0.0
      %1262 = vmatmul.mubr.f32.gmra.mxu0 %v1067
      %v1263 = vpop.f32.mrf.mxu0
      %v1264 = vadd.f32 %v975, %v1263
      %v1265 = vpop.f32.mrf.mxu0
      %1266 = vmatprep.mubr.f32.mxu0 0.0
      %1267 = vmatmul.mubr.f32.gmra.mxu0 %v1069
      %v1268 = vpop.f32.mrf.mxu0
      %v1269 = vadd.f32 %v980, %v1268
      %v1270 = vpop.f32.mrf.mxu0
      %1271 = vmatprep.mubr.f32.mxu0 0.0
      %1272 = vmatmul.mubr.f32.gmra.mxu0 %v1071
      %v1273 = vpop.f32.mrf.mxu0
      %v1274 = vadd.f32 %v985, %v1273
      %v1275 = vpop.f32.mrf.mxu0
      %1276 = vmatprep.mubr.f32.mxu0 0.0
      %1277 = vmatmul.mubr.f32.gmra.mxu0 %v1073
      %v1278 = vpop.f32.mrf.mxu0
      %v1279 = vadd.f32 %v990, %v1278
      %v1280 = vpop.f32.mrf.mxu0
      %1281 = vmatprep.mubr.f32.mxu0 0.0
      %1282 = vmatmul.mubr.f32.gmra.mxu0 %v1075
      %v1283 = vpop.f32.mrf.mxu0
      %v1284 = vadd.f32 %v995, %v1283
      %v1285 = vpop.f32.mrf.mxu0
      %1286 = vmatprep.mubr.f32.mxu0 0.0
      %1287 = vmatmul.mubr.f32.gmra.mxu0 %v1077
      %v1288 = vpop.f32.mrf.mxu0
      %v1289 = vadd.f32 %v1000, %v1288
      %v1290 = vpop.f32.mrf.mxu0
      %1291 = vmatprep.mubr.f32.mxu0 0.0
      %1292 = vmatmul.mubr.f32.gmra.mxu0 %v1079
      %v1293 = vpop.f32.mrf.mxu0
      %v1294 = vadd.f32 %v1005, %v1293
      %v1295 = vpop.f32.mrf.mxu0
      %1296 = vmatprep.mubr.f32.mxu0 0.0
      %1297 = vmatmul.mubr.f32.gmra.mxu0 %v1081
      %v1298 = vpop.f32.mrf.mxu0
      %v1299 = vadd.f32 %v1010, %v1298
      %v1300 = vpop.f32.mrf.mxu0
      %1301 = vmatprep.mubr.f32.mxu0 0.0
      %1302 = vmatmul.mubr.f32.gmra.mxu0 %v1083
      %v1303 = vpop.f32.mrf.mxu0
      %v1304 = vadd.f32 %v1015, %v1303
      %v1305 = vpop.f32.mrf.mxu0
      %1306 = vmatprep.mubr.f32.mxu0 0.0
      %1307 = vmatmul.mubr.f32.gmra.mxu0 %v1085
      %v1308 = vpop.f32.mrf.mxu0
      %v1309 = vadd.f32 %v1020, %v1308
      %v1310 = vpop.f32.mrf.mxu0
      %1311 = vdwg.mxu0
      %vm1312 = vcmask 1045504
      %v1313 = vrot.slane %v554, 2
      %v1314 = vrot.slane %v555, 2
      %v1315 = vsel %vm1312, %v1313, %v1314
      %v1316 = vrot.slane %v556, 2
      %v1317 = vsel %vm1312, %v1314, %v1316
      %v1318 = vrot.slane %v557, 2
      %v1319 = vrot.slane %v558, 2
      %v1320 = vsel %vm1312, %v1318, %v1319
      %v1321 = vrot.slane %v559, 2
      %v1322 = vsel %vm1312, %v1319, %v1321
      %v1323 = vrot.slane %v560, 2
      %v1324 = vrot.slane %v561, 2
      %v1325 = vsel %vm1312, %v1323, %v1324
      %v1326 = vrot.slane %v562, 2
      %v1327 = vsel %vm1312, %v1324, %v1326
      %v1328 = vrot.slane %v563, 2
      %v1329 = vrot.slane %v564, 2
      %v1330 = vsel %vm1312, %v1328, %v1329
      %v1331 = vrot.slane %v565, 2
      %v1332 = vsel %vm1312, %v1329, %v1331
      %v1333 = vrot.slane %v566, 2
      %v1334 = vrot.slane %v567, 2
      %v1335 = vsel %vm1312, %v1333, %v1334
      %v1336 = vrot.slane %v568, 2
      %v1337 = vsel %vm1312, %v1334, %v1336
      %v1338 = vrot.slane %v569, 2
      %v1339 = vrot.slane %v570, 2
      %v1340 = vsel %vm1312, %v1338, %v1339
      %v1341 = vrot.slane %v571, 2
      %v1342 = vsel %vm1312, %v1339, %v1341
      %v1343 = vrot.slane %v572, 2
      %v1344 = vrot.slane %v573, 2
      %v1345 = vsel %vm1312, %v1343, %v1344
      %v1346 = vrot.slane %v574, 2
      %v1347 = vsel %vm1312, %v1344, %v1346
      %v1348 = vrot.slane %v575, 2
      %v1349 = vrot.slane %v576, 2
      %v1350 = vsel %vm1312, %v1348, %v1349
      %v1351 = vrot.slane %v577, 2
      %v1352 = vsel %vm1312, %v1349, %v1351
      %v1353 = vrot.slane %v578, 2
      %v1354 = vrot.slane %v579, 2
      %v1355 = vsel %vm1312, %v1353, %v1354
      %v1356 = vrot.slane %v580, 2
      %v1357 = vsel %vm1312, %v1354, %v1356
      %v1358 = vrot.slane %v581, 2
      %v1359 = vrot.slane %v582, 2
      %v1360 = vsel %vm1312, %v1358, %v1359
      %v1361 = vrot.slane %v583, 2
      %v1362 = vsel %vm1312, %v1359, %v1361
      %v1363 = vrot.slane %v584, 2
      %v1364 = vrot.slane %v585, 2
      %v1365 = vsel %vm1312, %v1363, %v1364
      %v1366 = vrot.slane %v586, 2
      %v1367 = vsel %vm1312, %v1364, %v1366
      %v1368 = vrot.slane %v587, 2
      %v1369 = vrot.slane %v588, 2
      %v1370 = vsel %vm1312, %v1368, %v1369
      %v1371 = vrot.slane %v589, 2
      %v1372 = vsel %vm1312, %v1369, %v1371
      %v1373 = vrot.slane %v590, 2
      %v1374 = vrot.slane %v591, 2
      %v1375 = vsel %vm1312, %v1373, %v1374
      %v1376 = vrot.slane %v592, 2
      %v1377 = vsel %vm1312, %v1374, %v1376
      %v1378 = vrot.slane %v593, 2
      %v1379 = vrot.slane %v594, 2
      %v1380 = vsel %vm1312, %v1378, %v1379
      %v1381 = vrot.slane %v595, 2
      %v1382 = vsel %vm1312, %v1379, %v1381
      %v1383 = vrot.slane %v596, 2
      %v1384 = vrot.slane %v597, 2
      %v1385 = vsel %vm1312, %v1383, %v1384
      %v1386 = vrot.slane %v598, 2
      %v1387 = vsel %vm1312, %v1384, %v1386
      %v1388 = vrot.slane %v599, 2
      %v1389 = vrot.slane %v600, 2
      %v1390 = vsel %vm1312, %v1388, %v1389
      %v1391 = vrot.slane %v601, 2
      %v1392 = vsel %vm1312, %v1389, %v1391
      %s1393 = scalar_lea.vmem %s3, 16
      %v1394 = vld [vmem:[%s1393] sm:$0xff]
      %v1395 = vsel %vm269, %v1315, 0
      %v1397 = vsel %vm269, %v1317, 0
      %v1399 = vsel %vm269, %v1320, 0
      %v1401 = vsel %vm269, %v1322, 0
      %v1403 = vsel %vm269, %v1325, 0
      %v1405 = vsel %vm269, %v1327, 0
      %v1407 = vsel %vm269, %v1330, 0
      %v1409 = vsel %vm269, %v1332, 0
      %v1411 = vsel %vm269, %v1335, 0
      %v1413 = vsel %vm269, %v1337, 0
      %v1415 = vsel %vm269, %v1340, 0
      %v1417 = vsel %vm269, %v1342, 0
      %v1419 = vsel %vm269, %v1345, 0
      %v1421 = vsel %vm269, %v1347, 0
      %v1423 = vsel %vm269, %v1350, 0
      %v1425 = vsel %vm269, %v1352, 0
      %v1427 = vsel %vm269, %v1355, 0
      %v1429 = vsel %vm269, %v1357, 0
      %v1431 = vsel %vm269, %v1360, 0
      %v1433 = vsel %vm269, %v1362, 0
      %v1435 = vsel %vm269, %v1365, 0
      %v1437 = vsel %vm269, %v1367, 0
      %v1439 = vsel %vm269, %v1370, 0
      %v1441 = vsel %vm269, %v1372, 0
      %v1443 = vsel %vm269, %v1375, 0
      %v1445 = vsel %vm269, %v1377, 0
      %v1447 = vsel %vm269, %v1380, 0
      %v1449 = vsel %vm269, %v1382, 0
      %v1451 = vsel %vm269, %v1385, 0
      %v1453 = vsel %vm269, %v1387, 0
      %v1455 = vsel %vm269, %v1390, 0
      %v1457 = vsel %vm269, %v1392, 0
      %1459 = vmatprep.subr.mxu0 0.0
      %1460 = vmatpush1.msra.mxu0 0.0
      %1461 = vmatprep.subr.mxu0 0.0
      %1462 = vmatpush1.msra.mxu0 0.0
      %1463 = vmatprep.subr.mxu0 0.0
      %1464 = vmatpush1.msra.mxu0 0.0
      %1465 = vmatprep.subr.mxu0 0.0
      %1466 = vmatpush1.msra.mxu0 0.0
      %1467 = vmatprep.subr.mxu0 0.0
      %1468 = vmatpush1.msra.mxu0 0.0
      %1469 = vmatprep.subr.mxu0 0.0
      %1470 = vmatpush1.msra.mxu0 0.0
      %1471 = vmatprep.subr.mxu0 0.0
      %1472 = vmatpush1.msra.mxu0 0.0
      %1473 = vmatprep.subr.mxu0 0.0
      %1474 = vmatpush1.msra.mxu0 0.0
      %1475 = vmatprep.subr.mxu0 0.0
      %1476 = vmatpush1.msra.mxu0 0.0
      %1477 = vmatprep.subr.mxu0 0.0
      %1478 = vmatpush1.msra.mxu0 0.0
      %1479 = vmatprep.subr.mxu0 0.0
      %1480 = vmatpush1.msra.mxu0 0.0
      %1481 = vmatprep.subr.mxu0 0.0
      %1482 = vmatpush1.msra.mxu0 0.0
      %1483 = vmatprep.subr.mxu0 0.0
      %1484 = vmatpush1.msra.mxu0 0.0
      %1485 = vmatprep.subr.mxu0 0.0
      %1486 = vmatpush1.msra.mxu0 0.0
      %1487 = vmatprep.subr.mxu0 0.0
      %1488 = vmatpush1.msra.mxu0 0.0
      %1489 = vmatprep.subr.mxu0 0.0
      %1490 = vmatpush1.msra.mxu0 %v1394
      %1491 = vmatprep.subr.mxu0 0.0
      %1492 = vmatpush2.msra.mxu0 0.0
      %1493 = vmatprep.subr.mxu0 0.0
      %1494 = vmatpush2.msra.mxu0 0.0
      %1495 = vmatprep.subr.mxu0 0.0
      %1496 = vmatpush2.msra.mxu0 0.0
      %1497 = vmatprep.subr.mxu0 0.0
      %1498 = vmatpush2.msra.mxu0 0.0
      %1499 = vmatprep.subr.mxu0 0.0
      %1500 = vmatpush2.msra.mxu0 0.0
      %1501 = vmatprep.subr.mxu0 0.0
      %1502 = vmatpush2.msra.mxu0 0.0
      %1503 = vmatprep.subr.mxu0 0.0
      %1504 = vmatpush2.msra.mxu0 0.0
      %1505 = vmatprep.subr.mxu0 0.0
      %1506 = vmatpush2.msra.mxu0 0.0
      %1507 = vmatprep.subr.mxu0 0.0
      %1508 = vmatpush2.msra.mxu0 0.0
      %1509 = vmatprep.subr.mxu0 0.0
      %1510 = vmatpush2.msra.mxu0 0.0
      %1511 = vmatprep.subr.mxu0 0.0
      %1512 = vmatpush2.msra.mxu0 0.0
      %1513 = vmatprep.subr.mxu0 0.0
      %1514 = vmatpush2.msra.mxu0 0.0
      %1515 = vmatprep.subr.mxu0 0.0
      %1516 = vmatpush2.msra.mxu0 0.0
      %1517 = vmatprep.subr.mxu0 0.0
      %1518 = vmatpush2.msra.mxu0 0.0
      %1519 = vmatprep.subr.mxu0 0.0
      %1520 = vmatpush2.msra.mxu0 0.0
      %1521 = vmatprep.subr.mxu0 0.0
      %1522 = vmatpush2.msra.mxu0 0.0
      %1523 = vmatprep.mubr.f32.mxu0 0.0
      %1524 = vmatmul.mubr.f32.gmra.mxu0 %v1395
      %v1525 = vpop.f32.mrf.mxu0
      %v1526 = vadd.f32 0.0, %v1525
      %v1527 = vpop.f32.mrf.mxu0
      %1528 = vmatprep.mubr.f32.mxu0 0.0
      %1529 = vmatmul.mubr.f32.gmra.mxu0 %v1397
      %v1530 = vpop.f32.mrf.mxu0
      %v1531 = vadd.f32 0.0, %v1530
      %v1532 = vpop.f32.mrf.mxu0
      %1533 = vmatprep.mubr.f32.mxu0 0.0
      %1534 = vmatmul.mubr.f32.gmra.mxu0 %v1399
      %v1535 = vpop.f32.mrf.mxu0
      %v1536 = vadd.f32 0.0, %v1535
      %v1537 = vpop.f32.mrf.mxu0
      %1538 = vmatprep.mubr.f32.mxu0 0.0
      %1539 = vmatmul.mubr.f32.gmra.mxu0 %v1401
      %v1540 = vpop.f32.mrf.mxu0
      %v1541 = vadd.f32 0.0, %v1540
      %v1542 = vpop.f32.mrf.mxu0
      %1543 = vmatprep.mubr.f32.mxu0 0.0
      %1544 = vmatmul.mubr.f32.gmra.mxu0 %v1403
      %v1545 = vpop.f32.mrf.mxu0
      %v1546 = vadd.f32 0.0, %v1545
      %v1547 = vpop.f32.mrf.mxu0
      %1548 = vmatprep.mubr.f32.mxu0 0.0
      %1549 = vmatmul.mubr.f32.gmra.mxu0 %v1405
      %v1550 = vpop.f32.mrf.mxu0
      %v1551 = vadd.f32 0.0, %v1550
      %v1552 = vpop.f32.mrf.mxu0
      %1553 = vmatprep.mubr.f32.mxu0 0.0
      %1554 = vmatmul.mubr.f32.gmra.mxu0 %v1407
      %v1555 = vpop.f32.mrf.mxu0
      %v1556 = vadd.f32 0.0, %v1555
      %v1557 = vpop.f32.mrf.mxu0
      %1558 = vmatprep.mubr.f32.mxu0 0.0
      %1559 = vmatmul.mubr.f32.gmra.mxu0 %v1409
      %v1560 = vpop.f32.mrf.mxu0
      %v1561 = vadd.f32 0.0, %v1560
      %v1562 = vpop.f32.mrf.mxu0
      %1563 = vmatprep.mubr.f32.mxu0 0.0
      %1564 = vmatmul.mubr.f32.gmra.mxu0 %v1411
      %v1565 = vpop.f32.mrf.mxu0
      %v1566 = vadd.f32 0.0, %v1565
      %v1567 = vpop.f32.mrf.mxu0
      %1568 = vmatprep.mubr.f32.mxu0 0.0
      %1569 = vmatmul.mubr.f32.gmra.mxu0 %v1413
      %v1570 = vpop.f32.mrf.mxu0
      %v1571 = vadd.f32 0.0, %v1570
      %v1572 = vpop.f32.mrf.mxu0
      %1573 = vmatprep.mubr.f32.mxu0 0.0
      %1574 = vmatmul.mubr.f32.gmra.mxu0 %v1415
      %v1575 = vpop.f32.mrf.mxu0
      %v1576 = vadd.f32 0.0, %v1575
      %v1577 = vpop.f32.mrf.mxu0
      %1578 = vmatprep.mubr.f32.mxu0 0.0
      %1579 = vmatmul.mubr.f32.gmra.mxu0 %v1417
      %v1580 = vpop.f32.mrf.mxu0
      %v1581 = vadd.f32 0.0, %v1580
      %v1582 = vpop.f32.mrf.mxu0
      %1583 = vmatprep.mubr.f32.mxu0 0.0
      %1584 = vmatmul.mubr.f32.gmra.mxu0 %v1419
      %v1585 = vpop.f32.mrf.mxu0
      %v1586 = vadd.f32 0.0, %v1585
      %v1587 = vpop.f32.mrf.mxu0
      %1588 = vmatprep.mubr.f32.mxu0 0.0
      %1589 = vmatmul.mubr.f32.gmra.mxu0 %v1421
      %v1590 = vpop.f32.mrf.mxu0
      %v1591 = vadd.f32 0.0, %v1590
      %v1592 = vpop.f32.mrf.mxu0
      %1593 = vmatprep.mubr.f32.mxu0 0.0
      %1594 = vmatmul.mubr.f32.gmra.mxu0 %v1423
      %v1595 = vpop.f32.mrf.mxu0
      %v1596 = vadd.f32 0.0, %v1595
      %v1597 = vpop.f32.mrf.mxu0
      %1598 = vmatprep.mubr.f32.mxu0 0.0
      %1599 = vmatmul.mubr.f32.gmra.mxu0 %v1425
      %v1600 = vpop.f32.mrf.mxu0
      %v1601 = vadd.f32 0.0, %v1600
      %v1602 = vpop.f32.mrf.mxu0
      %1603 = vmatprep.mubr.f32.mxu0 0.0
      %1604 = vmatmul.mubr.f32.gmra.mxu0 %v1427
      %v1605 = vpop.f32.mrf.mxu0
      %v1606 = vadd.f32 0.0, %v1605
      %v1607 = vpop.f32.mrf.mxu0
      %1608 = vmatprep.mubr.f32.mxu0 0.0
      %1609 = vmatmul.mubr.f32.gmra.mxu0 %v1429
      %v1610 = vpop.f32.mrf.mxu0
      %v1611 = vadd.f32 0.0, %v1610
      %v1612 = vpop.f32.mrf.mxu0
      %1613 = vmatprep.mubr.f32.mxu0 0.0
      %1614 = vmatmul.mubr.f32.gmra.mxu0 %v1431
      %v1615 = vpop.f32.mrf.mxu0
      %v1616 = vadd.f32 0.0, %v1615
      %v1617 = vpop.f32.mrf.mxu0
      %1618 = vmatprep.mubr.f32.mxu0 0.0
      %1619 = vmatmul.mubr.f32.gmra.mxu0 %v1433
      %v1620 = vpop.f32.mrf.mxu0
      %v1621 = vadd.f32 0.0, %v1620
      %v1622 = vpop.f32.mrf.mxu0
      %1623 = vmatprep.mubr.f32.mxu0 0.0
      %1624 = vmatmul.mubr.f32.gmra.mxu0 %v1435
      %v1625 = vpop.f32.mrf.mxu0
      %v1626 = vadd.f32 0.0, %v1625
      %v1627 = vpop.f32.mrf.mxu0
      %1628 = vmatprep.mubr.f32.mxu0 0.0
      %1629 = vmatmul.mubr.f32.gmra.mxu0 %v1437
      %v1630 = vpop.f32.mrf.mxu0
      %v1631 = vadd.f32 0.0, %v1630
      %v1632 = vpop.f32.mrf.mxu0
      %1633 = vmatprep.mubr.f32.mxu0 0.0
      %1634 = vmatmul.mubr.f32.gmra.mxu0 %v1439
      %v1635 = vpop.f32.mrf.mxu0
      %v1636 = vadd.f32 0.0, %v1635
      %v1637 = vpop.f32.mrf.mxu0
      %1638 = vmatprep.mubr.f32.mxu0 0.0
      %1639 = vmatmul.mubr.f32.gmra.mxu0 %v1441
      %v1640 = vpop.f32.mrf.mxu0
      %v1641 = vadd.f32 0.0, %v1640
      %v1642 = vpop.f32.mrf.mxu0
      %1643 = vmatprep.mubr.f32.mxu0 0.0
      %1644 = vmatmul.mubr.f32.gmra.mxu0 %v1443
      %v1645 = vpop.f32.mrf.mxu0
      %v1646 = vadd.f32 0.0, %v1645
      %v1647 = vpop.f32.mrf.mxu0
      %1648 = vmatprep.mubr.f32.mxu0 0.0
      %1649 = vmatmul.mubr.f32.gmra.mxu0 %v1445
      %v1650 = vpop.f32.mrf.mxu0
      %v1651 = vadd.f32 0.0, %v1650
      %v1652 = vpop.f32.mrf.mxu0
      %1653 = vmatprep.mubr.f32.mxu0 0.0
      %1654 = vmatmul.mubr.f32.gmra.mxu0 %v1447
      %v1655 = vpop.f32.mrf.mxu0
      %v1656 = vadd.f32 0.0, %v1655
      %v1657 = vpop.f32.mrf.mxu0
      %1658 = vmatprep.mubr.f32.mxu0 0.0
      %1659 = vmatmul.mubr.f32.gmra.mxu0 %v1449
      %v1660 = vpop.f32.mrf.mxu0
      %v1661 = vadd.f32 0.0, %v1660
      %v1662 = vpop.f32.mrf.mxu0
      %1663 = vmatprep.mubr.f32.mxu0 0.0
      %1664 = vmatmul.mubr.f32.gmra.mxu0 %v1451
      %v1665 = vpop.f32.mrf.mxu0
      %v1666 = vadd.f32 0.0, %v1665
      %v1667 = vpop.f32.mrf.mxu0
      %1668 = vmatprep.mubr.f32.mxu0 0.0
      %1669 = vmatmul.mubr.f32.gmra.mxu0 %v1453
      %v1670 = vpop.f32.mrf.mxu0
      %v1671 = vadd.f32 0.0, %v1670
      %v1672 = vpop.f32.mrf.mxu0
      %1673 = vmatprep.mubr.f32.mxu0 0.0
      %1674 = vmatmul.mubr.f32.gmra.mxu0 %v1455
      %v1675 = vpop.f32.mrf.mxu0
      %v1676 = vadd.f32 0.0, %v1675
      %v1677 = vpop.f32.mrf.mxu0
      %1678 = vmatprep.mubr.f32.mxu0 0.0
      %1679 = vmatmul.mubr.f32.gmra.mxu0 %v1457
      %v1680 = vpop.f32.mrf.mxu0
      %v1681 = vadd.f32 0.0, %v1680
      %v1682 = vpop.f32.mrf.mxu0
      %1683 = vdwg.mxu0
      %v1684 = vadd.f32 %v1154, %v1526
      %v1685 = vadd.f32 %v1159, %v1531
      %v1686 = vadd.f32 %v1164, %v1536
      %v1687 = vadd.f32 %v1169, %v1541
      %v1688 = vadd.f32 %v1174, %v1546
      %v1689 = vadd.f32 %v1179, %v1551
      %v1690 = vadd.f32 %v1184, %v1556
      %v1691 = vadd.f32 %v1189, %v1561
      %v1692 = vadd.f32 %v1194, %v1566
      %v1693 = vadd.f32 %v1199, %v1571
      %v1694 = vadd.f32 %v1204, %v1576
      %v1695 = vadd.f32 %v1209, %v1581
      %v1696 = vadd.f32 %v1214, %v1586
      %v1697 = vadd.f32 %v1219, %v1591
      %v1698 = vadd.f32 %v1224, %v1596
      %v1699 = vadd.f32 %v1229, %v1601
      %v1700 = vadd.f32 %v1234, %v1606
      %v1701 = vadd.f32 %v1239, %v1611
      %v1702 = vadd.f32 %v1244, %v1616
      %v1703 = vadd.f32 %v1249, %v1621
      %v1704 = vadd.f32 %v1254, %v1626
      %v1705 = vadd.f32 %v1259, %v1631
      %v1706 = vadd.f32 %v1264, %v1636
      %v1707 = vadd.f32 %v1269, %v1641
      %v1708 = vadd.f32 %v1274, %v1646
      %v1709 = vadd.f32 %v1279, %v1651
      %v1710 = vadd.f32 %v1284, %v1656
      %v1711 = vadd.f32 %v1289, %v1661
      %v1712 = vadd.f32 %v1294, %v1666
      %v1713 = vadd.f32 %v1299, %v1671
      %v1714 = vadd.f32 %v1304, %v1676
      %v1715 = vadd.f32 %v1309, %v1681
      %v1716 = vld [vmem:[%s521] sm:$0xff]
      %v1717 = vld [vmem:[%s521 + $0x8] sm:$0xff]
      %v1718 = vld [vmem:[%s521 + $0x10] sm:$0x3]
      %v1719 = vld [vmem:[%s521 + $0x18] sm:$0xff]
      %v1720 = vld [vmem:[%s521 + $0x20] sm:$0xff]
      %v1721 = vld [vmem:[%s521 + $0x28] sm:$0x3]
      %v1722 = vld [vmem:[%s521 + $0x30] sm:$0xff]
      %v1723 = vld [vmem:[%s521 + $0x38] sm:$0xff]
      %v1724 = vld [vmem:[%s521 + $0x40] sm:$0x3]
      %v1725 = vld [vmem:[%s521 + $0x48] sm:$0xff]
      %v1726 = vld [vmem:[%s521 + $0x50] sm:$0xff]
      %v1727 = vld [vmem:[%s521 + $0x58] sm:$0x3]
      %v1728 = vld [vmem:[%s521 + $0x60] sm:$0xff]
      %v1729 = vld [vmem:[%s521 + $0x68] sm:$0xff]
      %v1730 = vld [vmem:[%s521 + $0x70] sm:$0x3]
      %v1731 = vld [vmem:[%s521 + $0x78] sm:$0xff]
      %v1732 = vld [vmem:[%s521 + $0x80] sm:$0xff]
      %v1733 = vld [vmem:[%s521 + $0x88] sm:$0x3]
      %v1734 = vld [vmem:[%s521 + $0x90] sm:$0xff]
      %v1735 = vld [vmem:[%s521 + $0x98] sm:$0xff]
      %v1736 = vld [vmem:[%s521 + $0xa0] sm:$0x3]
      %v1737 = vld [vmem:[%s521 + $0xa8] sm:$0xff]
      %v1738 = vld [vmem:[%s521 + $0xb0] sm:$0xff]
      %v1739 = vld [vmem:[%s521 + $0xb8] sm:$0x3]
      %v1740 = vld [vmem:[%s521 + $0xc0] sm:$0xff]
      %v1741 = vld [vmem:[%s521 + $0xc8] sm:$0xff]
      %v1742 = vld [vmem:[%s521 + $0xd0] sm:$0x3]
      %v1743 = vld [vmem:[%s521 + $0xd8] sm:$0xff]
      %v1744 = vld [vmem:[%s521 + $0xe0] sm:$0xff]
      %v1745 = vld [vmem:[%s521 + $0xe8] sm:$0x3]
      %v1746 = vld [vmem:[%s521 + $0xf0] sm:$0xff]
      %v1747 = vld [vmem:[%s521 + $0xf8] sm:$0xff]
      %v1748 = vld [vmem:[%s521 + $0x100] sm:$0x3]
      %v1749 = vld [vmem:[%s521 + $0x108] sm:$0xff]
      %v1750 = vld [vmem:[%s521 + $0x110] sm:$0xff]
      %v1751 = vld [vmem:[%s521 + $0x118] sm:$0x3]
      %v1752 = vld [vmem:[%s521 + $0x120] sm:$0xff]
      %v1753 = vld [vmem:[%s521 + $0x128] sm:$0xff]
      %v1754 = vld [vmem:[%s521 + $0x130] sm:$0x3]
      %v1755 = vld [vmem:[%s521 + $0x138] sm:$0xff]
      %v1756 = vld [vmem:[%s521 + $0x140] sm:$0xff]
      %v1757 = vld [vmem:[%s521 + $0x148] sm:$0x3]
      %v1758 = vld [vmem:[%s521 + $0x150] sm:$0xff]
      %v1759 = vld [vmem:[%s521 + $0x158] sm:$0xff]
      %v1760 = vld [vmem:[%s521 + $0x160] sm:$0x3]
      %v1761 = vld [vmem:[%s521 + $0x168] sm:$0xff]
      %v1762 = vld [vmem:[%s521 + $0x170] sm:$0xff]
      %v1763 = vld [vmem:[%s521 + $0x178] sm:$0x3]
      %s1764 = scalar_lea.vmem %s3, 24
      %v1765 = vld [vmem:[%s1764] sm:$0xff]
      %v1767 = vsel %vm269, %v1716, 0
      %v1770 = vsel %vm269, %v1717, 0
      %v1773 = vsel %vm269, %v1719, 0
      %v1776 = vsel %vm269, %v1720, 0
      %v1779 = vsel %vm269, %v1722, 0
      %v1782 = vsel %vm269, %v1723, 0
      %v1785 = vsel %vm269, %v1725, 0
      %v1788 = vsel %vm269, %v1726, 0
      %v1791 = vsel %vm269, %v1728, 0
      %v1794 = vsel %vm269, %v1729, 0
      %v1797 = vsel %vm269, %v1731, 0
      %v1800 = vsel %vm269, %v1732, 0
      %v1803 = vsel %vm269, %v1734, 0
      %v1806 = vsel %vm269, %v1735, 0
      %v1809 = vsel %vm269, %v1737, 0
      %v1812 = vsel %vm269, %v1738, 0
      %v1815 = vsel %vm269, %v1740, 0
      %v1818 = vsel %vm269, %v1741, 0
      %v1821 = vsel %vm269, %v1743, 0
      %v1824 = vsel %vm269, %v1744, 0
      %v1827 = vsel %vm269, %v1746, 0
      %v1830 = vsel %vm269, %v1747, 0
      %v1833 = vsel %vm269, %v1749, 0
      %v1836 = vsel %vm269, %v1750, 0
      %v1839 = vsel %vm269, %v1752, 0
      %v1842 = vsel %vm269, %v1753, 0
      %v1845 = vsel %vm269, %v1755, 0
      %v1848 = vsel %vm269, %v1756, 0
      %v1851 = vsel %vm269, %v1758, 0
      %v1854 = vsel %vm269, %v1759, 0
      %v1857 = vsel %vm269, %v1761, 0
      %v1860 = vsel %vm269, %v1762, 0
      %1862 = vmatprep.subr.mxu0 0.0
      %1863 = vmatpush1.msra.mxu0 0.0
      %1864 = vmatprep.subr.mxu0 0.0
      %1865 = vmatpush1.msra.mxu0 0.0
      %1866 = vmatprep.subr.mxu0 0.0
      %1867 = vmatpush1.msra.mxu0 0.0
      %1868 = vmatprep.subr.mxu0 0.0
      %1869 = vmatpush1.msra.mxu0 0.0
      %1870 = vmatprep.subr.mxu0 0.0
      %1871 = vmatpush1.msra.mxu0 0.0
      %1872 = vmatprep.subr.mxu0 0.0
      %1873 = vmatpush1.msra.mxu0 0.0
      %1874 = vmatprep.subr.mxu0 0.0
      %1875 = vmatpush1.msra.mxu0 0.0
      %1876 = vmatprep.subr.mxu0 0.0
      %1877 = vmatpush1.msra.mxu0 0.0
      %1878 = vmatprep.subr.mxu0 0.0
      %1879 = vmatpush1.msra.mxu0 0.0
      %1880 = vmatprep.subr.mxu0 0.0
      %1881 = vmatpush1.msra.mxu0 0.0
      %1882 = vmatprep.subr.mxu0 0.0
      %1883 = vmatpush1.msra.mxu0 0.0
      %1884 = vmatprep.subr.mxu0 0.0
      %1885 = vmatpush1.msra.mxu0 0.0
      %1886 = vmatprep.subr.mxu0 0.0
      %1887 = vmatpush1.msra.mxu0 0.0
      %1888 = vmatprep.subr.mxu0 0.0
      %1889 = vmatpush1.msra.mxu0 0.0
      %1890 = vmatprep.subr.mxu0 0.0
      %1891 = vmatpush1.msra.mxu0 0.0
      %1892 = vmatprep.subr.mxu0 0.0
      %1893 = vmatpush1.msra.mxu0 %v1765
      %1894 = vmatprep.subr.mxu0 0.0
      %1895 = vmatpush2.msra.mxu0 0.0
      %1896 = vmatprep.subr.mxu0 0.0
      %1897 = vmatpush2.msra.mxu0 0.0
      %1898 = vmatprep.subr.mxu0 0.0
      %1899 = vmatpush2.msra.mxu0 0.0
      %1900 = vmatprep.subr.mxu0 0.0
      %1901 = vmatpush2.msra.mxu0 0.0
      %1902 = vmatprep.subr.mxu0 0.0
      %1903 = vmatpush2.msra.mxu0 0.0
      %1904 = vmatprep.subr.mxu0 0.0
      %1905 = vmatpush2.msra.mxu0 0.0
      %1906 = vmatprep.subr.mxu0 0.0
      %1907 = vmatpush2.msra.mxu0 0.0
      %1908 = vmatprep.subr.mxu0 0.0
      %1909 = vmatpush2.msra.mxu0 0.0
      %1910 = vmatprep.subr.mxu0 0.0
      %1911 = vmatpush2.msra.mxu0 0.0
      %1912 = vmatprep.subr.mxu0 0.0
      %1913 = vmatpush2.msra.mxu0 0.0
      %1914 = vmatprep.subr.mxu0 0.0
      %1915 = vmatpush2.msra.mxu0 0.0
      %1916 = vmatprep.subr.mxu0 0.0
      %1917 = vmatpush2.msra.mxu0 0.0
      %1918 = vmatprep.subr.mxu0 0.0
      %1919 = vmatpush2.msra.mxu0 0.0
      %1920 = vmatprep.subr.mxu0 0.0
      %1921 = vmatpush2.msra.mxu0 0.0
      %1922 = vmatprep.subr.mxu0 0.0
      %1923 = vmatpush2.msra.mxu0 0.0
      %1924 = vmatprep.subr.mxu0 0.0
      %1925 = vmatpush2.msra.mxu0 0.0
      %1926 = vmatprep.mubr.f32.mxu0 0.0
      %1927 = vmatmul.mubr.f32.gmra.mxu0 %v1767
      %v1928 = vpop.f32.mrf.mxu0
      %v1929 = vadd.f32 0.0, %v1928
      %v1930 = vpop.f32.mrf.mxu0
      %1931 = vmatprep.mubr.f32.mxu0 0.0
      %1932 = vmatmul.mubr.f32.gmra.mxu0 %v1770
      %v1933 = vpop.f32.mrf.mxu0
      %v1934 = vadd.f32 0.0, %v1933
      %v1935 = vpop.f32.mrf.mxu0
      %1936 = vmatprep.mubr.f32.mxu0 0.0
      %1937 = vmatmul.mubr.f32.gmra.mxu0 %v1773
      %v1938 = vpop.f32.mrf.mxu0
      %v1939 = vadd.f32 0.0, %v1938
      %v1940 = vpop.f32.mrf.mxu0
      %1941 = vmatprep.mubr.f32.mxu0 0.0
      %1942 = vmatmul.mubr.f32.gmra.mxu0 %v1776
      %v1943 = vpop.f32.mrf.mxu0
      %v1944 = vadd.f32 0.0, %v1943
      %v1945 = vpop.f32.mrf.mxu0
      %1946 = vmatprep.mubr.f32.mxu0 0.0
      %1947 = vmatmul.mubr.f32.gmra.mxu0 %v1779
      %v1948 = vpop.f32.mrf.mxu0
      %v1949 = vadd.f32 0.0, %v1948
      %v1950 = vpop.f32.mrf.mxu0
      %1951 = vmatprep.mubr.f32.mxu0 0.0
      %1952 = vmatmul.mubr.f32.gmra.mxu0 %v1782
      %v1953 = vpop.f32.mrf.mxu0
      %v1954 = vadd.f32 0.0, %v1953
      %v1955 = vpop.f32.mrf.mxu0
      %1956 = vmatprep.mubr.f32.mxu0 0.0
      %1957 = vmatmul.mubr.f32.gmra.mxu0 %v1785
      %v1958 = vpop.f32.mrf.mxu0
      %v1959 = vadd.f32 0.0, %v1958
      %v1960 = vpop.f32.mrf.mxu0
      %1961 = vmatprep.mubr.f32.mxu0 0.0
      %1962 = vmatmul.mubr.f32.gmra.mxu0 %v1788
      %v1963 = vpop.f32.mrf.mxu0
      %v1964 = vadd.f32 0.0, %v1963
      %v1965 = vpop.f32.mrf.mxu0
      %1966 = vmatprep.mubr.f32.mxu0 0.0
      %1967 = vmatmul.mubr.f32.gmra.mxu0 %v1791
      %v1968 = vpop.f32.mrf.mxu0
      %v1969 = vadd.f32 0.0, %v1968
      %v1970 = vpop.f32.mrf.mxu0
      %1971 = vmatprep.mubr.f32.mxu0 0.0
      %1972 = vmatmul.mubr.f32.gmra.mxu0 %v1794
      %v1973 = vpop.f32.mrf.mxu0
      %v1974 = vadd.f32 0.0, %v1973
      %v1975 = vpop.f32.mrf.mxu0
      %1976 = vmatprep.mubr.f32.mxu0 0.0
      %1977 = vmatmul.mubr.f32.gmra.mxu0 %v1797
      %v1978 = vpop.f32.mrf.mxu0
      %v1979 = vadd.f32 0.0, %v1978
      %v1980 = vpop.f32.mrf.mxu0
      %1981 = vmatprep.mubr.f32.mxu0 0.0
      %1982 = vmatmul.mubr.f32.gmra.mxu0 %v1800
      %v1983 = vpop.f32.mrf.mxu0
      %v1984 = vadd.f32 0.0, %v1983
      %v1985 = vpop.f32.mrf.mxu0
      %1986 = vmatprep.mubr.f32.mxu0 0.0
      %1987 = vmatmul.mubr.f32.gmra.mxu0 %v1803
      %v1988 = vpop.f32.mrf.mxu0
      %v1989 = vadd.f32 0.0, %v1988
      %v1990 = vpop.f32.mrf.mxu0
      %1991 = vmatprep.mubr.f32.mxu0 0.0
      %1992 = vmatmul.mubr.f32.gmra.mxu0 %v1806
      %v1993 = vpop.f32.mrf.mxu0
      %v1994 = vadd.f32 0.0, %v1993
      %v1995 = vpop.f32.mrf.mxu0
      %1996 = vmatprep.mubr.f32.mxu0 0.0
      %1997 = vmatmul.mubr.f32.gmra.mxu0 %v1809
      %v1998 = vpop.f32.mrf.mxu0
      %v1999 = vadd.f32 0.0, %v1998
      %v2000 = vpop.f32.mrf.mxu0
      %2001 = vmatprep.mubr.f32.mxu0 0.0
      %2002 = vmatmul.mubr.f32.gmra.mxu0 %v1812
      %v2003 = vpop.f32.mrf.mxu0
      %v2004 = vadd.f32 0.0, %v2003
      %v2005 = vpop.f32.mrf.mxu0
      %2006 = vmatprep.mubr.f32.mxu0 0.0
      %2007 = vmatmul.mubr.f32.gmra.mxu0 %v1815
      %v2008 = vpop.f32.mrf.mxu0
      %v2009 = vadd.f32 0.0, %v2008
      %v2010 = vpop.f32.mrf.mxu0
      %2011 = vmatprep.mubr.f32.mxu0 0.0
      %2012 = vmatmul.mubr.f32.gmra.mxu0 %v1818
      %v2013 = vpop.f32.mrf.mxu0
      %v2014 = vadd.f32 0.0, %v2013
      %v2015 = vpop.f32.mrf.mxu0
      %2016 = vmatprep.mubr.f32.mxu0 0.0
      %2017 = vmatmul.mubr.f32.gmra.mxu0 %v1821
      %v2018 = vpop.f32.mrf.mxu0
      %v2019 = vadd.f32 0.0, %v2018
      %v2020 = vpop.f32.mrf.mxu0
      %2021 = vmatprep.mubr.f32.mxu0 0.0
      %2022 = vmatmul.mubr.f32.gmra.mxu0 %v1824
      %v2023 = vpop.f32.mrf.mxu0
      %v2024 = vadd.f32 0.0, %v2023
      %v2025 = vpop.f32.mrf.mxu0
      %2026 = vmatprep.mubr.f32.mxu0 0.0
      %2027 = vmatmul.mubr.f32.gmra.mxu0 %v1827
      %v2028 = vpop.f32.mrf.mxu0
      %v2029 = vadd.f32 0.0, %v2028
      %v2030 = vpop.f32.mrf.mxu0
      %2031 = vmatprep.mubr.f32.mxu0 0.0
      %2032 = vmatmul.mubr.f32.gmra.mxu0 %v1830
      %v2033 = vpop.f32.mrf.mxu0
      %v2034 = vadd.f32 0.0, %v2033
      %v2035 = vpop.f32.mrf.mxu0
      %2036 = vmatprep.mubr.f32.mxu0 0.0
      %2037 = vmatmul.mubr.f32.gmra.mxu0 %v1833
      %v2038 = vpop.f32.mrf.mxu0
      %v2039 = vadd.f32 0.0, %v2038
      %v2040 = vpop.f32.mrf.mxu0
      %2041 = vmatprep.mubr.f32.mxu0 0.0
      %2042 = vmatmul.mubr.f32.gmra.mxu0 %v1836
      %v2043 = vpop.f32.mrf.mxu0
      %v2044 = vadd.f32 0.0, %v2043
      %v2045 = vpop.f32.mrf.mxu0
      %2046 = vmatprep.mubr.f32.mxu0 0.0
      %2047 = vmatmul.mubr.f32.gmra.mxu0 %v1839
      %v2048 = vpop.f32.mrf.mxu0
      %v2049 = vadd.f32 0.0, %v2048
      %v2050 = vpop.f32.mrf.mxu0
      %2051 = vmatprep.mubr.f32.mxu0 0.0
      %2052 = vmatmul.mubr.f32.gmra.mxu0 %v1842
      %v2053 = vpop.f32.mrf.mxu0
      %v2054 = vadd.f32 0.0, %v2053
      %v2055 = vpop.f32.mrf.mxu0
      %2056 = vmatprep.mubr.f32.mxu0 0.0
      %2057 = vmatmul.mubr.f32.gmra.mxu0 %v1845
      %v2058 = vpop.f32.mrf.mxu0
      %v2059 = vadd.f32 0.0, %v2058
      %v2060 = vpop.f32.mrf.mxu0
      %2061 = vmatprep.mubr.f32.mxu0 0.0
      %2062 = vmatmul.mubr.f32.gmra.mxu0 %v1848
      %v2063 = vpop.f32.mrf.mxu0
      %v2064 = vadd.f32 0.0, %v2063
      %v2065 = vpop.f32.mrf.mxu0
      %2066 = vmatprep.mubr.f32.mxu0 0.0
      %2067 = vmatmul.mubr.f32.gmra.mxu0 %v1851
      %v2068 = vpop.f32.mrf.mxu0
      %v2069 = vadd.f32 0.0, %v2068
      %v2070 = vpop.f32.mrf.mxu0
      %2071 = vmatprep.mubr.f32.mxu0 0.0
      %2072 = vmatmul.mubr.f32.gmra.mxu0 %v1854
      %v2073 = vpop.f32.mrf.mxu0
      %v2074 = vadd.f32 0.0, %v2073
      %v2075 = vpop.f32.mrf.mxu0
      %2076 = vmatprep.mubr.f32.mxu0 0.0
      %2077 = vmatmul.mubr.f32.gmra.mxu0 %v1857
      %v2078 = vpop.f32.mrf.mxu0
      %v2079 = vadd.f32 0.0, %v2078
      %v2080 = vpop.f32.mrf.mxu0
      %2081 = vmatprep.mubr.f32.mxu0 0.0
      %2082 = vmatmul.mubr.f32.gmra.mxu0 %v1860
      %v2083 = vpop.f32.mrf.mxu0
      %v2084 = vadd.f32 0.0, %v2083
      %v2085 = vpop.f32.mrf.mxu0
      %2086 = vdwg.mxu0
      %v2087 = vadd.f32 %v1684, %v1929
      %v2088 = vadd.f32 %v1685, %v1934
      %v2089 = vadd.f32 %v1686, %v1939
      %v2090 = vadd.f32 %v1687, %v1944
      %v2091 = vadd.f32 %v1688, %v1949
      %v2092 = vadd.f32 %v1689, %v1954
      %v2093 = vadd.f32 %v1690, %v1959
      %v2094 = vadd.f32 %v1691, %v1964
      %v2095 = vadd.f32 %v1692, %v1969
      %v2096 = vadd.f32 %v1693, %v1974
      %v2097 = vadd.f32 %v1694, %v1979
      %v2098 = vadd.f32 %v1695, %v1984
      %v2099 = vadd.f32 %v1696, %v1989
      %v2100 = vadd.f32 %v1697, %v1994
      %v2101 = vadd.f32 %v1698, %v1999
      %v2102 = vadd.f32 %v1699, %v2004
      %v2103 = vadd.f32 %v1700, %v2009
      %v2104 = vadd.f32 %v1701, %v2014
      %v2105 = vadd.f32 %v1702, %v2019
      %v2106 = vadd.f32 %v1703, %v2024
      %v2107 = vadd.f32 %v1704, %v2029
      %v2108 = vadd.f32 %v1705, %v2034
      %v2109 = vadd.f32 %v1706, %v2039
      %v2110 = vadd.f32 %v1707, %v2044
      %v2111 = vadd.f32 %v1708, %v2049
      %v2112 = vadd.f32 %v1709, %v2054
      %v2113 = vadd.f32 %v1710, %v2059
      %v2114 = vadd.f32 %v1711, %v2064
      %v2115 = vadd.f32 %v1712, %v2069
      %v2116 = vadd.f32 %v1713, %v2074
      %v2117 = vadd.f32 %v1714, %v2079
      %v2118 = vadd.f32 %v1715, %v2084
      %v2135 = vrot.slane %v1716, 1
      %v2136 = vrot.slane %v1717, 1
      %v2137 = vsel %vm651, %v2135, %v2136
      %v2138 = vrot.slane %v1718, 1
      %v2139 = vsel %vm651, %v2136, %v2138
      %v2140 = vrot.slane %v1719, 1
      %v2141 = vrot.slane %v1720, 1
      %v2142 = vsel %vm651, %v2140, %v2141
      %v2143 = vrot.slane %v1721, 1
      %v2144 = vsel %vm651, %v2141, %v2143
      %v2145 = vrot.slane %v1722, 1
      %v2146 = vrot.slane %v1723, 1
      %v2147 = vsel %vm651, %v2145, %v2146
      %v2148 = vrot.slane %v1724, 1
      %v2149 = vsel %vm651, %v2146, %v2148
      %v2150 = vrot.slane %v1725, 1
      %v2151 = vrot.slane %v1726, 1
      %v2152 = vsel %vm651, %v2150, %v2151
      %v2153 = vrot.slane %v1727, 1
      %v2154 = vsel %vm651, %v2151, %v2153
      %v2155 = vrot.slane %v1728, 1
      %v2156 = vrot.slane %v1729, 1
      %v2157 = vsel %vm651, %v2155, %v2156
      %v2158 = vrot.slane %v1730, 1
      %v2159 = vsel %vm651, %v2156, %v2158
      %v2160 = vrot.slane %v1731, 1
      %v2161 = vrot.slane %v1732, 1
      %v2162 = vsel %vm651, %v2160, %v2161
      %v2163 = vrot.slane %v1733, 1
      %v2164 = vsel %vm651, %v2161, %v2163
      %v2165 = vrot.slane %v1734, 1
      %v2166 = vrot.slane %v1735, 1
      %v2167 = vsel %vm651, %v2165, %v2166
      %v2168 = vrot.slane %v1736, 1
      %v2169 = vsel %vm651, %v2166, %v2168
      %v2170 = vrot.slane %v1737, 1
      %v2171 = vrot.slane %v1738, 1
      %v2172 = vsel %vm651, %v2170, %v2171
      %v2173 = vrot.slane %v1739, 1
      %v2174 = vsel %vm651, %v2171, %v2173
      %v2175 = vrot.slane %v1740, 1
      %v2176 = vrot.slane %v1741, 1
      %v2177 = vsel %vm651, %v2175, %v2176
      %v2178 = vrot.slane %v1742, 1
      %v2179 = vsel %vm651, %v2176, %v2178
      %v2180 = vrot.slane %v1743, 1
      %v2181 = vrot.slane %v1744, 1
      %v2182 = vsel %vm651, %v2180, %v2181
      %v2183 = vrot.slane %v1745, 1
      %v2184 = vsel %vm651, %v2181, %v2183
      %v2185 = vrot.slane %v1746, 1
      %v2186 = vrot.slane %v1747, 1
      %v2187 = vsel %vm651, %v2185, %v2186
      %v2188 = vrot.slane %v1748, 1
      %v2189 = vsel %vm651, %v2186, %v2188
      %v2190 = vrot.slane %v1749, 1
      %v2191 = vrot.slane %v1750, 1
      %v2192 = vsel %vm651, %v2190, %v2191
      %v2193 = vrot.slane %v1751, 1
      %v2194 = vsel %vm651, %v2191, %v2193
      %v2195 = vrot.slane %v1752, 1
      %v2196 = vrot.slane %v1753, 1
      %v2197 = vsel %vm651, %v2195, %v2196
      %v2198 = vrot.slane %v1754, 1
      %v2199 = vsel %vm651, %v2196, %v2198
      %v2200 = vrot.slane %v1755, 1
      %v2201 = vrot.slane %v1756, 1
      %v2202 = vsel %vm651, %v2200, %v2201
      %v2203 = vrot.slane %v1757, 1
      %v2204 = vsel %vm651, %v2201, %v2203
      %v2205 = vrot.slane %v1758, 1
      %v2206 = vrot.slane %v1759, 1
      %v2207 = vsel %vm651, %v2205, %v2206
      %v2208 = vrot.slane %v1760, 1
      %v2209 = vsel %vm651, %v2206, %v2208
      %v2210 = vrot.slane %v1761, 1
      %v2211 = vrot.slane %v1762, 1
      %v2212 = vsel %vm651, %v2210, %v2211
      %v2213 = vrot.slane %v1763, 1
      %v2214 = vsel %vm651, %v2211, %v2213
      %s2215 = scalar_lea.vmem %s3, 32
      %v2216 = vld [vmem:[%s2215] sm:$0xff]
      %v2217 = vsel %vm269, %v2137, 0
      %v2219 = vsel %vm269, %v2139, 0
      %v2221 = vsel %vm269, %v2142, 0
      %v2223 = vsel %vm269, %v2144, 0
      %v2225 = vsel %vm269, %v2147, 0
      %v2227 = vsel %vm269, %v2149, 0
      %v2229 = vsel %vm269, %v2152, 0
      %v2231 = vsel %vm269, %v2154, 0
      %v2233 = vsel %vm269, %v2157, 0
      %v2235 = vsel %vm269, %v2159, 0
      %v2237 = vsel %vm269, %v2162, 0
      %v2239 = vsel %vm269, %v2164, 0
      %v2241 = vsel %vm269, %v2167, 0
      %v2243 = vsel %vm269, %v2169, 0
      %v2245 = vsel %vm269, %v2172, 0
      %v2247 = vsel %vm269, %v2174, 0
      %v2249 = vsel %vm269, %v2177, 0
      %v2251 = vsel %vm269, %v2179, 0
      %v2253 = vsel %vm269, %v2182, 0
      %v2255 = vsel %vm269, %v2184, 0
      %v2257 = vsel %vm269, %v2187, 0
      %v2259 = vsel %vm269, %v2189, 0
      %v2261 = vsel %vm269, %v2192, 0
      %v2263 = vsel %vm269, %v2194, 0
      %v2265 = vsel %vm269, %v2197, 0
      %v2267 = vsel %vm269, %v2199, 0
      %v2269 = vsel %vm269, %v2202, 0
      %v2271 = vsel %vm269, %v2204, 0
      %v2273 = vsel %vm269, %v2207, 0
      %v2275 = vsel %vm269, %v2209, 0
      %v2277 = vsel %vm269, %v2212, 0
      %v2279 = vsel %vm269, %v2214, 0
      %2281 = vmatprep.subr.mxu0 0.0
      %2282 = vmatpush1.msra.mxu0 0.0
      %2283 = vmatprep.subr.mxu0 0.0
      %2284 = vmatpush1.msra.mxu0 0.0
      %2285 = vmatprep.subr.mxu0 0.0
      %2286 = vmatpush1.msra.mxu0 0.0
      %2287 = vmatprep.subr.mxu0 0.0
      %2288 = vmatpush1.msra.mxu0 0.0
      %2289 = vmatprep.subr.mxu0 0.0
      %2290 = vmatpush1.msra.mxu0 0.0
      %2291 = vmatprep.subr.mxu0 0.0
      %2292 = vmatpush1.msra.mxu0 0.0
      %2293 = vmatprep.subr.mxu0 0.0
      %2294 = vmatpush1.msra.mxu0 0.0
      %2295 = vmatprep.subr.mxu0 0.0
      %2296 = vmatpush1.msra.mxu0 0.0
      %2297 = vmatprep.subr.mxu0 0.0
      %2298 = vmatpush1.msra.mxu0 0.0
      %2299 = vmatprep.subr.mxu0 0.0
      %2300 = vmatpush1.msra.mxu0 0.0
      %2301 = vmatprep.subr.mxu0 0.0
      %2302 = vmatpush1.msra.mxu0 0.0
      %2303 = vmatprep.subr.mxu0 0.0
      %2304 = vmatpush1.msra.mxu0 0.0
      %2305 = vmatprep.subr.mxu0 0.0
      %2306 = vmatpush1.msra.mxu0 0.0
      %2307 = vmatprep.subr.mxu0 0.0
      %2308 = vmatpush1.msra.mxu0 0.0
      %2309 = vmatprep.subr.mxu0 0.0
      %2310 = vmatpush1.msra.mxu0 0.0
      %2311 = vmatprep.subr.mxu0 0.0
      %2312 = vmatpush1.msra.mxu0 %v2216
      %2313 = vmatprep.subr.mxu0 0.0
      %2314 = vmatpush2.msra.mxu0 0.0
      %2315 = vmatprep.subr.mxu0 0.0
      %2316 = vmatpush2.msra.mxu0 0.0
      %2317 = vmatprep.subr.mxu0 0.0
      %2318 = vmatpush2.msra.mxu0 0.0
      %2319 = vmatprep.subr.mxu0 0.0
      %2320 = vmatpush2.msra.mxu0 0.0
      %2321 = vmatprep.subr.mxu0 0.0
      %2322 = vmatpush2.msra.mxu0 0.0
      %2323 = vmatprep.subr.mxu0 0.0
      %2324 = vmatpush2.msra.mxu0 0.0
      %2325 = vmatprep.subr.mxu0 0.0
      %2326 = vmatpush2.msra.mxu0 0.0
      %2327 = vmatprep.subr.mxu0 0.0
      %2328 = vmatpush2.msra.mxu0 0.0
      %2329 = vmatprep.subr.mxu0 0.0
      %2330 = vmatpush2.msra.mxu0 0.0
      %2331 = vmatprep.subr.mxu0 0.0
      %2332 = vmatpush2.msra.mxu0 0.0
      %2333 = vmatprep.subr.mxu0 0.0
      %2334 = vmatpush2.msra.mxu0 0.0
      %2335 = vmatprep.subr.mxu0 0.0
      %2336 = vmatpush2.msra.mxu0 0.0
      %2337 = vmatprep.subr.mxu0 0.0
      %2338 = vmatpush2.msra.mxu0 0.0
      %2339 = vmatprep.subr.mxu0 0.0
      %2340 = vmatpush2.msra.mxu0 0.0
      %2341 = vmatprep.subr.mxu0 0.0
      %2342 = vmatpush2.msra.mxu0 0.0
      %2343 = vmatprep.subr.mxu0 0.0
      %2344 = vmatpush2.msra.mxu0 0.0
      %2345 = vmatprep.mubr.f32.mxu0 0.0
      %2346 = vmatmul.mubr.f32.gmra.mxu0 %v2217
      %v2347 = vpop.f32.mrf.mxu0
      %v2348 = vadd.f32 0.0, %v2347
      %v2349 = vpop.f32.mrf.mxu0
      %2350 = vmatprep.mubr.f32.mxu0 0.0
      %2351 = vmatmul.mubr.f32.gmra.mxu0 %v2219
      %v2352 = vpop.f32.mrf.mxu0
      %v2353 = vadd.f32 0.0, %v2352
      %v2354 = vpop.f32.mrf.mxu0
      %2355 = vmatprep.mubr.f32.mxu0 0.0
      %2356 = vmatmul.mubr.f32.gmra.mxu0 %v2221
      %v2357 = vpop.f32.mrf.mxu0
      %v2358 = vadd.f32 0.0, %v2357
      %v2359 = vpop.f32.mrf.mxu0
      %2360 = vmatprep.mubr.f32.mxu0 0.0
      %2361 = vmatmul.mubr.f32.gmra.mxu0 %v2223
      %v2362 = vpop.f32.mrf.mxu0
      %v2363 = vadd.f32 0.0, %v2362
      %v2364 = vpop.f32.mrf.mxu0
      %2365 = vmatprep.mubr.f32.mxu0 0.0
      %2366 = vmatmul.mubr.f32.gmra.mxu0 %v2225
      %v2367 = vpop.f32.mrf.mxu0
      %v2368 = vadd.f32 0.0, %v2367
      %v2369 = vpop.f32.mrf.mxu0
      %2370 = vmatprep.mubr.f32.mxu0 0.0
      %2371 = vmatmul.mubr.f32.gmra.mxu0 %v2227
      %v2372 = vpop.f32.mrf.mxu0
      %v2373 = vadd.f32 0.0, %v2372
      %v2374 = vpop.f32.mrf.mxu0
      %2375 = vmatprep.mubr.f32.mxu0 0.0
      %2376 = vmatmul.mubr.f32.gmra.mxu0 %v2229
      %v2377 = vpop.f32.mrf.mxu0
      %v2378 = vadd.f32 0.0, %v2377
      %v2379 = vpop.f32.mrf.mxu0
      %2380 = vmatprep.mubr.f32.mxu0 0.0
      %2381 = vmatmul.mubr.f32.gmra.mxu0 %v2231
      %v2382 = vpop.f32.mrf.mxu0
      %v2383 = vadd.f32 0.0, %v2382
      %v2384 = vpop.f32.mrf.mxu0
      %2385 = vmatprep.mubr.f32.mxu0 0.0
      %2386 = vmatmul.mubr.f32.gmra.mxu0 %v2233
      %v2387 = vpop.f32.mrf.mxu0
      %v2388 = vadd.f32 0.0, %v2387
      %v2389 = vpop.f32.mrf.mxu0
      %2390 = vmatprep.mubr.f32.mxu0 0.0
      %2391 = vmatmul.mubr.f32.gmra.mxu0 %v2235
      %v2392 = vpop.f32.mrf.mxu0
      %v2393 = vadd.f32 0.0, %v2392
      %v2394 = vpop.f32.mrf.mxu0
      %2395 = vmatprep.mubr.f32.mxu0 0.0
      %2396 = vmatmul.mubr.f32.gmra.mxu0 %v2237
      %v2397 = vpop.f32.mrf.mxu0
      %v2398 = vadd.f32 0.0, %v2397
      %v2399 = vpop.f32.mrf.mxu0
      %2400 = vmatprep.mubr.f32.mxu0 0.0
      %2401 = vmatmul.mubr.f32.gmra.mxu0 %v2239
      %v2402 = vpop.f32.mrf.mxu0
      %v2403 = vadd.f32 0.0, %v2402
      %v2404 = vpop.f32.mrf.mxu0
      %2405 = vmatprep.mubr.f32.mxu0 0.0
      %2406 = vmatmul.mubr.f32.gmra.mxu0 %v2241
      %v2407 = vpop.f32.mrf.mxu0
      %v2408 = vadd.f32 0.0, %v2407
      %v2409 = vpop.f32.mrf.mxu0
      %2410 = vmatprep.mubr.f32.mxu0 0.0
      %2411 = vmatmul.mubr.f32.gmra.mxu0 %v2243
      %v2412 = vpop.f32.mrf.mxu0
      %v2413 = vadd.f32 0.0, %v2412
      %v2414 = vpop.f32.mrf.mxu0
      %2415 = vmatprep.mubr.f32.mxu0 0.0
      %2416 = vmatmul.mubr.f32.gmra.mxu0 %v2245
      %v2417 = vpop.f32.mrf.mxu0
      %v2418 = vadd.f32 0.0, %v2417
      %v2419 = vpop.f32.mrf.mxu0
      %2420 = vmatprep.mubr.f32.mxu0 0.0
      %2421 = vmatmul.mubr.f32.gmra.mxu0 %v2247
      %v2422 = vpop.f32.mrf.mxu0
      %v2423 = vadd.f32 0.0, %v2422
      %v2424 = vpop.f32.mrf.mxu0
      %2425 = vmatprep.mubr.f32.mxu0 0.0
      %2426 = vmatmul.mubr.f32.gmra.mxu0 %v2249
      %v2427 = vpop.f32.mrf.mxu0
      %v2428 = vadd.f32 0.0, %v2427
      %v2429 = vpop.f32.mrf.mxu0
      %2430 = vmatprep.mubr.f32.mxu0 0.0
      %2431 = vmatmul.mubr.f32.gmra.mxu0 %v2251
      %v2432 = vpop.f32.mrf.mxu0
      %v2433 = vadd.f32 0.0, %v2432
      %v2434 = vpop.f32.mrf.mxu0
      %2435 = vmatprep.mubr.f32.mxu0 0.0
      %2436 = vmatmul.mubr.f32.gmra.mxu0 %v2253
      %v2437 = vpop.f32.mrf.mxu0
      %v2438 = vadd.f32 0.0, %v2437
      %v2439 = vpop.f32.mrf.mxu0
      %2440 = vmatprep.mubr.f32.mxu0 0.0
      %2441 = vmatmul.mubr.f32.gmra.mxu0 %v2255
      %v2442 = vpop.f32.mrf.mxu0
      %v2443 = vadd.f32 0.0, %v2442
      %v2444 = vpop.f32.mrf.mxu0
      %2445 = vmatprep.mubr.f32.mxu0 0.0
      %2446 = vmatmul.mubr.f32.gmra.mxu0 %v2257
      %v2447 = vpop.f32.mrf.mxu0
      %v2448 = vadd.f32 0.0, %v2447
      %v2449 = vpop.f32.mrf.mxu0
      %2450 = vmatprep.mubr.f32.mxu0 0.0
      %2451 = vmatmul.mubr.f32.gmra.mxu0 %v2259
      %v2452 = vpop.f32.mrf.mxu0
      %v2453 = vadd.f32 0.0, %v2452
      %v2454 = vpop.f32.mrf.mxu0
      %2455 = vmatprep.mubr.f32.mxu0 0.0
      %2456 = vmatmul.mubr.f32.gmra.mxu0 %v2261
      %v2457 = vpop.f32.mrf.mxu0
      %v2458 = vadd.f32 0.0, %v2457
      %v2459 = vpop.f32.mrf.mxu0
      %2460 = vmatprep.mubr.f32.mxu0 0.0
      %2461 = vmatmul.mubr.f32.gmra.mxu0 %v2263
      %v2462 = vpop.f32.mrf.mxu0
      %v2463 = vadd.f32 0.0, %v2462
      %v2464 = vpop.f32.mrf.mxu0
      %2465 = vmatprep.mubr.f32.mxu0 0.0
      %2466 = vmatmul.mubr.f32.gmra.mxu0 %v2265
      %v2467 = vpop.f32.mrf.mxu0
      %v2468 = vadd.f32 0.0, %v2467
      %v2469 = vpop.f32.mrf.mxu0
      %2470 = vmatprep.mubr.f32.mxu0 0.0
      %2471 = vmatmul.mubr.f32.gmra.mxu0 %v2267
      %v2472 = vpop.f32.mrf.mxu0
      %v2473 = vadd.f32 0.0, %v2472
      %v2474 = vpop.f32.mrf.mxu0
      %2475 = vmatprep.mubr.f32.mxu0 0.0
      %2476 = vmatmul.mubr.f32.gmra.mxu0 %v2269
      %v2477 = vpop.f32.mrf.mxu0
      %v2478 = vadd.f32 0.0, %v2477
      %v2479 = vpop.f32.mrf.mxu0
      %2480 = vmatprep.mubr.f32.mxu0 0.0
      %2481 = vmatmul.mubr.f32.gmra.mxu0 %v2271
      %v2482 = vpop.f32.mrf.mxu0
      %v2483 = vadd.f32 0.0, %v2482
      %v2484 = vpop.f32.mrf.mxu0
      %2485 = vmatprep.mubr.f32.mxu0 0.0
      %2486 = vmatmul.mubr.f32.gmra.mxu0 %v2273
      %v2487 = vpop.f32.mrf.mxu0
      %v2488 = vadd.f32 0.0, %v2487
      %v2489 = vpop.f32.mrf.mxu0
      %2490 = vmatprep.mubr.f32.mxu0 0.0
      %2491 = vmatmul.mubr.f32.gmra.mxu0 %v2275
      %v2492 = vpop.f32.mrf.mxu0
      %v2493 = vadd.f32 0.0, %v2492
      %v2494 = vpop.f32.mrf.mxu0
      %2495 = vmatprep.mubr.f32.mxu0 0.0
      %2496 = vmatmul.mubr.f32.gmra.mxu0 %v2277
      %v2497 = vpop.f32.mrf.mxu0
      %v2498 = vadd.f32 0.0, %v2497
      %v2499 = vpop.f32.mrf.mxu0
      %2500 = vmatprep.mubr.f32.mxu0 0.0
      %2501 = vmatmul.mubr.f32.gmra.mxu0 %v2279
      %v2502 = vpop.f32.mrf.mxu0
      %v2503 = vadd.f32 0.0, %v2502
      %v2504 = vpop.f32.mrf.mxu0
      %2505 = vdwg.mxu0
      %v2506 = vadd.f32 %v2087, %v2348
      %v2507 = vadd.f32 %v2088, %v2353
      %v2508 = vadd.f32 %v2089, %v2358
      %v2509 = vadd.f32 %v2090, %v2363
      %v2510 = vadd.f32 %v2091, %v2368
      %v2511 = vadd.f32 %v2092, %v2373
      %v2512 = vadd.f32 %v2093, %v2378
      %v2513 = vadd.f32 %v2094, %v2383
      %v2514 = vadd.f32 %v2095, %v2388
      %v2515 = vadd.f32 %v2096, %v2393
      %v2516 = vadd.f32 %v2097, %v2398
      %v2517 = vadd.f32 %v2098, %v2403
      %v2518 = vadd.f32 %v2099, %v2408
      %v2519 = vadd.f32 %v2100, %v2413
      %v2520 = vadd.f32 %v2101, %v2418
      %v2521 = vadd.f32 %v2102, %v2423
      %v2522 = vadd.f32 %v2103, %v2428
      %v2523 = vadd.f32 %v2104, %v2433
      %v2524 = vadd.f32 %v2105, %v2438
      %v2525 = vadd.f32 %v2106, %v2443
      %v2526 = vadd.f32 %v2107, %v2448
      %v2527 = vadd.f32 %v2108, %v2453
      %v2528 = vadd.f32 %v2109, %v2458
      %v2529 = vadd.f32 %v2110, %v2463
      %v2530 = vadd.f32 %v2111, %v2468
      %v2531 = vadd.f32 %v2112, %v2473
      %v2532 = vadd.f32 %v2113, %v2478
      %v2533 = vadd.f32 %v2114, %v2483
      %v2534 = vadd.f32 %v2115, %v2488
      %v2535 = vadd.f32 %v2116, %v2493
      %v2536 = vadd.f32 %v2117, %v2498
      %v2537 = vadd.f32 %v2118, %v2503
      %v2538 = vrot.slane %v1716, 2
      %v2539 = vrot.slane %v1717, 2
      %v2540 = vsel %vm1312, %v2538, %v2539
      %v2541 = vrot.slane %v1718, 2
      %v2542 = vsel %vm1312, %v2539, %v2541
      %v2543 = vrot.slane %v1719, 2
      %v2544 = vrot.slane %v1720, 2
      %v2545 = vsel %vm1312, %v2543, %v2544
      %v2546 = vrot.slane %v1721, 2
      %v2547 = vsel %vm1312, %v2544, %v2546
      %v2548 = vrot.slane %v1722, 2
      %v2549 = vrot.slane %v1723, 2
      %v2550 = vsel %vm1312, %v2548, %v2549
      %v2551 = vrot.slane %v1724, 2
      %v2552 = vsel %vm1312, %v2549, %v2551
      %v2553 = vrot.slane %v1725, 2
      %v2554 = vrot.slane %v1726, 2
      %v2555 = vsel %vm1312, %v2553, %v2554
      %v2556 = vrot.slane %v1727, 2
      %v2557 = vsel %vm1312, %v2554, %v2556
      %v2558 = vrot.slane %v1728, 2
      %v2559 = vrot.slane %v1729, 2
      %v2560 = vsel %vm1312, %v2558, %v2559
      %v2561 = vrot.slane %v1730, 2
      %v2562 = vsel %vm1312, %v2559, %v2561
      %v2563 = vrot.slane %v1731, 2
      %v2564 = vrot.slane %v1732, 2
      %v2565 = vsel %vm1312, %v2563, %v2564
      %v2566 = vrot.slane %v1733, 2
      %v2567 = vsel %vm1312, %v2564, %v2566
      %v2568 = vrot.slane %v1734, 2
      %v2569 = vrot.slane %v1735, 2
      %v2570 = vsel %vm1312, %v2568, %v2569
      %v2571 = vrot.slane %v1736, 2
      %v2572 = vsel %vm1312, %v2569, %v2571
      %v2573 = vrot.slane %v1737, 2
      %v2574 = vrot.slane %v1738, 2
      %v2575 = vsel %vm1312, %v2573, %v2574
      %v2576 = vrot.slane %v1739, 2
      %v2577 = vsel %vm1312, %v2574, %v2576
      %v2578 = vrot.slane %v1740, 2
      %v2579 = vrot.slane %v1741, 2
      %v2580 = vsel %vm1312, %v2578, %v2579
      %v2581 = vrot.slane %v1742, 2
      %v2582 = vsel %vm1312, %v2579, %v2581
      %v2583 = vrot.slane %v1743, 2
      %v2584 = vrot.slane %v1744, 2
      %v2585 = vsel %vm1312, %v2583, %v2584
      %v2586 = vrot.slane %v1745, 2
      %v2587 = vsel %vm1312, %v2584, %v2586
      %v2588 = vrot.slane %v1746, 2
      %v2589 = vrot.slane %v1747, 2
      %v2590 = vsel %vm1312, %v2588, %v2589
      %v2591 = vrot.slane %v1748, 2
      %v2592 = vsel %vm1312, %v2589, %v2591
      %v2593 = vrot.slane %v1749, 2
      %v2594 = vrot.slane %v1750, 2
      %v2595 = vsel %vm1312, %v2593, %v2594
      %v2596 = vrot.slane %v1751, 2
      %v2597 = vsel %vm1312, %v2594, %v2596
      %v2598 = vrot.slane %v1752, 2
      %v2599 = vrot.slane %v1753, 2
      %v2600 = vsel %vm1312, %v2598, %v2599
      %v2601 = vrot.slane %v1754, 2
      %v2602 = vsel %vm1312, %v2599, %v2601
      %v2603 = vrot.slane %v1755, 2
      %v2604 = vrot.slane %v1756, 2
      %v2605 = vsel %vm1312, %v2603, %v2604
      %v2606 = vrot.slane %v1757, 2
      %v2607 = vsel %vm1312, %v2604, %v2606
      %v2608 = vrot.slane %v1758, 2
      %v2609 = vrot.slane %v1759, 2
      %v2610 = vsel %vm1312, %v2608, %v2609
      %v2611 = vrot.slane %v1760, 2
      %v2612 = vsel %vm1312, %v2609, %v2611
      %v2613 = vrot.slane %v1761, 2
      %v2614 = vrot.slane %v1762, 2
      %v2615 = vsel %vm1312, %v2613, %v2614
      %v2616 = vrot.slane %v1763, 2
      %v2617 = vsel %vm1312, %v2614, %v2616
      %s2618 = scalar_lea.vmem %s3, 40
      %v2619 = vld [vmem:[%s2618] sm:$0xff]
      %v2620 = vsel %vm269, %v2540, 0
      %v2622 = vsel %vm269, %v2542, 0
      %v2624 = vsel %vm269, %v2545, 0
      %v2626 = vsel %vm269, %v2547, 0
      %v2628 = vsel %vm269, %v2550, 0
      %v2630 = vsel %vm269, %v2552, 0
      %v2632 = vsel %vm269, %v2555, 0
      %v2634 = vsel %vm269, %v2557, 0
      %v2636 = vsel %vm269, %v2560, 0
      %v2638 = vsel %vm269, %v2562, 0
      %v2640 = vsel %vm269, %v2565, 0
      %v2642 = vsel %vm269, %v2567, 0
      %v2644 = vsel %vm269, %v2570, 0
      %v2646 = vsel %vm269, %v2572, 0
      %v2648 = vsel %vm269, %v2575, 0
      %v2650 = vsel %vm269, %v2577, 0
      %v2652 = vsel %vm269, %v2580, 0
      %v2654 = vsel %vm269, %v2582, 0
      %v2656 = vsel %vm269, %v2585, 0
      %v2658 = vsel %vm269, %v2587, 0
      %v2660 = vsel %vm269, %v2590, 0
      %v2662 = vsel %vm269, %v2592, 0
      %v2664 = vsel %vm269, %v2595, 0
      %v2666 = vsel %vm269, %v2597, 0
      %v2668 = vsel %vm269, %v2600, 0
      %v2670 = vsel %vm269, %v2602, 0
      %v2672 = vsel %vm269, %v2605, 0
      %v2674 = vsel %vm269, %v2607, 0
      %v2676 = vsel %vm269, %v2610, 0
      %v2678 = vsel %vm269, %v2612, 0
      %v2680 = vsel %vm269, %v2615, 0
      %v2682 = vsel %vm269, %v2617, 0
      %2684 = vmatprep.subr.mxu0 0.0
      %2685 = vmatpush1.msra.mxu0 0.0
      %2686 = vmatprep.subr.mxu0 0.0
      %2687 = vmatpush1.msra.mxu0 0.0
      %2688 = vmatprep.subr.mxu0 0.0
      %2689 = vmatpush1.msra.mxu0 0.0
      %2690 = vmatprep.subr.mxu0 0.0
      %2691 = vmatpush1.msra.mxu0 0.0
      %2692 = vmatprep.subr.mxu0 0.0
      %2693 = vmatpush1.msra.mxu0 0.0
      %2694 = vmatprep.subr.mxu0 0.0
      %2695 = vmatpush1.msra.mxu0 0.0
      %2696 = vmatprep.subr.mxu0 0.0
      %2697 = vmatpush1.msra.mxu0 0.0
      %2698 = vmatprep.subr.mxu0 0.0
      %2699 = vmatpush1.msra.mxu0 0.0
      %2700 = vmatprep.subr.mxu0 0.0
      %2701 = vmatpush1.msra.mxu0 0.0
      %2702 = vmatprep.subr.mxu0 0.0
      %2703 = vmatpush1.msra.mxu0 0.0
      %2704 = vmatprep.subr.mxu0 0.0
      %2705 = vmatpush1.msra.mxu0 0.0
      %2706 = vmatprep.subr.mxu0 0.0
      %2707 = vmatpush1.msra.mxu0 0.0
      %2708 = vmatprep.subr.mxu0 0.0
      %2709 = vmatpush1.msra.mxu0 0.0
      %2710 = vmatprep.subr.mxu0 0.0
      %2711 = vmatpush1.msra.mxu0 0.0
      %2712 = vmatprep.subr.mxu0 0.0
      %2713 = vmatpush1.msra.mxu0 0.0
      %2714 = vmatprep.subr.mxu0 0.0
      %2715 = vmatpush1.msra.mxu0 %v2619
      %2716 = vmatprep.subr.mxu0 0.0
      %2717 = vmatpush2.msra.mxu0 0.0
      %2718 = vmatprep.subr.mxu0 0.0
      %2719 = vmatpush2.msra.mxu0 0.0
      %2720 = vmatprep.subr.mxu0 0.0
      %2721 = vmatpush2.msra.mxu0 0.0
      %2722 = vmatprep.subr.mxu0 0.0
      %2723 = vmatpush2.msra.mxu0 0.0
      %2724 = vmatprep.subr.mxu0 0.0
      %2725 = vmatpush2.msra.mxu0 0.0
      %2726 = vmatprep.subr.mxu0 0.0
      %2727 = vmatpush2.msra.mxu0 0.0
      %2728 = vmatprep.subr.mxu0 0.0
      %2729 = vmatpush2.msra.mxu0 0.0
      %2730 = vmatprep.subr.mxu0 0.0
      %2731 = vmatpush2.msra.mxu0 0.0
      %2732 = vmatprep.subr.mxu0 0.0
      %2733 = vmatpush2.msra.mxu0 0.0
      %2734 = vmatprep.subr.mxu0 0.0
      %2735 = vmatpush2.msra.mxu0 0.0
      %2736 = vmatprep.subr.mxu0 0.0
      %2737 = vmatpush2.msra.mxu0 0.0
      %2738 = vmatprep.subr.mxu0 0.0
      %2739 = vmatpush2.msra.mxu0 0.0
      %2740 = vmatprep.subr.mxu0 0.0
      %2741 = vmatpush2.msra.mxu0 0.0
      %2742 = vmatprep.subr.mxu0 0.0
      %2743 = vmatpush2.msra.mxu0 0.0
      %2744 = vmatprep.subr.mxu0 0.0
      %2745 = vmatpush2.msra.mxu0 0.0
      %2746 = vmatprep.subr.mxu0 0.0
      %2747 = vmatpush2.msra.mxu0 0.0
      %2748 = vmatprep.mubr.f32.mxu0 0.0
      %2749 = vmatmul.mubr.f32.gmra.mxu0 %v2620
      %v2750 = vpop.f32.mrf.mxu0
      %v2751 = vadd.f32 0.0, %v2750
      %v2752 = vpop.f32.mrf.mxu0
      %2753 = vmatprep.mubr.f32.mxu0 0.0
      %2754 = vmatmul.mubr.f32.gmra.mxu0 %v2622
      %v2755 = vpop.f32.mrf.mxu0
      %v2756 = vadd.f32 0.0, %v2755
      %v2757 = vpop.f32.mrf.mxu0
      %2758 = vmatprep.mubr.f32.mxu0 0.0
      %2759 = vmatmul.mubr.f32.gmra.mxu0 %v2624
      %v2760 = vpop.f32.mrf.mxu0
      %v2761 = vadd.f32 0.0, %v2760
      %v2762 = vpop.f32.mrf.mxu0
      %2763 = vmatprep.mubr.f32.mxu0 0.0
      %2764 = vmatmul.mubr.f32.gmra.mxu0 %v2626
      %v2765 = vpop.f32.mrf.mxu0
      %v2766 = vadd.f32 0.0, %v2765
      %v2767 = vpop.f32.mrf.mxu0
      %2768 = vmatprep.mubr.f32.mxu0 0.0
      %2769 = vmatmul.mubr.f32.gmra.mxu0 %v2628
      %v2770 = vpop.f32.mrf.mxu0
      %v2771 = vadd.f32 0.0, %v2770
      %v2772 = vpop.f32.mrf.mxu0
      %2773 = vmatprep.mubr.f32.mxu0 0.0
      %2774 = vmatmul.mubr.f32.gmra.mxu0 %v2630
      %v2775 = vpop.f32.mrf.mxu0
      %v2776 = vadd.f32 0.0, %v2775
      %v2777 = vpop.f32.mrf.mxu0
      %2778 = vmatprep.mubr.f32.mxu0 0.0
      %2779 = vmatmul.mubr.f32.gmra.mxu0 %v2632
      %v2780 = vpop.f32.mrf.mxu0
      %v2781 = vadd.f32 0.0, %v2780
      %v2782 = vpop.f32.mrf.mxu0
      %2783 = vmatprep.mubr.f32.mxu0 0.0
      %2784 = vmatmul.mubr.f32.gmra.mxu0 %v2634
      %v2785 = vpop.f32.mrf.mxu0
      %v2786 = vadd.f32 0.0, %v2785
      %v2787 = vpop.f32.mrf.mxu0
      %2788 = vmatprep.mubr.f32.mxu0 0.0
      %2789 = vmatmul.mubr.f32.gmra.mxu0 %v2636
      %v2790 = vpop.f32.mrf.mxu0
      %v2791 = vadd.f32 0.0, %v2790
      %v2792 = vpop.f32.mrf.mxu0
      %2793 = vmatprep.mubr.f32.mxu0 0.0
      %2794 = vmatmul.mubr.f32.gmra.mxu0 %v2638
      %v2795 = vpop.f32.mrf.mxu0
      %v2796 = vadd.f32 0.0, %v2795
      %v2797 = vpop.f32.mrf.mxu0
      %2798 = vmatprep.mubr.f32.mxu0 0.0
      %2799 = vmatmul.mubr.f32.gmra.mxu0 %v2640
      %v2800 = vpop.f32.mrf.mxu0
      %v2801 = vadd.f32 0.0, %v2800
      %v2802 = vpop.f32.mrf.mxu0
      %2803 = vmatprep.mubr.f32.mxu0 0.0
      %2804 = vmatmul.mubr.f32.gmra.mxu0 %v2642
      %v2805 = vpop.f32.mrf.mxu0
      %v2806 = vadd.f32 0.0, %v2805
      %v2807 = vpop.f32.mrf.mxu0
      %2808 = vmatprep.mubr.f32.mxu0 0.0
      %2809 = vmatmul.mubr.f32.gmra.mxu0 %v2644
      %v2810 = vpop.f32.mrf.mxu0
      %v2811 = vadd.f32 0.0, %v2810
      %v2812 = vpop.f32.mrf.mxu0
      %2813 = vmatprep.mubr.f32.mxu0 0.0
      %2814 = vmatmul.mubr.f32.gmra.mxu0 %v2646
      %v2815 = vpop.f32.mrf.mxu0
      %v2816 = vadd.f32 0.0, %v2815
      %v2817 = vpop.f32.mrf.mxu0
      %2818 = vmatprep.mubr.f32.mxu0 0.0
      %2819 = vmatmul.mubr.f32.gmra.mxu0 %v2648
      %v2820 = vpop.f32.mrf.mxu0
      %v2821 = vadd.f32 0.0, %v2820
      %v2822 = vpop.f32.mrf.mxu0
      %2823 = vmatprep.mubr.f32.mxu0 0.0
      %2824 = vmatmul.mubr.f32.gmra.mxu0 %v2650
      %v2825 = vpop.f32.mrf.mxu0
      %v2826 = vadd.f32 0.0, %v2825
      %v2827 = vpop.f32.mrf.mxu0
      %2828 = vmatprep.mubr.f32.mxu0 0.0
      %2829 = vmatmul.mubr.f32.gmra.mxu0 %v2652
      %v2830 = vpop.f32.mrf.mxu0
      %v2831 = vadd.f32 0.0, %v2830
      %v2832 = vpop.f32.mrf.mxu0
      %2833 = vmatprep.mubr.f32.mxu0 0.0
      %2834 = vmatmul.mubr.f32.gmra.mxu0 %v2654
      %v2835 = vpop.f32.mrf.mxu0
      %v2836 = vadd.f32 0.0, %v2835
      %v2837 = vpop.f32.mrf.mxu0
      %2838 = vmatprep.mubr.f32.mxu0 0.0
      %2839 = vmatmul.mubr.f32.gmra.mxu0 %v2656
      %v2840 = vpop.f32.mrf.mxu0
      %v2841 = vadd.f32 0.0, %v2840
      %v2842 = vpop.f32.mrf.mxu0
      %2843 = vmatprep.mubr.f32.mxu0 0.0
      %2844 = vmatmul.mubr.f32.gmra.mxu0 %v2658
      %v2845 = vpop.f32.mrf.mxu0
      %v2846 = vadd.f32 0.0, %v2845
      %v2847 = vpop.f32.mrf.mxu0
      %2848 = vmatprep.mubr.f32.mxu0 0.0
      %2849 = vmatmul.mubr.f32.gmra.mxu0 %v2660
      %v2850 = vpop.f32.mrf.mxu0
      %v2851 = vadd.f32 0.0, %v2850
      %v2852 = vpop.f32.mrf.mxu0
      %2853 = vmatprep.mubr.f32.mxu0 0.0
      %2854 = vmatmul.mubr.f32.gmra.mxu0 %v2662
      %v2855 = vpop.f32.mrf.mxu0
      %v2856 = vadd.f32 0.0, %v2855
      %v2857 = vpop.f32.mrf.mxu0
      %2858 = vmatprep.mubr.f32.mxu0 0.0
      %2859 = vmatmul.mubr.f32.gmra.mxu0 %v2664
      %v2860 = vpop.f32.mrf.mxu0
      %v2861 = vadd.f32 0.0, %v2860
      %v2862 = vpop.f32.mrf.mxu0
      %2863 = vmatprep.mubr.f32.mxu0 0.0
      %2864 = vmatmul.mubr.f32.gmra.mxu0 %v2666
      %v2865 = vpop.f32.mrf.mxu0
      %v2866 = vadd.f32 0.0, %v2865
      %v2867 = vpop.f32.mrf.mxu0
      %2868 = vmatprep.mubr.f32.mxu0 0.0
      %2869 = vmatmul.mubr.f32.gmra.mxu0 %v2668
      %v2870 = vpop.f32.mrf.mxu0
      %v2871 = vadd.f32 0.0, %v2870
      %v2872 = vpop.f32.mrf.mxu0
      %2873 = vmatprep.mubr.f32.mxu0 0.0
      %2874 = vmatmul.mubr.f32.gmra.mxu0 %v2670
      %v2875 = vpop.f32.mrf.mxu0
      %v2876 = vadd.f32 0.0, %v2875
      %v2877 = vpop.f32.mrf.mxu0
      %2878 = vmatprep.mubr.f32.mxu0 0.0
      %2879 = vmatmul.mubr.f32.gmra.mxu0 %v2672
      %v2880 = vpop.f32.mrf.mxu0
      %v2881 = vadd.f32 0.0, %v2880
      %v2882 = vpop.f32.mrf.mxu0
      %2883 = vmatprep.mubr.f32.mxu0 0.0
      %2884 = vmatmul.mubr.f32.gmra.mxu0 %v2674
      %v2885 = vpop.f32.mrf.mxu0
      %v2886 = vadd.f32 0.0, %v2885
      %v2887 = vpop.f32.mrf.mxu0
      %2888 = vmatprep.mubr.f32.mxu0 0.0
      %2889 = vmatmul.mubr.f32.gmra.mxu0 %v2676
      %v2890 = vpop.f32.mrf.mxu0
      %v2891 = vadd.f32 0.0, %v2890
      %v2892 = vpop.f32.mrf.mxu0
      %2893 = vmatprep.mubr.f32.mxu0 0.0
      %2894 = vmatmul.mubr.f32.gmra.mxu0 %v2678
      %v2895 = vpop.f32.mrf.mxu0
      %v2896 = vadd.f32 0.0, %v2895
      %v2897 = vpop.f32.mrf.mxu0
      %2898 = vmatprep.mubr.f32.mxu0 0.0
      %2899 = vmatmul.mubr.f32.gmra.mxu0 %v2680
      %v2900 = vpop.f32.mrf.mxu0
      %v2901 = vadd.f32 0.0, %v2900
      %v2902 = vpop.f32.mrf.mxu0
      %2903 = vmatprep.mubr.f32.mxu0 0.0
      %2904 = vmatmul.mubr.f32.gmra.mxu0 %v2682
      %v2905 = vpop.f32.mrf.mxu0
      %v2906 = vadd.f32 0.0, %v2905
      %v2907 = vpop.f32.mrf.mxu0
      %2908 = vdwg.mxu0
      %v2909 = vadd.f32 %v2506, %v2751
      %v2910 = vadd.f32 %v2507, %v2756
      %v2911 = vadd.f32 %v2508, %v2761
      %v2912 = vadd.f32 %v2509, %v2766
      %v2913 = vadd.f32 %v2510, %v2771
      %v2914 = vadd.f32 %v2511, %v2776
      %v2915 = vadd.f32 %v2512, %v2781
      %v2916 = vadd.f32 %v2513, %v2786
      %v2917 = vadd.f32 %v2514, %v2791
      %v2918 = vadd.f32 %v2515, %v2796
      %v2919 = vadd.f32 %v2516, %v2801
      %v2920 = vadd.f32 %v2517, %v2806
      %v2921 = vadd.f32 %v2518, %v2811
      %v2922 = vadd.f32 %v2519, %v2816
      %v2923 = vadd.f32 %v2520, %v2821
      %v2924 = vadd.f32 %v2521, %v2826
      %v2925 = vadd.f32 %v2522, %v2831
      %v2926 = vadd.f32 %v2523, %v2836
      %v2927 = vadd.f32 %v2524, %v2841
      %v2928 = vadd.f32 %v2525, %v2846
      %v2929 = vadd.f32 %v2526, %v2851
      %v2930 = vadd.f32 %v2527, %v2856
      %v2931 = vadd.f32 %v2528, %v2861
      %v2932 = vadd.f32 %v2529, %v2866
      %v2933 = vadd.f32 %v2530, %v2871
      %v2934 = vadd.f32 %v2531, %v2876
      %v2935 = vadd.f32 %v2532, %v2881
      %v2936 = vadd.f32 %v2533, %v2886
      %v2937 = vadd.f32 %v2534, %v2891
      %v2938 = vadd.f32 %v2535, %v2896
      %v2939 = vadd.f32 %v2536, %v2901
      %v2940 = vadd.f32 %v2537, %v2906
      %s2941 = scalar_lea.vmem [#allocation2], 48
      %v2942 = vld [vmem:[%s2941] sm:$0xff]
      %v2943 = vld [vmem:[%s2941 + $0x8] sm:$0xff]
      %v2944 = vld [vmem:[%s2941 + $0x10] sm:$0x3]
      %v2945 = vld [vmem:[%s2941 + $0x18] sm:$0xff]
      %v2946 = vld [vmem:[%s2941 + $0x20] sm:$0xff]
      %v2947 = vld [vmem:[%s2941 + $0x28] sm:$0x3]
      %v2948 = vld [vmem:[%s2941 + $0x30] sm:$0xff]
      %v2949 = vld [vmem:[%s2941 + $0x38] sm:$0xff]
      %v2950 = vld [vmem:[%s2941 + $0x40] sm:$0x3]
      %v2951 = vld [vmem:[%s2941 + $0x48] sm:$0xff]
      %v2952 = vld [vmem:[%s2941 + $0x50] sm:$0xff]
      %v2953 = vld [vmem:[%s2941 + $0x58] sm:$0x3]
      %v2954 = vld [vmem:[%s2941 + $0x60] sm:$0xff]
      %v2955 = vld [vmem:[%s2941 + $0x68] sm:$0xff]
      %v2956 = vld [vmem:[%s2941 + $0x70] sm:$0x3]
      %v2957 = vld [vmem:[%s2941 + $0x78] sm:$0xff]
      %v2958 = vld [vmem:[%s2941 + $0x80] sm:$0xff]
      %v2959 = vld [vmem:[%s2941 + $0x88] sm:$0x3]
      %v2960 = vld [vmem:[%s2941 + $0x90] sm:$0xff]
      %v2961 = vld [vmem:[%s2941 + $0x98] sm:$0xff]
      %v2962 = vld [vmem:[%s2941 + $0xa0] sm:$0x3]
      %v2963 = vld [vmem:[%s2941 + $0xa8] sm:$0xff]
      %v2964 = vld [vmem:[%s2941 + $0xb0] sm:$0xff]
      %v2965 = vld [vmem:[%s2941 + $0xb8] sm:$0x3]
      %v2966 = vld [vmem:[%s2941 + $0xc0] sm:$0xff]
      %v2967 = vld [vmem:[%s2941 + $0xc8] sm:$0xff]
      %v2968 = vld [vmem:[%s2941 + $0xd0] sm:$0x3]
      %v2969 = vld [vmem:[%s2941 + $0xd8] sm:$0xff]
      %v2970 = vld [vmem:[%s2941 + $0xe0] sm:$0xff]
      %v2971 = vld [vmem:[%s2941 + $0xe8] sm:$0x3]
      %v2972 = vld [vmem:[%s2941 + $0xf0] sm:$0xff]
      %v2973 = vld [vmem:[%s2941 + $0xf8] sm:$0xff]
      %v2974 = vld [vmem:[%s2941 + $0x100] sm:$0x3]
      %v2975 = vld [vmem:[%s2941 + $0x108] sm:$0xff]
      %v2976 = vld [vmem:[%s2941 + $0x110] sm:$0xff]
      %v2977 = vld [vmem:[%s2941 + $0x118] sm:$0x3]
      %v2978 = vld [vmem:[%s2941 + $0x120] sm:$0xff]
      %v2979 = vld [vmem:[%s2941 + $0x128] sm:$0xff]
      %v2980 = vld [vmem:[%s2941 + $0x130] sm:$0x3]
      %v2981 = vld [vmem:[%s2941 + $0x138] sm:$0xff]
      %v2982 = vld [vmem:[%s2941 + $0x140] sm:$0xff]
      %v2983 = vld [vmem:[%s2941 + $0x148] sm:$0x3]
      %v2984 = vld [vmem:[%s2941 + $0x150] sm:$0xff]
      %v2985 = vld [vmem:[%s2941 + $0x158] sm:$0xff]
      %v2986 = vld [vmem:[%s2941 + $0x160] sm:$0x3]
      %v2987 = vld [vmem:[%s2941 + $0x168] sm:$0xff]
      %v2988 = vld [vmem:[%s2941 + $0x170] sm:$0xff]
      %v2989 = vld [vmem:[%s2941 + $0x178] sm:$0x3]
      %s2990 = scalar_lea.vmem %s3, 48
      %v2991 = vld [vmem:[%s2990] sm:$0xff]
      %v2993 = vsel %vm269, %v2942, 0
      %v2996 = vsel %vm269, %v2943, 0
      %v2999 = vsel %vm269, %v2945, 0
      %v3002 = vsel %vm269, %v2946, 0
      %v3005 = vsel %vm269, %v2948, 0
      %v3008 = vsel %vm269, %v2949, 0
      %v3011 = vsel %vm269, %v2951, 0
      %v3014 = vsel %vm269, %v2952, 0
      %v3017 = vsel %vm269, %v2954, 0
      %v3020 = vsel %vm269, %v2955, 0
      %v3023 = vsel %vm269, %v2957, 0
      %v3026 = vsel %vm269, %v2958, 0
      %v3029 = vsel %vm269, %v2960, 0
      %v3032 = vsel %vm269, %v2961, 0
      %v3035 = vsel %vm269, %v2963, 0
      %v3038 = vsel %vm269, %v2964, 0
      %v3041 = vsel %vm269, %v2966, 0
      %v3044 = vsel %vm269, %v2967, 0
      %v3047 = vsel %vm269, %v2969, 0
      %v3050 = vsel %vm269, %v2970, 0
      %v3053 = vsel %vm269, %v2972, 0
      %v3056 = vsel %vm269, %v2973, 0
      %v3059 = vsel %vm269, %v2975, 0
      %v3062 = vsel %vm269, %v2976, 0
      %v3065 = vsel %vm269, %v2978, 0
      %v3068 = vsel %vm269, %v2979, 0
      %v3071 = vsel %vm269, %v2981, 0
      %v3074 = vsel %vm269, %v2982, 0
      %v3077 = vsel %vm269, %v2984, 0
      %v3080 = vsel %vm269, %v2985, 0
      %v3083 = vsel %vm269, %v2987, 0
      %v3086 = vsel %vm269, %v2988, 0
      %3088 = vmatprep.subr.mxu0 0.0
      %3089 = vmatpush1.msra.mxu0 0.0
      %3090 = vmatprep.subr.mxu0 0.0
      %3091 = vmatpush1.msra.mxu0 0.0
      %3092 = vmatprep.subr.mxu0 0.0
      %3093 = vmatpush1.msra.mxu0 0.0
      %3094 = vmatprep.subr.mxu0 0.0
      %3095 = vmatpush1.msra.mxu0 0.0
      %3096 = vmatprep.subr.mxu0 0.0
      %3097 = vmatpush1.msra.mxu0 0.0
      %3098 = vmatprep.subr.mxu0 0.0
      %3099 = vmatpush1.msra.mxu0 0.0
      %3100 = vmatprep.subr.mxu0 0.0
      %3101 = vmatpush1.msra.mxu0 0.0
      %3102 = vmatprep.subr.mxu0 0.0
      %3103 = vmatpush1.msra.mxu0 0.0
      %3104 = vmatprep.subr.mxu0 0.0
      %3105 = vmatpush1.msra.mxu0 0.0
      %3106 = vmatprep.subr.mxu0 0.0
      %3107 = vmatpush1.msra.mxu0 0.0
      %3108 = vmatprep.subr.mxu0 0.0
      %3109 = vmatpush1.msra.mxu0 0.0
      %3110 = vmatprep.subr.mxu0 0.0
      %3111 = vmatpush1.msra.mxu0 0.0
      %3112 = vmatprep.subr.mxu0 0.0
      %3113 = vmatpush1.msra.mxu0 0.0
      %3114 = vmatprep.subr.mxu0 0.0
      %3115 = vmatpush1.msra.mxu0 0.0
      %3116 = vmatprep.subr.mxu0 0.0
      %3117 = vmatpush1.msra.mxu0 0.0
      %3118 = vmatprep.subr.mxu0 0.0
      %3119 = vmatpush1.msra.mxu0 %v2991
      %3120 = vmatprep.subr.mxu0 0.0
      %3121 = vmatpush2.msra.mxu0 0.0
      %3122 = vmatprep.subr.mxu0 0.0
      %3123 = vmatpush2.msra.mxu0 0.0
      %3124 = vmatprep.subr.mxu0 0.0
      %3125 = vmatpush2.msra.mxu0 0.0
      %3126 = vmatprep.subr.mxu0 0.0
      %3127 = vmatpush2.msra.mxu0 0.0
      %3128 = vmatprep.subr.mxu0 0.0
      %3129 = vmatpush2.msra.mxu0 0.0
      %3130 = vmatprep.subr.mxu0 0.0
      %3131 = vmatpush2.msra.mxu0 0.0
      %3132 = vmatprep.subr.mxu0 0.0
      %3133 = vmatpush2.msra.mxu0 0.0
      %3134 = vmatprep.subr.mxu0 0.0
      %3135 = vmatpush2.msra.mxu0 0.0
      %3136 = vmatprep.subr.mxu0 0.0
      %3137 = vmatpush2.msra.mxu0 0.0
      %3138 = vmatprep.subr.mxu0 0.0
      %3139 = vmatpush2.msra.mxu0 0.0
      %3140 = vmatprep.subr.mxu0 0.0
      %3141 = vmatpush2.msra.mxu0 0.0
      %3142 = vmatprep.subr.mxu0 0.0
      %3143 = vmatpush2.msra.mxu0 0.0
      %3144 = vmatprep.subr.mxu0 0.0
      %3145 = vmatpush2.msra.mxu0 0.0
      %3146 = vmatprep.subr.mxu0 0.0
      %3147 = vmatpush2.msra.mxu0 0.0
      %3148 = vmatprep.subr.mxu0 0.0
      %3149 = vmatpush2.msra.mxu0 0.0
      %3150 = vmatprep.subr.mxu0 0.0
      %3151 = vmatpush2.msra.mxu0 0.0
      %3152 = vmatprep.mubr.f32.mxu0 0.0
      %3153 = vmatmul.mubr.f32.gmra.mxu0 %v2993
      %v3154 = vpop.f32.mrf.mxu0
      %v3155 = vadd.f32 0.0, %v3154
      %v3156 = vpop.f32.mrf.mxu0
      %3157 = vmatprep.mubr.f32.mxu0 0.0
      %3158 = vmatmul.mubr.f32.gmra.mxu0 %v2996
      %v3159 = vpop.f32.mrf.mxu0
      %v3160 = vadd.f32 0.0, %v3159
      %v3161 = vpop.f32.mrf.mxu0
      %3162 = vmatprep.mubr.f32.mxu0 0.0
      %3163 = vmatmul.mubr.f32.gmra.mxu0 %v2999
      %v3164 = vpop.f32.mrf.mxu0
      %v3165 = vadd.f32 0.0, %v3164
      %v3166 = vpop.f32.mrf.mxu0
      %3167 = vmatprep.mubr.f32.mxu0 0.0
      %3168 = vmatmul.mubr.f32.gmra.mxu0 %v3002
      %v3169 = vpop.f32.mrf.mxu0
      %v3170 = vadd.f32 0.0, %v3169
      %v3171 = vpop.f32.mrf.mxu0
      %3172 = vmatprep.mubr.f32.mxu0 0.0
      %3173 = vmatmul.mubr.f32.gmra.mxu0 %v3005
      %v3174 = vpop.f32.mrf.mxu0
      %v3175 = vadd.f32 0.0, %v3174
      %v3176 = vpop.f32.mrf.mxu0
      %3177 = vmatprep.mubr.f32.mxu0 0.0
      %3178 = vmatmul.mubr.f32.gmra.mxu0 %v3008
      %v3179 = vpop.f32.mrf.mxu0
      %v3180 = vadd.f32 0.0, %v3179
      %v3181 = vpop.f32.mrf.mxu0
      %3182 = vmatprep.mubr.f32.mxu0 0.0
      %3183 = vmatmul.mubr.f32.gmra.mxu0 %v3011
      %v3184 = vpop.f32.mrf.mxu0
      %v3185 = vadd.f32 0.0, %v3184
      %v3186 = vpop.f32.mrf.mxu0
      %3187 = vmatprep.mubr.f32.mxu0 0.0
      %3188 = vmatmul.mubr.f32.gmra.mxu0 %v3014
      %v3189 = vpop.f32.mrf.mxu0
      %v3190 = vadd.f32 0.0, %v3189
      %v3191 = vpop.f32.mrf.mxu0
      %3192 = vmatprep.mubr.f32.mxu0 0.0
      %3193 = vmatmul.mubr.f32.gmra.mxu0 %v3017
      %v3194 = vpop.f32.mrf.mxu0
      %v3195 = vadd.f32 0.0, %v3194
      %v3196 = vpop.f32.mrf.mxu0
      %3197 = vmatprep.mubr.f32.mxu0 0.0
      %3198 = vmatmul.mubr.f32.gmra.mxu0 %v3020
      %v3199 = vpop.f32.mrf.mxu0
      %v3200 = vadd.f32 0.0, %v3199
      %v3201 = vpop.f32.mrf.mxu0
      %3202 = vmatprep.mubr.f32.mxu0 0.0
      %3203 = vmatmul.mubr.f32.gmra.mxu0 %v3023
      %v3204 = vpop.f32.mrf.mxu0
      %v3205 = vadd.f32 0.0, %v3204
      %v3206 = vpop.f32.mrf.mxu0
      %3207 = vmatprep.mubr.f32.mxu0 0.0
      %3208 = vmatmul.mubr.f32.gmra.mxu0 %v3026
      %v3209 = vpop.f32.mrf.mxu0
      %v3210 = vadd.f32 0.0, %v3209
      %v3211 = vpop.f32.mrf.mxu0
      %3212 = vmatprep.mubr.f32.mxu0 0.0
      %3213 = vmatmul.mubr.f32.gmra.mxu0 %v3029
      %v3214 = vpop.f32.mrf.mxu0
      %v3215 = vadd.f32 0.0, %v3214
      %v3216 = vpop.f32.mrf.mxu0
      %3217 = vmatprep.mubr.f32.mxu0 0.0
      %3218 = vmatmul.mubr.f32.gmra.mxu0 %v3032
      %v3219 = vpop.f32.mrf.mxu0
      %v3220 = vadd.f32 0.0, %v3219
      %v3221 = vpop.f32.mrf.mxu0
      %3222 = vmatprep.mubr.f32.mxu0 0.0
      %3223 = vmatmul.mubr.f32.gmra.mxu0 %v3035
      %v3224 = vpop.f32.mrf.mxu0
      %v3225 = vadd.f32 0.0, %v3224
      %v3226 = vpop.f32.mrf.mxu0
      %3227 = vmatprep.mubr.f32.mxu0 0.0
      %3228 = vmatmul.mubr.f32.gmra.mxu0 %v3038
      %v3229 = vpop.f32.mrf.mxu0
      %v3230 = vadd.f32 0.0, %v3229
      %v3231 = vpop.f32.mrf.mxu0
      %3232 = vmatprep.mubr.f32.mxu0 0.0
      %3233 = vmatmul.mubr.f32.gmra.mxu0 %v3041
      %v3234 = vpop.f32.mrf.mxu0
      %v3235 = vadd.f32 0.0, %v3234
      %v3236 = vpop.f32.mrf.mxu0
      %3237 = vmatprep.mubr.f32.mxu0 0.0
      %3238 = vmatmul.mubr.f32.gmra.mxu0 %v3044
      %v3239 = vpop.f32.mrf.mxu0
      %v3240 = vadd.f32 0.0, %v3239
      %v3241 = vpop.f32.mrf.mxu0
      %3242 = vmatprep.mubr.f32.mxu0 0.0
      %3243 = vmatmul.mubr.f32.gmra.mxu0 %v3047
      %v3244 = vpop.f32.mrf.mxu0
      %v3245 = vadd.f32 0.0, %v3244
      %v3246 = vpop.f32.mrf.mxu0
      %3247 = vmatprep.mubr.f32.mxu0 0.0
      %3248 = vmatmul.mubr.f32.gmra.mxu0 %v3050
      %v3249 = vpop.f32.mrf.mxu0
      %v3250 = vadd.f32 0.0, %v3249
      %v3251 = vpop.f32.mrf.mxu0
      %3252 = vmatprep.mubr.f32.mxu0 0.0
      %3253 = vmatmul.mubr.f32.gmra.mxu0 %v3053
      %v3254 = vpop.f32.mrf.mxu0
      %v3255 = vadd.f32 0.0, %v3254
      %v3256 = vpop.f32.mrf.mxu0
      %3257 = vmatprep.mubr.f32.mxu0 0.0
      %3258 = vmatmul.mubr.f32.gmra.mxu0 %v3056
      %v3259 = vpop.f32.mrf.mxu0
      %v3260 = vadd.f32 0.0, %v3259
      %v3261 = vpop.f32.mrf.mxu0
      %3262 = vmatprep.mubr.f32.mxu0 0.0
      %3263 = vmatmul.mubr.f32.gmra.mxu0 %v3059
      %v3264 = vpop.f32.mrf.mxu0
      %v3265 = vadd.f32 0.0, %v3264
      %v3266 = vpop.f32.mrf.mxu0
      %3267 = vmatprep.mubr.f32.mxu0 0.0
      %3268 = vmatmul.mubr.f32.gmra.mxu0 %v3062
      %v3269 = vpop.f32.mrf.mxu0
      %v3270 = vadd.f32 0.0, %v3269
      %v3271 = vpop.f32.mrf.mxu0
      %3272 = vmatprep.mubr.f32.mxu0 0.0
      %3273 = vmatmul.mubr.f32.gmra.mxu0 %v3065
      %v3274 = vpop.f32.mrf.mxu0
      %v3275 = vadd.f32 0.0, %v3274
      %v3276 = vpop.f32.mrf.mxu0
      %3277 = vmatprep.mubr.f32.mxu0 0.0
      %3278 = vmatmul.mubr.f32.gmra.mxu0 %v3068
      %v3279 = vpop.f32.mrf.mxu0
      %v3280 = vadd.f32 0.0, %v3279
      %v3281 = vpop.f32.mrf.mxu0
      %3282 = vmatprep.mubr.f32.mxu0 0.0
      %3283 = vmatmul.mubr.f32.gmra.mxu0 %v3071
      %v3284 = vpop.f32.mrf.mxu0
      %v3285 = vadd.f32 0.0, %v3284
      %v3286 = vpop.f32.mrf.mxu0
      %3287 = vmatprep.mubr.f32.mxu0 0.0
      %3288 = vmatmul.mubr.f32.gmra.mxu0 %v3074
      %v3289 = vpop.f32.mrf.mxu0
      %v3290 = vadd.f32 0.0, %v3289
      %v3291 = vpop.f32.mrf.mxu0
      %3292 = vmatprep.mubr.f32.mxu0 0.0
      %3293 = vmatmul.mubr.f32.gmra.mxu0 %v3077
      %v3294 = vpop.f32.mrf.mxu0
      %v3295 = vadd.f32 0.0, %v3294
      %v3296 = vpop.f32.mrf.mxu0
      %3297 = vmatprep.mubr.f32.mxu0 0.0
      %3298 = vmatmul.mubr.f32.gmra.mxu0 %v3080
      %v3299 = vpop.f32.mrf.mxu0
      %v3300 = vadd.f32 0.0, %v3299
      %v3301 = vpop.f32.mrf.mxu0
      %3302 = vmatprep.mubr.f32.mxu0 0.0
      %3303 = vmatmul.mubr.f32.gmra.mxu0 %v3083
      %v3304 = vpop.f32.mrf.mxu0
      %v3305 = vadd.f32 0.0, %v3304
      %v3306 = vpop.f32.mrf.mxu0
      %3307 = vmatprep.mubr.f32.mxu0 0.0
      %3308 = vmatmul.mubr.f32.gmra.mxu0 %v3086
      %v3309 = vpop.f32.mrf.mxu0
      %v3310 = vadd.f32 0.0, %v3309
      %v3311 = vpop.f32.mrf.mxu0
      %3312 = vdwg.mxu0
      %v3313 = vadd.f32 %v2909, %v3155
      %v3314 = vadd.f32 %v2910, %v3160
      %v3315 = vadd.f32 %v2911, %v3165
      %v3316 = vadd.f32 %v2912, %v3170
      %v3317 = vadd.f32 %v2913, %v3175
      %v3318 = vadd.f32 %v2914, %v3180
      %v3319 = vadd.f32 %v2915, %v3185
      %v3320 = vadd.f32 %v2916, %v3190
      %v3321 = vadd.f32 %v2917, %v3195
      %v3322 = vadd.f32 %v2918, %v3200
      %v3323 = vadd.f32 %v2919, %v3205
      %v3324 = vadd.f32 %v2920, %v3210
      %v3325 = vadd.f32 %v2921, %v3215
      %v3326 = vadd.f32 %v2922, %v3220
      %v3327 = vadd.f32 %v2923, %v3225
      %v3328 = vadd.f32 %v2924, %v3230
      %v3329 = vadd.f32 %v2925, %v3235
      %v3330 = vadd.f32 %v2926, %v3240
      %v3331 = vadd.f32 %v2927, %v3245
      %v3332 = vadd.f32 %v2928, %v3250
      %v3333 = vadd.f32 %v2929, %v3255
      %v3334 = vadd.f32 %v2930, %v3260
      %v3335 = vadd.f32 %v2931, %v3265
      %v3336 = vadd.f32 %v2932, %v3270
      %v3337 = vadd.f32 %v2933, %v3275
      %v3338 = vadd.f32 %v2934, %v3280
      %v3339 = vadd.f32 %v2935, %v3285
      %v3340 = vadd.f32 %v2936, %v3290
      %v3341 = vadd.f32 %v2937, %v3295
      %v3342 = vadd.f32 %v2938, %v3300
      %v3343 = vadd.f32 %v2939, %v3305
      %v3344 = vadd.f32 %v2940, %v3310
      %v3361 = vrot.slane %v2942, 1
      %v3362 = vrot.slane %v2943, 1
      %v3363 = vsel %vm651, %v3361, %v3362
      %v3364 = vrot.slane %v2944, 1
      %v3365 = vsel %vm651, %v3362, %v3364
      %v3366 = vrot.slane %v2945, 1
      %v3367 = vrot.slane %v2946, 1
      %v3368 = vsel %vm651, %v3366, %v3367
      %v3369 = vrot.slane %v2947, 1
      %v3370 = vsel %vm651, %v3367, %v3369
      %v3371 = vrot.slane %v2948, 1
      %v3372 = vrot.slane %v2949, 1
      %v3373 = vsel %vm651, %v3371, %v3372
      %v3374 = vrot.slane %v2950, 1
      %v3375 = vsel %vm651, %v3372, %v3374
      %v3376 = vrot.slane %v2951, 1
      %v3377 = vrot.slane %v2952, 1
      %v3378 = vsel %vm651, %v3376, %v3377
      %v3379 = vrot.slane %v2953, 1
      %v3380 = vsel %vm651, %v3377, %v3379
      %v3381 = vrot.slane %v2954, 1
      %v3382 = vrot.slane %v2955, 1
      %v3383 = vsel %vm651, %v3381, %v3382
      %v3384 = vrot.slane %v2956, 1
      %v3385 = vsel %vm651, %v3382, %v3384
      %v3386 = vrot.slane %v2957, 1
      %v3387 = vrot.slane %v2958, 1
      %v3388 = vsel %vm651, %v3386, %v3387
      %v3389 = vrot.slane %v2959, 1
      %v3390 = vsel %vm651, %v3387, %v3389
      %v3391 = vrot.slane %v2960, 1
      %v3392 = vrot.slane %v2961, 1
      %v3393 = vsel %vm651, %v3391, %v3392
      %v3394 = vrot.slane %v2962, 1
      %v3395 = vsel %vm651, %v3392, %v3394
      %v3396 = vrot.slane %v2963, 1
      %v3397 = vrot.slane %v2964, 1
      %v3398 = vsel %vm651, %v3396, %v3397
      %v3399 = vrot.slane %v2965, 1
      %v3400 = vsel %vm651, %v3397, %v3399
      %v3401 = vrot.slane %v2966, 1
      %v3402 = vrot.slane %v2967, 1
      %v3403 = vsel %vm651, %v3401, %v3402
      %v3404 = vrot.slane %v2968, 1
      %v3405 = vsel %vm651, %v3402, %v3404
      %v3406 = vrot.slane %v2969, 1
      %v3407 = vrot.slane %v2970, 1
      %v3408 = vsel %vm651, %v3406, %v3407
      %v3409 = vrot.slane %v2971, 1
      %v3410 = vsel %vm651, %v3407, %v3409
      %v3411 = vrot.slane %v2972, 1
      %v3412 = vrot.slane %v2973, 1
      %v3413 = vsel %vm651, %v3411, %v3412
      %v3414 = vrot.slane %v2974, 1
      %v3415 = vsel %vm651, %v3412, %v3414
      %v3416 = vrot.slane %v2975, 1
      %v3417 = vrot.slane %v2976, 1
      %v3418 = vsel %vm651, %v3416, %v3417
      %v3419 = vrot.slane %v2977, 1
      %v3420 = vsel %vm651, %v3417, %v3419
      %v3421 = vrot.slane %v2978, 1
      %v3422 = vrot.slane %v2979, 1
      %v3423 = vsel %vm651, %v3421, %v3422
      %v3424 = vrot.slane %v2980, 1
      %v3425 = vsel %vm651, %v3422, %v3424
      %v3426 = vrot.slane %v2981, 1
      %v3427 = vrot.slane %v2982, 1
      %v3428 = vsel %vm651, %v3426, %v3427
      %v3429 = vrot.slane %v2983, 1
      %v3430 = vsel %vm651, %v3427, %v3429
      %v3431 = vrot.slane %v2984, 1
      %v3432 = vrot.slane %v2985, 1
      %v3433 = vsel %vm651, %v3431, %v3432
      %v3434 = vrot.slane %v2986, 1
      %v3435 = vsel %vm651, %v3432, %v3434
      %v3436 = vrot.slane %v2987, 1
      %v3437 = vrot.slane %v2988, 1
      %v3438 = vsel %vm651, %v3436, %v3437
      %v3439 = vrot.slane %v2989, 1
      %v3440 = vsel %vm651, %v3437, %v3439
      %s3441 = scalar_lea.vmem %s3, 56
      %v3442 = vld [vmem:[%s3441] sm:$0xff]
      %v3443 = vsel %vm269, %v3363, 0
      %v3445 = vsel %vm269, %v3365, 0
      %v3447 = vsel %vm269, %v3368, 0
      %v3449 = vsel %vm269, %v3370, 0
      %v3451 = vsel %vm269, %v3373, 0
      %v3453 = vsel %vm269, %v3375, 0
      %v3455 = vsel %vm269, %v3378, 0
      %v3457 = vsel %vm269, %v3380, 0
      %v3459 = vsel %vm269, %v3383, 0
      %v3461 = vsel %vm269, %v3385, 0
      %v3463 = vsel %vm269, %v3388, 0
      %v3465 = vsel %vm269, %v3390, 0
      %v3467 = vsel %vm269, %v3393, 0
      %v3469 = vsel %vm269, %v3395, 0
      %v3471 = vsel %vm269, %v3398, 0
      %v3473 = vsel %vm269, %v3400, 0
      %v3475 = vsel %vm269, %v3403, 0
      %v3477 = vsel %vm269, %v3405, 0
      %v3479 = vsel %vm269, %v3408, 0
      %v3481 = vsel %vm269, %v3410, 0
      %v3483 = vsel %vm269, %v3413, 0
      %v3485 = vsel %vm269, %v3415, 0
      %v3487 = vsel %vm269, %v3418, 0
      %v3489 = vsel %vm269, %v3420, 0
      %v3491 = vsel %vm269, %v3423, 0
      %v3493 = vsel %vm269, %v3425, 0
      %v3495 = vsel %vm269, %v3428, 0
      %v3497 = vsel %vm269, %v3430, 0
      %v3499 = vsel %vm269, %v3433, 0
      %v3501 = vsel %vm269, %v3435, 0
      %v3503 = vsel %vm269, %v3438, 0
      %v3505 = vsel %vm269, %v3440, 0
      %3507 = vmatprep.subr.mxu0 0.0
      %3508 = vmatpush1.msra.mxu0 0.0
      %3509 = vmatprep.subr.mxu0 0.0
      %3510 = vmatpush1.msra.mxu0 0.0
      %3511 = vmatprep.subr.mxu0 0.0
      %3512 = vmatpush1.msra.mxu0 0.0
      %3513 = vmatprep.subr.mxu0 0.0
      %3514 = vmatpush1.msra.mxu0 0.0
      %3515 = vmatprep.subr.mxu0 0.0
      %3516 = vmatpush1.msra.mxu0 0.0
      %3517 = vmatprep.subr.mxu0 0.0
      %3518 = vmatpush1.msra.mxu0 0.0
      %3519 = vmatprep.subr.mxu0 0.0
      %3520 = vmatpush1.msra.mxu0 0.0
      %3521 = vmatprep.subr.mxu0 0.0
      %3522 = vmatpush1.msra.mxu0 0.0
      %3523 = vmatprep.subr.mxu0 0.0
      %3524 = vmatpush1.msra.mxu0 0.0
      %3525 = vmatprep.subr.mxu0 0.0
      %3526 = vmatpush1.msra.mxu0 0.0
      %3527 = vmatprep.subr.mxu0 0.0
      %3528 = vmatpush1.msra.mxu0 0.0
      %3529 = vmatprep.subr.mxu0 0.0
      %3530 = vmatpush1.msra.mxu0 0.0
      %3531 = vmatprep.subr.mxu0 0.0
      %3532 = vmatpush1.msra.mxu0 0.0
      %3533 = vmatprep.subr.mxu0 0.0
      %3534 = vmatpush1.msra.mxu0 0.0
      %3535 = vmatprep.subr.mxu0 0.0
      %3536 = vmatpush1.msra.mxu0 0.0
      %3537 = vmatprep.subr.mxu0 0.0
      %3538 = vmatpush1.msra.mxu0 %v3442
      %3539 = vmatprep.subr.mxu0 0.0
      %3540 = vmatpush2.msra.mxu0 0.0
      %3541 = vmatprep.subr.mxu0 0.0
      %3542 = vmatpush2.msra.mxu0 0.0
      %3543 = vmatprep.subr.mxu0 0.0
      %3544 = vmatpush2.msra.mxu0 0.0
      %3545 = vmatprep.subr.mxu0 0.0
      %3546 = vmatpush2.msra.mxu0 0.0
      %3547 = vmatprep.subr.mxu0 0.0
      %3548 = vmatpush2.msra.mxu0 0.0
      %3549 = vmatprep.subr.mxu0 0.0
      %3550 = vmatpush2.msra.mxu0 0.0
      %3551 = vmatprep.subr.mxu0 0.0
      %3552 = vmatpush2.msra.mxu0 0.0
      %3553 = vmatprep.subr.mxu0 0.0
      %3554 = vmatpush2.msra.mxu0 0.0
      %3555 = vmatprep.subr.mxu0 0.0
      %3556 = vmatpush2.msra.mxu0 0.0
      %3557 = vmatprep.subr.mxu0 0.0
      %3558 = vmatpush2.msra.mxu0 0.0
      %3559 = vmatprep.subr.mxu0 0.0
      %3560 = vmatpush2.msra.mxu0 0.0
      %3561 = vmatprep.subr.mxu0 0.0
      %3562 = vmatpush2.msra.mxu0 0.0
      %3563 = vmatprep.subr.mxu0 0.0
      %3564 = vmatpush2.msra.mxu0 0.0
      %3565 = vmatprep.subr.mxu0 0.0
      %3566 = vmatpush2.msra.mxu0 0.0
      %3567 = vmatprep.subr.mxu0 0.0
      %3568 = vmatpush2.msra.mxu0 0.0
      %3569 = vmatprep.subr.mxu0 0.0
      %3570 = vmatpush2.msra.mxu0 0.0
      %3571 = vmatprep.mubr.f32.mxu0 0.0
      %3572 = vmatmul.mubr.f32.gmra.mxu0 %v3443
      %v3573 = vpop.f32.mrf.mxu0
      %v3574 = vadd.f32 0.0, %v3573
      %v3575 = vpop.f32.mrf.mxu0
      %3576 = vmatprep.mubr.f32.mxu0 0.0
      %3577 = vmatmul.mubr.f32.gmra.mxu0 %v3445
      %v3578 = vpop.f32.mrf.mxu0
      %v3579 = vadd.f32 0.0, %v3578
      %v3580 = vpop.f32.mrf.mxu0
      %3581 = vmatprep.mubr.f32.mxu0 0.0
      %3582 = vmatmul.mubr.f32.gmra.mxu0 %v3447
      %v3583 = vpop.f32.mrf.mxu0
      %v3584 = vadd.f32 0.0, %v3583
      %v3585 = vpop.f32.mrf.mxu0
      %3586 = vmatprep.mubr.f32.mxu0 0.0
      %3587 = vmatmul.mubr.f32.gmra.mxu0 %v3449
      %v3588 = vpop.f32.mrf.mxu0
      %v3589 = vadd.f32 0.0, %v3588
      %v3590 = vpop.f32.mrf.mxu0
      %3591 = vmatprep.mubr.f32.mxu0 0.0
      %3592 = vmatmul.mubr.f32.gmra.mxu0 %v3451
      %v3593 = vpop.f32.mrf.mxu0
      %v3594 = vadd.f32 0.0, %v3593
      %v3595 = vpop.f32.mrf.mxu0
      %3596 = vmatprep.mubr.f32.mxu0 0.0
      %3597 = vmatmul.mubr.f32.gmra.mxu0 %v3453
      %v3598 = vpop.f32.mrf.mxu0
      %v3599 = vadd.f32 0.0, %v3598
      %v3600 = vpop.f32.mrf.mxu0
      %3601 = vmatprep.mubr.f32.mxu0 0.0
      %3602 = vmatmul.mubr.f32.gmra.mxu0 %v3455
      %v3603 = vpop.f32.mrf.mxu0
      %v3604 = vadd.f32 0.0, %v3603
      %v3605 = vpop.f32.mrf.mxu0
      %3606 = vmatprep.mubr.f32.mxu0 0.0
      %3607 = vmatmul.mubr.f32.gmra.mxu0 %v3457
      %v3608 = vpop.f32.mrf.mxu0
      %v3609 = vadd.f32 0.0, %v3608
      %v3610 = vpop.f32.mrf.mxu0
      %3611 = vmatprep.mubr.f32.mxu0 0.0
      %3612 = vmatmul.mubr.f32.gmra.mxu0 %v3459
      %v3613 = vpop.f32.mrf.mxu0
      %v3614 = vadd.f32 0.0, %v3613
      %v3615 = vpop.f32.mrf.mxu0
      %3616 = vmatprep.mubr.f32.mxu0 0.0
      %3617 = vmatmul.mubr.f32.gmra.mxu0 %v3461
      %v3618 = vpop.f32.mrf.mxu0
      %v3619 = vadd.f32 0.0, %v3618
      %v3620 = vpop.f32.mrf.mxu0
      %3621 = vmatprep.mubr.f32.mxu0 0.0
      %3622 = vmatmul.mubr.f32.gmra.mxu0 %v3463
      %v3623 = vpop.f32.mrf.mxu0
      %v3624 = vadd.f32 0.0, %v3623
      %v3625 = vpop.f32.mrf.mxu0
      %3626 = vmatprep.mubr.f32.mxu0 0.0
      %3627 = vmatmul.mubr.f32.gmra.mxu0 %v3465
      %v3628 = vpop.f32.mrf.mxu0
      %v3629 = vadd.f32 0.0, %v3628
      %v3630 = vpop.f32.mrf.mxu0
      %3631 = vmatprep.mubr.f32.mxu0 0.0
      %3632 = vmatmul.mubr.f32.gmra.mxu0 %v3467
      %v3633 = vpop.f32.mrf.mxu0
      %v3634 = vadd.f32 0.0, %v3633
      %v3635 = vpop.f32.mrf.mxu0
      %3636 = vmatprep.mubr.f32.mxu0 0.0
      %3637 = vmatmul.mubr.f32.gmra.mxu0 %v3469
      %v3638 = vpop.f32.mrf.mxu0
      %v3639 = vadd.f32 0.0, %v3638
      %v3640 = vpop.f32.mrf.mxu0
      %3641 = vmatprep.mubr.f32.mxu0 0.0
      %3642 = vmatmul.mubr.f32.gmra.mxu0 %v3471
      %v3643 = vpop.f32.mrf.mxu0
      %v3644 = vadd.f32 0.0, %v3643
      %v3645 = vpop.f32.mrf.mxu0
      %3646 = vmatprep.mubr.f32.mxu0 0.0
      %3647 = vmatmul.mubr.f32.gmra.mxu0 %v3473
      %v3648 = vpop.f32.mrf.mxu0
      %v3649 = vadd.f32 0.0, %v3648
      %v3650 = vpop.f32.mrf.mxu0
      %3651 = vmatprep.mubr.f32.mxu0 0.0
      %3652 = vmatmul.mubr.f32.gmra.mxu0 %v3475
      %v3653 = vpop.f32.mrf.mxu0
      %v3654 = vadd.f32 0.0, %v3653
      %v3655 = vpop.f32.mrf.mxu0
      %3656 = vmatprep.mubr.f32.mxu0 0.0
      %3657 = vmatmul.mubr.f32.gmra.mxu0 %v3477
      %v3658 = vpop.f32.mrf.mxu0
      %v3659 = vadd.f32 0.0, %v3658
      %v3660 = vpop.f32.mrf.mxu0
      %3661 = vmatprep.mubr.f32.mxu0 0.0
      %3662 = vmatmul.mubr.f32.gmra.mxu0 %v3479
      %v3663 = vpop.f32.mrf.mxu0
      %v3664 = vadd.f32 0.0, %v3663
      %v3665 = vpop.f32.mrf.mxu0
      %3666 = vmatprep.mubr.f32.mxu0 0.0
      %3667 = vmatmul.mubr.f32.gmra.mxu0 %v3481
      %v3668 = vpop.f32.mrf.mxu0
      %v3669 = vadd.f32 0.0, %v3668
      %v3670 = vpop.f32.mrf.mxu0
      %3671 = vmatprep.mubr.f32.mxu0 0.0
      %3672 = vmatmul.mubr.f32.gmra.mxu0 %v3483
      %v3673 = vpop.f32.mrf.mxu0
      %v3674 = vadd.f32 0.0, %v3673
      %v3675 = vpop.f32.mrf.mxu0
      %3676 = vmatprep.mubr.f32.mxu0 0.0
      %3677 = vmatmul.mubr.f32.gmra.mxu0 %v3485
      %v3678 = vpop.f32.mrf.mxu0
      %v3679 = vadd.f32 0.0, %v3678
      %v3680 = vpop.f32.mrf.mxu0
      %3681 = vmatprep.mubr.f32.mxu0 0.0
      %3682 = vmatmul.mubr.f32.gmra.mxu0 %v3487
      %v3683 = vpop.f32.mrf.mxu0
      %v3684 = vadd.f32 0.0, %v3683
      %v3685 = vpop.f32.mrf.mxu0
      %3686 = vmatprep.mubr.f32.mxu0 0.0
      %3687 = vmatmul.mubr.f32.gmra.mxu0 %v3489
      %v3688 = vpop.f32.mrf.mxu0
      %v3689 = vadd.f32 0.0, %v3688
      %v3690 = vpop.f32.mrf.mxu0
      %3691 = vmatprep.mubr.f32.mxu0 0.0
      %3692 = vmatmul.mubr.f32.gmra.mxu0 %v3491
      %v3693 = vpop.f32.mrf.mxu0
      %v3694 = vadd.f32 0.0, %v3693
      %v3695 = vpop.f32.mrf.mxu0
      %3696 = vmatprep.mubr.f32.mxu0 0.0
      %3697 = vmatmul.mubr.f32.gmra.mxu0 %v3493
      %v3698 = vpop.f32.mrf.mxu0
      %v3699 = vadd.f32 0.0, %v3698
      %v3700 = vpop.f32.mrf.mxu0
      %3701 = vmatprep.mubr.f32.mxu0 0.0
      %3702 = vmatmul.mubr.f32.gmra.mxu0 %v3495
      %v3703 = vpop.f32.mrf.mxu0
      %v3704 = vadd.f32 0.0, %v3703
      %v3705 = vpop.f32.mrf.mxu0
      %3706 = vmatprep.mubr.f32.mxu0 0.0
      %3707 = vmatmul.mubr.f32.gmra.mxu0 %v3497
      %v3708 = vpop.f32.mrf.mxu0
      %v3709 = vadd.f32 0.0, %v3708
      %v3710 = vpop.f32.mrf.mxu0
      %3711 = vmatprep.mubr.f32.mxu0 0.0
      %3712 = vmatmul.mubr.f32.gmra.mxu0 %v3499
      %v3713 = vpop.f32.mrf.mxu0
      %v3714 = vadd.f32 0.0, %v3713
      %v3715 = vpop.f32.mrf.mxu0
      %3716 = vmatprep.mubr.f32.mxu0 0.0
      %3717 = vmatmul.mubr.f32.gmra.mxu0 %v3501
      %v3718 = vpop.f32.mrf.mxu0
      %v3719 = vadd.f32 0.0, %v3718
      %v3720 = vpop.f32.mrf.mxu0
      %3721 = vmatprep.mubr.f32.mxu0 0.0
      %3722 = vmatmul.mubr.f32.gmra.mxu0 %v3503
      %v3723 = vpop.f32.mrf.mxu0
      %v3724 = vadd.f32 0.0, %v3723
      %v3725 = vpop.f32.mrf.mxu0
      %3726 = vmatprep.mubr.f32.mxu0 0.0
      %3727 = vmatmul.mubr.f32.gmra.mxu0 %v3505
      %v3728 = vpop.f32.mrf.mxu0
      %v3729 = vadd.f32 0.0, %v3728
      %v3730 = vpop.f32.mrf.mxu0
      %3731 = vdwg.mxu0
      %v3732 = vadd.f32 %v3313, %v3574
      %v3733 = vadd.f32 %v3314, %v3579
      %v3734 = vadd.f32 %v3315, %v3584
      %v3735 = vadd.f32 %v3316, %v3589
      %v3736 = vadd.f32 %v3317, %v3594
      %v3737 = vadd.f32 %v3318, %v3599
      %v3738 = vadd.f32 %v3319, %v3604
      %v3739 = vadd.f32 %v3320, %v3609
      %v3740 = vadd.f32 %v3321, %v3614
      %v3741 = vadd.f32 %v3322, %v3619
      %v3742 = vadd.f32 %v3323, %v3624
      %v3743 = vadd.f32 %v3324, %v3629
      %v3744 = vadd.f32 %v3325, %v3634
      %v3745 = vadd.f32 %v3326, %v3639
      %v3746 = vadd.f32 %v3327, %v3644
      %v3747 = vadd.f32 %v3328, %v3649
      %v3748 = vadd.f32 %v3329, %v3654
      %v3749 = vadd.f32 %v3330, %v3659
      %v3750 = vadd.f32 %v3331, %v3664
      %v3751 = vadd.f32 %v3332, %v3669
      %v3752 = vadd.f32 %v3333, %v3674
      %v3753 = vadd.f32 %v3334, %v3679
      %v3754 = vadd.f32 %v3335, %v3684
      %v3755 = vadd.f32 %v3336, %v3689
      %v3756 = vadd.f32 %v3337, %v3694
      %v3757 = vadd.f32 %v3338, %v3699
      %v3758 = vadd.f32 %v3339, %v3704
      %v3759 = vadd.f32 %v3340, %v3709
      %v3760 = vadd.f32 %v3341, %v3714
      %v3761 = vadd.f32 %v3342, %v3719
      %v3762 = vadd.f32 %v3343, %v3724
      %v3763 = vadd.f32 %v3344, %v3729
      %v3764 = vrot.slane %v2942, 2
      %v3765 = vrot.slane %v2943, 2
      %v3766 = vsel %vm1312, %v3764, %v3765
      %v3767 = vrot.slane %v2944, 2
      %v3768 = vsel %vm1312, %v3765, %v3767
      %v3769 = vrot.slane %v2945, 2
      %v3770 = vrot.slane %v2946, 2
      %v3771 = vsel %vm1312, %v3769, %v3770
      %v3772 = vrot.slane %v2947, 2
      %v3773 = vsel %vm1312, %v3770, %v3772
      %v3774 = vrot.slane %v2948, 2
      %v3775 = vrot.slane %v2949, 2
      %v3776 = vsel %vm1312, %v3774, %v3775
      %v3777 = vrot.slane %v2950, 2
      %v3778 = vsel %vm1312, %v3775, %v3777
      %v3779 = vrot.slane %v2951, 2
      %v3780 = vrot.slane %v2952, 2
      %v3781 = vsel %vm1312, %v3779, %v3780
      %v3782 = vrot.slane %v2953, 2
      %v3783 = vsel %vm1312, %v3780, %v3782
      %v3784 = vrot.slane %v2954, 2
      %v3785 = vrot.slane %v2955, 2
      %v3786 = vsel %vm1312, %v3784, %v3785
      %v3787 = vrot.slane %v2956, 2
      %v3788 = vsel %vm1312, %v3785, %v3787
      %v3789 = vrot.slane %v2957, 2
      %v3790 = vrot.slane %v2958, 2
      %v3791 = vsel %vm1312, %v3789, %v3790
      %v3792 = vrot.slane %v2959, 2
      %v3793 = vsel %vm1312, %v3790, %v3792
      %v3794 = vrot.slane %v2960, 2
      %v3795 = vrot.slane %v2961, 2
      %v3796 = vsel %vm1312, %v3794, %v3795
      %v3797 = vrot.slane %v2962, 2
      %v3798 = vsel %vm1312, %v3795, %v3797
      %v3799 = vrot.slane %v2963, 2
      %v3800 = vrot.slane %v2964, 2
      %v3801 = vsel %vm1312, %v3799, %v3800
      %v3802 = vrot.slane %v2965, 2
      %v3803 = vsel %vm1312, %v3800, %v3802
      %v3804 = vrot.slane %v2966, 2
      %v3805 = vrot.slane %v2967, 2
      %v3806 = vsel %vm1312, %v3804, %v3805
      %v3807 = vrot.slane %v2968, 2
      %v3808 = vsel %vm1312, %v3805, %v3807
      %v3809 = vrot.slane %v2969, 2
      %v3810 = vrot.slane %v2970, 2
      %v3811 = vsel %vm1312, %v3809, %v3810
      %v3812 = vrot.slane %v2971, 2
      %v3813 = vsel %vm1312, %v3810, %v3812
      %v3814 = vrot.slane %v2972, 2
      %v3815 = vrot.slane %v2973, 2
      %v3816 = vsel %vm1312, %v3814, %v3815
      %v3817 = vrot.slane %v2974, 2
      %v3818 = vsel %vm1312, %v3815, %v3817
      %v3819 = vrot.slane %v2975, 2
      %v3820 = vrot.slane %v2976, 2
      %v3821 = vsel %vm1312, %v3819, %v3820
      %v3822 = vrot.slane %v2977, 2
      %v3823 = vsel %vm1312, %v3820, %v3822
      %v3824 = vrot.slane %v2978, 2
      %v3825 = vrot.slane %v2979, 2
      %v3826 = vsel %vm1312, %v3824, %v3825
      %v3827 = vrot.slane %v2980, 2
      %v3828 = vsel %vm1312, %v3825, %v3827
      %v3829 = vrot.slane %v2981, 2
      %v3830 = vrot.slane %v2982, 2
      %v3831 = vsel %vm1312, %v3829, %v3830
      %v3832 = vrot.slane %v2983, 2
      %v3833 = vsel %vm1312, %v3830, %v3832
      %v3834 = vrot.slane %v2984, 2
      %v3835 = vrot.slane %v2985, 2
      %v3836 = vsel %vm1312, %v3834, %v3835
      %v3837 = vrot.slane %v2986, 2
      %v3838 = vsel %vm1312, %v3835, %v3837
      %v3839 = vrot.slane %v2987, 2
      %v3840 = vrot.slane %v2988, 2
      %v3841 = vsel %vm1312, %v3839, %v3840
      %v3842 = vrot.slane %v2989, 2
      %v3843 = vsel %vm1312, %v3840, %v3842
      %s3844 = scalar_lea.vmem %s3, 64
      %v3845 = vld [vmem:[%s3844] sm:$0xff]
      %v3846 = vsel %vm269, %v3766, 0
      %v3848 = vsel %vm269, %v3768, 0
      %v3850 = vsel %vm269, %v3771, 0
      %v3852 = vsel %vm269, %v3773, 0
      %v3854 = vsel %vm269, %v3776, 0
      %v3856 = vsel %vm269, %v3778, 0
      %v3858 = vsel %vm269, %v3781, 0
      %v3860 = vsel %vm269, %v3783, 0
      %v3862 = vsel %vm269, %v3786, 0
      %v3864 = vsel %vm269, %v3788, 0
      %v3866 = vsel %vm269, %v3791, 0
      %v3868 = vsel %vm269, %v3793, 0
      %v3870 = vsel %vm269, %v3796, 0
      %v3872 = vsel %vm269, %v3798, 0
      %v3874 = vsel %vm269, %v3801, 0
      %v3876 = vsel %vm269, %v3803, 0
      %v3878 = vsel %vm269, %v3806, 0
      %v3880 = vsel %vm269, %v3808, 0
      %v3882 = vsel %vm269, %v3811, 0
      %v3884 = vsel %vm269, %v3813, 0
      %v3886 = vsel %vm269, %v3816, 0
      %v3888 = vsel %vm269, %v3818, 0
      %v3890 = vsel %vm269, %v3821, 0
      %v3892 = vsel %vm269, %v3823, 0
      %v3894 = vsel %vm269, %v3826, 0
      %v3896 = vsel %vm269, %v3828, 0
      %v3898 = vsel %vm269, %v3831, 0
      %v3900 = vsel %vm269, %v3833, 0
      %v3902 = vsel %vm269, %v3836, 0
      %v3904 = vsel %vm269, %v3838, 0
      %v3906 = vsel %vm269, %v3841, 0
      %v3908 = vsel %vm269, %v3843, 0
      %3910 = vmatprep.subr.mxu0 0.0
      %3911 = vmatpush1.msra.mxu0 0.0
      %3912 = vmatprep.subr.mxu0 0.0
      %3913 = vmatpush1.msra.mxu0 0.0
      %3914 = vmatprep.subr.mxu0 0.0
      %3915 = vmatpush1.msra.mxu0 0.0
      %3916 = vmatprep.subr.mxu0 0.0
      %3917 = vmatpush1.msra.mxu0 0.0
      %3918 = vmatprep.subr.mxu0 0.0
      %3919 = vmatpush1.msra.mxu0 0.0
      %3920 = vmatprep.subr.mxu0 0.0
      %3921 = vmatpush1.msra.mxu0 0.0
      %3922 = vmatprep.subr.mxu0 0.0
      %3923 = vmatpush1.msra.mxu0 0.0
      %3924 = vmatprep.subr.mxu0 0.0
      %3925 = vmatpush1.msra.mxu0 0.0
      %3926 = vmatprep.subr.mxu0 0.0
      %3927 = vmatpush1.msra.mxu0 0.0
      %3928 = vmatprep.subr.mxu0 0.0
      %3929 = vmatpush1.msra.mxu0 0.0
      %3930 = vmatprep.subr.mxu0 0.0
      %3931 = vmatpush1.msra.mxu0 0.0
      %3932 = vmatprep.subr.mxu0 0.0
      %3933 = vmatpush1.msra.mxu0 0.0
      %3934 = vmatprep.subr.mxu0 0.0
      %3935 = vmatpush1.msra.mxu0 0.0
      %3936 = vmatprep.subr.mxu0 0.0
      %3937 = vmatpush1.msra.mxu0 0.0
      %3938 = vmatprep.subr.mxu0 0.0
      %3939 = vmatpush1.msra.mxu0 0.0
      %3940 = vmatprep.subr.mxu0 0.0
      %3941 = vmatpush1.msra.mxu0 %v3845
      %3942 = vmatprep.subr.mxu0 0.0
      %3943 = vmatpush2.msra.mxu0 0.0
      %3944 = vmatprep.subr.mxu0 0.0
      %3945 = vmatpush2.msra.mxu0 0.0
      %3946 = vmatprep.subr.mxu0 0.0
      %3947 = vmatpush2.msra.mxu0 0.0
      %3948 = vmatprep.subr.mxu0 0.0
      %3949 = vmatpush2.msra.mxu0 0.0
      %3950 = vmatprep.subr.mxu0 0.0
      %3951 = vmatpush2.msra.mxu0 0.0
      %3952 = vmatprep.subr.mxu0 0.0
      %3953 = vmatpush2.msra.mxu0 0.0
      %3954 = vmatprep.subr.mxu0 0.0
      %3955 = vmatpush2.msra.mxu0 0.0
      %3956 = vmatprep.subr.mxu0 0.0
      %3957 = vmatpush2.msra.mxu0 0.0
      %3958 = vmatprep.subr.mxu0 0.0
      %3959 = vmatpush2.msra.mxu0 0.0
      %3960 = vmatprep.subr.mxu0 0.0
      %3961 = vmatpush2.msra.mxu0 0.0
      %3962 = vmatprep.subr.mxu0 0.0
      %3963 = vmatpush2.msra.mxu0 0.0
      %3964 = vmatprep.subr.mxu0 0.0
      %3965 = vmatpush2.msra.mxu0 0.0
      %3966 = vmatprep.subr.mxu0 0.0
      %3967 = vmatpush2.msra.mxu0 0.0
      %3968 = vmatprep.subr.mxu0 0.0
      %3969 = vmatpush2.msra.mxu0 0.0
      %3970 = vmatprep.subr.mxu0 0.0
      %3971 = vmatpush2.msra.mxu0 0.0
      %3972 = vmatprep.subr.mxu0 0.0
      %3973 = vmatpush2.msra.mxu0 0.0
      %3974 = vmatprep.mubr.f32.mxu0 0.0
      %3975 = vmatmul.mubr.f32.gmra.mxu0 %v3846
      %v3976 = vpop.f32.mrf.mxu0
      %v3977 = vadd.f32 0.0, %v3976
      %v3978 = vpop.f32.mrf.mxu0
      %3979 = vmatprep.mubr.f32.mxu0 0.0
      %3980 = vmatmul.mubr.f32.gmra.mxu0 %v3848
      %v3981 = vpop.f32.mrf.mxu0
      %v3982 = vadd.f32 0.0, %v3981
      %v3983 = vpop.f32.mrf.mxu0
      %3984 = vmatprep.mubr.f32.mxu0 0.0
      %3985 = vmatmul.mubr.f32.gmra.mxu0 %v3850
      %v3986 = vpop.f32.mrf.mxu0
      %v3987 = vadd.f32 0.0, %v3986
      %v3988 = vpop.f32.mrf.mxu0
      %3989 = vmatprep.mubr.f32.mxu0 0.0
      %3990 = vmatmul.mubr.f32.gmra.mxu0 %v3852
      %v3991 = vpop.f32.mrf.mxu0
      %v3992 = vadd.f32 0.0, %v3991
      %v3993 = vpop.f32.mrf.mxu0
      %3994 = vmatprep.mubr.f32.mxu0 0.0
      %3995 = vmatmul.mubr.f32.gmra.mxu0 %v3854
      %v3996 = vpop.f32.mrf.mxu0
      %v3997 = vadd.f32 0.0, %v3996
      %v3998 = vpop.f32.mrf.mxu0
      %3999 = vmatprep.mubr.f32.mxu0 0.0
      %4000 = vmatmul.mubr.f32.gmra.mxu0 %v3856
      %v4001 = vpop.f32.mrf.mxu0
      %v4002 = vadd.f32 0.0, %v4001
      %v4003 = vpop.f32.mrf.mxu0
      %4004 = vmatprep.mubr.f32.mxu0 0.0
      %4005 = vmatmul.mubr.f32.gmra.mxu0 %v3858
      %v4006 = vpop.f32.mrf.mxu0
      %v4007 = vadd.f32 0.0, %v4006
      %v4008 = vpop.f32.mrf.mxu0
      %4009 = vmatprep.mubr.f32.mxu0 0.0
      %4010 = vmatmul.mubr.f32.gmra.mxu0 %v3860
      %v4011 = vpop.f32.mrf.mxu0
      %v4012 = vadd.f32 0.0, %v4011
      %v4013 = vpop.f32.mrf.mxu0
      %4014 = vmatprep.mubr.f32.mxu0 0.0
      %4015 = vmatmul.mubr.f32.gmra.mxu0 %v3862
      %v4016 = vpop.f32.mrf.mxu0
      %v4017 = vadd.f32 0.0, %v4016
      %v4018 = vpop.f32.mrf.mxu0
      %4019 = vmatprep.mubr.f32.mxu0 0.0
      %4020 = vmatmul.mubr.f32.gmra.mxu0 %v3864
      %v4021 = vpop.f32.mrf.mxu0
      %v4022 = vadd.f32 0.0, %v4021
      %v4023 = vpop.f32.mrf.mxu0
      %4024 = vmatprep.mubr.f32.mxu0 0.0
      %4025 = vmatmul.mubr.f32.gmra.mxu0 %v3866
      %v4026 = vpop.f32.mrf.mxu0
      %v4027 = vadd.f32 0.0, %v4026
      %v4028 = vpop.f32.mrf.mxu0
      %4029 = vmatprep.mubr.f32.mxu0 0.0
      %4030 = vmatmul.mubr.f32.gmra.mxu0 %v3868
      %v4031 = vpop.f32.mrf.mxu0
      %v4032 = vadd.f32 0.0, %v4031
      %v4033 = vpop.f32.mrf.mxu0
      %4034 = vmatprep.mubr.f32.mxu0 0.0
      %4035 = vmatmul.mubr.f32.gmra.mxu0 %v3870
      %v4036 = vpop.f32.mrf.mxu0
      %v4037 = vadd.f32 0.0, %v4036
      %v4038 = vpop.f32.mrf.mxu0
      %4039 = vmatprep.mubr.f32.mxu0 0.0
      %4040 = vmatmul.mubr.f32.gmra.mxu0 %v3872
      %v4041 = vpop.f32.mrf.mxu0
      %v4042 = vadd.f32 0.0, %v4041
      %v4043 = vpop.f32.mrf.mxu0
      %4044 = vmatprep.mubr.f32.mxu0 0.0
      %4045 = vmatmul.mubr.f32.gmra.mxu0 %v3874
      %v4046 = vpop.f32.mrf.mxu0
      %v4047 = vadd.f32 0.0, %v4046
      %v4048 = vpop.f32.mrf.mxu0
      %4049 = vmatprep.mubr.f32.mxu0 0.0
      %4050 = vmatmul.mubr.f32.gmra.mxu0 %v3876
      %v4051 = vpop.f32.mrf.mxu0
      %v4052 = vadd.f32 0.0, %v4051
      %v4053 = vpop.f32.mrf.mxu0
      %4054 = vmatprep.mubr.f32.mxu0 0.0
      %4055 = vmatmul.mubr.f32.gmra.mxu0 %v3878
      %v4056 = vpop.f32.mrf.mxu0
      %v4057 = vadd.f32 0.0, %v4056
      %v4058 = vpop.f32.mrf.mxu0
      %4059 = vmatprep.mubr.f32.mxu0 0.0
      %4060 = vmatmul.mubr.f32.gmra.mxu0 %v3880
      %v4061 = vpop.f32.mrf.mxu0
      %v4062 = vadd.f32 0.0, %v4061
      %v4063 = vpop.f32.mrf.mxu0
      %4064 = vmatprep.mubr.f32.mxu0 0.0
      %4065 = vmatmul.mubr.f32.gmra.mxu0 %v3882
      %v4066 = vpop.f32.mrf.mxu0
      %v4067 = vadd.f32 0.0, %v4066
      %v4068 = vpop.f32.mrf.mxu0
      %4069 = vmatprep.mubr.f32.mxu0 0.0
      %4070 = vmatmul.mubr.f32.gmra.mxu0 %v3884
      %v4071 = vpop.f32.mrf.mxu0
      %v4072 = vadd.f32 0.0, %v4071
      %v4073 = vpop.f32.mrf.mxu0
      %4074 = vmatprep.mubr.f32.mxu0 0.0
      %4075 = vmatmul.mubr.f32.gmra.mxu0 %v3886
      %v4076 = vpop.f32.mrf.mxu0
      %v4077 = vadd.f32 0.0, %v4076
      %v4078 = vpop.f32.mrf.mxu0
      %4079 = vmatprep.mubr.f32.mxu0 0.0
      %4080 = vmatmul.mubr.f32.gmra.mxu0 %v3888
      %v4081 = vpop.f32.mrf.mxu0
      %v4082 = vadd.f32 0.0, %v4081
      %v4083 = vpop.f32.mrf.mxu0
      %4084 = vmatprep.mubr.f32.mxu0 0.0
      %4085 = vmatmul.mubr.f32.gmra.mxu0 %v3890
      %v4086 = vpop.f32.mrf.mxu0
      %v4087 = vadd.f32 0.0, %v4086
      %v4088 = vpop.f32.mrf.mxu0
      %4089 = vmatprep.mubr.f32.mxu0 0.0
      %4090 = vmatmul.mubr.f32.gmra.mxu0 %v3892
      %v4091 = vpop.f32.mrf.mxu0
      %v4092 = vadd.f32 0.0, %v4091
      %v4093 = vpop.f32.mrf.mxu0
      %4094 = vmatprep.mubr.f32.mxu0 0.0
      %4095 = vmatmul.mubr.f32.gmra.mxu0 %v3894
      %v4096 = vpop.f32.mrf.mxu0
      %v4097 = vadd.f32 0.0, %v4096
      %v4098 = vpop.f32.mrf.mxu0
      %4099 = vmatprep.mubr.f32.mxu0 0.0
      %4100 = vmatmul.mubr.f32.gmra.mxu0 %v3896
      %v4101 = vpop.f32.mrf.mxu0
      %v4102 = vadd.f32 0.0, %v4101
      %v4103 = vpop.f32.mrf.mxu0
      %4104 = vmatprep.mubr.f32.mxu0 0.0
      %4105 = vmatmul.mubr.f32.gmra.mxu0 %v3898
      %v4106 = vpop.f32.mrf.mxu0
      %v4107 = vadd.f32 0.0, %v4106
      %v4108 = vpop.f32.mrf.mxu0
      %4109 = vmatprep.mubr.f32.mxu0 0.0
      %4110 = vmatmul.mubr.f32.gmra.mxu0 %v3900
      %v4111 = vpop.f32.mrf.mxu0
      %v4112 = vadd.f32 0.0, %v4111
      %v4113 = vpop.f32.mrf.mxu0
      %4114 = vmatprep.mubr.f32.mxu0 0.0
      %4115 = vmatmul.mubr.f32.gmra.mxu0 %v3902
      %v4116 = vpop.f32.mrf.mxu0
      %v4117 = vadd.f32 0.0, %v4116
      %v4118 = vpop.f32.mrf.mxu0
      %4119 = vmatprep.mubr.f32.mxu0 0.0
      %4120 = vmatmul.mubr.f32.gmra.mxu0 %v3904
      %v4121 = vpop.f32.mrf.mxu0
      %v4122 = vadd.f32 0.0, %v4121
      %v4123 = vpop.f32.mrf.mxu0
      %4124 = vmatprep.mubr.f32.mxu0 0.0
      %4125 = vmatmul.mubr.f32.gmra.mxu0 %v3906
      %v4126 = vpop.f32.mrf.mxu0
      %v4127 = vadd.f32 0.0, %v4126
      %v4128 = vpop.f32.mrf.mxu0
      %4129 = vmatprep.mubr.f32.mxu0 0.0
      %4130 = vmatmul.mubr.f32.gmra.mxu0 %v3908
      %v4131 = vpop.f32.mrf.mxu0
      %v4132 = vadd.f32 0.0, %v4131
      %v4133 = vpop.f32.mrf.mxu0
      %4134 = vdwg.mxu0
      %v4135 = vadd.f32 %v3732, %v3977
      %v4136 = vadd.f32 %v3733, %v3982
      %v4137 = vadd.f32 %v3734, %v3987
      %v4138 = vadd.f32 %v3735, %v3992
      %v4139 = vadd.f32 %v3736, %v3997
      %v4140 = vadd.f32 %v3737, %v4002
      %v4141 = vadd.f32 %v3738, %v4007
      %v4142 = vadd.f32 %v3739, %v4012
      %v4143 = vadd.f32 %v3740, %v4017
      %v4144 = vadd.f32 %v3741, %v4022
      %v4145 = vadd.f32 %v3742, %v4027
      %v4146 = vadd.f32 %v3743, %v4032
      %v4147 = vadd.f32 %v3744, %v4037
      %v4148 = vadd.f32 %v3745, %v4042
      %v4149 = vadd.f32 %v3746, %v4047
      %v4150 = vadd.f32 %v3747, %v4052
      %v4151 = vadd.f32 %v3748, %v4057
      %v4152 = vadd.f32 %v3749, %v4062
      %v4153 = vadd.f32 %v3750, %v4067
      %v4154 = vadd.f32 %v3751, %v4072
      %v4155 = vadd.f32 %v3752, %v4077
      %v4156 = vadd.f32 %v3753, %v4082
      %v4157 = vadd.f32 %v3754, %v4087
      %v4158 = vadd.f32 %v3755, %v4092
      %v4159 = vadd.f32 %v3756, %v4097
      %v4160 = vadd.f32 %v3757, %v4102
      %v4161 = vadd.f32 %v3758, %v4107
      %v4162 = vadd.f32 %v3759, %v4112
      %v4163 = vadd.f32 %v3760, %v4117
      %v4164 = vadd.f32 %v3761, %v4122
      %v4165 = vadd.f32 %v3762, %v4127
      %v4166 = vadd.f32 %v3763, %v4132
      %v4167 = vsel %vm269, %v4135, 0.0
      %v4168 = vsel %vm269, %v4136, 0.0
      %v4169 = vadd.f32 %v4167, %v4168
      %v4170 = vsel %vm269, %v4137, 0.0
      %v4171 = vadd.f32 %v4169, %v4170
      %v4172 = vsel %vm269, %v4138, 0.0
      %v4173 = vadd.f32 %v4171, %v4172
      %v4174 = vsel %vm269, %v4139, 0.0
      %v4175 = vadd.f32 %v4173, %v4174
      %v4176 = vsel %vm269, %v4140, 0.0
      %v4177 = vadd.f32 %v4175, %v4176
      %v4178 = vsel %vm269, %v4141, 0.0
      %v4179 = vadd.f32 %v4177, %v4178
      %v4180 = vsel %vm269, %v4142, 0.0
      %v4181 = vadd.f32 %v4179, %v4180
      %v4182 = vsel %vm269, %v4143, 0.0
      %v4183 = vadd.f32 %v4181, %v4182
      %v4184 = vsel %vm269, %v4144, 0.0
      %v4185 = vadd.f32 %v4183, %v4184
      %v4186 = vsel %vm269, %v4145, 0.0
      %v4187 = vadd.f32 %v4185, %v4186
      %v4188 = vsel %vm269, %v4146, 0.0
      %v4189 = vadd.f32 %v4187, %v4188
      %v4190 = vsel %vm269, %v4147, 0.0
      %v4191 = vadd.f32 %v4189, %v4190
      %v4192 = vsel %vm269, %v4148, 0.0
      %v4193 = vadd.f32 %v4191, %v4192
      %v4194 = vsel %vm269, %v4149, 0.0
      %v4195 = vadd.f32 %v4193, %v4194
      %v4196 = vsel %vm269, %v4150, 0.0
      %v4197 = vadd.f32 %v4195, %v4196
      %v4198 = vsel %vm269, %v4151, 0.0
      %v4199 = vadd.f32 %v4197, %v4198
      %v4200 = vsel %vm269, %v4152, 0.0
      %v4201 = vadd.f32 %v4199, %v4200
      %v4202 = vsel %vm269, %v4153, 0.0
      %v4203 = vadd.f32 %v4201, %v4202
      %v4204 = vsel %vm269, %v4154, 0.0
      %v4205 = vadd.f32 %v4203, %v4204
      %v4206 = vsel %vm269, %v4155, 0.0
      %v4207 = vadd.f32 %v4205, %v4206
      %v4208 = vsel %vm269, %v4156, 0.0
      %v4209 = vadd.f32 %v4207, %v4208
      %v4210 = vsel %vm269, %v4157, 0.0
      %v4211 = vadd.f32 %v4209, %v4210
      %v4212 = vsel %vm269, %v4158, 0.0
      %v4213 = vadd.f32 %v4211, %v4212
      %v4214 = vsel %vm269, %v4159, 0.0
      %v4215 = vadd.f32 %v4213, %v4214
      %v4216 = vsel %vm269, %v4160, 0.0
      %v4217 = vadd.f32 %v4215, %v4216
      %v4218 = vsel %vm269, %v4161, 0.0
      %v4219 = vadd.f32 %v4217, %v4218
      %v4220 = vsel %vm269, %v4162, 0.0
      %v4221 = vadd.f32 %v4219, %v4220
      %v4222 = vsel %vm269, %v4163, 0.0
      %v4223 = vadd.f32 %v4221, %v4222
      %v4224 = vsel %vm269, %v4164, 0.0
      %v4225 = vadd.f32 %v4223, %v4224
      %v4226 = vsel %vm269, %v4165, 0.0
      %v4227 = vadd.f32 %v4225, %v4226
      %v4228 = vsel %vm269, %v4166, 0.0
      %v4229 = vadd.f32 %v4227, %v4228
      %v4230 = vrot.slane %v4229, 4
      %v4231 = vadd.f32 %v4229, %v4230
      %v4232 = vrot.slane %v4231, 2
      %v4233 = vadd.f32 %v4231, %v4232
      %v4234 = vrot.slane %v4233, 1
      %v4235 = vadd.f32 %v4233, %v4234
      %4236 = vst.msk [vmem:[%s265] sm:$0x1] %vm278, %v4235
      %v4237 = vmul.f32 %v4135, %v4135
      %v4238 = vmul.f32 %v4136, %v4136
      %v4239 = vmul.f32 %v4137, %v4137
      %v4240 = vmul.f32 %v4138, %v4138
      %v4241 = vmul.f32 %v4139, %v4139
      %v4242 = vmul.f32 %v4140, %v4140
      %v4243 = vmul.f32 %v4141, %v4141
      %v4244 = vmul.f32 %v4142, %v4142
      %v4245 = vmul.f32 %v4143, %v4143
      %v4246 = vmul.f32 %v4144, %v4144
      %v4247 = vmul.f32 %v4145, %v4145
      %v4248 = vmul.f32 %v4146, %v4146
      %v4249 = vmul.f32 %v4147, %v4147
      %v4250 = vmul.f32 %v4148, %v4148
      %v4251 = vmul.f32 %v4149, %v4149
      %v4252 = vmul.f32 %v4150, %v4150
      %v4253 = vmul.f32 %v4151, %v4151
      %v4254 = vmul.f32 %v4152, %v4152
      %v4255 = vmul.f32 %v4153, %v4153
      %v4256 = vmul.f32 %v4154, %v4154
      %v4257 = vmul.f32 %v4155, %v4155
      %v4258 = vmul.f32 %v4156, %v4156
      %v4259 = vmul.f32 %v4157, %v4157
      %v4260 = vmul.f32 %v4158, %v4158
      %v4261 = vmul.f32 %v4159, %v4159
      %v4262 = vmul.f32 %v4160, %v4160
      %v4263 = vmul.f32 %v4161, %v4161
      %v4264 = vmul.f32 %v4162, %v4162
      %v4265 = vmul.f32 %v4163, %v4163
      %v4266 = vmul.f32 %v4164, %v4164
      %v4267 = vmul.f32 %v4165, %v4165
      %v4268 = vmul.f32 %v4166, %v4166
      %v4269 = vsel %vm269, %v4237, 0.0
      %v4270 = vsel %vm269, %v4238, 0.0
      %v4271 = vadd.f32 %v4269, %v4270
      %v4272 = vsel %vm269, %v4239, 0.0
      %v4273 = vadd.f32 %v4271, %v4272
      %v4274 = vsel %vm269, %v4240, 0.0
      %v4275 = vadd.f32 %v4273, %v4274
      %v4276 = vsel %vm269, %v4241, 0.0
      %v4277 = vadd.f32 %v4275, %v4276
      %v4278 = vsel %vm269, %v4242, 0.0
      %v4279 = vadd.f32 %v4277, %v4278
      %v4280 = vsel %vm269, %v4243, 0.0
      %v4281 = vadd.f32 %v4279, %v4280
      %v4282 = vsel %vm269, %v4244, 0.0
      %v4283 = vadd.f32 %v4281, %v4282
      %v4284 = vsel %vm269, %v4245, 0.0
      %v4285 = vadd.f32 %v4283, %v4284
      %v4286 = vsel %vm269, %v4246, 0.0
      %v4287 = vadd.f32 %v4285, %v4286
      %v4288 = vsel %vm269, %v4247, 0.0
      %v4289 = vadd.f32 %v4287, %v4288
      %v4290 = vsel %vm269, %v4248, 0.0
      %v4291 = vadd.f32 %v4289, %v4290
      %v4292 = vsel %vm269, %v4249, 0.0
      %v4293 = vadd.f32 %v4291, %v4292
      %v4294 = vsel %vm269, %v4250, 0.0
      %v4295 = vadd.f32 %v4293, %v4294
      %v4296 = vsel %vm269, %v4251, 0.0
      %v4297 = vadd.f32 %v4295, %v4296
      %v4298 = vsel %vm269, %v4252, 0.0
      %v4299 = vadd.f32 %v4297, %v4298
      %v4300 = vsel %vm269, %v4253, 0.0
      %v4301 = vadd.f32 %v4299, %v4300
      %v4302 = vsel %vm269, %v4254, 0.0
      %v4303 = vadd.f32 %v4301, %v4302
      %v4304 = vsel %vm269, %v4255, 0.0
      %v4305 = vadd.f32 %v4303, %v4304
      %v4306 = vsel %vm269, %v4256, 0.0
      %v4307 = vadd.f32 %v4305, %v4306
      %v4308 = vsel %vm269, %v4257, 0.0
      %v4309 = vadd.f32 %v4307, %v4308
      %v4310 = vsel %vm269, %v4258, 0.0
      %v4311 = vadd.f32 %v4309, %v4310
      %v4312 = vsel %vm269, %v4259, 0.0
      %v4313 = vadd.f32 %v4311, %v4312
      %v4314 = vsel %vm269, %v4260, 0.0
      %v4315 = vadd.f32 %v4313, %v4314
      %v4316 = vsel %vm269, %v4261, 0.0
      %v4317 = vadd.f32 %v4315, %v4316
      %v4318 = vsel %vm269, %v4262, 0.0
      %v4319 = vadd.f32 %v4317, %v4318
      %v4320 = vsel %vm269, %v4263, 0.0
      %v4321 = vadd.f32 %v4319, %v4320
      %v4322 = vsel %vm269, %v4264, 0.0
      %v4323 = vadd.f32 %v4321, %v4322
      %v4324 = vsel %vm269, %v4265, 0.0
      %v4325 = vadd.f32 %v4323, %v4324
      %v4326 = vsel %vm269, %v4266, 0.0
      %v4327 = vadd.f32 %v4325, %v4326
      %v4328 = vsel %vm269, %v4267, 0.0
      %v4329 = vadd.f32 %v4327, %v4328
      %v4330 = vsel %vm269, %v4268, 0.0
      %v4331 = vadd.f32 %v4329, %v4330
      %v4332 = vrot.slane %v4331, 4
      %v4333 = vadd.f32 %v4331, %v4332
      %v4334 = vrot.slane %v4333, 2
      %v4335 = vadd.f32 %v4333, %v4334
      %v4336 = vrot.slane %v4335, 1
      %v4337 = vadd.f32 %v4335, %v4336
      %4338 = vst.msk [vmem:[%s268] sm:$0x1] %vm278, %v4337
      %4339 = vst.msk [vmem:[%s262] sm:$0xff] %vm269, %v4135
      %4340 = vst.msk [vmem:[%s262 + $0x8] sm:$0xff] %vm269, %v4136
      %4341 = vst.msk [vmem:[%s262 + $0x10] sm:$0xff] %vm269, %v4137
      %4342 = vst.msk [vmem:[%s262 + $0x18] sm:$0xff] %vm269, %v4138
      %4343 = vst.msk [vmem:[%s262 + $0x20] sm:$0xff] %vm269, %v4139
      %4344 = vst.msk [vmem:[%s262 + $0x28] sm:$0xff] %vm269, %v4140
      %4345 = vst.msk [vmem:[%s262 + $0x30] sm:$0xff] %vm269, %v4141
      %4346 = vst.msk [vmem:[%s262 + $0x38] sm:$0xff] %vm269, %v4142
      %4347 = vst.msk [vmem:[%s262 + $0x40] sm:$0xff] %vm269, %v4143
      %4348 = vst.msk [vmem:[%s262 + $0x48] sm:$0xff] %vm269, %v4144
      %4349 = vst.msk [vmem:[%s262 + $0x50] sm:$0xff] %vm269, %v4145
      %4350 = vst.msk [vmem:[%s262 + $0x58] sm:$0xff] %vm269, %v4146
      %4351 = vst.msk [vmem:[%s262 + $0x60] sm:$0xff] %vm269, %v4147
      %4352 = vst.msk [vmem:[%s262 + $0x68] sm:$0xff] %vm269, %v4148
      %4353 = vst.msk [vmem:[%s262 + $0x70] sm:$0xff] %vm269, %v4149
      %4354 = vst.msk [vmem:[%s262 + $0x78] sm:$0xff] %vm269, %v4150
      %4355 = vst.msk [vmem:[%s262 + $0x80] sm:$0xff] %vm269, %v4151
      %4356 = vst.msk [vmem:[%s262 + $0x88] sm:$0xff] %vm269, %v4152
      %4357 = vst.msk [vmem:[%s262 + $0x90] sm:$0xff] %vm269, %v4153
      %4358 = vst.msk [vmem:[%s262 + $0x98] sm:$0xff] %vm269, %v4154
      %4359 = vst.msk [vmem:[%s262 + $0xa0] sm:$0xff] %vm269, %v4155
      %4360 = vst.msk [vmem:[%s262 + $0xa8] sm:$0xff] %vm269, %v4156
      %4361 = vst.msk [vmem:[%s262 + $0xb0] sm:$0xff] %vm269, %v4157
      %4362 = vst.msk [vmem:[%s262 + $0xb8] sm:$0xff] %vm269, %v4158
      %4363 = vst.msk [vmem:[%s262 + $0xc0] sm:$0xff] %vm269, %v4159
      %4364 = vst.msk [vmem:[%s262 + $0xc8] sm:$0xff] %vm269, %v4160
      %4365 = vst.msk [vmem:[%s262 + $0xd0] sm:$0xff] %vm269, %v4161
      %4366 = vst.msk [vmem:[%s262 + $0xd8] sm:$0xff] %vm269, %v4162
      %4367 = vst.msk [vmem:[%s262 + $0xe0] sm:$0xff] %vm269, %v4163
      %4368 = vst.msk [vmem:[%s262 + $0xe8] sm:$0xff] %vm269, %v4164
      %4369 = vst.msk [vmem:[%s262 + $0xf0] sm:$0xff] %vm269, %v4165
      %4370 = vst.msk [vmem:[%s262 + $0xf8] sm:$0xff] %vm269, %v4166
      %p4371 = scmp.lt.s32.totalorder %s18, 1
      %s4372 = scalar_select %p4371, %s18, 1
      %s4373 = smul.addr %s4372, 32
      %s4374 = smul.addr %s4373, 8
      %s4375 = scalar_lea.vmem %s4, %s4374
      %p4376 = scmp.lt.s32.totalorder %s18, 1
      %s4377 = scalar_select %p4376, %s18, 1
      %s4378 = scalar_lea.vmem %s5, %s4377
      %p4379 = scmp.lt.s32.totalorder %s18, 1
      %s4380 = scalar_select %p4379, %s18, 1
      %s4381 = scalar_lea.vmem %s6, %s4380
      // Predicated region
      $region37: #{double_conv_forward.4} parent=35 // pred_check
        %p4382 = pneg %p125
      $region38: #{double_conv_forward.4} parent=35 // pred_check_branch
        %4384 = sbr.rel (%p4382) target = $region40
      $region39: #{double_conv_forward.4} parent=35 // pred_region
        _
      $region40: #{double_conv_forward.4} parent=35 // pred_fallthru
        _
      // Predicated region
      $region41: #{double_conv_forward.4} parent=35 // pred_check
        %p4385 = pneg %p151
      $region42: #{double_conv_forward.4} parent=35 // pred_check_branch
        %4387 = sbr.rel (%p4385) target = $region44
      $region43: #{double_conv_forward.4} parent=35 // pred_region
        _
      $region44: #{double_conv_forward.4} parent=35 // pred_fallthru
        _
      // Predicated region
      $region45: #{double_conv_forward.4} parent=35 // pred_check
        %p4388 = pneg %p177
      $region46: #{double_conv_forward.4} parent=35 // pred_check_branch
        %4390 = sbr.rel (%p4388) target = $region48
      $region47: #{double_conv_forward.4} parent=35 // pred_region
        _
      $region48: #{double_conv_forward.4} parent=35 // pred_fallthru
        _
    $region36: #{double_conv_forward.4} parent=5 // pred_fallthru
      _
    %p4391 = scmp.le.s32.totalorder 2, %s13
    // Predicated region
    $region49: #{double_conv_forward.4} parent=5 // pred_check
      %p4392 = pneg %p4391
    $region50: #{double_conv_forward.4} parent=5 // pred_check_branch
      %4394 = sbr.rel (%p4392) target = $region52
    $region51: #{double_conv_forward.4} parent=5 // pred_region
      %s4395 = ssub.s32 %s13, 2
      // Predicated region
      $region53: #{double_conv_forward.4} parent=51 // pred_check
        %p4396 = pneg %p131
      $region54: #{double_conv_forward.4} parent=51 // pred_check_branch
        %4398 = sbr.rel (%p4396) target = $region56
      $region55: #{double_conv_forward.4} parent=51 // pred_region
        %p4399 = scmp.lt.s32.totalorder %s19, 1
        %s4400 = scalar_select %p4399, %s19, 1
        %s4401 = smul.addr %s4400, 32
        %s4402 = smul.addr %s4401, 8
        %s4403 = scalar_lea.vmem %s4, %s4402
      $region56: #{double_conv_forward.4} parent=51 // pred_fallthru
        _
      // Predicated region
      $region57: #{double_conv_forward.4} parent=51 // pred_check
        %p4404 = pneg %p157
      $region58: #{double_conv_forward.4} parent=51 // pred_check_branch
        %4406 = sbr.rel (%p4404) target = $region60
      $region59: #{double_conv_forward.4} parent=51 // pred_region
        %p4407 = scmp.lt.s32.totalorder %s19, 1
        %s4408 = scalar_select %p4407, %s19, 1
        %s4409 = scalar_lea.vmem %s5, %s4408
      $region60: #{double_conv_forward.4} parent=51 // pred_fallthru
        _
      // Predicated region
      $region61: #{double_conv_forward.4} parent=51 // pred_check
        %p4410 = pneg %p183
      $region62: #{double_conv_forward.4} parent=51 // pred_check_branch
        %4412 = sbr.rel (%p4410) target = $region64
      $region63: #{double_conv_forward.4} parent=51 // pred_region
        %p4413 = scmp.lt.s32.totalorder %s19, 1
        %s4414 = scalar_select %p4413, %s19, 1
        %s4415 = scalar_lea.vmem %s6, %s4414
      $region64: #{double_conv_forward.4} parent=51 // pred_fallthru
        _
    $region52: #{double_conv_forward.4} parent=5 // pred_fallthru
      _
  $region6: #{double_conv_forward.4} parent=0 // loop_footer
    %s17 = sadd.s32 1, %s13
  $region7: #{double_conv_forward.4} parent=0 // loop_footer_branch
    %12 = sbr.rel target = $region3
  $region8: #{double_conv_forward.4} parent=0 // loop_exit
    _

</llo_original>
